<compile_context>
chip_gen: v7x
topology: tpu7x:2x2x1
jax: 0.10.0
libtpu: 0.0.40
codegen_flags: <defaults>
</compile_context>

<pallas_src>
import functools

import jax
import jax.numpy as jnp
from jax import lax
from jax.experimental import pallas as pl
from jax.experimental.pallas import tpu as pltpu


def _round_up(x, m):
    return (x + m - 1) // m * m


# ----------------------------------------------------------------------------
# Fused kernel: conv3x3+BN+ReLU -> conv3x3+BN+ReLU on one (batch, row-tile)
# ----------------------------------------------------------------------------
def _fused_double_conv_kernel(TH, Wp,
                              x2_ref, x1_ref, mask_ref,
                              w1a_ref, w1b_ref, w2_ref, b1_ref, b2_ref,
                              o_ref, acc1_ref, mid_ref, acc2_ref):
    # x2_ref/x1_ref : (1, 1, TH+4, Wp, C)  bf16, spatially zero-padded row tile
    # mask_ref      : (1, M1, 1)           f32, 1.0 inside the image, 0.0 on padding
    # w1a/w1b_ref   : (9, C, CMIDP)        bf16, conv1 weights (x2 / x1 channel blocks)
    # w2_ref        : (9, CMIDP, COUTP)    bf16
    # b1/b2_ref     : (1, CMIDP/COUTP)     f32 folded conv-bias + BN bias
    # o_ref         : (1, TH, Wp, COUTP)   f32 (lane-dense output slab)
    THm = TH + 2                 # mid-slab rows (1-row halo per side)
    TH4 = TH + 4                 # input-tile rows (2-row halo per side)
    M1 = THm * Wp
    M2 = TH * Wp
    c2 = x2_ref.shape[-1]
    c1 = x1_ref.shape[-1]
    coutp = w2_ref.shape[-1]

    # Flatten (rows, Wp, C) -> (rows*Wp, C).  Wp is a multiple of 16, so this
    # reshape (and all row slices below) is layout-preserving for bf16 and f32.
    x2f = x2_ref[...].reshape(TH4 * Wp, c2)
    x1f = x1_ref[...].reshape(TH4 * Wp, c1)

    # ---- conv1: concat fused as two matmuls per tap, dx shift via roll ----
    for dx in range(3):
        partial = None
        for dy in range(3):
            t = dy * 3 + dx
            p = jnp.dot(x2f[dy * Wp: dy * Wp + M1], w1a_ref[t],
                        preferred_element_type=jnp.float32)
            p = p + jnp.dot(x1f[dy * Wp: dy * Wp + M1], w1b_ref[t],
                            preferred_element_type=jnp.float32)
            partial = p if partial is None else partial + p
        if dx != 1:
            # Column shift (dx - 1) realized as a flat sublane rotate on the
            # 128-lane f32 partial (XLU slot; no misaligned slices / copies).
            # Wrapped rows land only in masked padding columns.
            partial = pltpu.roll(partial, (1 - dx) % M1, axis=0)
        if dx == 0:
            acc1_ref[...] = partial
        else:
            acc1_ref[...] += partial

    # Folded BN + ReLU; zero the spatial-padding positions so the mid slab is a
    # correctly zero-padded input for conv2.
    mid_ref[...] = jnp.maximum(acc1_ref[...] + b1_ref[...], 0.0) * mask_ref[0]

    # ---- conv2 ----
    midf = mid_ref[...]
    first = True
    for dx in range(3):
        m = midf if dx == 1 else pltpu.roll(midf, (1 - dx) % M1, axis=0)
        mb = m.astype(jnp.bfloat16)          # bf16 MXU input, f32 accumulation
        for dy in range(3):
            t = dy * 3 + dx
            p = jnp.dot(mb[dy * Wp: dy * Wp + M2], w2_ref[t],
                        preferred_element_type=jnp.float32)
            if first:
                acc2_ref[...] = p
                first = False
            else:
                acc2_ref[...] += p

    out = jnp.maximum(acc2_ref[...] + b2_ref[...], 0.0)
    o_ref[...] = out.reshape(1, TH, Wp, coutp)


# ----------------------------------------------------------------------------
# Plain-JAX glue: bilinear upsample (align_corners=True)
# ----------------------------------------------------------------------------
# TODO(synk): the bilinear upsample / diff-pad stay in XLA; fusing them into the
# kernel is possible but not done here.
def _upsample_bilinear_x2_align_corners(x):
    """x: (N, H, W, C) -> (N, 2H, 2W, C); matches nn.Upsample(2,'bilinear',True)."""
    N, H, W, C = x.shape
    Ho, Wo = 2 * H, 2 * W

    def idx(in_size, out_size):
        if in_size == 1:
            z = jnp.zeros((out_size,), jnp.int32)
            return z, z, jnp.zeros((out_size,), jnp.float32)
        src = jnp.arange(out_size, dtype=jnp.float32) * (in_size - 1) / (out_size - 1)
        i0 = jnp.floor(src).astype(jnp.int32)
        i1 = jnp.minimum(i0 + 1, in_size - 1)
        return i0, i1, src - i0.astype(jnp.float32)

    h0, h1, fh = idx(H, Ho)
    w0, w1, fw = idx(W, Wo)
    xr = x[:, h0] * (1.0 - fh)[None, :, None, None] + x[:, h1] * fh[None, :, None, None]
    return (xr[:, :, w0] * (1.0 - fw)[None, None, :, None]
            + xr[:, :, w1] * fw[None, None, :, None])


# ----------------------------------------------------------------------------
# Pallas-backed forward of `Up` (NCHW in / NCHW out like PyTorch)
# ----------------------------------------------------------------------------
@jax.jit
def up_forward(x1_nchw, x2_nchw, p1, p2):
    x1 = jnp.transpose(x1_nchw, (0, 2, 3, 1)).astype(jnp.float32)
    x2 = jnp.transpose(x2_nchw, (0, 2, 3, 1)).astype(jnp.float32)

    x1 = _upsample_bilinear_x2_align_corners(x1)
    # TODO(synk): negative diffY/diffX (cropping, as F.pad would do) not supported.
    diffY = x2.shape[1] - x1.shape[1]
    diffX = x2.shape[2] - x1.shape[2]
    x1 = jnp.pad(x1, ((0, 0),
                      (diffY // 2, diffY - diffY // 2),
                      (diffX // 2, diffX - diffX // 2),
                      (0, 0)))

    N, H, W, c2 = x2.shape
    c1 = x1.shape[-1]

    w1, s1, b1 = p1
    w2, s2, b2 = p2
    cmid = w1.shape[-1]
    cout = w2.shape[-1]

    # ---- tiling parameters ----
    TH = 8 if H % 8 == 0 else H          # row tile (2-row halo/side for fused conv)
    HT = H // TH
    Wp = _round_up(W + 2, 16)            # padded width: mult of 16 -> aligned
                                         # reshapes / row slices for bf16 & f32
    CMIDP = _round_up(cmid, 128)         # lane-dense channel padding
    COUTP = _round_up(cout, 128)

    # ---- fold BN scale into weights, pad channels, cast to bf16 ----
    w1f = jnp.pad(w1 * s1, ((0, 0), (0, 0), (0, 0), (0, CMIDP - cmid)))
    w1_x2 = w1f[:, :, :c2, :].reshape(9, c2, CMIDP).astype(jnp.bfloat16)
    w1_x1 = w1f[:, :, c2:, :].reshape(9, c1, CMIDP).astype(jnp.bfloat16)
    b1p = jnp.pad(b1, (0, CMIDP - cmid)).reshape(1, CMIDP).astype(jnp.float32)

    w2f = jnp.pad(w2 * s2, ((0, 0), (0, 0), (0, CMIDP - cmid), (0, COUTP - cout)))
    w2f = w2f.reshape(9, CMIDP, COUTP).astype(jnp.bfloat16)
    b2p = jnp.pad(b2, (0, COUTP - cout)).reshape(1, COUTP).astype(jnp.float32)

    # ---- spatial zero-pad (2 halo rows, 1 left col, right cols to Wp), bf16 ----
    def pad_spatial(x):
        return jnp.pad(x, ((0, 0), (2, 2), (1, Wp - 1 - W), (0, 0))).astype(jnp.bfloat16)

    x2p = pad_spatial(x2)
    x1p = pad_spatial(x1)

    # ---- materialize row tiles with their halos (simple, non-overlapping blocks) ----
    TH4 = TH + 4
    def to_tiles(xp):
        return jnp.stack([xp[:, t * TH: t * TH + TH4] for t in range(HT)], axis=1)
    x2t = to_tiles(x2p)            # (N, HT, TH+4, Wp, c2)
    x1t = to_tiles(x1p)            # (N, HT, TH+4, Wp, c1)

    # ---- per-tile validity mask for the mid slab (image rows & real columns) ----
    THm = TH + 2
    r_img = (jnp.arange(HT) * TH - 1)[:, None] + jnp.arange(THm)[None, :]
    row_ok = (r_img >= 0) & (r_img < H)                       # (HT, THm)
    col = jnp.arange(Wp)
    col_ok = (col >= 1) & (col <= W)                          # (Wp,)
    mask = (row_ok[:, :, None] & col_ok[None, None, :]).astype(jnp.float32)
    mask = mask.reshape(HT, THm * Wp, 1)

    M1 = THm * Wp
    M2 = TH * Wp

    kernel = functools.partial(_fused_double_conv_kernel, TH, Wp)

    flops = 2 * 9 * N * HT * (M1 * (c2 + c1) * CMIDP + M2 * CMIDP * COUTP)
    bytes_accessed = ((x2t.size + x1t.size) * 2
                      + (w1_x2.size + w1_x1.size + w2f.size) * 2
                      + (b1p.size + b2p.size + mask.size) * 4
                      + N * H * Wp * COUTP * 4)

    out = pl.pallas_call(
        kernel,
        out_shape=jax.ShapeDtypeStruct((N, H, Wp, COUTP), jnp.float32),
        grid_spec=pltpu.PrefetchScalarGridSpec(
            num_scalar_prefetch=0,
            grid=(N, HT),
            in_specs=[
                pl.BlockSpec((1, 1, TH4, Wp, c2), lambda n, t: (n, t, 0, 0, 0)),
                pl.BlockSpec((1, 1, TH4, Wp, c1), lambda n, t: (n, t, 0, 0, 0)),
                pl.BlockSpec((1, M1, 1), lambda n, t: (t, 0, 0)),
                pl.BlockSpec((9, c2, CMIDP), lambda n, t: (0, 0, 0)),
                pl.BlockSpec((9, c1, CMIDP), lambda n, t: (0, 0, 0)),
                pl.BlockSpec((9, CMIDP, COUTP), lambda n, t: (0, 0, 0)),
                pl.BlockSpec((1, CMIDP), lambda n, t: (0, 0)),
                pl.BlockSpec((1, COUTP), lambda n, t: (0, 0)),
            ],
            out_specs=pl.BlockSpec((1, TH, Wp, COUTP), lambda n, t: (n, t, 0, 0)),
            scratch_shapes=[
                pltpu.VMEM((M1, CMIDP), jnp.float32),   # conv1 accumulator
                pltpu.VMEM((M1, CMIDP), jnp.float32),   # zero-padded mid slab
                pltpu.VMEM((M2, COUTP), jnp.float32),   # conv2 accumulator
            ],
        ),
        compiler_params=pltpu.CompilerParams(
            dimension_semantics=("parallel", "parallel"),
            vmem_limit_bytes=48 * 1024 * 1024,
        ),
        cost_estimate=pl.CostEstimate(flops=flops, transcendentals=0,
                                      bytes_accessed=bytes_accessed),
    )(x2t, x1t, mask, w1_x2, w1_x1, w2f, b1p, b2p)

    # Strip padded columns / channels, back to NCHW.
    y = out[:, :, 1:1 + W, :cout]
    return jnp.transpose(y, (0, 3, 1, 2))


# ----------------------------------------------------------------------------
# Deterministic parameter construction (Conv2d bias + BatchNorm folded)
# ----------------------------------------------------------------------------
# TODO(synk): BatchNorm is inference-mode only (running stats folded into a
# per-channel affine); training-mode batch statistics are not reproduced.
def make_conv_bn_params(key, cin, cout, eps=1e-5):
    k = jax.random.split(key, 6)
    w = 0.1 * jax.random.normal(k[0], (3, 3, cin, cout), jnp.float32)     # HWIO
    cbias = 0.1 * jax.random.normal(k[1], (cout,), jnp.float32)
    gamma = 1.0 + 0.1 * jax.random.normal(k[2], (cout,), jnp.float32)
    beta = 0.1 * jax.random.normal(k[3], (cout,), jnp.float32)
    mean = 0.1 * jax.random.normal(k[4], (cout,), jnp.float32)
    var = 1.0 + 0.1 * jnp.abs(jax.random.normal(k[5], (cout,), jnp.float32))
    scale = gamma / jnp.sqrt(var + eps)
    bias = (cbias - mean) * scale + beta
    return w, scale, bias


# ----------------------------------------------------------------------------
# Pure-JAX reference (lax conv, same bf16 quantization points as the kernel)
# ----------------------------------------------------------------------------
def up_forward_reference(x1_nchw, x2_nchw, p1, p2):
    x1 = jnp.transpose(x1_nchw, (0, 2, 3, 1))
    x2 = jnp.transpose(x2_nchw, (0, 2, 3, 1))
    x1 = _upsample_bilinear_x2_align_corners(x1)
    diffY = x2.shape[1] - x1.shape[1]
    diffX = x2.shape[2] - x1.shape[2]
    x1 = jnp.pad(x1, ((0, 0), (diffY // 2, diffY - diffY // 2),
                      (diffX // 2, diffX - diffX // 2), (0, 0)))
    x = jnp.concatenate([x2, x1], axis=-1)

    def conv_bn_relu(x, p):
        w, s, b = p
        wf = (w * s).astype(jnp.bfloat16)
        dn = lax.conv_dimension_numbers(x.shape, wf.shape, ('NHWC', 'HWIO', 'NHWC'))
        y = lax.conv_general_dilated(x.astype(jnp.bfloat16), wf, (1, 1), 'SAME',
                                     dimension_numbers=dn,
                                     preferred_element_type=jnp.float32)
        return jnp.maximum(y + b, 0.0)

    y = conv_bn_relu(x, p1)
    y = conv_bn_relu(y, p2)
    return jnp.transpose(y, (0, 3, 1, 2))


if __name__ == "__main__":
    key = jax.random.PRNGKey(0)
    keys = jax.random.split(key, 4)

    # Up(in_channels=8, out_channels=4): x1 and x2 each carry in_channels//2 = 4 channels.
    in_channels, out_channels = 8, 4
    mid_channels = in_channels // 2
    N = 2
    x1 = jax.random.normal(keys[0], (N, in_channels // 2, 8, 8), jnp.float32)    # deep feature
    x2 = jax.random.normal(keys[1], (N, in_channels // 2, 16, 16), jnp.float32)  # skip feature

    p1 = make_conv_bn_params(keys[2], in_channels, mid_channels)   # conv1: in -> mid
    p2 = make_conv_bn_params(keys[3], mid_channels, out_channels)  # conv2: mid -> out

    out = jax.block_until_ready(up_forward(x1, x2, p1, p2))
    ref = jax.block_until_ready(up_forward_reference(x1, x2, p1, p2))

    assert out.shape == (N, out_channels, 16, 16), out.shape
    err = float(jnp.max(jnp.abs(out - ref)))
    assert err < 1e-2, err

    print("KERNEL_OK")
</pallas_src>

<mosaic_0001>
module attributes {stable_mosaic.version = 11 : i64} {
  func.func @_fused_double_conv_kernel(%arg0: i32, %arg1: i32, %arg2: memref<1x1x12x32x4xbf16, #tpu.memory_space<vmem>>, %arg3: memref<1x1x12x32x4xbf16, #tpu.memory_space<vmem>>, %arg4: memref<1x320x1xf32, #tpu.memory_space<vmem>>, %arg5: memref<9x4x128xbf16, #tpu.memory_space<vmem>>, %arg6: memref<9x4x128xbf16, #tpu.memory_space<vmem>>, %arg7: memref<9x128x128xbf16, #tpu.memory_space<vmem>>, %arg8: memref<1x128xf32, #tpu.memory_space<vmem>>, %arg9: memref<1x128xf32, #tpu.memory_space<vmem>>, %arg10: memref<1x8x32x128xf32, #tpu.memory_space<vmem>>, %arg11: memref<320x128xf32, #tpu.memory_space<vmem>>, %arg12: memref<320x128xf32, #tpu.memory_space<vmem>>, %arg13: memref<256x128xf32, #tpu.memory_space<vmem>>) attributes {dimension_semantics = [#tpu.dimension_semantics<parallel>, #tpu.dimension_semantics<parallel>], iteration_bounds = array<i64: 2, 2>, scalar_prefetch = 0 : i64, scratch_operands = 3 : i64, tpu.core_type = #tpu.core_type<tc>, window_params = [{transform_indices = @transform_0, window_bounds = array<i64: 1, 1, 12, 32, 4>}, {transform_indices = @transform_1, window_bounds = array<i64: 1, 1, 12, 32, 4>}, {transform_indices = @transform_2, window_bounds = array<i64: 1, 320, 1>}, {pipeline_mode = #tpu.pipeline_mode<synchronous>, transform_indices = @transform_3, window_bounds = array<i64: 9, 4, 128>}, {pipeline_mode = #tpu.pipeline_mode<synchronous>, transform_indices = @transform_4, window_bounds = array<i64: 9, 4, 128>}, {pipeline_mode = #tpu.pipeline_mode<synchronous>, transform_indices = @transform_5, window_bounds = array<i64: 9, 128, 128>}, {pipeline_mode = #tpu.pipeline_mode<synchronous>, transform_indices = @transform_6, window_bounds = array<i64: 1, 128>}, {pipeline_mode = #tpu.pipeline_mode<synchronous>, transform_indices = @transform_7, window_bounds = array<i64: 1, 128>}, {transform_indices = @transform_8, window_bounds = array<i64: 1, 8, 32, 128>}]} {
    %c0 = arith.constant 0 : index
    %c0_0 = arith.constant 0 : index
    %c0_1 = arith.constant 0 : index
    %c0_2 = arith.constant 0 : index
    %c0_3 = arith.constant 0 : index
    %0 = vector.load %arg2[%c0, %c0_0, %c0_1, %c0_2, %c0_3] : memref<1x1x12x32x4xbf16, #tpu.memory_space<vmem>>, vector<1x1x12x32x4xbf16>
    %1 = vector.shape_cast %0 : vector<1x1x12x32x4xbf16> to vector<384x4xbf16>
    %c0_4 = arith.constant 0 : index
    %c0_5 = arith.constant 0 : index
    %c0_6 = arith.constant 0 : index
    %c0_7 = arith.constant 0 : index
    %c0_8 = arith.constant 0 : index
    %2 = vector.load %arg3[%c0_4, %c0_5, %c0_6, %c0_7, %c0_8] : memref<1x1x12x32x4xbf16, #tpu.memory_space<vmem>>, vector<1x1x12x32x4xbf16>
    %3 = vector.shape_cast %2 : vector<1x1x12x32x4xbf16> to vector<384x4xbf16>
    %4 = vector.extract_strided_slice %1 {offsets = [0, 0], sizes = [320, 4], strides = [1, 1]} : vector<384x4xbf16> to vector<320x4xbf16>
    %c0_9 = arith.constant 0 : index
    %c0_10 = arith.constant 0 : index
    %c0_11 = arith.constant 0 : index
    %5 = vector.load %arg5[%c0_9, %c0_10, %c0_11] : memref<9x4x128xbf16, #tpu.memory_space<vmem>>, vector<1x4x128xbf16>
    %6 = vector.shape_cast %5 : vector<1x4x128xbf16> to vector<4x128xbf16>
    %cst = arith.constant dense<0.000000e+00> : vector<320x128xf32>
    %7 = tpu.matmul %4, %6, %cst {dimension_numbers = #tpu.dot_dimension_numbers<[1], [0], [0], [1], [0, 0, 1, 1], [], []>} : vector<320x4xbf16>, vector<4x128xbf16>, vector<320x128xf32> -> vector<320x128xf32>
    %8 = vector.extract_strided_slice %3 {offsets = [0, 0], sizes = [320, 4], strides = [1, 1]} : vector<384x4xbf16> to vector<320x4xbf16>
    %c0_12 = arith.constant 0 : index
    %c0_13 = arith.constant 0 : index
    %c0_14 = arith.constant 0 : index
    %9 = vector.load %arg6[%c0_12, %c0_13, %c0_14] : memref<9x4x128xbf16, #tpu.memory_space<vmem>>, vector<1x4x128xbf16>
    %10 = vector.shape_cast %9 : vector<1x4x128xbf16> to vector<4x128xbf16>
    %cst_15 = arith.constant dense<0.000000e+00> : vector<320x128xf32>
    %11 = tpu.matmul %8, %10, %cst_15 {dimension_numbers = #tpu.dot_dimension_numbers<[1], [0], [0], [1], [0, 0, 1, 1], [], []>} : vector<320x4xbf16>, vector<4x128xbf16>, vector<320x128xf32> -> vector<320x128xf32>
    %12 = arith.addf %7, %11 : vector<320x128xf32>
    %13 = vector.extract_strided_slice %1 {offsets = [32, 0], sizes = [320, 4], strides = [1, 1]} : vector<384x4xbf16> to vector<320x4xbf16>
    %c3 = arith.constant 3 : index
    %c0_16 = arith.constant 0 : index
    %c0_17 = arith.constant 0 : index
    %14 = vector.load %arg5[%c3, %c0_16, %c0_17] : memref<9x4x128xbf16, #tpu.memory_space<vmem>>, vector<1x4x128xbf16>
    %15 = vector.shape_cast %14 : vector<1x4x128xbf16> to vector<4x128xbf16>
    %cst_18 = arith.constant dense<0.000000e+00> : vector<320x128xf32>
    %16 = tpu.matmul %13, %15, %cst_18 {dimension_numbers = #tpu.dot_dimension_numbers<[1], [0], [0], [1], [0, 0, 1, 1], [], []>} : vector<320x4xbf16>, vector<4x128xbf16>, vector<320x128xf32> -> vector<320x128xf32>
    %17 = vector.extract_strided_slice %3 {offsets = [32, 0], sizes = [320, 4], strides = [1, 1]} : vector<384x4xbf16> to vector<320x4xbf16>
    %c3_19 = arith.constant 3 : index
    %c0_20 = arith.constant 0 : index
    %c0_21 = arith.constant 0 : index
    %18 = vector.load %arg6[%c3_19, %c0_20, %c0_21] : memref<9x4x128xbf16, #tpu.memory_space<vmem>>, vector<1x4x128xbf16>
    %19 = vector.shape_cast %18 : vector<1x4x128xbf16> to vector<4x128xbf16>
    %cst_22 = arith.constant dense<0.000000e+00> : vector<320x128xf32>
    %20 = tpu.matmul %17, %19, %cst_22 {dimension_numbers = #tpu.dot_dimension_numbers<[1], [0], [0], [1], [0, 0, 1, 1], [], []>} : vector<320x4xbf16>, vector<4x128xbf16>, vector<320x128xf32> -> vector<320x128xf32>
    %21 = arith.addf %16, %20 : vector<320x128xf32>
    %22 = arith.addf %12, %21 : vector<320x128xf32>
    %23 = vector.extract_strided_slice %1 {offsets = [64, 0], sizes = [320, 4], strides = [1, 1]} : vector<384x4xbf16> to vector<320x4xbf16>
    %c6 = arith.constant 6 : index
    %c0_23 = arith.constant 0 : index
    %c0_24 = arith.constant 0 : index
    %24 = vector.load %arg5[%c6, %c0_23, %c0_24] : memref<9x4x128xbf16, #tpu.memory_space<vmem>>, vector<1x4x128xbf16>
    %25 = vector.shape_cast %24 : vector<1x4x128xbf16> to vector<4x128xbf16>
    %cst_25 = arith.constant dense<0.000000e+00> : vector<320x128xf32>
    %26 = tpu.matmul %23, %25, %cst_25 {dimension_numbers = #tpu.dot_dimension_numbers<[1], [0], [0], [1], [0, 0, 1, 1], [], []>} : vector<320x4xbf16>, vector<4x128xbf16>, vector<320x128xf32> -> vector<320x128xf32>
    %27 = vector.extract_strided_slice %3 {offsets = [64, 0], sizes = [320, 4], strides = [1, 1]} : vector<384x4xbf16> to vector<320x4xbf16>
    %c6_26 = arith.constant 6 : index
    %c0_27 = arith.constant 0 : index
    %c0_28 = arith.constant 0 : index
    %28 = vector.load %arg6[%c6_26, %c0_27, %c0_28] : memref<9x4x128xbf16, #tpu.memory_space<vmem>>, vector<1x4x128xbf16>
    %29 = vector.shape_cast %28 : vector<1x4x128xbf16> to vector<4x128xbf16>
    %cst_29 = arith.constant dense<0.000000e+00> : vector<320x128xf32>
    %30 = tpu.matmul %27, %29, %cst_29 {dimension_numbers = #tpu.dot_dimension_numbers<[1], [0], [0], [1], [0, 0, 1, 1], [], []>} : vector<320x4xbf16>, vector<4x128xbf16>, vector<320x128xf32> -> vector<320x128xf32>
    %31 = arith.addf %26, %30 : vector<320x128xf32>
    %32 = arith.addf %22, %31 : vector<320x128xf32>
    %c1_i32 = arith.constant 1 : i32
    %33 = tpu.dynamic_rotate %32 by %c1_i32 dim 0 : vector<320x128xf32>, i32 -> vector<320x128xf32>
    %c0_30 = arith.constant 0 : index
    %c0_31 = arith.constant 0 : index
    %34 = vector.load %arg11[%c0_30, %c0_31] : memref<320x128xf32, #tpu.memory_space<vmem>>, vector<320x128xf32>
    tpu.vector_store %arg11[%c0_30, %c0_31], %33 {strides = array<i32>} : memref<320x128xf32, #tpu.memory_space<vmem>>, vector<320x128xf32>,
    %35 = vector.extract_strided_slice %1 {offsets = [0, 0], sizes = [320, 4], strides = [1, 1]} : vector<384x4xbf16> to vector<320x4xbf16>
    %c1 = arith.constant 1 : index
    %c0_32 = arith.constant 0 : index
    %c0_33 = arith.constant 0 : index
    %36 = vector.load %arg5[%c1, %c0_32, %c0_33] : memref<9x4x128xbf16, #tpu.memory_space<vmem>>, vector<1x4x128xbf16>
    %37 = vector.shape_cast %36 : vector<1x4x128xbf16> to vector<4x128xbf16>
    %cst_34 = arith.constant dense<0.000000e+00> : vector<320x128xf32>
    %38 = tpu.matmul %35, %37, %cst_34 {dimension_numbers = #tpu.dot_dimension_numbers<[1], [0], [0], [1], [0, 0, 1, 1], [], []>} : vector<320x4xbf16>, vector<4x128xbf16>, vector<320x128xf32> -> vector<320x128xf32>
    %39 = vector.extract_strided_slice %3 {offsets = [0, 0], sizes = [320, 4], strides = [1, 1]} : vector<384x4xbf16> to vector<320x4xbf16>
    %c1_35 = arith.constant 1 : index
    %c0_36 = arith.constant 0 : index
    %c0_37 = arith.constant 0 : index
    %40 = vector.load %arg6[%c1_35, %c0_36, %c0_37] : memref<9x4x128xbf16, #tpu.memory_space<vmem>>, vector<1x4x128xbf16>
    %41 = vector.shape_cast %40 : vector<1x4x128xbf16> to vector<4x128xbf16>
    %cst_38 = arith.constant dense<0.000000e+00> : vector<320x128xf32>
    %42 = tpu.matmul %39, %41, %cst_38 {dimension_numbers = #tpu.dot_dimension_numbers<[1], [0], [0], [1], [0, 0, 1, 1], [], []>} : vector<320x4xbf16>, vector<4x128xbf16>, vector<320x128xf32> -> vector<320x128xf32>
    %43 = arith.addf %38, %42 : vector<320x128xf32>
    %44 = vector.extract_strided_slice %1 {offsets = [32, 0], sizes = [320, 4], strides = [1, 1]} : vector<384x4xbf16> to vector<320x4xbf16>
    %c4 = arith.constant 4 : index
    %c0_39 = arith.constant 0 : index
    %c0_40 = arith.constant 0 : index
    %45 = vector.load %arg5[%c4, %c0_39, %c0_40] : memref<9x4x128xbf16, #tpu.memory_space<vmem>>, vector<1x4x128xbf16>
    %46 = vector.shape_cast %45 : vector<1x4x128xbf16> to vector<4x128xbf16>
    %cst_41 = arith.constant dense<0.000000e+00> : vector<320x128xf32>
    %47 = tpu.matmul %44, %46, %cst_41 {dimension_numbers = #tpu.dot_dimension_numbers<[1], [0], [0], [1], [0, 0, 1, 1], [], []>} : vector<320x4xbf16>, vector<4x128xbf16>, vector<320x128xf32> -> vector<320x128xf32>
    %48 = vector.extract_strided_slice %3 {offsets = [32, 0], sizes = [320, 4], strides = [1, 1]} : vector<384x4xbf16> to vector<320x4xbf16>
    %c4_42 = arith.constant 4 : index
    %c0_43 = arith.constant 0 : index
    %c0_44 = arith.constant 0 : index
    %49 = vector.load %arg6[%c4_42, %c0_43, %c0_44] : memref<9x4x128xbf16, #tpu.memory_space<vmem>>, vector<1x4x128xbf16>
    %50 = vector.shape_cast %49 : vector<1x4x128xbf16> to vector<4x128xbf16>
    %cst_45 = arith.constant dense<0.000000e+00> : vector<320x128xf32>
    %51 = tpu.matmul %48, %50, %cst_45 {dimension_numbers = #tpu.dot_dimension_numbers<[1], [0], [0], [1], [0, 0, 1, 1], [], []>} : vector<320x4xbf16>, vector<4x128xbf16>, vector<320x128xf32> -> vector<320x128xf32>
    %52 = arith.addf %47, %51 : vector<320x128xf32>
    %53 = arith.addf %43, %52 : vector<320x128xf32>
    %54 = vector.extract_strided_slice %1 {offsets = [64, 0], sizes = [320, 4], strides = [1, 1]} : vector<384x4xbf16> to vector<320x4xbf16>
    %c7 = arith.constant 7 : index
    %c0_46 = arith.constant 0 : index
    %c0_47 = arith.constant 0 : index
    %55 = vector.load %arg5[%c7, %c0_46, %c0_47] : memref<9x4x128xbf16, #tpu.memory_space<vmem>>, vector<1x4x128xbf16>
    %56 = vector.shape_cast %55 : vector<1x4x128xbf16> to vector<4x128xbf16>
    %cst_48 = arith.constant dense<0.000000e+00> : vector<320x128xf32>
    %57 = tpu.matmul %54, %56, %cst_48 {dimension_numbers = #tpu.dot_dimension_numbers<[1], [0], [0], [1], [0, 0, 1, 1], [], []>} : vector<320x4xbf16>, vector<4x128xbf16>, vector<320x128xf32> -> vector<320x128xf32>
    %58 = vector.extract_strided_slice %3 {offsets = [64, 0], sizes = [320, 4], strides = [1, 1]} : vector<384x4xbf16> to vector<320x4xbf16>
    %c7_49 = arith.constant 7 : index
    %c0_50 = arith.constant 0 : index
    %c0_51 = arith.constant 0 : index
    %59 = vector.load %arg6[%c7_49, %c0_50, %c0_51] : memref<9x4x128xbf16, #tpu.memory_space<vmem>>, vector<1x4x128xbf16>
    %60 = vector.shape_cast %59 : vector<1x4x128xbf16> to vector<4x128xbf16>
    %cst_52 = arith.constant dense<0.000000e+00> : vector<320x128xf32>
    %61 = tpu.matmul %58, %60, %cst_52 {dimension_numbers = #tpu.dot_dimension_numbers<[1], [0], [0], [1], [0, 0, 1, 1], [], []>} : vector<320x4xbf16>, vector<4x128xbf16>, vector<320x128xf32> -> vector<320x128xf32>
    %62 = arith.addf %57, %61 : vector<320x128xf32>
    %63 = arith.addf %53, %62 : vector<320x128xf32>
    %c0_53 = arith.constant 0 : index
    %c0_54 = arith.constant 0 : index
    %64 = vector.load %arg11[%c0_53, %c0_54] : memref<320x128xf32, #tpu.memory_space<vmem>>, vector<320x128xf32>
    %65 = arith.addf %64, %63 : vector<320x128xf32>
    %c0_55 = arith.constant 0 : index
    %c0_56 = arith.constant 0 : index
    %66 = vector.load %arg11[%c0_55, %c0_56] : memref<320x128xf32, #tpu.memory_space<vmem>>, vector<320x128xf32>
    tpu.vector_store %arg11[%c0_55, %c0_56], %65 {strides = array<i32>} : memref<320x128xf32, #tpu.memory_space<vmem>>, vector<320x128xf32>,
    %67 = vector.extract_strided_slice %1 {offsets = [0, 0], sizes = [320, 4], strides = [1, 1]} : vector<384x4xbf16> to vector<320x4xbf16>
    %c2 = arith.constant 2 : index
    %c0_57 = arith.constant 0 : index
    %c0_58 = arith.constant 0 : index
    %68 = vector.load %arg5[%c2, %c0_57, %c0_58] : memref<9x4x128xbf16, #tpu.memory_space<vmem>>, vector<1x4x128xbf16>
    %69 = vector.shape_cast %68 : vector<1x4x128xbf16> to vector<4x128xbf16>
    %cst_59 = arith.constant dense<0.000000e+00> : vector<320x128xf32>
    %70 = tpu.matmul %67, %69, %cst_59 {dimension_numbers = #tpu.dot_dimension_numbers<[1], [0], [0], [1], [0, 0, 1, 1], [], []>} : vector<320x4xbf16>, vector<4x128xbf16>, vector<320x128xf32> -> vector<320x128xf32>
    %71 = vector.extract_strided_slice %3 {offsets = [0, 0], sizes = [320, 4], strides = [1, 1]} : vector<384x4xbf16> to vector<320x4xbf16>
    %c2_60 = arith.constant 2 : index
    %c0_61 = arith.constant 0 : index
    %c0_62 = arith.constant 0 : index
    %72 = vector.load %arg6[%c2_60, %c0_61, %c0_62] : memref<9x4x128xbf16, #tpu.memory_space<vmem>>, vector<1x4x128xbf16>
    %73 = vector.shape_cast %72 : vector<1x4x128xbf16> to vector<4x128xbf16>
    %cst_63 = arith.constant dense<0.000000e+00> : vector<320x128xf32>
    %74 = tpu.matmul %71, %73, %cst_63 {dimension_numbers = #tpu.dot_dimension_numbers<[1], [0], [0], [1], [0, 0, 1, 1], [], []>} : vector<320x4xbf16>, vector<4x128xbf16>, vector<320x128xf32> -> vector<320x128xf32>
    %75 = arith.addf %70, %74 : vector<320x128xf32>
    %76 = vector.extract_strided_slice %1 {offsets = [32, 0], sizes = [320, 4], strides = [1, 1]} : vector<384x4xbf16> to vector<320x4xbf16>
    %c5 = arith.constant 5 : index
    %c0_64 = arith.constant 0 : index
    %c0_65 = arith.constant 0 : index
    %77 = vector.load %arg5[%c5, %c0_64, %c0_65] : memref<9x4x128xbf16, #tpu.memory_space<vmem>>, vector<1x4x128xbf16>
    %78 = vector.shape_cast %77 : vector<1x4x128xbf16> to vector<4x128xbf16>
    %cst_66 = arith.constant dense<0.000000e+00> : vector<320x128xf32>
    %79 = tpu.matmul %76, %78, %cst_66 {dimension_numbers = #tpu.dot_dimension_numbers<[1], [0], [0], [1], [0, 0, 1, 1], [], []>} : vector<320x4xbf16>, vector<4x128xbf16>, vector<320x128xf32> -> vector<320x128xf32>
    %80 = vector.extract_strided_slice %3 {offsets = [32, 0], sizes = [320, 4], strides = [1, 1]} : vector<384x4xbf16> to vector<320x4xbf16>
    %c5_67 = arith.constant 5 : index
    %c0_68 = arith.constant 0 : index
    %c0_69 = arith.constant 0 : index
    %81 = vector.load %arg6[%c5_67, %c0_68, %c0_69] : memref<9x4x128xbf16, #tpu.memory_space<vmem>>, vector<1x4x128xbf16>
    %82 = vector.shape_cast %81 : vector<1x4x128xbf16> to vector<4x128xbf16>
    %cst_70 = arith.constant dense<0.000000e+00> : vector<320x128xf32>
    %83 = tpu.matmul %80, %82, %cst_70 {dimension_numbers = #tpu.dot_dimension_numbers<[1], [0], [0], [1], [0, 0, 1, 1], [], []>} : vector<320x4xbf16>, vector<4x128xbf16>, vector<320x128xf32> -> vector<320x128xf32>
    %84 = arith.addf %79, %83 : vector<320x128xf32>
    %85 = arith.addf %75, %84 : vector<320x128xf32>
    %86 = vector.extract_strided_slice %1 {offsets = [64, 0], sizes = [320, 4], strides = [1, 1]} : vector<384x4xbf16> to vector<320x4xbf16>
    %c8 = arith.constant 8 : index
    %c0_71 = arith.constant 0 : index
    %c0_72 = arith.constant 0 : index
    %87 = vector.load %arg5[%c8, %c0_71, %c0_72] : memref<9x4x128xbf16, #tpu.memory_space<vmem>>, vector<1x4x128xbf16>
    %88 = vector.shape_cast %87 : vector<1x4x128xbf16> to vector<4x128xbf16>
    %cst_73 = arith.constant dense<0.000000e+00> : vector<320x128xf32>
    %89 = tpu.matmul %86, %88, %cst_73 {dimension_numbers = #tpu.dot_dimension_numbers<[1], [0], [0], [1], [0, 0, 1, 1], [], []>} : vector<320x4xbf16>, vector<4x128xbf16>, vector<320x128xf32> -> vector<320x128xf32>
    %90 = vector.extract_strided_slice %3 {offsets = [64, 0], sizes = [320, 4], strides = [1, 1]} : vector<384x4xbf16> to vector<320x4xbf16>
    %c8_74 = arith.constant 8 : index
    %c0_75 = arith.constant 0 : index
    %c0_76 = arith.constant 0 : index
    %91 = vector.load %arg6[%c8_74, %c0_75, %c0_76] : memref<9x4x128xbf16, #tpu.memory_space<vmem>>, vector<1x4x128xbf16>
    %92 = vector.shape_cast %91 : vector<1x4x128xbf16> to vector<4x128xbf16>
    %cst_77 = arith.constant dense<0.000000e+00> : vector<320x128xf32>
    %93 = tpu.matmul %90, %92, %cst_77 {dimension_numbers = #tpu.dot_dimension_numbers<[1], [0], [0], [1], [0, 0, 1, 1], [], []>} : vector<320x4xbf16>, vector<4x128xbf16>, vector<320x128xf32> -> vector<320x128xf32>
    %94 = arith.addf %89, %93 : vector<320x128xf32>
    %95 = arith.addf %85, %94 : vector<320x128xf32>
    %c319_i32 = arith.constant 319 : i32
    %96 = tpu.dynamic_rotate %95 by %c319_i32 dim 0 : vector<320x128xf32>, i32 -> vector<320x128xf32>
    %c0_78 = arith.constant 0 : index
    %c0_79 = arith.constant 0 : index
    %97 = vector.load %arg11[%c0_78, %c0_79] : memref<320x128xf32, #tpu.memory_space<vmem>>, vector<320x128xf32>
    %98 = arith.addf %97, %96 : vector<320x128xf32>
    %c0_80 = arith.constant 0 : index
    %c0_81 = arith.constant 0 : index
    %99 = vector.load %arg11[%c0_80, %c0_81] : memref<320x128xf32, #tpu.memory_space<vmem>>, vector<320x128xf32>
    tpu.vector_store %arg11[%c0_80, %c0_81], %98 {strides = array<i32>} : memref<320x128xf32, #tpu.memory_space<vmem>>, vector<320x128xf32>,
    %c0_82 = arith.constant 0 : index
    %c0_83 = arith.constant 0 : index
    %100 = vector.load %arg11[%c0_82, %c0_83] : memref<320x128xf32, #tpu.memory_space<vmem>>, vector<320x128xf32>
    %c0_84 = arith.constant 0 : index
    %c0_85 = arith.constant 0 : index
    %101 = vector.load %arg8[%c0_84, %c0_85] : memref<1x128xf32, #tpu.memory_space<vmem>>, vector<1x128xf32>
    %102 = vector.broadcast %101 : vector<1x128xf32> to vector<320x128xf32>
    %103 = arith.addf %100, %102 : vector<320x128xf32>
    %cst_86 = arith.constant 0.000000e+00 : f32
    %104 = vector.broadcast %cst_86 : f32 to vector<320x128xf32>
    %105 = arith.maximumf %103, %104 : vector<320x128xf32>
    %c0_87 = arith.constant 0 : index
    %c0_88 = arith.constant 0 : index
    %c0_89 = arith.constant 0 : index
    %106 = vector.load %arg4[%c0_87, %c0_88, %c0_89] : memref<1x320x1xf32, #tpu.memory_space<vmem>>, vector<1x320x1xf32>
    %107 = vector.shape_cast %106 : vector<1x320x1xf32> to vector<320x1xf32>
    %108 = vector.broadcast %107 : vector<320x1xf32> to vector<320x128xf32>
    %109 = arith.mulf %105, %108 : vector<320x128xf32>
    %c0_90 = arith.constant 0 : index
    %c0_91 = arith.constant 0 : index
    %110 = vector.load %arg12[%c0_90, %c0_91] : memref<320x128xf32, #tpu.memory_space<vmem>>, vector<320x128xf32>
    tpu.vector_store %arg12[%c0_90, %c0_91], %109 {strides = array<i32>} : memref<320x128xf32, #tpu.memory_space<vmem>>, vector<320x128xf32>,
    %c0_92 = arith.constant 0 : index
    %c0_93 = arith.constant 0 : index
    %111 = vector.load %arg12[%c0_92, %c0_93] : memref<320x128xf32, #tpu.memory_space<vmem>>, vector<320x128xf32>
    %c1_i32_94 = arith.constant 1 : i32
    %112 = tpu.dynamic_rotate %111 by %c1_i32_94 dim 0 : vector<320x128xf32>, i32 -> vector<320x128xf32>
    %113 = arith.truncf %112 : vector<320x128xf32> to vector<320x128xbf16>
    %114 = vector.extract_strided_slice %113 {offsets = [0, 0], sizes = [256, 128], strides = [1, 1]} : vector<320x128xbf16> to vector<256x128xbf16>
    %c0_95 = arith.constant 0 : index
    %c0_96 = arith.constant 0 : index
    %c0_97 = arith.constant 0 : index
    %115 = vector.load %arg7[%c0_95, %c0_96, %c0_97] : memref<9x128x128xbf16, #tpu.memory_space<vmem>>, vector<1x128x128xbf16>
    %116 = vector.shape_cast %115 : vector<1x128x128xbf16> to vector<128x128xbf16>
    %cst_98 = arith.constant dense<0.000000e+00> : vector<256x128xf32>
    %117 = tpu.matmul %114, %116, %cst_98 {dimension_numbers = #tpu.dot_dimension_numbers<[1], [0], [0], [1], [0, 0, 1, 1], [], []>} : vector<256x128xbf16>, vector<128x128xbf16>, vector<256x128xf32> -> vector<256x128xf32>
    %c0_99 = arith.constant 0 : index
    %c0_100 = arith.constant 0 : index
    %118 = vector.load %arg13[%c0_99, %c0_100] : memref<256x128xf32, #tpu.memory_space<vmem>>, vector<256x128xf32>
    tpu.vector_store %arg13[%c0_99, %c0_100], %117 {strides = array<i32>} : memref<256x128xf32, #tpu.memory_space<vmem>>, vector<256x128xf32>,
    %119 = vector.extract_strided_slice %113 {offsets = [32, 0], sizes = [256, 128], strides = [1, 1]} : vector<320x128xbf16> to vector<256x128xbf16>
    %c3_101 = arith.constant 3 : index
    %c0_102 = arith.constant 0 : index
    %c0_103 = arith.constant 0 : index
    %120 = vector.load %arg7[%c3_101, %c0_102, %c0_103] : memref<9x128x128xbf16, #tpu.memory_space<vmem>>, vector<1x128x128xbf16>
    %121 = vector.shape_cast %120 : vector<1x128x128xbf16> to vector<128x128xbf16>
    %cst_104 = arith.constant dense<0.000000e+00> : vector<256x128xf32>
    %122 = tpu.matmul %119, %121, %cst_104 {dimension_numbers = #tpu.dot_dimension_numbers<[1], [0], [0], [1], [0, 0, 1, 1], [], []>} : vector<256x128xbf16>, vector<128x128xbf16>, vector<256x128xf32> -> vector<256x128xf32>
    %c0_105 = arith.constant 0 : index
    %c0_106 = arith.constant 0 : index
    %123 = vector.load %arg13[%c0_105, %c0_106] : memref<256x128xf32, #tpu.memory_space<vmem>>, vector<256x128xf32>
    %124 = arith.addf %123, %122 : vector<256x128xf32>
    %c0_107 = arith.constant 0 : index
    %c0_108 = arith.constant 0 : index
    %125 = vector.load %arg13[%c0_107, %c0_108] : memref<256x128xf32, #tpu.memory_space<vmem>>, vector<256x128xf32>
    tpu.vector_store %arg13[%c0_107, %c0_108], %124 {strides = array<i32>} : memref<256x128xf32, #tpu.memory_space<vmem>>, vector<256x128xf32>,
    %126 = vector.extract_strided_slice %113 {offsets = [64, 0], sizes = [256, 128], strides = [1, 1]} : vector<320x128xbf16> to vector<256x128xbf16>
    %c6_109 = arith.constant 6 : index
    %c0_110 = arith.constant 0 : index
    %c0_111 = arith.constant 0 : index
    %127 = vector.load %arg7[%c6_109, %c0_110, %c0_111] : memref<9x128x128xbf16, #tpu.memory_space<vmem>>, vector<1x128x128xbf16>
    %128 = vector.shape_cast %127 : vector<1x128x128xbf16> to vector<128x128xbf16>
    %cst_112 = arith.constant dense<0.000000e+00> : vector<256x128xf32>
    %129 = tpu.matmul %126, %128, %cst_112 {dimension_numbers = #tpu.dot_dimension_numbers<[1], [0], [0], [1], [0, 0, 1, 1], [], []>} : vector<256x128xbf16>, vector<128x128xbf16>, vector<256x128xf32> -> vector<256x128xf32>
    %c0_113 = arith.constant 0 : index
    %c0_114 = arith.constant 0 : index
    %130 = vector.load %arg13[%c0_113, %c0_114] : memref<256x128xf32, #tpu.memory_space<vmem>>, vector<256x128xf32>
    %131 = arith.addf %130, %129 : vector<256x128xf32>
    %c0_115 = arith.constant 0 : index
    %c0_116 = arith.constant 0 : index
    %132 = vector.load %arg13[%c0_115, %c0_116] : memref<256x128xf32, #tpu.memory_space<vmem>>, vector<256x128xf32>
    tpu.vector_store %arg13[%c0_115, %c0_116], %131 {strides = array<i32>} : memref<256x128xf32, #tpu.memory_space<vmem>>, vector<256x128xf32>,
    %133 = arith.truncf %111 : vector<320x128xf32> to vector<320x128xbf16>
    %134 = vector.extract_strided_slice %133 {offsets = [0, 0], sizes = [256, 128], strides = [1, 1]} : vector<320x128xbf16> to vector<256x128xbf16>
    %c1_117 = arith.constant 1 : index
    %c0_118 = arith.constant 0 : index
    %c0_119 = arith.constant 0 : index
    %135 = vector.load %arg7[%c1_117, %c0_118, %c0_119] : memref<9x128x128xbf16, #tpu.memory_space<vmem>>, vector<1x128x128xbf16>
    %136 = vector.shape_cast %135 : vector<1x128x128xbf16> to vector<128x128xbf16>
    %cst_120 = arith.constant dense<0.000000e+00> : vector<256x128xf32>
    %137 = tpu.matmul %134, %136, %cst_120 {dimension_numbers = #tpu.dot_dimension_numbers<[1], [0], [0], [1], [0, 0, 1, 1], [], []>} : vector<256x128xbf16>, vector<128x128xbf16>, vector<256x128xf32> -> vector<256x128xf32>
    %c0_121 = arith.constant 0 : index
    %c0_122 = arith.constant 0 : index
    %138 = vector.load %arg13[%c0_121, %c0_122] : memref<256x128xf32, #tpu.memory_space<vmem>>, vector<256x128xf32>
    %139 = arith.addf %138, %137 : vector<256x128xf32>
    %c0_123 = arith.constant 0 : index
    %c0_124 = arith.constant 0 : index
    %140 = vector.load %arg13[%c0_123, %c0_124] : memref<256x128xf32, #tpu.memory_space<vmem>>, vector<256x128xf32>
    tpu.vector_store %arg13[%c0_123, %c0_124], %139 {strides = array<i32>} : memref<256x128xf32, #tpu.memory_space<vmem>>, vector<256x128xf32>,
    %141 = vector.extract_strided_slice %133 {offsets = [32, 0], sizes = [256, 128], strides = [1, 1]} : vector<320x128xbf16> to vector<256x128xbf16>
    %c4_125 = arith.constant 4 : index
    %c0_126 = arith.constant 0 : index
    %c0_127 = arith.constant 0 : index
    %142 = vector.load %arg7[%c4_125, %c0_126, %c0_127] : memref<9x128x128xbf16, #tpu.memory_space<vmem>>, vector<1x128x128xbf16>
    %143 = vector.shape_cast %142 : vector<1x128x128xbf16> to vector<128x128xbf16>
    %cst_128 = arith.constant dense<0.000000e+00> : vector<256x128xf32>
    %144 = tpu.matmul %141, %143, %cst_128 {dimension_numbers = #tpu.dot_dimension_numbers<[1], [0], [0], [1], [0, 0, 1, 1], [], []>} : vector<256x128xbf16>, vector<128x128xbf16>, vector<256x128xf32> -> vector<256x128xf32>
    %c0_129 = arith.constant 0 : index
    %c0_130 = arith.constant 0 : index
    %145 = vector.load %arg13[%c0_129, %c0_130] : memref<256x128xf32, #tpu.memory_space<vmem>>, vector<256x128xf32>
    %146 = arith.addf %145, %144 : vector<256x128xf32>
    %c0_131 = arith.constant 0 : index
    %c0_132 = arith.constant 0 : index
    %147 = vector.load %arg13[%c0_131, %c0_132] : memref<256x128xf32, #tpu.memory_space<vmem>>, vector<256x128xf32>
    tpu.vector_store %arg13[%c0_131, %c0_132], %146 {strides = array<i32>} : memref<256x128xf32, #tpu.memory_space<vmem>>, vector<256x128xf32>,
    %148 = vector.extract_strided_slice %133 {offsets = [64, 0], sizes = [256, 128], strides = [1, 1]} : vector<320x128xbf16> to vector<256x128xbf16>
    %c7_133 = arith.constant 7 : index
    %c0_134 = arith.constant 0 : index
    %c0_135 = arith.constant 0 : index
    %149 = vector.load %arg7[%c7_133, %c0_134, %c0_135] : memref<9x128x128xbf16, #tpu.memory_space<vmem>>, vector<1x128x128xbf16>
    %150 = vector.shape_cast %149 : vector<1x128x128xbf16> to vector<128x128xbf16>
    %cst_136 = arith.constant dense<0.000000e+00> : vector<256x128xf32>
    %151 = tpu.matmul %148, %150, %cst_136 {dimension_numbers = #tpu.dot_dimension_numbers<[1], [0], [0], [1], [0, 0, 1, 1], [], []>} : vector<256x128xbf16>, vector<128x128xbf16>, vector<256x128xf32> -> vector<256x128xf32>
    %c0_137 = arith.constant 0 : index
    %c0_138 = arith.constant 0 : index
    %152 = vector.load %arg13[%c0_137, %c0_138] : memref<256x128xf32, #tpu.memory_space<vmem>>, vector<256x128xf32>
    %153 = arith.addf %152, %151 : vector<256x128xf32>
    %c0_139 = arith.constant 0 : index
    %c0_140 = arith.constant 0 : index
    %154 = vector.load %arg13[%c0_139, %c0_140] : memref<256x128xf32, #tpu.memory_space<vmem>>, vector<256x128xf32>
    tpu.vector_store %arg13[%c0_139, %c0_140], %153 {strides = array<i32>} : memref<256x128xf32, #tpu.memory_space<vmem>>, vector<256x128xf32>,
    %c319_i32_141 = arith.constant 319 : i32
    %155 = tpu.dynamic_rotate %111 by %c319_i32_141 dim 0 : vector<320x128xf32>, i32 -> vector<320x128xf32>
    %156 = arith.truncf %155 : vector<320x128xf32> to vector<320x128xbf16>
    %157 = vector.extract_strided_slice %156 {offsets = [0, 0], sizes = [256, 128], strides = [1, 1]} : vector<320x128xbf16> to vector<256x128xbf16>
    %c2_142 = arith.constant 2 : index
    %c0_143 = arith.constant 0 : index
    %c0_144 = arith.constant 0 : index
    %158 = vector.load %arg7[%c2_142, %c0_143, %c0_144] : memref<9x128x128xbf16, #tpu.memory_space<vmem>>, vector<1x128x128xbf16>
    %159 = vector.shape_cast %158 : vector<1x128x128xbf16> to vector<128x128xbf16>
    %cst_145 = arith.constant dense<0.000000e+00> : vector<256x128xf32>
    %160 = tpu.matmul %157, %159, %cst_145 {dimension_numbers = #tpu.dot_dimension_numbers<[1], [0], [0], [1], [0, 0, 1, 1], [], []>} : vector<256x128xbf16>, vector<128x128xbf16>, vector<256x128xf32> -> vector<256x128xf32>
    %c0_146 = arith.constant 0 : index
    %c0_147 = arith.constant 0 : index
    %161 = vector.load %arg13[%c0_146, %c0_147] : memref<256x128xf32, #tpu.memory_space<vmem>>, vector<256x128xf32>
    %162 = arith.addf %161, %160 : vector<256x128xf32>
    %c0_148 = arith.constant 0 : index
    %c0_149 = arith.constant 0 : index
    %163 = vector.load %arg13[%c0_148, %c0_149] : memref<256x128xf32, #tpu.memory_space<vmem>>, vector<256x128xf32>
    tpu.vector_store %arg13[%c0_148, %c0_149], %162 {strides = array<i32>} : memref<256x128xf32, #tpu.memory_space<vmem>>, vector<256x128xf32>,
    %164 = vector.extract_strided_slice %156 {offsets = [32, 0], sizes = [256, 128], strides = [1, 1]} : vector<320x128xbf16> to vector<256x128xbf16>
    %c5_150 = arith.constant 5 : index
    %c0_151 = arith.constant 0 : index
    %c0_152 = arith.constant 0 : index
    %165 = vector.load %arg7[%c5_150, %c0_151, %c0_152] : memref<9x128x128xbf16, #tpu.memory_space<vmem>>, vector<1x128x128xbf16>
    %166 = vector.shape_cast %165 : vector<1x128x128xbf16> to vector<128x128xbf16>
    %cst_153 = arith.constant dense<0.000000e+00> : vector<256x128xf32>
    %167 = tpu.matmul %164, %166, %cst_153 {dimension_numbers = #tpu.dot_dimension_numbers<[1], [0], [0], [1], [0, 0, 1, 1], [], []>} : vector<256x128xbf16>, vector<128x128xbf16>, vector<256x128xf32> -> vector<256x128xf32>
    %c0_154 = arith.constant 0 : index
    %c0_155 = arith.constant 0 : index
    %168 = vector.load %arg13[%c0_154, %c0_155] : memref<256x128xf32, #tpu.memory_space<vmem>>, vector<256x128xf32>
    %169 = arith.addf %168, %167 : vector<256x128xf32>
    %c0_156 = arith.constant 0 : index
    %c0_157 = arith.constant 0 : index
    %170 = vector.load %arg13[%c0_156, %c0_157] : memref<256x128xf32, #tpu.memory_space<vmem>>, vector<256x128xf32>
    tpu.vector_store %arg13[%c0_156, %c0_157], %169 {strides = array<i32>} : memref<256x128xf32, #tpu.memory_space<vmem>>, vector<256x128xf32>,
    %171 = vector.extract_strided_slice %156 {offsets = [64, 0], sizes = [256, 128], strides = [1, 1]} : vector<320x128xbf16> to vector<256x128xbf16>
    %c8_158 = arith.constant 8 : index
    %c0_159 = arith.constant 0 : index
    %c0_160 = arith.constant 0 : index
    %172 = vector.load %arg7[%c8_158, %c0_159, %c0_160] : memref<9x128x128xbf16, #tpu.memory_space<vmem>>, vector<1x128x128xbf16>
    %173 = vector.shape_cast %172 : vector<1x128x128xbf16> to vector<128x128xbf16>
    %cst_161 = arith.constant dense<0.000000e+00> : vector<256x128xf32>
    %174 = tpu.matmul %171, %173, %cst_161 {dimension_numbers = #tpu.dot_dimension_numbers<[1], [0], [0], [1], [0, 0, 1, 1], [], []>} : vector<256x128xbf16>, vector<128x128xbf16>, vector<256x128xf32> -> vector<256x128xf32>
    %c0_162 = arith.constant 0 : index
    %c0_163 = arith.constant 0 : index
    %175 = vector.load %arg13[%c0_162, %c0_163] : memref<256x128xf32, #tpu.memory_space<vmem>>, vector<256x128xf32>
    %176 = arith.addf %175, %174 : vector<256x128xf32>
    %c0_164 = arith.constant 0 : index
    %c0_165 = arith.constant 0 : index
    %177 = vector.load %arg13[%c0_164, %c0_165] : memref<256x128xf32, #tpu.memory_space<vmem>>, vector<256x128xf32>
    tpu.vector_store %arg13[%c0_164, %c0_165], %176 {strides = array<i32>} : memref<256x128xf32, #tpu.memory_space<vmem>>, vector<256x128xf32>,
    %c0_166 = arith.constant 0 : index
    %c0_167 = arith.constant 0 : index
    %178 = vector.load %arg13[%c0_166, %c0_167] : memref<256x128xf32, #tpu.memory_space<vmem>>, vector<256x128xf32>
    %c0_168 = arith.constant 0 : index
    %c0_169 = arith.constant 0 : index
    %179 = vector.load %arg9[%c0_168, %c0_169] : memref<1x128xf32, #tpu.memory_space<vmem>>, vector<1x128xf32>
    %180 = vector.broadcast %179 : vector<1x128xf32> to vector<256x128xf32>
    %181 = arith.addf %178, %180 : vector<256x128xf32>
    %cst_170 = arith.constant 0.000000e+00 : f32
    %182 = vector.broadcast %cst_170 : f32 to vector<256x128xf32>
    %183 = arith.maximumf %181, %182 : vector<256x128xf32>
    %184 = vector.shape_cast %183 : vector<256x128xf32> to vector<1x8x32x128xf32>
    %c0_171 = arith.constant 0 : index
    %c0_172 = arith.constant 0 : index
    %c0_173 = arith.constant 0 : index
    %c0_174 = arith.constant 0 : index
    %185 = vector.load %arg10[%c0_171, %c0_172, %c0_173, %c0_174] : memref<1x8x32x128xf32, #tpu.memory_space<vmem>>, vector<1x8x32x128xf32>
    tpu.vector_store %arg10[%c0_171, %c0_172, %c0_173, %c0_174], %184 {strides = array<i32>} : memref<1x8x32x128xf32, #tpu.memory_space<vmem>>, vector<1x8x32x128xf32>,
    return
  }
  func.func @transform_0(%arg0: i32, %arg1: i32) -> (i32, i32, i32, i32, i32) {
    %c0_i32 = arith.constant 0 : i32
    %c0_i32_0 = arith.constant 0 : i32
    %c0_i32_1 = arith.constant 0 : i32
    %c0_i32_2 = arith.constant 0 : i32
    return %arg0, %arg1, %c0_i32, %c0_i32_0, %c0_i32_1 : i32, i32, i32, i32, i32
  }
  func.func @transform_1(%arg0: i32, %arg1: i32) -> (i32, i32, i32, i32, i32) {
    %c0_i32 = arith.constant 0 : i32
    %c0_i32_0 = arith.constant 0 : i32
    %c0_i32_1 = arith.constant 0 : i32
    %c0_i32_2 = arith.constant 0 : i32
    return %arg0, %arg1, %c0_i32, %c0_i32_0, %c0_i32_1 : i32, i32, i32, i32, i32
  }
  func.func @transform_2(%arg0: i32, %arg1: i32) -> (i32, i32, i32) {
    %c0_i32 = arith.constant 0 : i32
    %c0_i32_0 = arith.constant 0 : i32
    %c0_i32_1 = arith.constant 0 : i32
    return %arg1, %c0_i32, %c0_i32_0 : i32, i32, i32
  }
  func.func @transform_3(%arg0: i32, %arg1: i32) -> (i32, i32, i32) {
    %c0_i32 = arith.constant 0 : i32
    %c0_i32_0 = arith.constant 0 : i32
    %c0_i32_1 = arith.constant 0 : i32
    %c0_i32_2 = arith.constant 0 : i32
    return %c0_i32, %c0_i32_0, %c0_i32_1 : i32, i32, i32
  }
  func.func @transform_4(%arg0: i32, %arg1: i32) -> (i32, i32, i32) {
    %c0_i32 = arith.constant 0 : i32
    %c0_i32_0 = arith.constant 0 : i32
    %c0_i32_1 = arith.constant 0 : i32
    %c0_i32_2 = arith.constant 0 : i32
    return %c0_i32, %c0_i32_0, %c0_i32_1 : i32, i32, i32
  }
  func.func @transform_5(%arg0: i32, %arg1: i32) -> (i32, i32, i32) {
    %c0_i32 = arith.constant 0 : i32
    %c0_i32_0 = arith.constant 0 : i32
    %c0_i32_1 = arith.constant 0 : i32
    %c0_i32_2 = arith.constant 0 : i32
    return %c0_i32, %c0_i32_0, %c0_i32_1 : i32, i32, i32
  }
  func.func @transform_6(%arg0: i32, %arg1: i32) -> (i32, i32) {
    %c0_i32 = arith.constant 0 : i32
    %c0_i32_0 = arith.constant 0 : i32
    %c0_i32_1 = arith.constant 0 : i32
    return %c0_i32, %c0_i32_0 : i32, i32
  }
  func.func @transform_7(%arg0: i32, %arg1: i32) -> (i32, i32) {
    %c0_i32 = arith.constant 0 : i32
    %c0_i32_0 = arith.constant 0 : i32
    %c0_i32_1 = arith.constant 0 : i32
    return %c0_i32, %c0_i32_0 : i32, i32
  }
  func.func @transform_8(%arg0: i32, %arg1: i32) -> (i32, i32, i32, i32) {
    %c0_i32 = arith.constant 0 : i32
    %c0_i32_0 = arith.constant 0 : i32
    %c0_i32_1 = arith.constant 0 : i32
    return %arg0, %arg1, %c0_i32, %c0_i32_0 : i32, i32, i32, i32
  }
}

</mosaic_0001>

<llo_original>
// kernel: up_forward.1
$region0: #{up_forward.1}
  #allocation0 [shape = 'u32[]', space=smem, size = 0x4, offset = 0x4, fixed_abs, tag = 'smem constant byte address 0x4 - core index']
  #allocation1 [shape = 'u32[144,128]{1,0:T(1,128)}', space=vmem, size = 0x12000, scoped, tag = 'internal scratch']
  #allocation2 [shape = 'f32[320,128]{1,0:T(8,128)}', space=vmem, size = 0x28000, scoped, tag = 'scratch operand']
  #allocation3 [shape = 'f32[320,128]{1,0:T(8,128)}', space=vmem, size = 0x28000, scoped, tag = 'scratch operand']
  #allocation4 [shape = 'f32[256,128]{1,0:T(8,128)}', space=vmem, size = 0x20000, scoped, tag = 'scratch operand']
  %s0 = inlined_call_operand.vmem [shape: bf16[2,2,12,32,4], index: 0, kind: input, shape index: {}]
  %s1 = inlined_call_operand.vmem [shape: bf16[2,2,12,32,4], index: 1, kind: input, shape index: {}]
  %s2 = inlined_call_operand.vmem [shape: f32[2,320,1], index: 2, kind: input, shape index: {}]
  %s3 = inlined_call_operand.vmem [shape: bf16[9,4,128], index: 3, kind: input, shape index: {}]
  %s4 = inlined_call_operand.vmem [shape: bf16[9,4,128], index: 4, kind: input, shape index: {}]
  %s5 = inlined_call_operand.vmem [shape: bf16[9,128,128], index: 5, kind: input, shape index: {}]
  %s6 = inlined_call_operand.vmem [shape: f32[1,128], index: 6, kind: input, shape index: {}]
  %s7 = inlined_call_operand.vmem [shape: f32[1,128], index: 7, kind: input, shape index: {}]
  %s8 = inlined_call_operand.vmem [shape: f32[2,16,32,128], index: 8, kind: output, shape index: {}]
  %s9 = sld [smem:[#allocation0]]
  $region65: #{up_forward.1} parent=0
    _
  %s11 = ssub.s32 1, %s9
  %s12 = scalar_select 0, %s11, %s9
  loop: start=0, step=1, limit=6
  $region2: #{up_forward.1} parent=0 // loop_pre_header
    _
  $region3: #{up_forward.1} parent=0 // loop_header
    %s14 = sphi 0, %s18
    %p15 = scmp.ge.s32.totalorder %s14, 6
    %s21 = sphi 0, %s33
    %s22 = sphi 0, %s29
    %s23 = sphi 0, %s21
    %s24 = sphi 0, %s22
    %s25 = sphi 0, %s23
    %s26 = sphi 0, %s24
    %s38 = sphi 0, %s40
    %s41 = sphi 0, %s38
    %s42 = sphi 0, %s41
    %s58 = sphi 0, %s42
    %s66 = sphi 0, %s68
    %s69 = sphi 0, %s66
    %s70 = sphi 0, %s69
    %s86 = sphi 0, %s70
    %s92 = sphi 0, %s94
    %s95 = sphi 0, %s92
    %s96 = sphi 0, %s95
    %s112 = sphi 0, %s96
    %s116 = sphi 0, %s116
    %s118 = sphi 0, %s116
    %s119 = sphi 0, %s118
    %s133 = sphi 0, %s119
    %s137 = sphi 0, %s137
    %s139 = sphi 0, %s137
    %s140 = sphi 0, %s139
    %s154 = sphi 0, %s140
    %s158 = sphi 0, %s158
    %s160 = sphi 0, %s158
    %s161 = sphi 0, %s160
    %s175 = sphi 0, %s161
    %s179 = sphi 0, %s179
    %s181 = sphi 0, %s179
    %s182 = sphi 0, %s181
    %s196 = sphi 0, %s182
    %s200 = sphi 0, %s200
    %s202 = sphi 0, %s200
    %s203 = sphi 0, %s202
    %s217 = sphi 0, %s203
    %s225 = sphi 0, %s227
    %s228 = sphi 0, %s225
    %s229 = sphi 0, %s228
    %s245 = sphi 0, %s229
  $region4: #{up_forward.1} parent=0 // loop_header_branch
    %17 = sbr.rel (%p15) target = $region8
  $region5: #{up_forward.1} parent=0 // loop_body
    %s19 = ssub.s32 %s14, 1
    %s20 = ssub.s32 %s14, 2
    %s27 = sadd.s32 1, %s22
    %p28 = scmp.ge.s32.totalorder %s27, 2
    %s29 = scalar_select %p28, 0, %s27
    %s30 = sadd.s32 1, %s21
    %s31 = scalar_select %p28, %s30, %s21
    %p32 = scmp.ge.s32.totalorder %s31, 2
    %s33 = scalar_select %p32, 0, %s31
    %s34 = ssub.s32 %s21, %s33
    %s35 = ssub.s32 %s22, %s29
    %s36 = sor.u32 %s34, %s35
    %p37 = scmp.eq.s32.totalorder %s36, 0
    %s39 = sadd.s32 %s38, 1
    %s40 = scalar_select %p37, %s38, %s39
    %p43 = pneg %p37
    %p44 = scmp.eq.s32.totalorder %s14, 3
    %p45 = por %p43, %p44
    %p46 = scmp.ne.s32.totalorder %s38, %s41
    %p47 = scmp.eq.s32.totalorder %s14, 0
    %p48 = por %p46, %p47
    %p49 = scmp.ne.s32.totalorder %s38, %s41
    %p50 = scmp.eq.s32.totalorder %s19, 3
    %p51 = por %p49, %p50
    %p52 = scmp.ne.s32.totalorder %s41, %s42
    %p53 = scmp.eq.s32.totalorder %s19, 0
    %p54 = por %p52, %p53
    %p55 = scmp.ne.s32.totalorder %s41, %s42
    %p56 = scmp.eq.s32.totalorder %s20, 3
    %p57 = por %p55, %p56
    %p59 = scmp.ne.s32.totalorder %s42, %s58
    %p60 = scmp.eq.s32.totalorder %s20, 0
    %p61 = por %p59, %p60
    %s62 = ssub.s32 %s21, %s33
    %s63 = ssub.s32 %s22, %s29
    %s64 = sor.u32 %s62, %s63
    %p65 = scmp.eq.s32.totalorder %s64, 0
    %s67 = sadd.s32 %s66, 1
    %s68 = scalar_select %p65, %s66, %s67
    %p71 = pneg %p65
    %p72 = scmp.eq.s32.totalorder %s14, 3
    %p73 = por %p71, %p72
    %p74 = scmp.ne.s32.totalorder %s66, %s69
    %p75 = scmp.eq.s32.totalorder %s14, 0
    %p76 = por %p74, %p75
    %p77 = scmp.ne.s32.totalorder %s66, %s69
    %p78 = scmp.eq.s32.totalorder %s19, 3
    %p79 = por %p77, %p78
    %p80 = scmp.ne.s32.totalorder %s69, %s70
    %p81 = scmp.eq.s32.totalorder %s19, 0
    %p82 = por %p80, %p81
    %p83 = scmp.ne.s32.totalorder %s69, %s70
    %p84 = scmp.eq.s32.totalorder %s20, 3
    %p85 = por %p83, %p84
    %p87 = scmp.ne.s32.totalorder %s70, %s86
    %p88 = scmp.eq.s32.totalorder %s20, 0
    %p89 = por %p87, %p88
    %s90 = ssub.s32 %s22, %s29
    %p91 = scmp.eq.s32.totalorder %s90, 0
    %s93 = sadd.s32 %s92, 1
    %s94 = scalar_select %p91, %s92, %s93
    %p97 = pneg %p91
    %p98 = scmp.eq.s32.totalorder %s14, 3
    %p99 = por %p97, %p98
    %p100 = scmp.ne.s32.totalorder %s92, %s95
    %p101 = scmp.eq.s32.totalorder %s14, 0
    %p102 = por %p100, %p101
    %p103 = scmp.ne.s32.totalorder %s92, %s95
    %p104 = scmp.eq.s32.totalorder %s19, 3
    %p105 = por %p103, %p104
    %p106 = scmp.ne.s32.totalorder %s95, %s96
    %p107 = scmp.eq.s32.totalorder %s19, 0
    %p108 = por %p106, %p107
    %p109 = scmp.ne.s32.totalorder %s95, %s96
    %p110 = scmp.eq.s32.totalorder %s20, 3
    %p111 = por %p109, %p110
    %p113 = scmp.ne.s32.totalorder %s96, %s112
    %p114 = scmp.eq.s32.totalorder %s20, 0
    %p115 = por %p113, %p114
    %s117 = sadd.s32 %s116, 1
    %p120 = scmp.eq.s32.totalorder %s14, 3
    %p121 = scmp.ne.s32.totalorder %s116, %s118
    %p122 = scmp.eq.s32.totalorder %s14, 0
    %p123 = por %p121, %p122
    %p124 = scmp.ne.s32.totalorder %s116, %s118
    %p125 = scmp.eq.s32.totalorder %s19, 3
    %p126 = por %p124, %p125
    %p127 = scmp.ne.s32.totalorder %s118, %s119
    %p128 = scmp.eq.s32.totalorder %s19, 0
    %p129 = por %p127, %p128
    %p130 = scmp.ne.s32.totalorder %s118, %s119
    %p131 = scmp.eq.s32.totalorder %s20, 3
    %p132 = por %p130, %p131
    %p134 = scmp.ne.s32.totalorder %s119, %s133
    %p135 = scmp.eq.s32.totalorder %s20, 0
    %p136 = por %p134, %p135
    %s138 = sadd.s32 %s137, 1
    %p141 = scmp.eq.s32.totalorder %s14, 3
    %p142 = scmp.ne.s32.totalorder %s137, %s139
    %p143 = scmp.eq.s32.totalorder %s14, 0
    %p144 = por %p142, %p143
    %p145 = scmp.ne.s32.totalorder %s137, %s139
    %p146 = scmp.eq.s32.totalorder %s19, 3
    %p147 = por %p145, %p146
    %p148 = scmp.ne.s32.totalorder %s139, %s140
    %p149 = scmp.eq.s32.totalorder %s19, 0
    %p150 = por %p148, %p149
    %p151 = scmp.ne.s32.totalorder %s139, %s140
    %p152 = scmp.eq.s32.totalorder %s20, 3
    %p153 = por %p151, %p152
    %p155 = scmp.ne.s32.totalorder %s140, %s154
    %p156 = scmp.eq.s32.totalorder %s20, 0
    %p157 = por %p155, %p156
    %s159 = sadd.s32 %s158, 1
    %p162 = scmp.eq.s32.totalorder %s14, 3
    %p163 = scmp.ne.s32.totalorder %s158, %s160
    %p164 = scmp.eq.s32.totalorder %s14, 0
    %p165 = por %p163, %p164
    %p166 = scmp.ne.s32.totalorder %s158, %s160
    %p167 = scmp.eq.s32.totalorder %s19, 3
    %p168 = por %p166, %p167
    %p169 = scmp.ne.s32.totalorder %s160, %s161
    %p170 = scmp.eq.s32.totalorder %s19, 0
    %p171 = por %p169, %p170
    %p172 = scmp.ne.s32.totalorder %s160, %s161
    %p173 = scmp.eq.s32.totalorder %s20, 3
    %p174 = por %p172, %p173
    %p176 = scmp.ne.s32.totalorder %s161, %s175
    %p177 = scmp.eq.s32.totalorder %s20, 0
    %p178 = por %p176, %p177
    %s180 = sadd.s32 %s179, 1
    %p183 = scmp.eq.s32.totalorder %s14, 3
    %p184 = scmp.ne.s32.totalorder %s179, %s181
    %p185 = scmp.eq.s32.totalorder %s14, 0
    %p186 = por %p184, %p185
    %p187 = scmp.ne.s32.totalorder %s179, %s181
    %p188 = scmp.eq.s32.totalorder %s19, 3
    %p189 = por %p187, %p188
    %p190 = scmp.ne.s32.totalorder %s181, %s182
    %p191 = scmp.eq.s32.totalorder %s19, 0
    %p192 = por %p190, %p191
    %p193 = scmp.ne.s32.totalorder %s181, %s182
    %p194 = scmp.eq.s32.totalorder %s20, 3
    %p195 = por %p193, %p194
    %p197 = scmp.ne.s32.totalorder %s182, %s196
    %p198 = scmp.eq.s32.totalorder %s20, 0
    %p199 = por %p197, %p198
    %s201 = sadd.s32 %s200, 1
    %p204 = scmp.eq.s32.totalorder %s14, 3
    %p205 = scmp.ne.s32.totalorder %s200, %s202
    %p206 = scmp.eq.s32.totalorder %s14, 0
    %p207 = por %p205, %p206
    %p208 = scmp.ne.s32.totalorder %s200, %s202
    %p209 = scmp.eq.s32.totalorder %s19, 3
    %p210 = por %p208, %p209
    %p211 = scmp.ne.s32.totalorder %s202, %s203
    %p212 = scmp.eq.s32.totalorder %s19, 0
    %p213 = por %p211, %p212
    %p214 = scmp.ne.s32.totalorder %s202, %s203
    %p215 = scmp.eq.s32.totalorder %s20, 3
    %p216 = por %p214, %p215
    %p218 = scmp.ne.s32.totalorder %s203, %s217
    %p219 = scmp.eq.s32.totalorder %s20, 0
    %p220 = por %p218, %p219
    %s221 = ssub.s32 %s21, %s33
    %s222 = ssub.s32 %s22, %s29
    %s223 = sor.u32 %s221, %s222
    %p224 = scmp.eq.s32.totalorder %s223, 0
    %s226 = sadd.s32 %s225, 1
    %s227 = scalar_select %p224, %s225, %s226
    %p230 = pneg %p224
    %p231 = scmp.eq.s32.totalorder %s14, 3
    %p232 = por %p230, %p231
    %p233 = scmp.ne.s32.totalorder %s225, %s228
    %p234 = scmp.eq.s32.totalorder %s14, 0
    %p235 = por %p233, %p234
    %p236 = scmp.ne.s32.totalorder %s225, %s228
    %p237 = scmp.eq.s32.totalorder %s19, 3
    %p238 = por %p236, %p237
    %p239 = scmp.ne.s32.totalorder %s228, %s229
    %p240 = scmp.eq.s32.totalorder %s19, 0
    %p241 = por %p239, %p240
    %p242 = scmp.ne.s32.totalorder %s228, %s229
    %p243 = scmp.eq.s32.totalorder %s20, 3
    %p244 = por %p242, %p243
    %p246 = scmp.ne.s32.totalorder %s229, %s245
    %p247 = scmp.eq.s32.totalorder %s20, 0
    %p248 = por %p246, %p247
    %p249 = scmp.le.s32.totalorder 1, %s14
    %p250 = scmp.lt.s32.totalorder %s14, 5
    %p251 = pnand %p249, %p250
    %p252 = pneg %p251
    // Predicated region
    $region9: #{up_forward.1} parent=5 // pred_check
      _
    $region10: #{up_forward.1} parent=5 // pred_check_branch
      %254 = sbr.rel (%p251) target = $region12
    $region11: #{up_forward.1} parent=5 // pred_region
      %s255 = ssub.s32 %s14, 1
      // Predicated region
      $region13: #{up_forward.1} parent=11 // pred_check
        %p256 = pneg %p129
      $region14: #{up_forward.1} parent=11 // pred_check_branch
        %258 = sbr.rel (%p256) target = $region16
      $region15: #{up_forward.1} parent=11 // pred_region
        _
      $region16: #{up_forward.1} parent=11 // pred_fallthru
        _
      // Predicated region
      $region17: #{up_forward.1} parent=11 // pred_check
        %p259 = pneg %p150
      $region18: #{up_forward.1} parent=11 // pred_check_branch
        %261 = sbr.rel (%p259) target = $region20
      $region19: #{up_forward.1} parent=11 // pred_region
        _
      $region20: #{up_forward.1} parent=11 // pred_fallthru
        _
      // Predicated region
      $region21: #{up_forward.1} parent=11 // pred_check
        %p262 = pneg %p171
      $region22: #{up_forward.1} parent=11 // pred_check_branch
        %264 = sbr.rel (%p262) target = $region24
      $region23: #{up_forward.1} parent=11 // pred_region
        _
      $region24: #{up_forward.1} parent=11 // pred_fallthru
        _
      // Predicated region
      $region25: #{up_forward.1} parent=11 // pred_check
        %p265 = pneg %p192
      $region26: #{up_forward.1} parent=11 // pred_check_branch
        %267 = sbr.rel (%p265) target = $region28
      $region27: #{up_forward.1} parent=11 // pred_region
        _
      $region28: #{up_forward.1} parent=11 // pred_fallthru
        _
      // Predicated region
      $region29: #{up_forward.1} parent=11 // pred_check
        %p268 = pneg %p213
      $region30: #{up_forward.1} parent=11 // pred_check_branch
        %270 = sbr.rel (%p268) target = $region32
      $region31: #{up_forward.1} parent=11 // pred_region
        _
      $region32: #{up_forward.1} parent=11 // pred_fallthru
        _
    $region12: #{up_forward.1} parent=5 // pred_fallthru
      _
    %p271 = scmp.lt.s32.totalorder %s14, 4
    // Predicated region
    $region33: #{up_forward.1} parent=5 // pred_check
      %p272 = pneg %p271
    $region34: #{up_forward.1} parent=5 // pred_check_branch
      %274 = sbr.rel (%p272) target = $region36
    $region35: #{up_forward.1} parent=5 // pred_region
      // Predicated region
      $region37: #{up_forward.1} parent=35 // pred_check
        %p275 = pneg %p48
      $region38: #{up_forward.1} parent=35 // pred_check_branch
        %277 = sbr.rel (%p275) target = $region40
      $region39: #{up_forward.1} parent=35 // pred_region
        %p278 = scmp.lt.s32.totalorder %s21, 1
        %s279 = scalar_select %p278, %s21, 1
        %p280 = scmp.lt.s32.totalorder %s22, 1
        %s281 = scalar_select %p280, %s22, 1
        %s282 = smul.addr %s281, 48
        %s283 = smul.addr %s279, 96
        %s284 = sadd.s32 %s282, %s283
        %s285 = smul.addr %s284, 4
        %s286 = scalar_lea.vmem %s0, %s285
      $region40: #{up_forward.1} parent=35 // pred_fallthru
        _
      // Predicated region
      $region41: #{up_forward.1} parent=35 // pred_check
        %p287 = pneg %p76
      $region42: #{up_forward.1} parent=35 // pred_check_branch
        %289 = sbr.rel (%p287) target = $region44
      $region43: #{up_forward.1} parent=35 // pred_region
        %p290 = scmp.lt.s32.totalorder %s21, 1
        %s291 = scalar_select %p290, %s21, 1
        %p292 = scmp.lt.s32.totalorder %s22, 1
        %s293 = scalar_select %p292, %s22, 1
        %s294 = smul.addr %s293, 48
        %s295 = smul.addr %s291, 96
        %s296 = sadd.s32 %s294, %s295
        %s297 = smul.addr %s296, 4
        %s298 = scalar_lea.vmem %s1, %s297
      $region44: #{up_forward.1} parent=35 // pred_fallthru
        _
      // Predicated region
      $region45: #{up_forward.1} parent=35 // pred_check
        %p299 = pneg %p102
      $region46: #{up_forward.1} parent=35 // pred_check_branch
        %301 = sbr.rel (%p299) target = $region48
      $region47: #{up_forward.1} parent=35 // pred_region
        %p302 = scmp.lt.s32.totalorder %s22, 1
        %s303 = scalar_select %p302, %s22, 1
        %s304 = smul.addr %s303, 40
        %s305 = smul.addr %s304, 8
        %s306 = scalar_lea.vmem %s2, %s305
      $region48: #{up_forward.1} parent=35 // pred_fallthru
        _
    $region36: #{up_forward.1} parent=5 // pred_fallthru
      _
    %p307 = scmp.le.s32.totalorder 1, %s14
    %p308 = scmp.lt.s32.totalorder %s14, 5
    %p309 = pnand %p307, %p308
    %p310 = pneg %p309
    // Predicated region
    $region49: #{up_forward.1} parent=5 // pred_check
      _
    $region50: #{up_forward.1} parent=5 // pred_check_branch
      %312 = sbr.rel (%p309) target = $region52
    $region51: #{up_forward.1} parent=5 // pred_region
      %s313 = ssub.s32 %s14, 1
      %p314 = scmp.lt.s32.totalorder %s23, 1
      %s315 = scalar_select %p314, %s23, 1
      %p316 = scmp.lt.s32.totalorder %s24, 1
      %s317 = scalar_select %p316, %s24, 1
      %s318 = smul.addr %s317, 48
      %s319 = smul.addr %s315, 96
      %s320 = sadd.s32 %s318, %s319
      %s321 = smul.addr %s320, 4
      %s322 = scalar_lea.vmem %s0, %s321
      %p323 = pneg %p54
      %p324 = pneg %p51
      %p325 = scmp.lt.s32.totalorder %s23, 1
      %s326 = scalar_select %p325, %s23, 1
      %p327 = scmp.lt.s32.totalorder %s24, 1
      %s328 = scalar_select %p327, %s24, 1
      %s329 = smul.addr %s328, 48
      %s330 = smul.addr %s326, 96
      %s331 = sadd.s32 %s329, %s330
      %s332 = smul.addr %s331, 4
      %s333 = scalar_lea.vmem %s1, %s332
      %p334 = pneg %p82
      %p335 = pneg %p79
      %p336 = scmp.lt.s32.totalorder %s24, 1
      %s337 = scalar_select %p336, %s24, 1
      %s338 = smul.addr %s337, 40
      %s339 = smul.addr %s338, 8
      %s340 = scalar_lea.vmem %s2, %s339
      %p341 = pneg %p108
      %p342 = pneg %p105
      %p343 = pneg %p129
      %p344 = pneg %p126
      %p345 = pneg %p150
      %p346 = pneg %p147
      %p347 = pneg %p171
      %p348 = pneg %p168
      %p349 = pneg %p192
      %p350 = pneg %p189
      %p351 = pneg %p213
      %p352 = pneg %p210
      %p353 = pneg %p241
      %p354 = pneg %p238
      %s355 = smul.u32 8, %s24
      %p356 = scmp.lt.s32.totalorder %s23, 1
      %s357 = scalar_select %p356, %s23, 1
      %p358 = scmp.lt.s32.totalorder %s355, 15
      %s359 = scalar_select %p358, %s355, 15
      %s360 = smul.addr %s359, 4
      %s361 = smul.addr %s357, 64
      %s362 = sadd.s32 %s360, %s361
      %s363 = smul.addr %s362, 8
      %s364 = scalar_lea.vmem %s8, %s363
      %p365 = scmp.lt.s32.totalorder %s23, 1
      %s366 = scalar_select %p365, %s23, 1
      %p367 = scmp.lt.s32.totalorder %s24, 1
      %s368 = scalar_select %p367, %s24, 1
      %s369 = smul.addr %s368, 48
      %s370 = smul.addr %s366, 96
      %s371 = sadd.s32 %s369, %s370
      %s372 = smul.addr %s371, 4
      %s373 = scalar_lea.vmem %s0, %s372
      %p374 = scmp.lt.s32.totalorder %s23, 1
      %s375 = scalar_select %p374, %s23, 1
      %p376 = scmp.lt.s32.totalorder %s24, 1
      %s377 = scalar_select %p376, %s24, 1
      %s378 = smul.addr %s377, 48
      %s379 = smul.addr %s375, 96
      %s380 = sadd.s32 %s378, %s379
      %s381 = smul.addr %s380, 4
      %s382 = scalar_lea.vmem %s1, %s381
      %p383 = scmp.lt.s32.totalorder %s24, 1
      %s384 = scalar_select %p383, %s24, 1
      %s385 = smul.addr %s384, 40
      %s386 = smul.addr %s385, 8
      %s387 = scalar_lea.vmem %s2, %s386
      %s388 = smul.u32 8, %s24
      %p389 = scmp.lt.s32.totalorder %s23, 1
      %s390 = scalar_select %p389, %s23, 1
      %p391 = scmp.lt.s32.totalorder %s388, 15
      %s392 = scalar_select %p391, %s388, 15
      %s393 = smul.addr %s392, 4
      %s394 = smul.addr %s390, 64
      %s395 = sadd.s32 %s393, %s394
      %s396 = smul.addr %s395, 8
      %s397 = scalar_lea.vmem %s8, %s396
      %s398 = smul.u32 8, %s24
      %v400 = vld [vmem:[%s373] sm:$0xf]
      %v401 = vld [vmem:[%s373 + $0x4] sm:$0xf]
      %v402 = vld [vmem:[%s373 + $0x8] sm:$0xf]
      %v403 = vld [vmem:[%s373 + $0xc] sm:$0xf]
      %v404 = vld [vmem:[%s373 + $0x10] sm:$0xf]
      %v405 = vld [vmem:[%s373 + $0x14] sm:$0xf]
      %v406 = vld [vmem:[%s373 + $0x18] sm:$0xf]
      %v407 = vld [vmem:[%s373 + $0x1c] sm:$0xf]
      %v408 = vld [vmem:[%s373 + $0x20] sm:$0xf]
      %v409 = vld [vmem:[%s373 + $0x24] sm:$0xf]
      %v410 = vld [vmem:[%s373 + $0x28] sm:$0xf]
      %v411 = vld [vmem:[%s373 + $0x2c] sm:$0xf]
      %v412 = vld [vmem:[%s373 + $0x30] sm:$0xf]
      %v413 = vld [vmem:[%s373 + $0x34] sm:$0xf]
      %v414 = vld [vmem:[%s373 + $0x38] sm:$0xf]
      %v415 = vld [vmem:[%s373 + $0x3c] sm:$0xf]
      %v416 = vld [vmem:[%s373 + $0x40] sm:$0xf]
      %v417 = vld [vmem:[%s373 + $0x44] sm:$0xf]
      %v418 = vld [vmem:[%s373 + $0x48] sm:$0xf]
      %v419 = vld [vmem:[%s373 + $0x4c] sm:$0xf]
      %v420 = vld [vmem:[%s373 + $0x50] sm:$0xf]
      %v421 = vld [vmem:[%s373 + $0x54] sm:$0xf]
      %v422 = vld [vmem:[%s373 + $0x58] sm:$0xf]
      %v423 = vld [vmem:[%s373 + $0x5c] sm:$0xf]
      %v424 = vld [vmem:[%s373 + $0x60] sm:$0xf]
      %v425 = vld [vmem:[%s373 + $0x64] sm:$0xf]
      %v426 = vld [vmem:[%s373 + $0x68] sm:$0xf]
      %v427 = vld [vmem:[%s373 + $0x6c] sm:$0xf]
      %v428 = vld [vmem:[%s373 + $0x70] sm:$0xf]
      %v429 = vld [vmem:[%s373 + $0x74] sm:$0xf]
      %v430 = vld [vmem:[%s373 + $0x78] sm:$0xf]
      %v431 = vld [vmem:[%s373 + $0x7c] sm:$0xf]
      %v432 = vld [vmem:[%s373 + $0x80] sm:$0xf]
      %v433 = vld [vmem:[%s373 + $0x84] sm:$0xf]
      %v434 = vld [vmem:[%s373 + $0x88] sm:$0xf]
      %v435 = vld [vmem:[%s373 + $0x8c] sm:$0xf]
      %v436 = vld [vmem:[%s373 + $0x90] sm:$0xf]
      %v437 = vld [vmem:[%s373 + $0x94] sm:$0xf]
      %v438 = vld [vmem:[%s373 + $0x98] sm:$0xf]
      %v439 = vld [vmem:[%s373 + $0x9c] sm:$0xf]
      %v440 = vld [vmem:[%s373 + $0xa0] sm:$0xf]
      %v441 = vld [vmem:[%s373 + $0xa4] sm:$0xf]
      %v442 = vld [vmem:[%s373 + $0xa8] sm:$0xf]
      %v443 = vld [vmem:[%s373 + $0xac] sm:$0xf]
      %v444 = vld [vmem:[%s373 + $0xb0] sm:$0xf]
      %v445 = vld [vmem:[%s373 + $0xb4] sm:$0xf]
      %v446 = vld [vmem:[%s373 + $0xb8] sm:$0xf]
      %v447 = vld [vmem:[%s373 + $0xbc] sm:$0xf]
      %v448 = vld [vmem:[%s382] sm:$0xf]
      %v449 = vld [vmem:[%s382 + $0x4] sm:$0xf]
      %v450 = vld [vmem:[%s382 + $0x8] sm:$0xf]
      %v451 = vld [vmem:[%s382 + $0xc] sm:$0xf]
      %v452 = vld [vmem:[%s382 + $0x10] sm:$0xf]
      %v453 = vld [vmem:[%s382 + $0x14] sm:$0xf]
      %v454 = vld [vmem:[%s382 + $0x18] sm:$0xf]
      %v455 = vld [vmem:[%s382 + $0x1c] sm:$0xf]
      %v456 = vld [vmem:[%s382 + $0x20] sm:$0xf]
      %v457 = vld [vmem:[%s382 + $0x24] sm:$0xf]
      %v458 = vld [vmem:[%s382 + $0x28] sm:$0xf]
      %v459 = vld [vmem:[%s382 + $0x2c] sm:$0xf]
      %v460 = vld [vmem:[%s382 + $0x30] sm:$0xf]
      %v461 = vld [vmem:[%s382 + $0x34] sm:$0xf]
      %v462 = vld [vmem:[%s382 + $0x38] sm:$0xf]
      %v463 = vld [vmem:[%s382 + $0x3c] sm:$0xf]
      %v464 = vld [vmem:[%s382 + $0x40] sm:$0xf]
      %v465 = vld [vmem:[%s382 + $0x44] sm:$0xf]
      %v466 = vld [vmem:[%s382 + $0x48] sm:$0xf]
      %v467 = vld [vmem:[%s382 + $0x4c] sm:$0xf]
      %v468 = vld [vmem:[%s382 + $0x50] sm:$0xf]
      %v469 = vld [vmem:[%s382 + $0x54] sm:$0xf]
      %v470 = vld [vmem:[%s382 + $0x58] sm:$0xf]
      %v471 = vld [vmem:[%s382 + $0x5c] sm:$0xf]
      %v472 = vld [vmem:[%s382 + $0x60] sm:$0xf]
      %v473 = vld [vmem:[%s382 + $0x64] sm:$0xf]
      %v474 = vld [vmem:[%s382 + $0x68] sm:$0xf]
      %v475 = vld [vmem:[%s382 + $0x6c] sm:$0xf]
      %v476 = vld [vmem:[%s382 + $0x70] sm:$0xf]
      %v477 = vld [vmem:[%s382 + $0x74] sm:$0xf]
      %v478 = vld [vmem:[%s382 + $0x78] sm:$0xf]
      %v479 = vld [vmem:[%s382 + $0x7c] sm:$0xf]
      %v480 = vld [vmem:[%s382 + $0x80] sm:$0xf]
      %v481 = vld [vmem:[%s382 + $0x84] sm:$0xf]
      %v482 = vld [vmem:[%s382 + $0x88] sm:$0xf]
      %v483 = vld [vmem:[%s382 + $0x8c] sm:$0xf]
      %v484 = vld [vmem:[%s382 + $0x90] sm:$0xf]
      %v485 = vld [vmem:[%s382 + $0x94] sm:$0xf]
      %v486 = vld [vmem:[%s382 + $0x98] sm:$0xf]
      %v487 = vld [vmem:[%s382 + $0x9c] sm:$0xf]
      %v488 = vld [vmem:[%s382 + $0xa0] sm:$0xf]
      %v489 = vld [vmem:[%s382 + $0xa4] sm:$0xf]
      %v490 = vld [vmem:[%s382 + $0xa8] sm:$0xf]
      %v491 = vld [vmem:[%s382 + $0xac] sm:$0xf]
      %v492 = vld [vmem:[%s382 + $0xb0] sm:$0xf]
      %v493 = vld [vmem:[%s382 + $0xb4] sm:$0xf]
      %v494 = vld [vmem:[%s382 + $0xb8] sm:$0xf]
      %v495 = vld [vmem:[%s382 + $0xbc] sm:$0xf]
      %v496 = vld [vmem:[%s3] sm:$0x3]
      %v497 = vld [vmem:[%s4] sm:$0x3]
      %v538 = vunpack.c.l.b16 %v448
      %v539 = vunpack.c.l.b16 %v449
      %v540 = vunpack.c.l.b16 %v450
      %v541 = vunpack.c.l.b16 %v451
      %v542 = vunpack.c.l.b16 %v452
      %v543 = vunpack.c.l.b16 %v453
      %v544 = vunpack.c.l.b16 %v454
      %v545 = vunpack.c.l.b16 %v455
      %v546 = vunpack.c.l.b16 %v456
      %v547 = vunpack.c.l.b16 %v457
      %v548 = vunpack.c.l.b16 %v458
      %v549 = vunpack.c.l.b16 %v459
      %v550 = vunpack.c.l.b16 %v460
      %v551 = vunpack.c.l.b16 %v461
      %v552 = vunpack.c.l.b16 %v462
      %v553 = vunpack.c.l.b16 %v463
      %v554 = vunpack.c.l.b16 %v464
      %v555 = vunpack.c.l.b16 %v465
      %v556 = vunpack.c.l.b16 %v466
      %v557 = vunpack.c.l.b16 %v467
      %v558 = vunpack.c.l.b16 %v468
      %v559 = vunpack.c.l.b16 %v469
      %v560 = vunpack.c.l.b16 %v470
      %v561 = vunpack.c.l.b16 %v471
      %v562 = vunpack.c.l.b16 %v472
      %v563 = vunpack.c.l.b16 %v473
      %v564 = vunpack.c.l.b16 %v474
      %v565 = vunpack.c.l.b16 %v475
      %v566 = vunpack.c.l.b16 %v476
      %v567 = vunpack.c.l.b16 %v477
      %v568 = vunpack.c.l.b16 %v478
      %v569 = vunpack.c.l.b16 %v479
      %v570 = vunpack.c.l.b16 %v480
      %v571 = vunpack.c.l.b16 %v481
      %v572 = vunpack.c.l.b16 %v482
      %v573 = vunpack.c.l.b16 %v483
      %v574 = vunpack.c.l.b16 %v484
      %v575 = vunpack.c.l.b16 %v485
      %v576 = vunpack.c.l.b16 %v486
      %v577 = vunpack.c.l.b16 %v487
      %v578 = vpack.c.b16 %v539, %v538
      %v579 = vpack.c.b16 %v541, %v540
      %v580 = vpack.c.b16 %v543, %v542
      %v581 = vpack.c.b16 %v545, %v544
      %v582 = vpack.c.b16 %v547, %v546
      %v583 = vpack.c.b16 %v549, %v548
      %v584 = vpack.c.b16 %v551, %v550
      %v585 = vpack.c.b16 %v553, %v552
      %v586 = vpack.c.b16 %v555, %v554
      %v587 = vpack.c.b16 %v557, %v556
      %v588 = vpack.c.b16 %v559, %v558
      %v589 = vpack.c.b16 %v561, %v560
      %v590 = vpack.c.b16 %v563, %v562
      %v591 = vpack.c.b16 %v565, %v564
      %v592 = vpack.c.b16 %v567, %v566
      %v593 = vpack.c.b16 %v569, %v568
      %v594 = vpack.c.b16 %v571, %v570
      %v595 = vpack.c.b16 %v573, %v572
      %v596 = vpack.c.b16 %v575, %v574
      %v597 = vpack.c.b16 %v577, %v576
      %vm598 = vcmask 31744
      %v600 = vsel %vm598, %v578, 0
      %v603 = vsel %vm598, %v579, 0
      %v606 = vsel %vm598, %v580, 0
      %v609 = vsel %vm598, %v581, 0
      %v612 = vsel %vm598, %v582, 0
      %v615 = vsel %vm598, %v583, 0
      %v618 = vsel %vm598, %v584, 0
      %v621 = vsel %vm598, %v585, 0
      %v624 = vsel %vm598, %v586, 0
      %v627 = vsel %vm598, %v587, 0
      %v630 = vsel %vm598, %v588, 0
      %v633 = vsel %vm598, %v589, 0
      %v636 = vsel %vm598, %v590, 0
      %v639 = vsel %vm598, %v591, 0
      %v642 = vsel %vm598, %v592, 0
      %v645 = vsel %vm598, %v593, 0
      %v648 = vsel %vm598, %v594, 0
      %v651 = vsel %vm598, %v595, 0
      %v654 = vsel %vm598, %v596, 0
      %v657 = vsel %vm598, %v597, 0
      %vm659 = vcmask 1041408
      %v661 = vsel %vm659, %v497, 0
      %663 = vmatprep.subr.bf16.mxu0 0
      %664 = vmatpush1.bf16.msra.mxu0 %v661
      %665 = vmatprep.subr.bf16.mxu0 0
      %666 = vmatpush1.bf16.msra.mxu0 0
      %667 = vmatprep.subr.bf16.mxu0 0
      %668 = vmatpush1.bf16.msra.mxu0 0
      %669 = vmatprep.subr.bf16.mxu0 0
      %670 = vmatpush1.bf16.msra.mxu0 0
      %671 = vmatprep.subr.bf16.mxu0 0
      %672 = vmatpush1.bf16.msra.mxu0 0
      %673 = vmatprep.subr.bf16.mxu0 0
      %674 = vmatpush1.bf16.msra.mxu0 0
      %675 = vmatprep.subr.bf16.mxu0 0
      %676 = vmatpush1.bf16.msra.mxu0 0
      %677 = vmatprep.subr.bf16.mxu0 0
      %678 = vmatpush1.bf16.msra.mxu0 0
      %679 = vmatprep.subr.bf16.mxu0 0
      %680 = vmatpush1.bf16.msra.mxu0 0
      %681 = vmatprep.subr.bf16.mxu0 0
      %682 = vmatpush1.bf16.msra.mxu0 0
      %683 = vmatprep.subr.bf16.mxu0 0
      %684 = vmatpush1.bf16.msra.mxu0 0
      %685 = vmatprep.subr.bf16.mxu0 0
      %686 = vmatpush1.bf16.msra.mxu0 0
      %687 = vmatprep.subr.bf16.mxu0 0
      %688 = vmatpush1.bf16.msra.mxu0 0
      %689 = vmatprep.subr.bf16.mxu0 0
      %690 = vmatpush1.bf16.msra.mxu0 0
      %691 = vmatprep.subr.bf16.mxu0 0
      %692 = vmatpush1.bf16.msra.mxu0 0
      %693 = vmatprep.subr.bf16.mxu0 0
      %694 = vmatpush1.bf16.msra.mxu0 0
      %695 = vmatprep.mubr.bf16.mxu0 0
      %696 = vmatmul.mubr.bf16.gmra.mrb[0].mxu0 %v600
      %v697 = vpop.f32.mrb[0].mxu0
      %v698 = vadd.f32 0.0, %v697
      %v699 = vpop.f32.mrb[0].mxu0
      %v700 = vpop.f32.mrb[0].mxu0
      %v701 = vadd.f32 0.0, %v700
      %v702 = vpop.f32.mrb[0].mxu0
      %703 = vmatprep.mubr.bf16.mxu0 0
      %704 = vmatmul.mubr.bf16.gmra.mrb[0].mxu0 %v603
      %v705 = vpop.f32.mrb[0].mxu0
      %v706 = vadd.f32 0.0, %v705
      %v707 = vpop.f32.mrb[0].mxu0
      %v708 = vpop.f32.mrb[0].mxu0
      %v709 = vadd.f32 0.0, %v708
      %v710 = vpop.f32.mrb[0].mxu0
      %711 = vmatprep.mubr.bf16.mxu0 0
      %712 = vmatmul.mubr.bf16.gmra.mrb[0].mxu0 %v606
      %v713 = vpop.f32.mrb[0].mxu0
      %v714 = vadd.f32 0.0, %v713
      %v715 = vpop.f32.mrb[0].mxu0
      %v716 = vpop.f32.mrb[0].mxu0
      %v717 = vadd.f32 0.0, %v716
      %v718 = vpop.f32.mrb[0].mxu0
      %719 = vmatprep.mubr.bf16.mxu0 0
      %720 = vmatmul.mubr.bf16.gmra.mrb[0].mxu0 %v609
      %v721 = vpop.f32.mrb[0].mxu0
      %v722 = vadd.f32 0.0, %v721
      %v723 = vpop.f32.mrb[0].mxu0
      %v724 = vpop.f32.mrb[0].mxu0
      %v725 = vadd.f32 0.0, %v724
      %v726 = vpop.f32.mrb[0].mxu0
      %727 = vmatprep.mubr.bf16.mxu0 0
      %728 = vmatmul.mubr.bf16.gmra.mrb[0].mxu0 %v612
      %v729 = vpop.f32.mrb[0].mxu0
      %v730 = vadd.f32 0.0, %v729
      %v731 = vpop.f32.mrb[0].mxu0
      %v732 = vpop.f32.mrb[0].mxu0
      %v733 = vadd.f32 0.0, %v732
      %v734 = vpop.f32.mrb[0].mxu0
      %735 = vmatprep.mubr.bf16.mxu0 0
      %736 = vmatmul.mubr.bf16.gmra.mrb[0].mxu0 %v615
      %v737 = vpop.f32.mrb[0].mxu0
      %v738 = vadd.f32 0.0, %v737
      %v739 = vpop.f32.mrb[0].mxu0
      %v740 = vpop.f32.mrb[0].mxu0
      %v741 = vadd.f32 0.0, %v740
      %v742 = vpop.f32.mrb[0].mxu0
      %743 = vmatprep.mubr.bf16.mxu0 0
      %744 = vmatmul.mubr.bf16.gmra.mrb[0].mxu0 %v618
      %v745 = vpop.f32.mrb[0].mxu0
      %v746 = vadd.f32 0.0, %v745
      %v747 = vpop.f32.mrb[0].mxu0
      %v748 = vpop.f32.mrb[0].mxu0
      %v749 = vadd.f32 0.0, %v748
      %v750 = vpop.f32.mrb[0].mxu0
      %751 = vmatprep.mubr.bf16.mxu0 0
      %752 = vmatmul.mubr.bf16.gmra.mrb[0].mxu0 %v621
      %v753 = vpop.f32.mrb[0].mxu0
      %v754 = vadd.f32 0.0, %v753
      %v755 = vpop.f32.mrb[0].mxu0
      %v756 = vpop.f32.mrb[0].mxu0
      %v757 = vadd.f32 0.0, %v756
      %v758 = vpop.f32.mrb[0].mxu0
      %759 = vmatprep.mubr.bf16.mxu0 0
      %760 = vmatmul.mubr.bf16.gmra.mrb[0].mxu0 %v624
      %v761 = vpop.f32.mrb[0].mxu0
      %v762 = vadd.f32 0.0, %v761
      %v763 = vpop.f32.mrb[0].mxu0
      %v764 = vpop.f32.mrb[0].mxu0
      %v765 = vadd.f32 0.0, %v764
      %v766 = vpop.f32.mrb[0].mxu0
      %767 = vmatprep.mubr.bf16.mxu0 0
      %768 = vmatmul.mubr.bf16.gmra.mrb[0].mxu0 %v627
      %v769 = vpop.f32.mrb[0].mxu0
      %v770 = vadd.f32 0.0, %v769
      %v771 = vpop.f32.mrb[0].mxu0
      %v772 = vpop.f32.mrb[0].mxu0
      %v773 = vadd.f32 0.0, %v772
      %v774 = vpop.f32.mrb[0].mxu0
      %775 = vmatprep.mubr.bf16.mxu0 0
      %776 = vmatmul.mubr.bf16.gmra.mrb[0].mxu0 %v630
      %v777 = vpop.f32.mrb[0].mxu0
      %v778 = vadd.f32 0.0, %v777
      %v779 = vpop.f32.mrb[0].mxu0
      %v780 = vpop.f32.mrb[0].mxu0
      %v781 = vadd.f32 0.0, %v780
      %v782 = vpop.f32.mrb[0].mxu0
      %783 = vmatprep.mubr.bf16.mxu0 0
      %784 = vmatmul.mubr.bf16.gmra.mrb[0].mxu0 %v633
      %v785 = vpop.f32.mrb[0].mxu0
      %v786 = vadd.f32 0.0, %v785
      %v787 = vpop.f32.mrb[0].mxu0
      %v788 = vpop.f32.mrb[0].mxu0
      %v789 = vadd.f32 0.0, %v788
      %v790 = vpop.f32.mrb[0].mxu0
      %791 = vmatprep.mubr.bf16.mxu0 0
      %792 = vmatmul.mubr.bf16.gmra.mrb[0].mxu0 %v636
      %v793 = vpop.f32.mrb[0].mxu0
      %v794 = vadd.f32 0.0, %v793
      %v795 = vpop.f32.mrb[0].mxu0
      %v796 = vpop.f32.mrb[0].mxu0
      %v797 = vadd.f32 0.0, %v796
      %v798 = vpop.f32.mrb[0].mxu0
      %799 = vmatprep.mubr.bf16.mxu0 0
      %800 = vmatmul.mubr.bf16.gmra.mrb[0].mxu0 %v639
      %v801 = vpop.f32.mrb[0].mxu0
      %v802 = vadd.f32 0.0, %v801
      %v803 = vpop.f32.mrb[0].mxu0
      %v804 = vpop.f32.mrb[0].mxu0
      %v805 = vadd.f32 0.0, %v804
      %v806 = vpop.f32.mrb[0].mxu0
      %807 = vmatprep.mubr.bf16.mxu0 0
      %808 = vmatmul.mubr.bf16.gmra.mrb[0].mxu0 %v642
      %v809 = vpop.f32.mrb[0].mxu0
      %v810 = vadd.f32 0.0, %v809
      %v811 = vpop.f32.mrb[0].mxu0
      %v812 = vpop.f32.mrb[0].mxu0
      %v813 = vadd.f32 0.0, %v812
      %v814 = vpop.f32.mrb[0].mxu0
      %815 = vmatprep.mubr.bf16.mxu0 0
      %816 = vmatmul.mubr.bf16.gmra.mrb[0].mxu0 %v645
      %v817 = vpop.f32.mrb[0].mxu0
      %v818 = vadd.f32 0.0, %v817
      %v819 = vpop.f32.mrb[0].mxu0
      %v820 = vpop.f32.mrb[0].mxu0
      %v821 = vadd.f32 0.0, %v820
      %v822 = vpop.f32.mrb[0].mxu0
      %823 = vmatprep.mubr.bf16.mxu0 0
      %824 = vmatmul.mubr.bf16.gmra.mrb[0].mxu0 %v648
      %v825 = vpop.f32.mrb[0].mxu0
      %v826 = vadd.f32 0.0, %v825
      %v827 = vpop.f32.mrb[0].mxu0
      %v828 = vpop.f32.mrb[0].mxu0
      %v829 = vadd.f32 0.0, %v828
      %v830 = vpop.f32.mrb[0].mxu0
      %831 = vmatprep.mubr.bf16.mxu0 0
      %832 = vmatmul.mubr.bf16.gmra.mrb[0].mxu0 %v651
      %v833 = vpop.f32.mrb[0].mxu0
      %v834 = vadd.f32 0.0, %v833
      %v835 = vpop.f32.mrb[0].mxu0
      %v836 = vpop.f32.mrb[0].mxu0
      %v837 = vadd.f32 0.0, %v836
      %v838 = vpop.f32.mrb[0].mxu0
      %839 = vmatprep.mubr.bf16.mxu0 0
      %840 = vmatmul.mubr.bf16.gmra.mrb[0].mxu0 %v654
      %v841 = vpop.f32.mrb[0].mxu0
      %v842 = vadd.f32 0.0, %v841
      %v843 = vpop.f32.mrb[0].mxu0
      %v844 = vpop.f32.mrb[0].mxu0
      %v845 = vadd.f32 0.0, %v844
      %v846 = vpop.f32.mrb[0].mxu0
      %847 = vmatprep.mubr.bf16.mxu0 0
      %848 = vmatmul.mubr.bf16.gmra.mrb[0].mxu0 %v657
      %v849 = vpop.f32.mrb[0].mxu0
      %v850 = vadd.f32 0.0, %v849
      %v851 = vpop.f32.mrb[0].mxu0
      %v852 = vpop.f32.mrb[0].mxu0
      %v853 = vadd.f32 0.0, %v852
      %v854 = vpop.f32.mrb[0].mxu0
      %855 = vdwg.mxu0
      %v896 = vunpack.c.l.b16 %v400
      %v897 = vunpack.c.l.b16 %v401
      %v898 = vunpack.c.l.b16 %v402
      %v899 = vunpack.c.l.b16 %v403
      %v900 = vunpack.c.l.b16 %v404
      %v901 = vunpack.c.l.b16 %v405
      %v902 = vunpack.c.l.b16 %v406
      %v903 = vunpack.c.l.b16 %v407
      %v904 = vunpack.c.l.b16 %v408
      %v905 = vunpack.c.l.b16 %v409
      %v906 = vunpack.c.l.b16 %v410
      %v907 = vunpack.c.l.b16 %v411
      %v908 = vunpack.c.l.b16 %v412
      %v909 = vunpack.c.l.b16 %v413
      %v910 = vunpack.c.l.b16 %v414
      %v911 = vunpack.c.l.b16 %v415
      %v912 = vunpack.c.l.b16 %v416
      %v913 = vunpack.c.l.b16 %v417
      %v914 = vunpack.c.l.b16 %v418
      %v915 = vunpack.c.l.b16 %v419
      %v916 = vunpack.c.l.b16 %v420
      %v917 = vunpack.c.l.b16 %v421
      %v918 = vunpack.c.l.b16 %v422
      %v919 = vunpack.c.l.b16 %v423
      %v920 = vunpack.c.l.b16 %v424
      %v921 = vunpack.c.l.b16 %v425
      %v922 = vunpack.c.l.b16 %v426
      %v923 = vunpack.c.l.b16 %v427
      %v924 = vunpack.c.l.b16 %v428
      %v925 = vunpack.c.l.b16 %v429
      %v926 = vunpack.c.l.b16 %v430
      %v927 = vunpack.c.l.b16 %v431
      %v928 = vunpack.c.l.b16 %v432
      %v929 = vunpack.c.l.b16 %v433
      %v930 = vunpack.c.l.b16 %v434
      %v931 = vunpack.c.l.b16 %v435
      %v932 = vunpack.c.l.b16 %v436
      %v933 = vunpack.c.l.b16 %v437
      %v934 = vunpack.c.l.b16 %v438
      %v935 = vunpack.c.l.b16 %v439
      %v936 = vpack.c.b16 %v897, %v896
      %v937 = vpack.c.b16 %v899, %v898
      %v938 = vpack.c.b16 %v901, %v900
      %v939 = vpack.c.b16 %v903, %v902
      %v940 = vpack.c.b16 %v905, %v904
      %v941 = vpack.c.b16 %v907, %v906
      %v942 = vpack.c.b16 %v909, %v908
      %v943 = vpack.c.b16 %v911, %v910
      %v944 = vpack.c.b16 %v913, %v912
      %v945 = vpack.c.b16 %v915, %v914
      %v946 = vpack.c.b16 %v917, %v916
      %v947 = vpack.c.b16 %v919, %v918
      %v948 = vpack.c.b16 %v921, %v920
      %v949 = vpack.c.b16 %v923, %v922
      %v950 = vpack.c.b16 %v925, %v924
      %v951 = vpack.c.b16 %v927, %v926
      %v952 = vpack.c.b16 %v929, %v928
      %v953 = vpack.c.b16 %v931, %v930
      %v954 = vpack.c.b16 %v933, %v932
      %v955 = vpack.c.b16 %v935, %v934
      %v957 = vsel %vm598, %v936, 0
      %v960 = vsel %vm598, %v937, 0
      %v963 = vsel %vm598, %v938, 0
      %v966 = vsel %vm598, %v939, 0
      %v969 = vsel %vm598, %v940, 0
      %v972 = vsel %vm598, %v941, 0
      %v975 = vsel %vm598, %v942, 0
      %v978 = vsel %vm598, %v943, 0
      %v981 = vsel %vm598, %v944, 0
      %v984 = vsel %vm598, %v945, 0
      %v987 = vsel %vm598, %v946, 0
      %v990 = vsel %vm598, %v947, 0
      %v993 = vsel %vm598, %v948, 0
      %v996 = vsel %vm598, %v949, 0
      %v999 = vsel %vm598, %v950, 0
      %v1002 = vsel %vm598, %v951, 0
      %v1005 = vsel %vm598, %v952, 0
      %v1008 = vsel %vm598, %v953, 0
      %v1011 = vsel %vm598, %v954, 0
      %v1014 = vsel %vm598, %v955, 0
      %v1017 = vsel %vm659, %v496, 0
      %1019 = vmatprep.subr.bf16.mxu0 0
      %1020 = vmatpush1.bf16.msra.mxu0 %v1017
      %1021 = vmatprep.subr.bf16.mxu0 0
      %1022 = vmatpush1.bf16.msra.mxu0 0
      %1023 = vmatprep.subr.bf16.mxu0 0
      %1024 = vmatpush1.bf16.msra.mxu0 0
      %1025 = vmatprep.subr.bf16.mxu0 0
      %1026 = vmatpush1.bf16.msra.mxu0 0
      %1027 = vmatprep.subr.bf16.mxu0 0
      %1028 = vmatpush1.bf16.msra.mxu0 0
      %1029 = vmatprep.subr.bf16.mxu0 0
      %1030 = vmatpush1.bf16.msra.mxu0 0
      %1031 = vmatprep.subr.bf16.mxu0 0
      %1032 = vmatpush1.bf16.msra.mxu0 0
      %1033 = vmatprep.subr.bf16.mxu0 0
      %1034 = vmatpush1.bf16.msra.mxu0 0
      %1035 = vmatprep.subr.bf16.mxu0 0
      %1036 = vmatpush1.bf16.msra.mxu0 0
      %1037 = vmatprep.subr.bf16.mxu0 0
      %1038 = vmatpush1.bf16.msra.mxu0 0
      %1039 = vmatprep.subr.bf16.mxu0 0
      %1040 = vmatpush1.bf16.msra.mxu0 0
      %1041 = vmatprep.subr.bf16.mxu0 0
      %1042 = vmatpush1.bf16.msra.mxu0 0
      %1043 = vmatprep.subr.bf16.mxu0 0
      %1044 = vmatpush1.bf16.msra.mxu0 0
      %1045 = vmatprep.subr.bf16.mxu0 0
      %1046 = vmatpush1.bf16.msra.mxu0 0
      %1047 = vmatprep.subr.bf16.mxu0 0
      %1048 = vmatpush1.bf16.msra.mxu0 0
      %1049 = vmatprep.subr.bf16.mxu0 0
      %1050 = vmatpush1.bf16.msra.mxu0 0
      %1051 = vmatprep.mubr.bf16.mxu0 0
      %1052 = vmatmul.mubr.bf16.gmra.mrb[0].mxu0 %v957
      %v1053 = vpop.f32.mrb[0].mxu0
      %v1054 = vadd.f32 %v698, %v1053
      %v1055 = vpop.f32.mrb[0].mxu0
      %v1056 = vpop.f32.mrb[0].mxu0
      %v1057 = vadd.f32 %v701, %v1056
      %v1058 = vpop.f32.mrb[0].mxu0
      %1059 = vmatprep.mubr.bf16.mxu0 0
      %1060 = vmatmul.mubr.bf16.gmra.mrb[0].mxu0 %v960
      %v1061 = vpop.f32.mrb[0].mxu0
      %v1062 = vadd.f32 %v706, %v1061
      %v1063 = vpop.f32.mrb[0].mxu0
      %v1064 = vpop.f32.mrb[0].mxu0
      %v1065 = vadd.f32 %v709, %v1064
      %v1066 = vpop.f32.mrb[0].mxu0
      %1067 = vmatprep.mubr.bf16.mxu0 0
      %1068 = vmatmul.mubr.bf16.gmra.mrb[0].mxu0 %v963
      %v1069 = vpop.f32.mrb[0].mxu0
      %v1070 = vadd.f32 %v714, %v1069
      %v1071 = vpop.f32.mrb[0].mxu0
      %v1072 = vpop.f32.mrb[0].mxu0
      %v1073 = vadd.f32 %v717, %v1072
      %v1074 = vpop.f32.mrb[0].mxu0
      %1075 = vmatprep.mubr.bf16.mxu0 0
      %1076 = vmatmul.mubr.bf16.gmra.mrb[0].mxu0 %v966
      %v1077 = vpop.f32.mrb[0].mxu0
      %v1078 = vadd.f32 %v722, %v1077
      %v1079 = vpop.f32.mrb[0].mxu0
      %v1080 = vpop.f32.mrb[0].mxu0
      %v1081 = vadd.f32 %v725, %v1080
      %v1082 = vpop.f32.mrb[0].mxu0
      %1083 = vmatprep.mubr.bf16.mxu0 0
      %1084 = vmatmul.mubr.bf16.gmra.mrb[0].mxu0 %v969
      %v1085 = vpop.f32.mrb[0].mxu0
      %v1086 = vadd.f32 %v730, %v1085
      %v1087 = vpop.f32.mrb[0].mxu0
      %v1088 = vpop.f32.mrb[0].mxu0
      %v1089 = vadd.f32 %v733, %v1088
      %v1090 = vpop.f32.mrb[0].mxu0
      %1091 = vmatprep.mubr.bf16.mxu0 0
      %1092 = vmatmul.mubr.bf16.gmra.mrb[0].mxu0 %v972
      %v1093 = vpop.f32.mrb[0].mxu0
      %v1094 = vadd.f32 %v738, %v1093
      %v1095 = vpop.f32.mrb[0].mxu0
      %v1096 = vpop.f32.mrb[0].mxu0
      %v1097 = vadd.f32 %v741, %v1096
      %v1098 = vpop.f32.mrb[0].mxu0
      %1099 = vmatprep.mubr.bf16.mxu0 0
      %1100 = vmatmul.mubr.bf16.gmra.mrb[0].mxu0 %v975
      %v1101 = vpop.f32.mrb[0].mxu0
      %v1102 = vadd.f32 %v746, %v1101
      %v1103 = vpop.f32.mrb[0].mxu0
      %v1104 = vpop.f32.mrb[0].mxu0
      %v1105 = vadd.f32 %v749, %v1104
      %v1106 = vpop.f32.mrb[0].mxu0
      %1107 = vmatprep.mubr.bf16.mxu0 0
      %1108 = vmatmul.mubr.bf16.gmra.mrb[0].mxu0 %v978
      %v1109 = vpop.f32.mrb[0].mxu0
      %v1110 = vadd.f32 %v754, %v1109
      %v1111 = vpop.f32.mrb[0].mxu0
      %v1112 = vpop.f32.mrb[0].mxu0
      %v1113 = vadd.f32 %v757, %v1112
      %v1114 = vpop.f32.mrb[0].mxu0
      %1115 = vmatprep.mubr.bf16.mxu0 0
      %1116 = vmatmul.mubr.bf16.gmra.mrb[0].mxu0 %v981
      %v1117 = vpop.f32.mrb[0].mxu0
      %v1118 = vadd.f32 %v762, %v1117
      %v1119 = vpop.f32.mrb[0].mxu0
      %v1120 = vpop.f32.mrb[0].mxu0
      %v1121 = vadd.f32 %v765, %v1120
      %v1122 = vpop.f32.mrb[0].mxu0
      %1123 = vmatprep.mubr.bf16.mxu0 0
      %1124 = vmatmul.mubr.bf16.gmra.mrb[0].mxu0 %v984
      %v1125 = vpop.f32.mrb[0].mxu0
      %v1126 = vadd.f32 %v770, %v1125
      %v1127 = vpop.f32.mrb[0].mxu0
      %v1128 = vpop.f32.mrb[0].mxu0
      %v1129 = vadd.f32 %v773, %v1128
      %v1130 = vpop.f32.mrb[0].mxu0
      %1131 = vmatprep.mubr.bf16.mxu0 0
      %1132 = vmatmul.mubr.bf16.gmra.mrb[0].mxu0 %v987
      %v1133 = vpop.f32.mrb[0].mxu0
      %v1134 = vadd.f32 %v778, %v1133
      %v1135 = vpop.f32.mrb[0].mxu0
      %v1136 = vpop.f32.mrb[0].mxu0
      %v1137 = vadd.f32 %v781, %v1136
      %v1138 = vpop.f32.mrb[0].mxu0
      %1139 = vmatprep.mubr.bf16.mxu0 0
      %1140 = vmatmul.mubr.bf16.gmra.mrb[0].mxu0 %v990
      %v1141 = vpop.f32.mrb[0].mxu0
      %v1142 = vadd.f32 %v786, %v1141
      %v1143 = vpop.f32.mrb[0].mxu0
      %v1144 = vpop.f32.mrb[0].mxu0
      %v1145 = vadd.f32 %v789, %v1144
      %v1146 = vpop.f32.mrb[0].mxu0
      %1147 = vmatprep.mubr.bf16.mxu0 0
      %1148 = vmatmul.mubr.bf16.gmra.mrb[0].mxu0 %v993
      %v1149 = vpop.f32.mrb[0].mxu0
      %v1150 = vadd.f32 %v794, %v1149
      %v1151 = vpop.f32.mrb[0].mxu0
      %v1152 = vpop.f32.mrb[0].mxu0
      %v1153 = vadd.f32 %v797, %v1152
      %v1154 = vpop.f32.mrb[0].mxu0
      %1155 = vmatprep.mubr.bf16.mxu0 0
      %1156 = vmatmul.mubr.bf16.gmra.mrb[0].mxu0 %v996
      %v1157 = vpop.f32.mrb[0].mxu0
      %v1158 = vadd.f32 %v802, %v1157
      %v1159 = vpop.f32.mrb[0].mxu0
      %v1160 = vpop.f32.mrb[0].mxu0
      %v1161 = vadd.f32 %v805, %v1160
      %v1162 = vpop.f32.mrb[0].mxu0
      %1163 = vmatprep.mubr.bf16.mxu0 0
      %1164 = vmatmul.mubr.bf16.gmra.mrb[0].mxu0 %v999
      %v1165 = vpop.f32.mrb[0].mxu0
      %v1166 = vadd.f32 %v810, %v1165
      %v1167 = vpop.f32.mrb[0].mxu0
      %v1168 = vpop.f32.mrb[0].mxu0
      %v1169 = vadd.f32 %v813, %v1168
      %v1170 = vpop.f32.mrb[0].mxu0
      %1171 = vmatprep.mubr.bf16.mxu0 0
      %1172 = vmatmul.mubr.bf16.gmra.mrb[0].mxu0 %v1002
      %v1173 = vpop.f32.mrb[0].mxu0
      %v1174 = vadd.f32 %v818, %v1173
      %v1175 = vpop.f32.mrb[0].mxu0
      %v1176 = vpop.f32.mrb[0].mxu0
      %v1177 = vadd.f32 %v821, %v1176
      %v1178 = vpop.f32.mrb[0].mxu0
      %1179 = vmatprep.mubr.bf16.mxu0 0
      %1180 = vmatmul.mubr.bf16.gmra.mrb[0].mxu0 %v1005
      %v1181 = vpop.f32.mrb[0].mxu0
      %v1182 = vadd.f32 %v826, %v1181
      %v1183 = vpop.f32.mrb[0].mxu0
      %v1184 = vpop.f32.mrb[0].mxu0
      %v1185 = vadd.f32 %v829, %v1184
      %v1186 = vpop.f32.mrb[0].mxu0
      %1187 = vmatprep.mubr.bf16.mxu0 0
      %1188 = vmatmul.mubr.bf16.gmra.mrb[0].mxu0 %v1008
      %v1189 = vpop.f32.mrb[0].mxu0
      %v1190 = vadd.f32 %v834, %v1189
      %v1191 = vpop.f32.mrb[0].mxu0
      %v1192 = vpop.f32.mrb[0].mxu0
      %v1193 = vadd.f32 %v837, %v1192
      %v1194 = vpop.f32.mrb[0].mxu0
      %1195 = vmatprep.mubr.bf16.mxu0 0
      %1196 = vmatmul.mubr.bf16.gmra.mrb[0].mxu0 %v1011
      %v1197 = vpop.f32.mrb[0].mxu0
      %v1198 = vadd.f32 %v842, %v1197
      %v1199 = vpop.f32.mrb[0].mxu0
      %v1200 = vpop.f32.mrb[0].mxu0
      %v1201 = vadd.f32 %v845, %v1200
      %v1202 = vpop.f32.mrb[0].mxu0
      %1203 = vmatprep.mubr.bf16.mxu0 0
      %1204 = vmatmul.mubr.bf16.gmra.mrb[0].mxu0 %v1014
      %v1205 = vpop.f32.mrb[0].mxu0
      %v1206 = vadd.f32 %v850, %v1205
      %v1207 = vpop.f32.mrb[0].mxu0
      %v1208 = vpop.f32.mrb[0].mxu0
      %v1209 = vadd.f32 %v853, %v1208
      %v1210 = vpop.f32.mrb[0].mxu0
      %1211 = vdwg.mxu0
      %s1212 = scalar_lea.vmem %s3, 6
      %v1213 = vld [vmem:[%s1212] sm:$0x3]
      %s1214 = scalar_lea.vmem %s4, 6
      %v1215 = vld [vmem:[%s1214] sm:$0x3]
      %v1220 = vunpack.c.l.b16 %v488
      %v1221 = vunpack.c.l.b16 %v489
      %v1222 = vunpack.c.l.b16 %v490
      %v1223 = vunpack.c.l.b16 %v491
      %v1224 = vpack.c.b16 %v1221, %v1220
      %v1225 = vpack.c.b16 %v1223, %v1222
      %v1227 = vsel %vm598, %v1224, 0
      %v1230 = vsel %vm598, %v1225, 0
      %v1233 = vsel %vm659, %v1215, 0
      %1235 = vmatprep.subr.bf16.mxu0 0
      %1236 = vmatpush1.bf16.msra.mxu0 %v1233
      %1237 = vmatprep.subr.bf16.mxu0 0
      %1238 = vmatpush1.bf16.msra.mxu0 0
      %1239 = vmatprep.subr.bf16.mxu0 0
      %1240 = vmatpush1.bf16.msra.mxu0 0
      %1241 = vmatprep.subr.bf16.mxu0 0
      %1242 = vmatpush1.bf16.msra.mxu0 0
      %1243 = vmatprep.subr.bf16.mxu0 0
      %1244 = vmatpush1.bf16.msra.mxu0 0
      %1245 = vmatprep.subr.bf16.mxu0 0
      %1246 = vmatpush1.bf16.msra.mxu0 0
      %1247 = vmatprep.subr.bf16.mxu0 0
      %1248 = vmatpush1.bf16.msra.mxu0 0
      %1249 = vmatprep.subr.bf16.mxu0 0
      %1250 = vmatpush1.bf16.msra.mxu0 0
      %1251 = vmatprep.subr.bf16.mxu0 0
      %1252 = vmatpush1.bf16.msra.mxu0 0
      %1253 = vmatprep.subr.bf16.mxu0 0
      %1254 = vmatpush1.bf16.msra.mxu0 0
      %1255 = vmatprep.subr.bf16.mxu0 0
      %1256 = vmatpush1.bf16.msra.mxu0 0
      %1257 = vmatprep.subr.bf16.mxu0 0
      %1258 = vmatpush1.bf16.msra.mxu0 0
      %1259 = vmatprep.subr.bf16.mxu0 0
      %1260 = vmatpush1.bf16.msra.mxu0 0
      %1261 = vmatprep.subr.bf16.mxu0 0
      %1262 = vmatpush1.bf16.msra.mxu0 0
      %1263 = vmatprep.subr.bf16.mxu0 0
      %1264 = vmatpush1.bf16.msra.mxu0 0
      %1265 = vmatprep.subr.bf16.mxu0 0
      %1266 = vmatpush1.bf16.msra.mxu0 0
      %1267 = vmatprep.mubr.bf16.mxu0 0
      %1268 = vmatmul.mubr.bf16.gmra.mrb[0].mxu0 %v606
      %v1269 = vpop.f32.mrb[0].mxu0
      %v1270 = vadd.f32 0.0, %v1269
      %v1271 = vpop.f32.mrb[0].mxu0
      %v1272 = vpop.f32.mrb[0].mxu0
      %v1273 = vadd.f32 0.0, %v1272
      %v1274 = vpop.f32.mrb[0].mxu0
      %1275 = vmatprep.mubr.bf16.mxu0 0
      %1276 = vmatmul.mubr.bf16.gmra.mrb[0].mxu0 %v609
      %v1277 = vpop.f32.mrb[0].mxu0
      %v1278 = vadd.f32 0.0, %v1277
      %v1279 = vpop.f32.mrb[0].mxu0
      %v1280 = vpop.f32.mrb[0].mxu0
      %v1281 = vadd.f32 0.0, %v1280
      %v1282 = vpop.f32.mrb[0].mxu0
      %1283 = vmatprep.mubr.bf16.mxu0 0
      %1284 = vmatmul.mubr.bf16.gmra.mrb[0].mxu0 %v612
      %v1285 = vpop.f32.mrb[0].mxu0
      %v1286 = vadd.f32 0.0, %v1285
      %v1287 = vpop.f32.mrb[0].mxu0
      %v1288 = vpop.f32.mrb[0].mxu0
      %v1289 = vadd.f32 0.0, %v1288
      %v1290 = vpop.f32.mrb[0].mxu0
      %1291 = vmatprep.mubr.bf16.mxu0 0
      %1292 = vmatmul.mubr.bf16.gmra.mrb[0].mxu0 %v615
      %v1293 = vpop.f32.mrb[0].mxu0
      %v1294 = vadd.f32 0.0, %v1293
      %v1295 = vpop.f32.mrb[0].mxu0
      %v1296 = vpop.f32.mrb[0].mxu0
      %v1297 = vadd.f32 0.0, %v1296
      %v1298 = vpop.f32.mrb[0].mxu0
      %1299 = vmatprep.mubr.bf16.mxu0 0
      %1300 = vmatmul.mubr.bf16.gmra.mrb[0].mxu0 %v618
      %v1301 = vpop.f32.mrb[0].mxu0
      %v1302 = vadd.f32 0.0, %v1301
      %v1303 = vpop.f32.mrb[0].mxu0
      %v1304 = vpop.f32.mrb[0].mxu0
      %v1305 = vadd.f32 0.0, %v1304
      %v1306 = vpop.f32.mrb[0].mxu0
      %1307 = vmatprep.mubr.bf16.mxu0 0
      %1308 = vmatmul.mubr.bf16.gmra.mrb[0].mxu0 %v621
      %v1309 = vpop.f32.mrb[0].mxu0
      %v1310 = vadd.f32 0.0, %v1309
      %v1311 = vpop.f32.mrb[0].mxu0
      %v1312 = vpop.f32.mrb[0].mxu0
      %v1313 = vadd.f32 0.0, %v1312
      %v1314 = vpop.f32.mrb[0].mxu0
      %1315 = vmatprep.mubr.bf16.mxu0 0
      %1316 = vmatmul.mubr.bf16.gmra.mrb[0].mxu0 %v624
      %v1317 = vpop.f32.mrb[0].mxu0
      %v1318 = vadd.f32 0.0, %v1317
      %v1319 = vpop.f32.mrb[0].mxu0
      %v1320 = vpop.f32.mrb[0].mxu0
      %v1321 = vadd.f32 0.0, %v1320
      %v1322 = vpop.f32.mrb[0].mxu0
      %1323 = vmatprep.mubr.bf16.mxu0 0
      %1324 = vmatmul.mubr.bf16.gmra.mrb[0].mxu0 %v627
      %v1325 = vpop.f32.mrb[0].mxu0
      %v1326 = vadd.f32 0.0, %v1325
      %v1327 = vpop.f32.mrb[0].mxu0
      %v1328 = vpop.f32.mrb[0].mxu0
      %v1329 = vadd.f32 0.0, %v1328
      %v1330 = vpop.f32.mrb[0].mxu0
      %1331 = vmatprep.mubr.bf16.mxu0 0
      %1332 = vmatmul.mubr.bf16.gmra.mrb[0].mxu0 %v630
      %v1333 = vpop.f32.mrb[0].mxu0
      %v1334 = vadd.f32 0.0, %v1333
      %v1335 = vpop.f32.mrb[0].mxu0
      %v1336 = vpop.f32.mrb[0].mxu0
      %v1337 = vadd.f32 0.0, %v1336
      %v1338 = vpop.f32.mrb[0].mxu0
      %1339 = vmatprep.mubr.bf16.mxu0 0
      %1340 = vmatmul.mubr.bf16.gmra.mrb[0].mxu0 %v633
      %v1341 = vpop.f32.mrb[0].mxu0
      %v1342 = vadd.f32 0.0, %v1341
      %v1343 = vpop.f32.mrb[0].mxu0
      %v1344 = vpop.f32.mrb[0].mxu0
      %v1345 = vadd.f32 0.0, %v1344
      %v1346 = vpop.f32.mrb[0].mxu0
      %1347 = vmatprep.mubr.bf16.mxu0 0
      %1348 = vmatmul.mubr.bf16.gmra.mrb[0].mxu0 %v636
      %v1349 = vpop.f32.mrb[0].mxu0
      %v1350 = vadd.f32 0.0, %v1349
      %v1351 = vpop.f32.mrb[0].mxu0
      %v1352 = vpop.f32.mrb[0].mxu0
      %v1353 = vadd.f32 0.0, %v1352
      %v1354 = vpop.f32.mrb[0].mxu0
      %1355 = vmatprep.mubr.bf16.mxu0 0
      %1356 = vmatmul.mubr.bf16.gmra.mrb[0].mxu0 %v639
      %v1357 = vpop.f32.mrb[0].mxu0
      %v1358 = vadd.f32 0.0, %v1357
      %v1359 = vpop.f32.mrb[0].mxu0
      %v1360 = vpop.f32.mrb[0].mxu0
      %v1361 = vadd.f32 0.0, %v1360
      %v1362 = vpop.f32.mrb[0].mxu0
      %1363 = vmatprep.mubr.bf16.mxu0 0
      %1364 = vmatmul.mubr.bf16.gmra.mrb[0].mxu0 %v642
      %v1365 = vpop.f32.mrb[0].mxu0
      %v1366 = vadd.f32 0.0, %v1365
      %v1367 = vpop.f32.mrb[0].mxu0
      %v1368 = vpop.f32.mrb[0].mxu0
      %v1369 = vadd.f32 0.0, %v1368
      %v1370 = vpop.f32.mrb[0].mxu0
      %1371 = vmatprep.mubr.bf16.mxu0 0
      %1372 = vmatmul.mubr.bf16.gmra.mrb[0].mxu0 %v645
      %v1373 = vpop.f32.mrb[0].mxu0
      %v1374 = vadd.f32 0.0, %v1373
      %v1375 = vpop.f32.mrb[0].mxu0
      %v1376 = vpop.f32.mrb[0].mxu0
      %v1377 = vadd.f32 0.0, %v1376
      %v1378 = vpop.f32.mrb[0].mxu0
      %1379 = vmatprep.mubr.bf16.mxu0 0
      %1380 = vmatmul.mubr.bf16.gmra.mrb[0].mxu0 %v648
      %v1381 = vpop.f32.mrb[0].mxu0
      %v1382 = vadd.f32 0.0, %v1381
      %v1383 = vpop.f32.mrb[0].mxu0
      %v1384 = vpop.f32.mrb[0].mxu0
      %v1385 = vadd.f32 0.0, %v1384
      %v1386 = vpop.f32.mrb[0].mxu0
      %1387 = vmatprep.mubr.bf16.mxu0 0
      %1388 = vmatmul.mubr.bf16.gmra.mrb[0].mxu0 %v651
      %v1389 = vpop.f32.mrb[0].mxu0
      %v1390 = vadd.f32 0.0, %v1389
      %v1391 = vpop.f32.mrb[0].mxu0
      %v1392 = vpop.f32.mrb[0].mxu0
      %v1393 = vadd.f32 0.0, %v1392
      %v1394 = vpop.f32.mrb[0].mxu0
      %1395 = vmatprep.mubr.bf16.mxu0 0
      %1396 = vmatmul.mubr.bf16.gmra.mrb[0].mxu0 %v654
      %v1397 = vpop.f32.mrb[0].mxu0
      %v1398 = vadd.f32 0.0, %v1397
      %v1399 = vpop.f32.mrb[0].mxu0
      %v1400 = vpop.f32.mrb[0].mxu0
      %v1401 = vadd.f32 0.0, %v1400
      %v1402 = vpop.f32.mrb[0].mxu0
      %1403 = vmatprep.mubr.bf16.mxu0 0
      %1404 = vmatmul.mubr.bf16.gmra.mrb[0].mxu0 %v657
      %v1405 = vpop.f32.mrb[0].mxu0
      %v1406 = vadd.f32 0.0, %v1405
      %v1407 = vpop.f32.mrb[0].mxu0
      %v1408 = vpop.f32.mrb[0].mxu0
      %v1409 = vadd.f32 0.0, %v1408
      %v1410 = vpop.f32.mrb[0].mxu0
      %1411 = vmatprep.mubr.bf16.mxu0 0
      %1412 = vmatmul.mubr.bf16.gmra.mrb[0].mxu0 %v1227
      %v1413 = vpop.f32.mrb[0].mxu0
      %v1414 = vadd.f32 0.0, %v1413
      %v1415 = vpop.f32.mrb[0].mxu0
      %v1416 = vpop.f32.mrb[0].mxu0
      %v1417 = vadd.f32 0.0, %v1416
      %v1418 = vpop.f32.mrb[0].mxu0
      %1419 = vmatprep.mubr.bf16.mxu0 0
      %1420 = vmatmul.mubr.bf16.gmra.mrb[0].mxu0 %v1230
      %v1421 = vpop.f32.mrb[0].mxu0
      %v1422 = vadd.f32 0.0, %v1421
      %v1423 = vpop.f32.mrb[0].mxu0
      %v1424 = vpop.f32.mrb[0].mxu0
      %v1425 = vadd.f32 0.0, %v1424
      %v1426 = vpop.f32.mrb[0].mxu0
      %1427 = vdwg.mxu0
      %v1432 = vunpack.c.l.b16 %v440
      %v1433 = vunpack.c.l.b16 %v441
      %v1434 = vunpack.c.l.b16 %v442
      %v1435 = vunpack.c.l.b16 %v443
      %v1436 = vpack.c.b16 %v1433, %v1432
      %v1437 = vpack.c.b16 %v1435, %v1434
      %v1439 = vsel %vm598, %v1436, 0
      %v1442 = vsel %vm598, %v1437, 0
      %v1445 = vsel %vm659, %v1213, 0
      %1447 = vmatprep.subr.bf16.mxu0 0
      %1448 = vmatpush1.bf16.msra.mxu0 %v1445
      %1449 = vmatprep.subr.bf16.mxu0 0
      %1450 = vmatpush1.bf16.msra.mxu0 0
      %1451 = vmatprep.subr.bf16.mxu0 0
      %1452 = vmatpush1.bf16.msra.mxu0 0
      %1453 = vmatprep.subr.bf16.mxu0 0
      %1454 = vmatpush1.bf16.msra.mxu0 0
      %1455 = vmatprep.subr.bf16.mxu0 0
      %1456 = vmatpush1.bf16.msra.mxu0 0
      %1457 = vmatprep.subr.bf16.mxu0 0
      %1458 = vmatpush1.bf16.msra.mxu0 0
      %1459 = vmatprep.subr.bf16.mxu0 0
      %1460 = vmatpush1.bf16.msra.mxu0 0
      %1461 = vmatprep.subr.bf16.mxu0 0
      %1462 = vmatpush1.bf16.msra.mxu0 0
      %1463 = vmatprep.subr.bf16.mxu0 0
      %1464 = vmatpush1.bf16.msra.mxu0 0
      %1465 = vmatprep.subr.bf16.mxu0 0
      %1466 = vmatpush1.bf16.msra.mxu0 0
      %1467 = vmatprep.subr.bf16.mxu0 0
      %1468 = vmatpush1.bf16.msra.mxu0 0
      %1469 = vmatprep.subr.bf16.mxu0 0
      %1470 = vmatpush1.bf16.msra.mxu0 0
      %1471 = vmatprep.subr.bf16.mxu0 0
      %1472 = vmatpush1.bf16.msra.mxu0 0
      %1473 = vmatprep.subr.bf16.mxu0 0
      %1474 = vmatpush1.bf16.msra.mxu0 0
      %1475 = vmatprep.subr.bf16.mxu0 0
      %1476 = vmatpush1.bf16.msra.mxu0 0
      %1477 = vmatprep.subr.bf16.mxu0 0
      %1478 = vmatpush1.bf16.msra.mxu0 0
      %1479 = vmatprep.mubr.bf16.mxu0 0
      %1480 = vmatmul.mubr.bf16.gmra.mrb[0].mxu0 %v963
      %v1481 = vpop.f32.mrb[0].mxu0
      %v1482 = vadd.f32 %v1270, %v1481
      %v1483 = vpop.f32.mrb[0].mxu0
      %v1484 = vpop.f32.mrb[0].mxu0
      %v1485 = vadd.f32 %v1273, %v1484
      %v1486 = vpop.f32.mrb[0].mxu0
      %1487 = vmatprep.mubr.bf16.mxu0 0
      %1488 = vmatmul.mubr.bf16.gmra.mrb[0].mxu0 %v966
      %v1489 = vpop.f32.mrb[0].mxu0
      %v1490 = vadd.f32 %v1278, %v1489
      %v1491 = vpop.f32.mrb[0].mxu0
      %v1492 = vpop.f32.mrb[0].mxu0
      %v1493 = vadd.f32 %v1281, %v1492
      %v1494 = vpop.f32.mrb[0].mxu0
      %1495 = vmatprep.mubr.bf16.mxu0 0
      %1496 = vmatmul.mubr.bf16.gmra.mrb[0].mxu0 %v969
      %v1497 = vpop.f32.mrb[0].mxu0
      %v1498 = vadd.f32 %v1286, %v1497
      %v1499 = vpop.f32.mrb[0].mxu0
      %v1500 = vpop.f32.mrb[0].mxu0
      %v1501 = vadd.f32 %v1289, %v1500
      %v1502 = vpop.f32.mrb[0].mxu0
      %1503 = vmatprep.mubr.bf16.mxu0 0
      %1504 = vmatmul.mubr.bf16.gmra.mrb[0].mxu0 %v972
      %v1505 = vpop.f32.mrb[0].mxu0
      %v1506 = vadd.f32 %v1294, %v1505
      %v1507 = vpop.f32.mrb[0].mxu0
      %v1508 = vpop.f32.mrb[0].mxu0
      %v1509 = vadd.f32 %v1297, %v1508
      %v1510 = vpop.f32.mrb[0].mxu0
      %1511 = vmatprep.mubr.bf16.mxu0 0
      %1512 = vmatmul.mubr.bf16.gmra.mrb[0].mxu0 %v975
      %v1513 = vpop.f32.mrb[0].mxu0
      %v1514 = vadd.f32 %v1302, %v1513
      %v1515 = vpop.f32.mrb[0].mxu0
      %v1516 = vpop.f32.mrb[0].mxu0
      %v1517 = vadd.f32 %v1305, %v1516
      %v1518 = vpop.f32.mrb[0].mxu0
      %1519 = vmatprep.mubr.bf16.mxu0 0
      %1520 = vmatmul.mubr.bf16.gmra.mrb[0].mxu0 %v978
      %v1521 = vpop.f32.mrb[0].mxu0
      %v1522 = vadd.f32 %v1310, %v1521
      %v1523 = vpop.f32.mrb[0].mxu0
      %v1524 = vpop.f32.mrb[0].mxu0
      %v1525 = vadd.f32 %v1313, %v1524
      %v1526 = vpop.f32.mrb[0].mxu0
      %1527 = vmatprep.mubr.bf16.mxu0 0
      %1528 = vmatmul.mubr.bf16.gmra.mrb[0].mxu0 %v981
      %v1529 = vpop.f32.mrb[0].mxu0
      %v1530 = vadd.f32 %v1318, %v1529
      %v1531 = vpop.f32.mrb[0].mxu0
      %v1532 = vpop.f32.mrb[0].mxu0
      %v1533 = vadd.f32 %v1321, %v1532
      %v1534 = vpop.f32.mrb[0].mxu0
      %1535 = vmatprep.mubr.bf16.mxu0 0
      %1536 = vmatmul.mubr.bf16.gmra.mrb[0].mxu0 %v984
      %v1537 = vpop.f32.mrb[0].mxu0
      %v1538 = vadd.f32 %v1326, %v1537
      %v1539 = vpop.f32.mrb[0].mxu0
      %v1540 = vpop.f32.mrb[0].mxu0
      %v1541 = vadd.f32 %v1329, %v1540
      %v1542 = vpop.f32.mrb[0].mxu0
      %1543 = vmatprep.mubr.bf16.mxu0 0
      %1544 = vmatmul.mubr.bf16.gmra.mrb[0].mxu0 %v987
      %v1545 = vpop.f32.mrb[0].mxu0
      %v1546 = vadd.f32 %v1334, %v1545
      %v1547 = vpop.f32.mrb[0].mxu0
      %v1548 = vpop.f32.mrb[0].mxu0
      %v1549 = vadd.f32 %v1337, %v1548
      %v1550 = vpop.f32.mrb[0].mxu0
      %1551 = vmatprep.mubr.bf16.mxu0 0
      %1552 = vmatmul.mubr.bf16.gmra.mrb[0].mxu0 %v990
      %v1553 = vpop.f32.mrb[0].mxu0
      %v1554 = vadd.f32 %v1342, %v1553
      %v1555 = vpop.f32.mrb[0].mxu0
      %v1556 = vpop.f32.mrb[0].mxu0
      %v1557 = vadd.f32 %v1345, %v1556
      %v1558 = vpop.f32.mrb[0].mxu0
      %1559 = vmatprep.mubr.bf16.mxu0 0
      %1560 = vmatmul.mubr.bf16.gmra.mrb[0].mxu0 %v993
      %v1561 = vpop.f32.mrb[0].mxu0
      %v1562 = vadd.f32 %v1350, %v1561
      %v1563 = vpop.f32.mrb[0].mxu0
      %v1564 = vpop.f32.mrb[0].mxu0
      %v1565 = vadd.f32 %v1353, %v1564
      %v1566 = vpop.f32.mrb[0].mxu0
      %1567 = vmatprep.mubr.bf16.mxu0 0
      %1568 = vmatmul.mubr.bf16.gmra.mrb[0].mxu0 %v996
      %v1569 = vpop.f32.mrb[0].mxu0
      %v1570 = vadd.f32 %v1358, %v1569
      %v1571 = vpop.f32.mrb[0].mxu0
      %v1572 = vpop.f32.mrb[0].mxu0
      %v1573 = vadd.f32 %v1361, %v1572
      %v1574 = vpop.f32.mrb[0].mxu0
      %1575 = vmatprep.mubr.bf16.mxu0 0
      %1576 = vmatmul.mubr.bf16.gmra.mrb[0].mxu0 %v999
      %v1577 = vpop.f32.mrb[0].mxu0
      %v1578 = vadd.f32 %v1366, %v1577
      %v1579 = vpop.f32.mrb[0].mxu0
      %v1580 = vpop.f32.mrb[0].mxu0
      %v1581 = vadd.f32 %v1369, %v1580
      %v1582 = vpop.f32.mrb[0].mxu0
      %1583 = vmatprep.mubr.bf16.mxu0 0
      %1584 = vmatmul.mubr.bf16.gmra.mrb[0].mxu0 %v1002
      %v1585 = vpop.f32.mrb[0].mxu0
      %v1586 = vadd.f32 %v1374, %v1585
      %v1587 = vpop.f32.mrb[0].mxu0
      %v1588 = vpop.f32.mrb[0].mxu0
      %v1589 = vadd.f32 %v1377, %v1588
      %v1590 = vpop.f32.mrb[0].mxu0
      %1591 = vmatprep.mubr.bf16.mxu0 0
      %1592 = vmatmul.mubr.bf16.gmra.mrb[0].mxu0 %v1005
      %v1593 = vpop.f32.mrb[0].mxu0
      %v1594 = vadd.f32 %v1382, %v1593
      %v1595 = vpop.f32.mrb[0].mxu0
      %v1596 = vpop.f32.mrb[0].mxu0
      %v1597 = vadd.f32 %v1385, %v1596
      %v1598 = vpop.f32.mrb[0].mxu0
      %1599 = vmatprep.mubr.bf16.mxu0 0
      %1600 = vmatmul.mubr.bf16.gmra.mrb[0].mxu0 %v1008
      %v1601 = vpop.f32.mrb[0].mxu0
      %v1602 = vadd.f32 %v1390, %v1601
      %v1603 = vpop.f32.mrb[0].mxu0
      %v1604 = vpop.f32.mrb[0].mxu0
      %v1605 = vadd.f32 %v1393, %v1604
      %v1606 = vpop.f32.mrb[0].mxu0
      %1607 = vmatprep.mubr.bf16.mxu0 0
      %1608 = vmatmul.mubr.bf16.gmra.mrb[0].mxu0 %v1011
      %v1609 = vpop.f32.mrb[0].mxu0
      %v1610 = vadd.f32 %v1398, %v1609
      %v1611 = vpop.f32.mrb[0].mxu0
      %v1612 = vpop.f32.mrb[0].mxu0
      %v1613 = vadd.f32 %v1401, %v1612
      %v1614 = vpop.f32.mrb[0].mxu0
      %1615 = vmatprep.mubr.bf16.mxu0 0
      %1616 = vmatmul.mubr.bf16.gmra.mrb[0].mxu0 %v1014
      %v1617 = vpop.f32.mrb[0].mxu0
      %v1618 = vadd.f32 %v1406, %v1617
      %v1619 = vpop.f32.mrb[0].mxu0
      %v1620 = vpop.f32.mrb[0].mxu0
      %v1621 = vadd.f32 %v1409, %v1620
      %v1622 = vpop.f32.mrb[0].mxu0
      %1623 = vmatprep.mubr.bf16.mxu0 0
      %1624 = vmatmul.mubr.bf16.gmra.mrb[0].mxu0 %v1439
      %v1625 = vpop.f32.mrb[0].mxu0
      %v1626 = vadd.f32 %v1414, %v1625
      %v1627 = vpop.f32.mrb[0].mxu0
      %v1628 = vpop.f32.mrb[0].mxu0
      %v1629 = vadd.f32 %v1417, %v1628
      %v1630 = vpop.f32.mrb[0].mxu0
      %1631 = vmatprep.mubr.bf16.mxu0 0
      %1632 = vmatmul.mubr.bf16.gmra.mrb[0].mxu0 %v1442
      %v1633 = vpop.f32.mrb[0].mxu0
      %v1634 = vadd.f32 %v1422, %v1633
      %v1635 = vpop.f32.mrb[0].mxu0
      %v1636 = vpop.f32.mrb[0].mxu0
      %v1637 = vadd.f32 %v1425, %v1636
      %v1638 = vpop.f32.mrb[0].mxu0
      %1639 = vdwg.mxu0
      %v1640 = vadd.f32 %v1054, %v1482
      %v1641 = vadd.f32 %v1057, %v1485
      %v1642 = vadd.f32 %v1062, %v1490
      %v1643 = vadd.f32 %v1065, %v1493
      %v1644 = vadd.f32 %v1070, %v1498
      %v1645 = vadd.f32 %v1073, %v1501
      %v1646 = vadd.f32 %v1078, %v1506
      %v1647 = vadd.f32 %v1081, %v1509
      %v1648 = vadd.f32 %v1086, %v1514
      %v1649 = vadd.f32 %v1089, %v1517
      %v1650 = vadd.f32 %v1094, %v1522
      %v1651 = vadd.f32 %v1097, %v1525
      %v1652 = vadd.f32 %v1102, %v1530
      %v1653 = vadd.f32 %v1105, %v1533
      %v1654 = vadd.f32 %v1110, %v1538
      %v1655 = vadd.f32 %v1113, %v1541
      %v1656 = vadd.f32 %v1118, %v1546
      %v1657 = vadd.f32 %v1121, %v1549
      %v1658 = vadd.f32 %v1126, %v1554
      %v1659 = vadd.f32 %v1129, %v1557
      %v1660 = vadd.f32 %v1134, %v1562
      %v1661 = vadd.f32 %v1137, %v1565
      %v1662 = vadd.f32 %v1142, %v1570
      %v1663 = vadd.f32 %v1145, %v1573
      %v1664 = vadd.f32 %v1150, %v1578
      %v1665 = vadd.f32 %v1153, %v1581
      %v1666 = vadd.f32 %v1158, %v1586
      %v1667 = vadd.f32 %v1161, %v1589
      %v1668 = vadd.f32 %v1166, %v1594
      %v1669 = vadd.f32 %v1169, %v1597
      %v1670 = vadd.f32 %v1174, %v1602
      %v1671 = vadd.f32 %v1177, %v1605
      %v1672 = vadd.f32 %v1182, %v1610
      %v1673 = vadd.f32 %v1185, %v1613
      %v1674 = vadd.f32 %v1190, %v1618
      %v1675 = vadd.f32 %v1193, %v1621
      %v1676 = vadd.f32 %v1198, %v1626
      %v1677 = vadd.f32 %v1201, %v1629
      %v1678 = vadd.f32 %v1206, %v1634
      %v1679 = vadd.f32 %v1209, %v1637
      %s1680 = scalar_lea.vmem %s3, 12
      %v1681 = vld [vmem:[%s1680] sm:$0x3]
      %s1682 = scalar_lea.vmem %s4, 12
      %v1683 = vld [vmem:[%s1682] sm:$0x3]
      %v1688 = vunpack.c.l.b16 %v492
      %v1689 = vunpack.c.l.b16 %v493
      %v1690 = vunpack.c.l.b16 %v494
      %v1691 = vunpack.c.l.b16 %v495
      %v1692 = vpack.c.b16 %v1689, %v1688
      %v1693 = vpack.c.b16 %v1691, %v1690
      %v1695 = vsel %vm598, %v1692, 0
      %v1698 = vsel %vm598, %v1693, 0
      %v1701 = vsel %vm659, %v1683, 0
      %1703 = vmatprep.subr.bf16.mxu0 0
      %1704 = vmatpush1.bf16.msra.mxu0 %v1701
      %1705 = vmatprep.subr.bf16.mxu0 0
      %1706 = vmatpush1.bf16.msra.mxu0 0
      %1707 = vmatprep.subr.bf16.mxu0 0
      %1708 = vmatpush1.bf16.msra.mxu0 0
      %1709 = vmatprep.subr.bf16.mxu0 0
      %1710 = vmatpush1.bf16.msra.mxu0 0
      %1711 = vmatprep.subr.bf16.mxu0 0
      %1712 = vmatpush1.bf16.msra.mxu0 0
      %1713 = vmatprep.subr.bf16.mxu0 0
      %1714 = vmatpush1.bf16.msra.mxu0 0
      %1715 = vmatprep.subr.bf16.mxu0 0
      %1716 = vmatpush1.bf16.msra.mxu0 0
      %1717 = vmatprep.subr.bf16.mxu0 0
      %1718 = vmatpush1.bf16.msra.mxu0 0
      %1719 = vmatprep.subr.bf16.mxu0 0
      %1720 = vmatpush1.bf16.msra.mxu0 0
      %1721 = vmatprep.subr.bf16.mxu0 0
      %1722 = vmatpush1.bf16.msra.mxu0 0
      %1723 = vmatprep.subr.bf16.mxu0 0
      %1724 = vmatpush1.bf16.msra.mxu0 0
      %1725 = vmatprep.subr.bf16.mxu0 0
      %1726 = vmatpush1.bf16.msra.mxu0 0
      %1727 = vmatprep.subr.bf16.mxu0 0
      %1728 = vmatpush1.bf16.msra.mxu0 0
      %1729 = vmatprep.subr.bf16.mxu0 0
      %1730 = vmatpush1.bf16.msra.mxu0 0
      %1731 = vmatprep.subr.bf16.mxu0 0
      %1732 = vmatpush1.bf16.msra.mxu0 0
      %1733 = vmatprep.subr.bf16.mxu0 0
      %1734 = vmatpush1.bf16.msra.mxu0 0
      %1735 = vmatprep.mubr.bf16.mxu0 0
      %1736 = vmatmul.mubr.bf16.gmra.mrb[0].mxu0 %v612
      %v1737 = vpop.f32.mrb[0].mxu0
      %v1738 = vadd.f32 0.0, %v1737
      %v1739 = vpop.f32.mrb[0].mxu0
      %v1740 = vpop.f32.mrb[0].mxu0
      %v1741 = vadd.f32 0.0, %v1740
      %v1742 = vpop.f32.mrb[0].mxu0
      %1743 = vmatprep.mubr.bf16.mxu0 0
      %1744 = vmatmul.mubr.bf16.gmra.mrb[0].mxu0 %v615
      %v1745 = vpop.f32.mrb[0].mxu0
      %v1746 = vadd.f32 0.0, %v1745
      %v1747 = vpop.f32.mrb[0].mxu0
      %v1748 = vpop.f32.mrb[0].mxu0
      %v1749 = vadd.f32 0.0, %v1748
      %v1750 = vpop.f32.mrb[0].mxu0
      %1751 = vmatprep.mubr.bf16.mxu0 0
      %1752 = vmatmul.mubr.bf16.gmra.mrb[0].mxu0 %v618
      %v1753 = vpop.f32.mrb[0].mxu0
      %v1754 = vadd.f32 0.0, %v1753
      %v1755 = vpop.f32.mrb[0].mxu0
      %v1756 = vpop.f32.mrb[0].mxu0
      %v1757 = vadd.f32 0.0, %v1756
      %v1758 = vpop.f32.mrb[0].mxu0
      %1759 = vmatprep.mubr.bf16.mxu0 0
      %1760 = vmatmul.mubr.bf16.gmra.mrb[0].mxu0 %v621
      %v1761 = vpop.f32.mrb[0].mxu0
      %v1762 = vadd.f32 0.0, %v1761
      %v1763 = vpop.f32.mrb[0].mxu0
      %v1764 = vpop.f32.mrb[0].mxu0
      %v1765 = vadd.f32 0.0, %v1764
      %v1766 = vpop.f32.mrb[0].mxu0
      %1767 = vmatprep.mubr.bf16.mxu0 0
      %1768 = vmatmul.mubr.bf16.gmra.mrb[0].mxu0 %v624
      %v1769 = vpop.f32.mrb[0].mxu0
      %v1770 = vadd.f32 0.0, %v1769
      %v1771 = vpop.f32.mrb[0].mxu0
      %v1772 = vpop.f32.mrb[0].mxu0
      %v1773 = vadd.f32 0.0, %v1772
      %v1774 = vpop.f32.mrb[0].mxu0
      %1775 = vmatprep.mubr.bf16.mxu0 0
      %1776 = vmatmul.mubr.bf16.gmra.mrb[0].mxu0 %v627
      %v1777 = vpop.f32.mrb[0].mxu0
      %v1778 = vadd.f32 0.0, %v1777
      %v1779 = vpop.f32.mrb[0].mxu0
      %v1780 = vpop.f32.mrb[0].mxu0
      %v1781 = vadd.f32 0.0, %v1780
      %v1782 = vpop.f32.mrb[0].mxu0
      %1783 = vmatprep.mubr.bf16.mxu0 0
      %1784 = vmatmul.mubr.bf16.gmra.mrb[0].mxu0 %v630
      %v1785 = vpop.f32.mrb[0].mxu0
      %v1786 = vadd.f32 0.0, %v1785
      %v1787 = vpop.f32.mrb[0].mxu0
      %v1788 = vpop.f32.mrb[0].mxu0
      %v1789 = vadd.f32 0.0, %v1788
      %v1790 = vpop.f32.mrb[0].mxu0
      %1791 = vmatprep.mubr.bf16.mxu0 0
      %1792 = vmatmul.mubr.bf16.gmra.mrb[0].mxu0 %v633
      %v1793 = vpop.f32.mrb[0].mxu0
      %v1794 = vadd.f32 0.0, %v1793
      %v1795 = vpop.f32.mrb[0].mxu0
      %v1796 = vpop.f32.mrb[0].mxu0
      %v1797 = vadd.f32 0.0, %v1796
      %v1798 = vpop.f32.mrb[0].mxu0
      %1799 = vmatprep.mubr.bf16.mxu0 0
      %1800 = vmatmul.mubr.bf16.gmra.mrb[0].mxu0 %v636
      %v1801 = vpop.f32.mrb[0].mxu0
      %v1802 = vadd.f32 0.0, %v1801
      %v1803 = vpop.f32.mrb[0].mxu0
      %v1804 = vpop.f32.mrb[0].mxu0
      %v1805 = vadd.f32 0.0, %v1804
      %v1806 = vpop.f32.mrb[0].mxu0
      %1807 = vmatprep.mubr.bf16.mxu0 0
      %1808 = vmatmul.mubr.bf16.gmra.mrb[0].mxu0 %v639
      %v1809 = vpop.f32.mrb[0].mxu0
      %v1810 = vadd.f32 0.0, %v1809
      %v1811 = vpop.f32.mrb[0].mxu0
      %v1812 = vpop.f32.mrb[0].mxu0
      %v1813 = vadd.f32 0.0, %v1812
      %v1814 = vpop.f32.mrb[0].mxu0
      %1815 = vmatprep.mubr.bf16.mxu0 0
      %1816 = vmatmul.mubr.bf16.gmra.mrb[0].mxu0 %v642
      %v1817 = vpop.f32.mrb[0].mxu0
      %v1818 = vadd.f32 0.0, %v1817
      %v1819 = vpop.f32.mrb[0].mxu0
      %v1820 = vpop.f32.mrb[0].mxu0
      %v1821 = vadd.f32 0.0, %v1820
      %v1822 = vpop.f32.mrb[0].mxu0
      %1823 = vmatprep.mubr.bf16.mxu0 0
      %1824 = vmatmul.mubr.bf16.gmra.mrb[0].mxu0 %v645
      %v1825 = vpop.f32.mrb[0].mxu0
      %v1826 = vadd.f32 0.0, %v1825
      %v1827 = vpop.f32.mrb[0].mxu0
      %v1828 = vpop.f32.mrb[0].mxu0
      %v1829 = vadd.f32 0.0, %v1828
      %v1830 = vpop.f32.mrb[0].mxu0
      %1831 = vmatprep.mubr.bf16.mxu0 0
      %1832 = vmatmul.mubr.bf16.gmra.mrb[0].mxu0 %v648
      %v1833 = vpop.f32.mrb[0].mxu0
      %v1834 = vadd.f32 0.0, %v1833
      %v1835 = vpop.f32.mrb[0].mxu0
      %v1836 = vpop.f32.mrb[0].mxu0
      %v1837 = vadd.f32 0.0, %v1836
      %v1838 = vpop.f32.mrb[0].mxu0
      %1839 = vmatprep.mubr.bf16.mxu0 0
      %1840 = vmatmul.mubr.bf16.gmra.mrb[0].mxu0 %v651
      %v1841 = vpop.f32.mrb[0].mxu0
      %v1842 = vadd.f32 0.0, %v1841
      %v1843 = vpop.f32.mrb[0].mxu0
      %v1844 = vpop.f32.mrb[0].mxu0
      %v1845 = vadd.f32 0.0, %v1844
      %v1846 = vpop.f32.mrb[0].mxu0
      %1847 = vmatprep.mubr.bf16.mxu0 0
      %1848 = vmatmul.mubr.bf16.gmra.mrb[0].mxu0 %v654
      %v1849 = vpop.f32.mrb[0].mxu0
      %v1850 = vadd.f32 0.0, %v1849
      %v1851 = vpop.f32.mrb[0].mxu0
      %v1852 = vpop.f32.mrb[0].mxu0
      %v1853 = vadd.f32 0.0, %v1852
      %v1854 = vpop.f32.mrb[0].mxu0
      %1855 = vmatprep.mubr.bf16.mxu0 0
      %1856 = vmatmul.mubr.bf16.gmra.mrb[0].mxu0 %v657
      %v1857 = vpop.f32.mrb[0].mxu0
      %v1858 = vadd.f32 0.0, %v1857
      %v1859 = vpop.f32.mrb[0].mxu0
      %v1860 = vpop.f32.mrb[0].mxu0
      %v1861 = vadd.f32 0.0, %v1860
      %v1862 = vpop.f32.mrb[0].mxu0
      %1863 = vmatprep.mubr.bf16.mxu0 0
      %1864 = vmatmul.mubr.bf16.gmra.mrb[0].mxu0 %v1227
      %v1865 = vpop.f32.mrb[0].mxu0
      %v1866 = vadd.f32 0.0, %v1865
      %v1867 = vpop.f32.mrb[0].mxu0
      %v1868 = vpop.f32.mrb[0].mxu0
      %v1869 = vadd.f32 0.0, %v1868
      %v1870 = vpop.f32.mrb[0].mxu0
      %1871 = vmatprep.mubr.bf16.mxu0 0
      %1872 = vmatmul.mubr.bf16.gmra.mrb[0].mxu0 %v1230
      %v1873 = vpop.f32.mrb[0].mxu0
      %v1874 = vadd.f32 0.0, %v1873
      %v1875 = vpop.f32.mrb[0].mxu0
      %v1876 = vpop.f32.mrb[0].mxu0
      %v1877 = vadd.f32 0.0, %v1876
      %v1878 = vpop.f32.mrb[0].mxu0
      %1879 = vmatprep.mubr.bf16.mxu0 0
      %1880 = vmatmul.mubr.bf16.gmra.mrb[0].mxu0 %v1695
      %v1881 = vpop.f32.mrb[0].mxu0
      %v1882 = vadd.f32 0.0, %v1881
      %v1883 = vpop.f32.mrb[0].mxu0
      %v1884 = vpop.f32.mrb[0].mxu0
      %v1885 = vadd.f32 0.0, %v1884
      %v1886 = vpop.f32.mrb[0].mxu0
      %1887 = vmatprep.mubr.bf16.mxu0 0
      %1888 = vmatmul.mubr.bf16.gmra.mrb[0].mxu0 %v1698
      %v1889 = vpop.f32.mrb[0].mxu0
      %v1890 = vadd.f32 0.0, %v1889
      %v1891 = vpop.f32.mrb[0].mxu0
      %v1892 = vpop.f32.mrb[0].mxu0
      %v1893 = vadd.f32 0.0, %v1892
      %v1894 = vpop.f32.mrb[0].mxu0
      %1895 = vdwg.mxu0
      %v1900 = vunpack.c.l.b16 %v444
      %v1901 = vunpack.c.l.b16 %v445
      %v1902 = vunpack.c.l.b16 %v446
      %v1903 = vunpack.c.l.b16 %v447
      %v1904 = vpack.c.b16 %v1901, %v1900
      %v1905 = vpack.c.b16 %v1903, %v1902
      %v1907 = vsel %vm598, %v1904, 0
      %v1910 = vsel %vm598, %v1905, 0
      %v1913 = vsel %vm659, %v1681, 0
      %1915 = vmatprep.subr.bf16.mxu0 0
      %1916 = vmatpush1.bf16.msra.mxu0 %v1913
      %1917 = vmatprep.subr.bf16.mxu0 0
      %1918 = vmatpush1.bf16.msra.mxu0 0
      %1919 = vmatprep.subr.bf16.mxu0 0
      %1920 = vmatpush1.bf16.msra.mxu0 0
      %1921 = vmatprep.subr.bf16.mxu0 0
      %1922 = vmatpush1.bf16.msra.mxu0 0
      %1923 = vmatprep.subr.bf16.mxu0 0
      %1924 = vmatpush1.bf16.msra.mxu0 0
      %1925 = vmatprep.subr.bf16.mxu0 0
      %1926 = vmatpush1.bf16.msra.mxu0 0
      %1927 = vmatprep.subr.bf16.mxu0 0
      %1928 = vmatpush1.bf16.msra.mxu0 0
      %1929 = vmatprep.subr.bf16.mxu0 0
      %1930 = vmatpush1.bf16.msra.mxu0 0
      %1931 = vmatprep.subr.bf16.mxu0 0
      %1932 = vmatpush1.bf16.msra.mxu0 0
      %1933 = vmatprep.subr.bf16.mxu0 0
      %1934 = vmatpush1.bf16.msra.mxu0 0
      %1935 = vmatprep.subr.bf16.mxu0 0
      %1936 = vmatpush1.bf16.msra.mxu0 0
      %1937 = vmatprep.subr.bf16.mxu0 0
      %1938 = vmatpush1.bf16.msra.mxu0 0
      %1939 = vmatprep.subr.bf16.mxu0 0
      %1940 = vmatpush1.bf16.msra.mxu0 0
      %1941 = vmatprep.subr.bf16.mxu0 0
      %1942 = vmatpush1.bf16.msra.mxu0 0
      %1943 = vmatprep.subr.bf16.mxu0 0
      %1944 = vmatpush1.bf16.msra.mxu0 0
      %1945 = vmatprep.subr.bf16.mxu0 0
      %1946 = vmatpush1.bf16.msra.mxu0 0
      %1947 = vmatprep.mubr.bf16.mxu0 0
      %1948 = vmatmul.mubr.bf16.gmra.mrb[0].mxu0 %v969
      %v1949 = vpop.f32.mrb[0].mxu0
      %v1950 = vadd.f32 %v1738, %v1949
      %v1951 = vpop.f32.mrb[0].mxu0
      %v1952 = vpop.f32.mrb[0].mxu0
      %v1953 = vadd.f32 %v1741, %v1952
      %v1954 = vpop.f32.mrb[0].mxu0
      %1955 = vmatprep.mubr.bf16.mxu0 0
      %1956 = vmatmul.mubr.bf16.gmra.mrb[0].mxu0 %v972
      %v1957 = vpop.f32.mrb[0].mxu0
      %v1958 = vadd.f32 %v1746, %v1957
      %v1959 = vpop.f32.mrb[0].mxu0
      %v1960 = vpop.f32.mrb[0].mxu0
      %v1961 = vadd.f32 %v1749, %v1960
      %v1962 = vpop.f32.mrb[0].mxu0
      %1963 = vmatprep.mubr.bf16.mxu0 0
      %1964 = vmatmul.mubr.bf16.gmra.mrb[0].mxu0 %v975
      %v1965 = vpop.f32.mrb[0].mxu0
      %v1966 = vadd.f32 %v1754, %v1965
      %v1967 = vpop.f32.mrb[0].mxu0
      %v1968 = vpop.f32.mrb[0].mxu0
      %v1969 = vadd.f32 %v1757, %v1968
      %v1970 = vpop.f32.mrb[0].mxu0
      %1971 = vmatprep.mubr.bf16.mxu0 0
      %1972 = vmatmul.mubr.bf16.gmra.mrb[0].mxu0 %v978
      %v1973 = vpop.f32.mrb[0].mxu0
      %v1974 = vadd.f32 %v1762, %v1973
      %v1975 = vpop.f32.mrb[0].mxu0
      %v1976 = vpop.f32.mrb[0].mxu0
      %v1977 = vadd.f32 %v1765, %v1976
      %v1978 = vpop.f32.mrb[0].mxu0
      %1979 = vmatprep.mubr.bf16.mxu0 0
      %1980 = vmatmul.mubr.bf16.gmra.mrb[0].mxu0 %v981
      %v1981 = vpop.f32.mrb[0].mxu0
      %v1982 = vadd.f32 %v1770, %v1981
      %v1983 = vpop.f32.mrb[0].mxu0
      %v1984 = vpop.f32.mrb[0].mxu0
      %v1985 = vadd.f32 %v1773, %v1984
      %v1986 = vpop.f32.mrb[0].mxu0
      %1987 = vmatprep.mubr.bf16.mxu0 0
      %1988 = vmatmul.mubr.bf16.gmra.mrb[0].mxu0 %v984
      %v1989 = vpop.f32.mrb[0].mxu0
      %v1990 = vadd.f32 %v1778, %v1989
      %v1991 = vpop.f32.mrb[0].mxu0
      %v1992 = vpop.f32.mrb[0].mxu0
      %v1993 = vadd.f32 %v1781, %v1992
      %v1994 = vpop.f32.mrb[0].mxu0
      %1995 = vmatprep.mubr.bf16.mxu0 0
      %1996 = vmatmul.mubr.bf16.gmra.mrb[0].mxu0 %v987
      %v1997 = vpop.f32.mrb[0].mxu0
      %v1998 = vadd.f32 %v1786, %v1997
      %v1999 = vpop.f32.mrb[0].mxu0
      %v2000 = vpop.f32.mrb[0].mxu0
      %v2001 = vadd.f32 %v1789, %v2000
      %v2002 = vpop.f32.mrb[0].mxu0
      %2003 = vmatprep.mubr.bf16.mxu0 0
      %2004 = vmatmul.mubr.bf16.gmra.mrb[0].mxu0 %v990
      %v2005 = vpop.f32.mrb[0].mxu0
      %v2006 = vadd.f32 %v1794, %v2005
      %v2007 = vpop.f32.mrb[0].mxu0
      %v2008 = vpop.f32.mrb[0].mxu0
      %v2009 = vadd.f32 %v1797, %v2008
      %v2010 = vpop.f32.mrb[0].mxu0
      %2011 = vmatprep.mubr.bf16.mxu0 0
      %2012 = vmatmul.mubr.bf16.gmra.mrb[0].mxu0 %v993
      %v2013 = vpop.f32.mrb[0].mxu0
      %v2014 = vadd.f32 %v1802, %v2013
      %v2015 = vpop.f32.mrb[0].mxu0
      %v2016 = vpop.f32.mrb[0].mxu0
      %v2017 = vadd.f32 %v1805, %v2016
      %v2018 = vpop.f32.mrb[0].mxu0
      %2019 = vmatprep.mubr.bf16.mxu0 0
      %2020 = vmatmul.mubr.bf16.gmra.mrb[0].mxu0 %v996
      %v2021 = vpop.f32.mrb[0].mxu0
      %v2022 = vadd.f32 %v1810, %v2021
      %v2023 = vpop.f32.mrb[0].mxu0
      %v2024 = vpop.f32.mrb[0].mxu0
      %v2025 = vadd.f32 %v1813, %v2024
      %v2026 = vpop.f32.mrb[0].mxu0
      %2027 = vmatprep.mubr.bf16.mxu0 0
      %2028 = vmatmul.mubr.bf16.gmra.mrb[0].mxu0 %v999
      %v2029 = vpop.f32.mrb[0].mxu0
      %v2030 = vadd.f32 %v1818, %v2029
      %v2031 = vpop.f32.mrb[0].mxu0
      %v2032 = vpop.f32.mrb[0].mxu0
      %v2033 = vadd.f32 %v1821, %v2032
      %v2034 = vpop.f32.mrb[0].mxu0
      %2035 = vmatprep.mubr.bf16.mxu0 0
      %2036 = vmatmul.mubr.bf16.gmra.mrb[0].mxu0 %v1002
      %v2037 = vpop.f32.mrb[0].mxu0
      %v2038 = vadd.f32 %v1826, %v2037
      %v2039 = vpop.f32.mrb[0].mxu0
      %v2040 = vpop.f32.mrb[0].mxu0
      %v2041 = vadd.f32 %v1829, %v2040
      %v2042 = vpop.f32.mrb[0].mxu0
      %2043 = vmatprep.mubr.bf16.mxu0 0
      %2044 = vmatmul.mubr.bf16.gmra.mrb[0].mxu0 %v1005
      %v2045 = vpop.f32.mrb[0].mxu0
      %v2046 = vadd.f32 %v1834, %v2045
      %v2047 = vpop.f32.mrb[0].mxu0
      %v2048 = vpop.f32.mrb[0].mxu0
      %v2049 = vadd.f32 %v1837, %v2048
      %v2050 = vpop.f32.mrb[0].mxu0
      %2051 = vmatprep.mubr.bf16.mxu0 0
      %2052 = vmatmul.mubr.bf16.gmra.mrb[0].mxu0 %v1008
      %v2053 = vpop.f32.mrb[0].mxu0
      %v2054 = vadd.f32 %v1842, %v2053
      %v2055 = vpop.f32.mrb[0].mxu0
      %v2056 = vpop.f32.mrb[0].mxu0
      %v2057 = vadd.f32 %v1845, %v2056
      %v2058 = vpop.f32.mrb[0].mxu0
      %2059 = vmatprep.mubr.bf16.mxu0 0
      %2060 = vmatmul.mubr.bf16.gmra.mrb[0].mxu0 %v1011
      %v2061 = vpop.f32.mrb[0].mxu0
      %v2062 = vadd.f32 %v1850, %v2061
      %v2063 = vpop.f32.mrb[0].mxu0
      %v2064 = vpop.f32.mrb[0].mxu0
      %v2065 = vadd.f32 %v1853, %v2064
      %v2066 = vpop.f32.mrb[0].mxu0
      %2067 = vmatprep.mubr.bf16.mxu0 0
      %2068 = vmatmul.mubr.bf16.gmra.mrb[0].mxu0 %v1014
      %v2069 = vpop.f32.mrb[0].mxu0
      %v2070 = vadd.f32 %v1858, %v2069
      %v2071 = vpop.f32.mrb[0].mxu0
      %v2072 = vpop.f32.mrb[0].mxu0
      %v2073 = vadd.f32 %v1861, %v2072
      %v2074 = vpop.f32.mrb[0].mxu0
      %2075 = vmatprep.mubr.bf16.mxu0 0
      %2076 = vmatmul.mubr.bf16.gmra.mrb[0].mxu0 %v1439
      %v2077 = vpop.f32.mrb[0].mxu0
      %v2078 = vadd.f32 %v1866, %v2077
      %v2079 = vpop.f32.mrb[0].mxu0
      %v2080 = vpop.f32.mrb[0].mxu0
      %v2081 = vadd.f32 %v1869, %v2080
      %v2082 = vpop.f32.mrb[0].mxu0
      %2083 = vmatprep.mubr.bf16.mxu0 0
      %2084 = vmatmul.mubr.bf16.gmra.mrb[0].mxu0 %v1442
      %v2085 = vpop.f32.mrb[0].mxu0
      %v2086 = vadd.f32 %v1874, %v2085
      %v2087 = vpop.f32.mrb[0].mxu0
      %v2088 = vpop.f32.mrb[0].mxu0
      %v2089 = vadd.f32 %v1877, %v2088
      %v2090 = vpop.f32.mrb[0].mxu0
      %2091 = vmatprep.mubr.bf16.mxu0 0
      %2092 = vmatmul.mubr.bf16.gmra.mrb[0].mxu0 %v1907
      %v2093 = vpop.f32.mrb[0].mxu0
      %v2094 = vadd.f32 %v1882, %v2093
      %v2095 = vpop.f32.mrb[0].mxu0
      %v2096 = vpop.f32.mrb[0].mxu0
      %v2097 = vadd.f32 %v1885, %v2096
      %v2098 = vpop.f32.mrb[0].mxu0
      %2099 = vmatprep.mubr.bf16.mxu0 0
      %2100 = vmatmul.mubr.bf16.gmra.mrb[0].mxu0 %v1910
      %v2101 = vpop.f32.mrb[0].mxu0
      %v2102 = vadd.f32 %v1890, %v2101
      %v2103 = vpop.f32.mrb[0].mxu0
      %v2104 = vpop.f32.mrb[0].mxu0
      %v2105 = vadd.f32 %v1893, %v2104
      %v2106 = vpop.f32.mrb[0].mxu0
      %2107 = vdwg.mxu0
      %v2108 = vadd.f32 %v1640, %v1950
      %v2109 = vadd.f32 %v1641, %v1953
      %v2110 = vadd.f32 %v1642, %v1958
      %v2111 = vadd.f32 %v1643, %v1961
      %v2112 = vadd.f32 %v1644, %v1966
      %v2113 = vadd.f32 %v1645, %v1969
      %v2114 = vadd.f32 %v1646, %v1974
      %v2115 = vadd.f32 %v1647, %v1977
      %v2116 = vadd.f32 %v1648, %v1982
      %v2117 = vadd.f32 %v1649, %v1985
      %v2118 = vadd.f32 %v1650, %v1990
      %v2119 = vadd.f32 %v1651, %v1993
      %v2120 = vadd.f32 %v1652, %v1998
      %v2121 = vadd.f32 %v1653, %v2001
      %v2122 = vadd.f32 %v1654, %v2006
      %v2123 = vadd.f32 %v1655, %v2009
      %v2124 = vadd.f32 %v1656, %v2014
      %v2125 = vadd.f32 %v1657, %v2017
      %v2126 = vadd.f32 %v1658, %v2022
      %v2127 = vadd.f32 %v1659, %v2025
      %v2128 = vadd.f32 %v1660, %v2030
      %v2129 = vadd.f32 %v1661, %v2033
      %v2130 = vadd.f32 %v1662, %v2038
      %v2131 = vadd.f32 %v1663, %v2041
      %v2132 = vadd.f32 %v1664, %v2046
      %v2133 = vadd.f32 %v1665, %v2049
      %v2134 = vadd.f32 %v1666, %v2054
      %v2135 = vadd.f32 %v1667, %v2057
      %v2136 = vadd.f32 %v1668, %v2062
      %v2137 = vadd.f32 %v1669, %v2065
      %v2138 = vadd.f32 %v1670, %v2070
      %v2139 = vadd.f32 %v1671, %v2073
      %v2140 = vadd.f32 %v1672, %v2078
      %v2141 = vadd.f32 %v1673, %v2081
      %v2142 = vadd.f32 %v1674, %v2086
      %v2143 = vadd.f32 %v1675, %v2089
      %v2144 = vadd.f32 %v1676, %v2094
      %v2145 = vadd.f32 %v1677, %v2097
      %v2146 = vadd.f32 %v1678, %v2102
      %v2147 = vadd.f32 %v1679, %v2105
      %v2148 = vrot.slane %v2108, 7
      %v2149 = vrot.slane %v2109, 7
      %v2150 = vrot.slane %v2110, 7
      %v2151 = vrot.slane %v2111, 7
      %v2152 = vrot.slane %v2112, 7
      %v2153 = vrot.slane %v2113, 7
      %v2154 = vrot.slane %v2114, 7
      %v2155 = vrot.slane %v2115, 7
      %v2156 = vrot.slane %v2116, 7
      %v2157 = vrot.slane %v2117, 7
      %v2158 = vrot.slane %v2118, 7
      %v2159 = vrot.slane %v2119, 7
      %v2160 = vrot.slane %v2120, 7
      %v2161 = vrot.slane %v2121, 7
      %v2162 = vrot.slane %v2122, 7
      %v2163 = vrot.slane %v2123, 7
      %v2164 = vrot.slane %v2124, 7
      %v2165 = vrot.slane %v2125, 7
      %v2166 = vrot.slane %v2126, 7
      %v2167 = vrot.slane %v2127, 7
      %v2168 = vrot.slane %v2128, 7
      %v2169 = vrot.slane %v2129, 7
      %v2170 = vrot.slane %v2130, 7
      %v2171 = vrot.slane %v2131, 7
      %v2172 = vrot.slane %v2132, 7
      %v2173 = vrot.slane %v2133, 7
      %v2174 = vrot.slane %v2134, 7
      %v2175 = vrot.slane %v2135, 7
      %v2176 = vrot.slane %v2136, 7
      %v2177 = vrot.slane %v2137, 7
      %v2178 = vrot.slane %v2138, 7
      %v2179 = vrot.slane %v2139, 7
      %v2180 = vrot.slane %v2140, 7
      %v2181 = vrot.slane %v2141, 7
      %v2182 = vrot.slane %v2142, 7
      %v2183 = vrot.slane %v2143, 7
      %v2184 = vrot.slane %v2144, 7
      %v2185 = vrot.slane %v2145, 7
      %v2186 = vrot.slane %v2146, 7
      %v2187 = vrot.slane %v2147, 7
      %v2188 = vlaneseq
      %v2189 = vshrl.u32 %v2188, 7
      %vm2190 = vcmp.lt.s32.totalorder %v2189, 1
      %v2191 = vsel %vm2190, %v2186, %v2187
      %v2192 = vsel %vm2190, %v2185, %v2186
      %v2193 = vsel %vm2190, %v2184, %v2185
      %v2194 = vsel %vm2190, %v2183, %v2184
      %v2195 = vsel %vm2190, %v2182, %v2183
      %v2196 = vsel %vm2190, %v2181, %v2182
      %v2197 = vsel %vm2190, %v2180, %v2181
      %v2198 = vsel %vm2190, %v2179, %v2180
      %v2199 = vsel %vm2190, %v2178, %v2179
      %v2200 = vsel %vm2190, %v2177, %v2178
      %v2201 = vsel %vm2190, %v2176, %v2177
      %v2202 = vsel %vm2190, %v2175, %v2176
      %v2203 = vsel %vm2190, %v2174, %v2175
      %v2204 = vsel %vm2190, %v2173, %v2174
      %v2205 = vsel %vm2190, %v2172, %v2173
      %v2206 = vsel %vm2190, %v2171, %v2172
      %v2207 = vsel %vm2190, %v2170, %v2171
      %v2208 = vsel %vm2190, %v2169, %v2170
      %v2209 = vsel %vm2190, %v2168, %v2169
      %v2210 = vsel %vm2190, %v2167, %v2168
      %v2211 = vsel %vm2190, %v2166, %v2167
      %v2212 = vsel %vm2190, %v2165, %v2166
      %v2213 = vsel %vm2190, %v2164, %v2165
      %v2214 = vsel %vm2190, %v2163, %v2164
      %v2215 = vsel %vm2190, %v2162, %v2163
      %v2216 = vsel %vm2190, %v2161, %v2162
      %v2217 = vsel %vm2190, %v2160, %v2161
      %v2218 = vsel %vm2190, %v2159, %v2160
      %v2219 = vsel %vm2190, %v2158, %v2159
      %v2220 = vsel %vm2190, %v2157, %v2158
      %v2221 = vsel %vm2190, %v2156, %v2157
      %v2222 = vsel %vm2190, %v2155, %v2156
      %v2223 = vsel %vm2190, %v2154, %v2155
      %v2224 = vsel %vm2190, %v2153, %v2154
      %v2225 = vsel %vm2190, %v2152, %v2153
      %v2226 = vsel %vm2190, %v2151, %v2152
      %v2227 = vsel %vm2190, %v2150, %v2151
      %v2228 = vsel %vm2190, %v2149, %v2150
      %v2229 = vsel %vm2190, %v2148, %v2149
      %v2230 = vsel %vm2190, %v2187, %v2148
      %2231 = vst [vmem:[#allocation2] sm:$0xff] %v2230
      %2232 = vst [vmem:[#allocation2 + $0x8] sm:$0xff] %v2229
      %2233 = vst [vmem:[#allocation2 + $0x10] sm:$0xff] %v2228
      %2234 = vst [vmem:[#allocation2 + $0x18] sm:$0xff] %v2227
      %2235 = vst [vmem:[#allocation2 + $0x20] sm:$0xff] %v2226
      %2236 = vst [vmem:[#allocation2 + $0x28] sm:$0xff] %v2225
      %2237 = vst [vmem:[#allocation2 + $0x30] sm:$0xff] %v2224
      %2238 = vst [vmem:[#allocation2 + $0x38] sm:$0xff] %v2223
      %2239 = vst [vmem:[#allocation2 + $0x40] sm:$0xff] %v2222
      %2240 = vst [vmem:[#allocation2 + $0x48] sm:$0xff] %v2221
      %2241 = vst [vmem:[#allocation2 + $0x50] sm:$0xff] %v2220
      %2242 = vst [vmem:[#allocation2 + $0x58] sm:$0xff] %v2219
      %2243 = vst [vmem:[#allocation2 + $0x60] sm:$0xff] %v2218
      %2244 = vst [vmem:[#allocation2 + $0x68] sm:$0xff] %v2217
      %2245 = vst [vmem:[#allocation2 + $0x70] sm:$0xff] %v2216
      %2246 = vst [vmem:[#allocation2 + $0x78] sm:$0xff] %v2215
      %2247 = vst [vmem:[#allocation2 + $0x80] sm:$0xff] %v2214
      %2248 = vst [vmem:[#allocation2 + $0x88] sm:$0xff] %v2213
      %2249 = vst [vmem:[#allocation2 + $0x90] sm:$0xff] %v2212
      %2250 = vst [vmem:[#allocation2 + $0x98] sm:$0xff] %v2211
      %2251 = vst [vmem:[#allocation2 + $0xa0] sm:$0xff] %v2210
      %2252 = vst [vmem:[#allocation2 + $0xa8] sm:$0xff] %v2209
      %2253 = vst [vmem:[#allocation2 + $0xb0] sm:$0xff] %v2208
      %2254 = vst [vmem:[#allocation2 + $0xb8] sm:$0xff] %v2207
      %2255 = vst [vmem:[#allocation2 + $0xc0] sm:$0xff] %v2206
      %2256 = vst [vmem:[#allocation2 + $0xc8] sm:$0xff] %v2205
      %2257 = vst [vmem:[#allocation2 + $0xd0] sm:$0xff] %v2204
      %2258 = vst [vmem:[#allocation2 + $0xd8] sm:$0xff] %v2203
      %2259 = vst [vmem:[#allocation2 + $0xe0] sm:$0xff] %v2202
      %2260 = vst [vmem:[#allocation2 + $0xe8] sm:$0xff] %v2201
      %2261 = vst [vmem:[#allocation2 + $0xf0] sm:$0xff] %v2200
      %2262 = vst [vmem:[#allocation2 + $0xf8] sm:$0xff] %v2199
      %2263 = vst [vmem:[#allocation2 + $0x100] sm:$0xff] %v2198
      %2264 = vst [vmem:[#allocation2 + $0x108] sm:$0xff] %v2197
      %2265 = vst [vmem:[#allocation2 + $0x110] sm:$0xff] %v2196
      %2266 = vst [vmem:[#allocation2 + $0x118] sm:$0xff] %v2195
      %2267 = vst [vmem:[#allocation2 + $0x120] sm:$0xff] %v2194
      %2268 = vst [vmem:[#allocation2 + $0x128] sm:$0xff] %v2193
      %2269 = vst [vmem:[#allocation2 + $0x130] sm:$0xff] %v2192
      %2270 = vst [vmem:[#allocation2 + $0x138] sm:$0xff] %v2191
      %s2271 = scalar_lea.vmem %s3, 2
      %v2272 = vld [vmem:[%s2271] sm:$0x3]
      %s2273 = scalar_lea.vmem %s4, 2
      %v2274 = vld [vmem:[%s2273] sm:$0x3]
      %v2276 = vsel %vm659, %v2274, 0
      %2278 = vmatprep.subr.bf16.mxu0 0
      %2279 = vmatpush1.bf16.msra.mxu0 %v2276
      %2280 = vmatprep.subr.bf16.mxu0 0
      %2281 = vmatpush1.bf16.msra.mxu0 0
      %2282 = vmatprep.subr.bf16.mxu0 0
      %2283 = vmatpush1.bf16.msra.mxu0 0
      %2284 = vmatprep.subr.bf16.mxu0 0
      %2285 = vmatpush1.bf16.msra.mxu0 0
      %2286 = vmatprep.subr.bf16.mxu0 0
      %2287 = vmatpush1.bf16.msra.mxu0 0
      %2288 = vmatprep.subr.bf16.mxu0 0
      %2289 = vmatpush1.bf16.msra.mxu0 0
      %2290 = vmatprep.subr.bf16.mxu0 0
      %2291 = vmatpush1.bf16.msra.mxu0 0
      %2292 = vmatprep.subr.bf16.mxu0 0
      %2293 = vmatpush1.bf16.msra.mxu0 0
      %2294 = vmatprep.subr.bf16.mxu0 0
      %2295 = vmatpush1.bf16.msra.mxu0 0
      %2296 = vmatprep.subr.bf16.mxu0 0
      %2297 = vmatpush1.bf16.msra.mxu0 0
      %2298 = vmatprep.subr.bf16.mxu0 0
      %2299 = vmatpush1.bf16.msra.mxu0 0
      %2300 = vmatprep.subr.bf16.mxu0 0
      %2301 = vmatpush1.bf16.msra.mxu0 0
      %2302 = vmatprep.subr.bf16.mxu0 0
      %2303 = vmatpush1.bf16.msra.mxu0 0
      %2304 = vmatprep.subr.bf16.mxu0 0
      %2305 = vmatpush1.bf16.msra.mxu0 0
      %2306 = vmatprep.subr.bf16.mxu0 0
      %2307 = vmatpush1.bf16.msra.mxu0 0
      %2308 = vmatprep.subr.bf16.mxu0 0
      %2309 = vmatpush1.bf16.msra.mxu0 0
      %2310 = vmatprep.mubr.bf16.mxu0 0
      %2311 = vmatmul.mubr.bf16.gmra.mrb[0].mxu0 %v600
      %v2312 = vpop.f32.mrb[0].mxu0
      %v2313 = vadd.f32 0.0, %v2312
      %v2314 = vpop.f32.mrb[0].mxu0
      %v2315 = vpop.f32.mrb[0].mxu0
      %v2316 = vadd.f32 0.0, %v2315
      %v2317 = vpop.f32.mrb[0].mxu0
      %2318 = vmatprep.mubr.bf16.mxu0 0
      %2319 = vmatmul.mubr.bf16.gmra.mrb[0].mxu0 %v603
      %v2320 = vpop.f32.mrb[0].mxu0
      %v2321 = vadd.f32 0.0, %v2320
      %v2322 = vpop.f32.mrb[0].mxu0
      %v2323 = vpop.f32.mrb[0].mxu0
      %v2324 = vadd.f32 0.0, %v2323
      %v2325 = vpop.f32.mrb[0].mxu0
      %2326 = vmatprep.mubr.bf16.mxu0 0
      %2327 = vmatmul.mubr.bf16.gmra.mrb[0].mxu0 %v606
      %v2328 = vpop.f32.mrb[0].mxu0
      %v2329 = vadd.f32 0.0, %v2328
      %v2330 = vpop.f32.mrb[0].mxu0
      %v2331 = vpop.f32.mrb[0].mxu0
      %v2332 = vadd.f32 0.0, %v2331
      %v2333 = vpop.f32.mrb[0].mxu0
      %2334 = vmatprep.mubr.bf16.mxu0 0
      %2335 = vmatmul.mubr.bf16.gmra.mrb[0].mxu0 %v609
      %v2336 = vpop.f32.mrb[0].mxu0
      %v2337 = vadd.f32 0.0, %v2336
      %v2338 = vpop.f32.mrb[0].mxu0
      %v2339 = vpop.f32.mrb[0].mxu0
      %v2340 = vadd.f32 0.0, %v2339
      %v2341 = vpop.f32.mrb[0].mxu0
      %2342 = vmatprep.mubr.bf16.mxu0 0
      %2343 = vmatmul.mubr.bf16.gmra.mrb[0].mxu0 %v612
      %v2344 = vpop.f32.mrb[0].mxu0
      %v2345 = vadd.f32 0.0, %v2344
      %v2346 = vpop.f32.mrb[0].mxu0
      %v2347 = vpop.f32.mrb[0].mxu0
      %v2348 = vadd.f32 0.0, %v2347
      %v2349 = vpop.f32.mrb[0].mxu0
      %2350 = vmatprep.mubr.bf16.mxu0 0
      %2351 = vmatmul.mubr.bf16.gmra.mrb[0].mxu0 %v615
      %v2352 = vpop.f32.mrb[0].mxu0
      %v2353 = vadd.f32 0.0, %v2352
      %v2354 = vpop.f32.mrb[0].mxu0
      %v2355 = vpop.f32.mrb[0].mxu0
      %v2356 = vadd.f32 0.0, %v2355
      %v2357 = vpop.f32.mrb[0].mxu0
      %2358 = vmatprep.mubr.bf16.mxu0 0
      %2359 = vmatmul.mubr.bf16.gmra.mrb[0].mxu0 %v618
      %v2360 = vpop.f32.mrb[0].mxu0
      %v2361 = vadd.f32 0.0, %v2360
      %v2362 = vpop.f32.mrb[0].mxu0
      %v2363 = vpop.f32.mrb[0].mxu0
      %v2364 = vadd.f32 0.0, %v2363
      %v2365 = vpop.f32.mrb[0].mxu0
      %2366 = vmatprep.mubr.bf16.mxu0 0
      %2367 = vmatmul.mubr.bf16.gmra.mrb[0].mxu0 %v621
      %v2368 = vpop.f32.mrb[0].mxu0
      %v2369 = vadd.f32 0.0, %v2368
      %v2370 = vpop.f32.mrb[0].mxu0
      %v2371 = vpop.f32.mrb[0].mxu0
      %v2372 = vadd.f32 0.0, %v2371
      %v2373 = vpop.f32.mrb[0].mxu0
      %2374 = vmatprep.mubr.bf16.mxu0 0
      %2375 = vmatmul.mubr.bf16.gmra.mrb[0].mxu0 %v624
      %v2376 = vpop.f32.mrb[0].mxu0
      %v2377 = vadd.f32 0.0, %v2376
      %v2378 = vpop.f32.mrb[0].mxu0
      %v2379 = vpop.f32.mrb[0].mxu0
      %v2380 = vadd.f32 0.0, %v2379
      %v2381 = vpop.f32.mrb[0].mxu0
      %2382 = vmatprep.mubr.bf16.mxu0 0
      %2383 = vmatmul.mubr.bf16.gmra.mrb[0].mxu0 %v627
      %v2384 = vpop.f32.mrb[0].mxu0
      %v2385 = vadd.f32 0.0, %v2384
      %v2386 = vpop.f32.mrb[0].mxu0
      %v2387 = vpop.f32.mrb[0].mxu0
      %v2388 = vadd.f32 0.0, %v2387
      %v2389 = vpop.f32.mrb[0].mxu0
      %2390 = vmatprep.mubr.bf16.mxu0 0
      %2391 = vmatmul.mubr.bf16.gmra.mrb[0].mxu0 %v630
      %v2392 = vpop.f32.mrb[0].mxu0
      %v2393 = vadd.f32 0.0, %v2392
      %v2394 = vpop.f32.mrb[0].mxu0
      %v2395 = vpop.f32.mrb[0].mxu0
      %v2396 = vadd.f32 0.0, %v2395
      %v2397 = vpop.f32.mrb[0].mxu0
      %2398 = vmatprep.mubr.bf16.mxu0 0
      %2399 = vmatmul.mubr.bf16.gmra.mrb[0].mxu0 %v633
      %v2400 = vpop.f32.mrb[0].mxu0
      %v2401 = vadd.f32 0.0, %v2400
      %v2402 = vpop.f32.mrb[0].mxu0
      %v2403 = vpop.f32.mrb[0].mxu0
      %v2404 = vadd.f32 0.0, %v2403
      %v2405 = vpop.f32.mrb[0].mxu0
      %2406 = vmatprep.mubr.bf16.mxu0 0
      %2407 = vmatmul.mubr.bf16.gmra.mrb[0].mxu0 %v636
      %v2408 = vpop.f32.mrb[0].mxu0
      %v2409 = vadd.f32 0.0, %v2408
      %v2410 = vpop.f32.mrb[0].mxu0
      %v2411 = vpop.f32.mrb[0].mxu0
      %v2412 = vadd.f32 0.0, %v2411
      %v2413 = vpop.f32.mrb[0].mxu0
      %2414 = vmatprep.mubr.bf16.mxu0 0
      %2415 = vmatmul.mubr.bf16.gmra.mrb[0].mxu0 %v639
      %v2416 = vpop.f32.mrb[0].mxu0
      %v2417 = vadd.f32 0.0, %v2416
      %v2418 = vpop.f32.mrb[0].mxu0
      %v2419 = vpop.f32.mrb[0].mxu0
      %v2420 = vadd.f32 0.0, %v2419
      %v2421 = vpop.f32.mrb[0].mxu0
      %2422 = vmatprep.mubr.bf16.mxu0 0
      %2423 = vmatmul.mubr.bf16.gmra.mrb[0].mxu0 %v642
      %v2424 = vpop.f32.mrb[0].mxu0
      %v2425 = vadd.f32 0.0, %v2424
      %v2426 = vpop.f32.mrb[0].mxu0
      %v2427 = vpop.f32.mrb[0].mxu0
      %v2428 = vadd.f32 0.0, %v2427
      %v2429 = vpop.f32.mrb[0].mxu0
      %2430 = vmatprep.mubr.bf16.mxu0 0
      %2431 = vmatmul.mubr.bf16.gmra.mrb[0].mxu0 %v645
      %v2432 = vpop.f32.mrb[0].mxu0
      %v2433 = vadd.f32 0.0, %v2432
      %v2434 = vpop.f32.mrb[0].mxu0
      %v2435 = vpop.f32.mrb[0].mxu0
      %v2436 = vadd.f32 0.0, %v2435
      %v2437 = vpop.f32.mrb[0].mxu0
      %2438 = vmatprep.mubr.bf16.mxu0 0
      %2439 = vmatmul.mubr.bf16.gmra.mrb[0].mxu0 %v648
      %v2440 = vpop.f32.mrb[0].mxu0
      %v2441 = vadd.f32 0.0, %v2440
      %v2442 = vpop.f32.mrb[0].mxu0
      %v2443 = vpop.f32.mrb[0].mxu0
      %v2444 = vadd.f32 0.0, %v2443
      %v2445 = vpop.f32.mrb[0].mxu0
      %2446 = vmatprep.mubr.bf16.mxu0 0
      %2447 = vmatmul.mubr.bf16.gmra.mrb[0].mxu0 %v651
      %v2448 = vpop.f32.mrb[0].mxu0
      %v2449 = vadd.f32 0.0, %v2448
      %v2450 = vpop.f32.mrb[0].mxu0
      %v2451 = vpop.f32.mrb[0].mxu0
      %v2452 = vadd.f32 0.0, %v2451
      %v2453 = vpop.f32.mrb[0].mxu0
      %2454 = vmatprep.mubr.bf16.mxu0 0
      %2455 = vmatmul.mubr.bf16.gmra.mrb[0].mxu0 %v654
      %v2456 = vpop.f32.mrb[0].mxu0
      %v2457 = vadd.f32 0.0, %v2456
      %v2458 = vpop.f32.mrb[0].mxu0
      %v2459 = vpop.f32.mrb[0].mxu0
      %v2460 = vadd.f32 0.0, %v2459
      %v2461 = vpop.f32.mrb[0].mxu0
      %2462 = vmatprep.mubr.bf16.mxu0 0
      %2463 = vmatmul.mubr.bf16.gmra.mrb[0].mxu0 %v657
      %v2464 = vpop.f32.mrb[0].mxu0
      %v2465 = vadd.f32 0.0, %v2464
      %v2466 = vpop.f32.mrb[0].mxu0
      %v2467 = vpop.f32.mrb[0].mxu0
      %v2468 = vadd.f32 0.0, %v2467
      %v2469 = vpop.f32.mrb[0].mxu0
      %2470 = vdwg.mxu0
      %v2472 = vsel %vm659, %v2272, 0
      %2474 = vmatprep.subr.bf16.mxu0 0
      %2475 = vmatpush1.bf16.msra.mxu0 %v2472
      %2476 = vmatprep.subr.bf16.mxu0 0
      %2477 = vmatpush1.bf16.msra.mxu0 0
      %2478 = vmatprep.subr.bf16.mxu0 0
      %2479 = vmatpush1.bf16.msra.mxu0 0
      %2480 = vmatprep.subr.bf16.mxu0 0
      %2481 = vmatpush1.bf16.msra.mxu0 0
      %2482 = vmatprep.subr.bf16.mxu0 0
      %2483 = vmatpush1.bf16.msra.mxu0 0
      %2484 = vmatprep.subr.bf16.mxu0 0
      %2485 = vmatpush1.bf16.msra.mxu0 0
      %2486 = vmatprep.subr.bf16.mxu0 0
      %2487 = vmatpush1.bf16.msra.mxu0 0
      %2488 = vmatprep.subr.bf16.mxu0 0
      %2489 = vmatpush1.bf16.msra.mxu0 0
      %2490 = vmatprep.subr.bf16.mxu0 0
      %2491 = vmatpush1.bf16.msra.mxu0 0
      %2492 = vmatprep.subr.bf16.mxu0 0
      %2493 = vmatpush1.bf16.msra.mxu0 0
      %2494 = vmatprep.subr.bf16.mxu0 0
      %2495 = vmatpush1.bf16.msra.mxu0 0
      %2496 = vmatprep.subr.bf16.mxu0 0
      %2497 = vmatpush1.bf16.msra.mxu0 0
      %2498 = vmatprep.subr.bf16.mxu0 0
      %2499 = vmatpush1.bf16.msra.mxu0 0
      %2500 = vmatprep.subr.bf16.mxu0 0
      %2501 = vmatpush1.bf16.msra.mxu0 0
      %2502 = vmatprep.subr.bf16.mxu0 0
      %2503 = vmatpush1.bf16.msra.mxu0 0
      %2504 = vmatprep.subr.bf16.mxu0 0
      %2505 = vmatpush1.bf16.msra.mxu0 0
      %2506 = vmatprep.mubr.bf16.mxu0 0
      %2507 = vmatmul.mubr.bf16.gmra.mrb[0].mxu0 %v957
      %v2508 = vpop.f32.mrb[0].mxu0
      %v2509 = vadd.f32 %v2313, %v2508
      %v2510 = vpop.f32.mrb[0].mxu0
      %v2511 = vpop.f32.mrb[0].mxu0
      %v2512 = vadd.f32 %v2316, %v2511
      %v2513 = vpop.f32.mrb[0].mxu0
      %2514 = vmatprep.mubr.bf16.mxu0 0
      %2515 = vmatmul.mubr.bf16.gmra.mrb[0].mxu0 %v960
      %v2516 = vpop.f32.mrb[0].mxu0
      %v2517 = vadd.f32 %v2321, %v2516
      %v2518 = vpop.f32.mrb[0].mxu0
      %v2519 = vpop.f32.mrb[0].mxu0
      %v2520 = vadd.f32 %v2324, %v2519
      %v2521 = vpop.f32.mrb[0].mxu0
      %2522 = vmatprep.mubr.bf16.mxu0 0
      %2523 = vmatmul.mubr.bf16.gmra.mrb[0].mxu0 %v963
      %v2524 = vpop.f32.mrb[0].mxu0
      %v2525 = vadd.f32 %v2329, %v2524
      %v2526 = vpop.f32.mrb[0].mxu0
      %v2527 = vpop.f32.mrb[0].mxu0
      %v2528 = vadd.f32 %v2332, %v2527
      %v2529 = vpop.f32.mrb[0].mxu0
      %2530 = vmatprep.mubr.bf16.mxu0 0
      %2531 = vmatmul.mubr.bf16.gmra.mrb[0].mxu0 %v966
      %v2532 = vpop.f32.mrb[0].mxu0
      %v2533 = vadd.f32 %v2337, %v2532
      %v2534 = vpop.f32.mrb[0].mxu0
      %v2535 = vpop.f32.mrb[0].mxu0
      %v2536 = vadd.f32 %v2340, %v2535
      %v2537 = vpop.f32.mrb[0].mxu0
      %2538 = vmatprep.mubr.bf16.mxu0 0
      %2539 = vmatmul.mubr.bf16.gmra.mrb[0].mxu0 %v969
      %v2540 = vpop.f32.mrb[0].mxu0
      %v2541 = vadd.f32 %v2345, %v2540
      %v2542 = vpop.f32.mrb[0].mxu0
      %v2543 = vpop.f32.mrb[0].mxu0
      %v2544 = vadd.f32 %v2348, %v2543
      %v2545 = vpop.f32.mrb[0].mxu0
      %2546 = vmatprep.mubr.bf16.mxu0 0
      %2547 = vmatmul.mubr.bf16.gmra.mrb[0].mxu0 %v972
      %v2548 = vpop.f32.mrb[0].mxu0
      %v2549 = vadd.f32 %v2353, %v2548
      %v2550 = vpop.f32.mrb[0].mxu0
      %v2551 = vpop.f32.mrb[0].mxu0
      %v2552 = vadd.f32 %v2356, %v2551
      %v2553 = vpop.f32.mrb[0].mxu0
      %2554 = vmatprep.mubr.bf16.mxu0 0
      %2555 = vmatmul.mubr.bf16.gmra.mrb[0].mxu0 %v975
      %v2556 = vpop.f32.mrb[0].mxu0
      %v2557 = vadd.f32 %v2361, %v2556
      %v2558 = vpop.f32.mrb[0].mxu0
      %v2559 = vpop.f32.mrb[0].mxu0
      %v2560 = vadd.f32 %v2364, %v2559
      %v2561 = vpop.f32.mrb[0].mxu0
      %2562 = vmatprep.mubr.bf16.mxu0 0
      %2563 = vmatmul.mubr.bf16.gmra.mrb[0].mxu0 %v978
      %v2564 = vpop.f32.mrb[0].mxu0
      %v2565 = vadd.f32 %v2369, %v2564
      %v2566 = vpop.f32.mrb[0].mxu0
      %v2567 = vpop.f32.mrb[0].mxu0
      %v2568 = vadd.f32 %v2372, %v2567
      %v2569 = vpop.f32.mrb[0].mxu0
      %2570 = vmatprep.mubr.bf16.mxu0 0
      %2571 = vmatmul.mubr.bf16.gmra.mrb[0].mxu0 %v981
      %v2572 = vpop.f32.mrb[0].mxu0
      %v2573 = vadd.f32 %v2377, %v2572
      %v2574 = vpop.f32.mrb[0].mxu0
      %v2575 = vpop.f32.mrb[0].mxu0
      %v2576 = vadd.f32 %v2380, %v2575
      %v2577 = vpop.f32.mrb[0].mxu0
      %2578 = vmatprep.mubr.bf16.mxu0 0
      %2579 = vmatmul.mubr.bf16.gmra.mrb[0].mxu0 %v984
      %v2580 = vpop.f32.mrb[0].mxu0
      %v2581 = vadd.f32 %v2385, %v2580
      %v2582 = vpop.f32.mrb[0].mxu0
      %v2583 = vpop.f32.mrb[0].mxu0
      %v2584 = vadd.f32 %v2388, %v2583
      %v2585 = vpop.f32.mrb[0].mxu0
      %2586 = vmatprep.mubr.bf16.mxu0 0
      %2587 = vmatmul.mubr.bf16.gmra.mrb[0].mxu0 %v987
      %v2588 = vpop.f32.mrb[0].mxu0
      %v2589 = vadd.f32 %v2393, %v2588
      %v2590 = vpop.f32.mrb[0].mxu0
      %v2591 = vpop.f32.mrb[0].mxu0
      %v2592 = vadd.f32 %v2396, %v2591
      %v2593 = vpop.f32.mrb[0].mxu0
      %2594 = vmatprep.mubr.bf16.mxu0 0
      %2595 = vmatmul.mubr.bf16.gmra.mrb[0].mxu0 %v990
      %v2596 = vpop.f32.mrb[0].mxu0
      %v2597 = vadd.f32 %v2401, %v2596
      %v2598 = vpop.f32.mrb[0].mxu0
      %v2599 = vpop.f32.mrb[0].mxu0
      %v2600 = vadd.f32 %v2404, %v2599
      %v2601 = vpop.f32.mrb[0].mxu0
      %2602 = vmatprep.mubr.bf16.mxu0 0
      %2603 = vmatmul.mubr.bf16.gmra.mrb[0].mxu0 %v993
      %v2604 = vpop.f32.mrb[0].mxu0
      %v2605 = vadd.f32 %v2409, %v2604
      %v2606 = vpop.f32.mrb[0].mxu0
      %v2607 = vpop.f32.mrb[0].mxu0
      %v2608 = vadd.f32 %v2412, %v2607
      %v2609 = vpop.f32.mrb[0].mxu0
      %2610 = vmatprep.mubr.bf16.mxu0 0
      %2611 = vmatmul.mubr.bf16.gmra.mrb[0].mxu0 %v996
      %v2612 = vpop.f32.mrb[0].mxu0
      %v2613 = vadd.f32 %v2417, %v2612
      %v2614 = vpop.f32.mrb[0].mxu0
      %v2615 = vpop.f32.mrb[0].mxu0
      %v2616 = vadd.f32 %v2420, %v2615
      %v2617 = vpop.f32.mrb[0].mxu0
      %2618 = vmatprep.mubr.bf16.mxu0 0
      %2619 = vmatmul.mubr.bf16.gmra.mrb[0].mxu0 %v999
      %v2620 = vpop.f32.mrb[0].mxu0
      %v2621 = vadd.f32 %v2425, %v2620
      %v2622 = vpop.f32.mrb[0].mxu0
      %v2623 = vpop.f32.mrb[0].mxu0
      %v2624 = vadd.f32 %v2428, %v2623
      %v2625 = vpop.f32.mrb[0].mxu0
      %2626 = vmatprep.mubr.bf16.mxu0 0
      %2627 = vmatmul.mubr.bf16.gmra.mrb[0].mxu0 %v1002
      %v2628 = vpop.f32.mrb[0].mxu0
      %v2629 = vadd.f32 %v2433, %v2628
      %v2630 = vpop.f32.mrb[0].mxu0
      %v2631 = vpop.f32.mrb[0].mxu0
      %v2632 = vadd.f32 %v2436, %v2631
      %v2633 = vpop.f32.mrb[0].mxu0
      %2634 = vmatprep.mubr.bf16.mxu0 0
      %2635 = vmatmul.mubr.bf16.gmra.mrb[0].mxu0 %v1005
      %v2636 = vpop.f32.mrb[0].mxu0
      %v2637 = vadd.f32 %v2441, %v2636
      %v2638 = vpop.f32.mrb[0].mxu0
      %v2639 = vpop.f32.mrb[0].mxu0
      %v2640 = vadd.f32 %v2444, %v2639
      %v2641 = vpop.f32.mrb[0].mxu0
      %2642 = vmatprep.mubr.bf16.mxu0 0
      %2643 = vmatmul.mubr.bf16.gmra.mrb[0].mxu0 %v1008
      %v2644 = vpop.f32.mrb[0].mxu0
      %v2645 = vadd.f32 %v2449, %v2644
      %v2646 = vpop.f32.mrb[0].mxu0
      %v2647 = vpop.f32.mrb[0].mxu0
      %v2648 = vadd.f32 %v2452, %v2647
      %v2649 = vpop.f32.mrb[0].mxu0
      %2650 = vmatprep.mubr.bf16.mxu0 0
      %2651 = vmatmul.mubr.bf16.gmra.mrb[0].mxu0 %v1011
      %v2652 = vpop.f32.mrb[0].mxu0
      %v2653 = vadd.f32 %v2457, %v2652
      %v2654 = vpop.f32.mrb[0].mxu0
      %v2655 = vpop.f32.mrb[0].mxu0
      %v2656 = vadd.f32 %v2460, %v2655
      %v2657 = vpop.f32.mrb[0].mxu0
      %2658 = vmatprep.mubr.bf16.mxu0 0
      %2659 = vmatmul.mubr.bf16.gmra.mrb[0].mxu0 %v1014
      %v2660 = vpop.f32.mrb[0].mxu0
      %v2661 = vadd.f32 %v2465, %v2660
      %v2662 = vpop.f32.mrb[0].mxu0
      %v2663 = vpop.f32.mrb[0].mxu0
      %v2664 = vadd.f32 %v2468, %v2663
      %v2665 = vpop.f32.mrb[0].mxu0
      %2666 = vdwg.mxu0
      %s2667 = scalar_lea.vmem %s3, 8
      %v2668 = vld [vmem:[%s2667] sm:$0x3]
      %s2669 = scalar_lea.vmem %s4, 8
      %v2670 = vld [vmem:[%s2669] sm:$0x3]
      %v2672 = vsel %vm659, %v2670, 0
      %2674 = vmatprep.subr.bf16.mxu0 0
      %2675 = vmatpush1.bf16.msra.mxu0 %v2672
      %2676 = vmatprep.subr.bf16.mxu0 0
      %2677 = vmatpush1.bf16.msra.mxu0 0
      %2678 = vmatprep.subr.bf16.mxu0 0
      %2679 = vmatpush1.bf16.msra.mxu0 0
      %2680 = vmatprep.subr.bf16.mxu0 0
      %2681 = vmatpush1.bf16.msra.mxu0 0
      %2682 = vmatprep.subr.bf16.mxu0 0
      %2683 = vmatpush1.bf16.msra.mxu0 0
      %2684 = vmatprep.subr.bf16.mxu0 0
      %2685 = vmatpush1.bf16.msra.mxu0 0
      %2686 = vmatprep.subr.bf16.mxu0 0
      %2687 = vmatpush1.bf16.msra.mxu0 0
      %2688 = vmatprep.subr.bf16.mxu0 0
      %2689 = vmatpush1.bf16.msra.mxu0 0
      %2690 = vmatprep.subr.bf16.mxu0 0
      %2691 = vmatpush1.bf16.msra.mxu0 0
      %2692 = vmatprep.subr.bf16.mxu0 0
      %2693 = vmatpush1.bf16.msra.mxu0 0
      %2694 = vmatprep.subr.bf16.mxu0 0
      %2695 = vmatpush1.bf16.msra.mxu0 0
      %2696 = vmatprep.subr.bf16.mxu0 0
      %2697 = vmatpush1.bf16.msra.mxu0 0
      %2698 = vmatprep.subr.bf16.mxu0 0
      %2699 = vmatpush1.bf16.msra.mxu0 0
      %2700 = vmatprep.subr.bf16.mxu0 0
      %2701 = vmatpush1.bf16.msra.mxu0 0
      %2702 = vmatprep.subr.bf16.mxu0 0
      %2703 = vmatpush1.bf16.msra.mxu0 0
      %2704 = vmatprep.subr.bf16.mxu0 0
      %2705 = vmatpush1.bf16.msra.mxu0 0
      %2706 = vmatprep.mubr.bf16.mxu0 0
      %2707 = vmatmul.mubr.bf16.gmra.mrb[0].mxu0 %v606
      %v2708 = vpop.f32.mrb[0].mxu0
      %v2709 = vadd.f32 0.0, %v2708
      %v2710 = vpop.f32.mrb[0].mxu0
      %v2711 = vpop.f32.mrb[0].mxu0
      %v2712 = vadd.f32 0.0, %v2711
      %v2713 = vpop.f32.mrb[0].mxu0
      %2714 = vmatprep.mubr.bf16.mxu0 0
      %2715 = vmatmul.mubr.bf16.gmra.mrb[0].mxu0 %v609
      %v2716 = vpop.f32.mrb[0].mxu0
      %v2717 = vadd.f32 0.0, %v2716
      %v2718 = vpop.f32.mrb[0].mxu0
      %v2719 = vpop.f32.mrb[0].mxu0
      %v2720 = vadd.f32 0.0, %v2719
      %v2721 = vpop.f32.mrb[0].mxu0
      %2722 = vmatprep.mubr.bf16.mxu0 0
      %2723 = vmatmul.mubr.bf16.gmra.mrb[0].mxu0 %v612
      %v2724 = vpop.f32.mrb[0].mxu0
      %v2725 = vadd.f32 0.0, %v2724
      %v2726 = vpop.f32.mrb[0].mxu0
      %v2727 = vpop.f32.mrb[0].mxu0
      %v2728 = vadd.f32 0.0, %v2727
      %v2729 = vpop.f32.mrb[0].mxu0
      %2730 = vmatprep.mubr.bf16.mxu0 0
      %2731 = vmatmul.mubr.bf16.gmra.mrb[0].mxu0 %v615
      %v2732 = vpop.f32.mrb[0].mxu0
      %v2733 = vadd.f32 0.0, %v2732
      %v2734 = vpop.f32.mrb[0].mxu0
      %v2735 = vpop.f32.mrb[0].mxu0
      %v2736 = vadd.f32 0.0, %v2735
      %v2737 = vpop.f32.mrb[0].mxu0
      %2738 = vmatprep.mubr.bf16.mxu0 0
      %2739 = vmatmul.mubr.bf16.gmra.mrb[0].mxu0 %v618
      %v2740 = vpop.f32.mrb[0].mxu0
      %v2741 = vadd.f32 0.0, %v2740
      %v2742 = vpop.f32.mrb[0].mxu0
      %v2743 = vpop.f32.mrb[0].mxu0
      %v2744 = vadd.f32 0.0, %v2743
      %v2745 = vpop.f32.mrb[0].mxu0
      %2746 = vmatprep.mubr.bf16.mxu0 0
      %2747 = vmatmul.mubr.bf16.gmra.mrb[0].mxu0 %v621
      %v2748 = vpop.f32.mrb[0].mxu0
      %v2749 = vadd.f32 0.0, %v2748
      %v2750 = vpop.f32.mrb[0].mxu0
      %v2751 = vpop.f32.mrb[0].mxu0
      %v2752 = vadd.f32 0.0, %v2751
      %v2753 = vpop.f32.mrb[0].mxu0
      %2754 = vmatprep.mubr.bf16.mxu0 0
      %2755 = vmatmul.mubr.bf16.gmra.mrb[0].mxu0 %v624
      %v2756 = vpop.f32.mrb[0].mxu0
      %v2757 = vadd.f32 0.0, %v2756
      %v2758 = vpop.f32.mrb[0].mxu0
      %v2759 = vpop.f32.mrb[0].mxu0
      %v2760 = vadd.f32 0.0, %v2759
      %v2761 = vpop.f32.mrb[0].mxu0
      %2762 = vmatprep.mubr.bf16.mxu0 0
      %2763 = vmatmul.mubr.bf16.gmra.mrb[0].mxu0 %v627
      %v2764 = vpop.f32.mrb[0].mxu0
      %v2765 = vadd.f32 0.0, %v2764
      %v2766 = vpop.f32.mrb[0].mxu0
      %v2767 = vpop.f32.mrb[0].mxu0
      %v2768 = vadd.f32 0.0, %v2767
      %v2769 = vpop.f32.mrb[0].mxu0
      %2770 = vmatprep.mubr.bf16.mxu0 0
      %2771 = vmatmul.mubr.bf16.gmra.mrb[0].mxu0 %v630
      %v2772 = vpop.f32.mrb[0].mxu0
      %v2773 = vadd.f32 0.0, %v2772
      %v2774 = vpop.f32.mrb[0].mxu0
      %v2775 = vpop.f32.mrb[0].mxu0
      %v2776 = vadd.f32 0.0, %v2775
      %v2777 = vpop.f32.mrb[0].mxu0
      %2778 = vmatprep.mubr.bf16.mxu0 0
      %2779 = vmatmul.mubr.bf16.gmra.mrb[0].mxu0 %v633
      %v2780 = vpop.f32.mrb[0].mxu0
      %v2781 = vadd.f32 0.0, %v2780
      %v2782 = vpop.f32.mrb[0].mxu0
      %v2783 = vpop.f32.mrb[0].mxu0
      %v2784 = vadd.f32 0.0, %v2783
      %v2785 = vpop.f32.mrb[0].mxu0
      %2786 = vmatprep.mubr.bf16.mxu0 0
      %2787 = vmatmul.mubr.bf16.gmra.mrb[0].mxu0 %v636
      %v2788 = vpop.f32.mrb[0].mxu0
      %v2789 = vadd.f32 0.0, %v2788
      %v2790 = vpop.f32.mrb[0].mxu0
      %v2791 = vpop.f32.mrb[0].mxu0
      %v2792 = vadd.f32 0.0, %v2791
      %v2793 = vpop.f32.mrb[0].mxu0
      %2794 = vmatprep.mubr.bf16.mxu0 0
      %2795 = vmatmul.mubr.bf16.gmra.mrb[0].mxu0 %v639
      %v2796 = vpop.f32.mrb[0].mxu0
      %v2797 = vadd.f32 0.0, %v2796
      %v2798 = vpop.f32.mrb[0].mxu0
      %v2799 = vpop.f32.mrb[0].mxu0
      %v2800 = vadd.f32 0.0, %v2799
      %v2801 = vpop.f32.mrb[0].mxu0
      %2802 = vmatprep.mubr.bf16.mxu0 0
      %2803 = vmatmul.mubr.bf16.gmra.mrb[0].mxu0 %v642
      %v2804 = vpop.f32.mrb[0].mxu0
      %v2805 = vadd.f32 0.0, %v2804
      %v2806 = vpop.f32.mrb[0].mxu0
      %v2807 = vpop.f32.mrb[0].mxu0
      %v2808 = vadd.f32 0.0, %v2807
      %v2809 = vpop.f32.mrb[0].mxu0
      %2810 = vmatprep.mubr.bf16.mxu0 0
      %2811 = vmatmul.mubr.bf16.gmra.mrb[0].mxu0 %v645
      %v2812 = vpop.f32.mrb[0].mxu0
      %v2813 = vadd.f32 0.0, %v2812
      %v2814 = vpop.f32.mrb[0].mxu0
      %v2815 = vpop.f32.mrb[0].mxu0
      %v2816 = vadd.f32 0.0, %v2815
      %v2817 = vpop.f32.mrb[0].mxu0
      %2818 = vmatprep.mubr.bf16.mxu0 0
      %2819 = vmatmul.mubr.bf16.gmra.mrb[0].mxu0 %v648
      %v2820 = vpop.f32.mrb[0].mxu0
      %v2821 = vadd.f32 0.0, %v2820
      %v2822 = vpop.f32.mrb[0].mxu0
      %v2823 = vpop.f32.mrb[0].mxu0
      %v2824 = vadd.f32 0.0, %v2823
      %v2825 = vpop.f32.mrb[0].mxu0
      %2826 = vmatprep.mubr.bf16.mxu0 0
      %2827 = vmatmul.mubr.bf16.gmra.mrb[0].mxu0 %v651
      %v2828 = vpop.f32.mrb[0].mxu0
      %v2829 = vadd.f32 0.0, %v2828
      %v2830 = vpop.f32.mrb[0].mxu0
      %v2831 = vpop.f32.mrb[0].mxu0
      %v2832 = vadd.f32 0.0, %v2831
      %v2833 = vpop.f32.mrb[0].mxu0
      %2834 = vmatprep.mubr.bf16.mxu0 0
      %2835 = vmatmul.mubr.bf16.gmra.mrb[0].mxu0 %v654
      %v2836 = vpop.f32.mrb[0].mxu0
      %v2837 = vadd.f32 0.0, %v2836
      %v2838 = vpop.f32.mrb[0].mxu0
      %v2839 = vpop.f32.mrb[0].mxu0
      %v2840 = vadd.f32 0.0, %v2839
      %v2841 = vpop.f32.mrb[0].mxu0
      %2842 = vmatprep.mubr.bf16.mxu0 0
      %2843 = vmatmul.mubr.bf16.gmra.mrb[0].mxu0 %v657
      %v2844 = vpop.f32.mrb[0].mxu0
      %v2845 = vadd.f32 0.0, %v2844
      %v2846 = vpop.f32.mrb[0].mxu0
      %v2847 = vpop.f32.mrb[0].mxu0
      %v2848 = vadd.f32 0.0, %v2847
      %v2849 = vpop.f32.mrb[0].mxu0
      %2850 = vmatprep.mubr.bf16.mxu0 0
      %2851 = vmatmul.mubr.bf16.gmra.mrb[0].mxu0 %v1227
      %v2852 = vpop.f32.mrb[0].mxu0
      %v2853 = vadd.f32 0.0, %v2852
      %v2854 = vpop.f32.mrb[0].mxu0
      %v2855 = vpop.f32.mrb[0].mxu0
      %v2856 = vadd.f32 0.0, %v2855
      %v2857 = vpop.f32.mrb[0].mxu0
      %2858 = vmatprep.mubr.bf16.mxu0 0
      %2859 = vmatmul.mubr.bf16.gmra.mrb[0].mxu0 %v1230
      %v2860 = vpop.f32.mrb[0].mxu0
      %v2861 = vadd.f32 0.0, %v2860
      %v2862 = vpop.f32.mrb[0].mxu0
      %v2863 = vpop.f32.mrb[0].mxu0
      %v2864 = vadd.f32 0.0, %v2863
      %v2865 = vpop.f32.mrb[0].mxu0
      %2866 = vdwg.mxu0
      %v2868 = vsel %vm659, %v2668, 0
      %2870 = vmatprep.subr.bf16.mxu0 0
      %2871 = vmatpush1.bf16.msra.mxu0 %v2868
      %2872 = vmatprep.subr.bf16.mxu0 0
      %2873 = vmatpush1.bf16.msra.mxu0 0
      %2874 = vmatprep.subr.bf16.mxu0 0
      %2875 = vmatpush1.bf16.msra.mxu0 0
      %2876 = vmatprep.subr.bf16.mxu0 0
      %2877 = vmatpush1.bf16.msra.mxu0 0
      %2878 = vmatprep.subr.bf16.mxu0 0
      %2879 = vmatpush1.bf16.msra.mxu0 0
      %2880 = vmatprep.subr.bf16.mxu0 0
      %2881 = vmatpush1.bf16.msra.mxu0 0
      %2882 = vmatprep.subr.bf16.mxu0 0
      %2883 = vmatpush1.bf16.msra.mxu0 0
      %2884 = vmatprep.subr.bf16.mxu0 0
      %2885 = vmatpush1.bf16.msra.mxu0 0
      %2886 = vmatprep.subr.bf16.mxu0 0
      %2887 = vmatpush1.bf16.msra.mxu0 0
      %2888 = vmatprep.subr.bf16.mxu0 0
      %2889 = vmatpush1.bf16.msra.mxu0 0
      %2890 = vmatprep.subr.bf16.mxu0 0
      %2891 = vmatpush1.bf16.msra.mxu0 0
      %2892 = vmatprep.subr.bf16.mxu0 0
      %2893 = vmatpush1.bf16.msra.mxu0 0
      %2894 = vmatprep.subr.bf16.mxu0 0
      %2895 = vmatpush1.bf16.msra.mxu0 0
      %2896 = vmatprep.subr.bf16.mxu0 0
      %2897 = vmatpush1.bf16.msra.mxu0 0
      %2898 = vmatprep.subr.bf16.mxu0 0
      %2899 = vmatpush1.bf16.msra.mxu0 0
      %2900 = vmatprep.subr.bf16.mxu0 0
      %2901 = vmatpush1.bf16.msra.mxu0 0
      %2902 = vmatprep.mubr.bf16.mxu0 0
      %2903 = vmatmul.mubr.bf16.gmra.mrb[0].mxu0 %v963
      %v2904 = vpop.f32.mrb[0].mxu0
      %v2905 = vadd.f32 %v2709, %v2904
      %v2906 = vpop.f32.mrb[0].mxu0
      %v2907 = vpop.f32.mrb[0].mxu0
      %v2908 = vadd.f32 %v2712, %v2907
      %v2909 = vpop.f32.mrb[0].mxu0
      %2910 = vmatprep.mubr.bf16.mxu0 0
      %2911 = vmatmul.mubr.bf16.gmra.mrb[0].mxu0 %v966
      %v2912 = vpop.f32.mrb[0].mxu0
      %v2913 = vadd.f32 %v2717, %v2912
      %v2914 = vpop.f32.mrb[0].mxu0
      %v2915 = vpop.f32.mrb[0].mxu0
      %v2916 = vadd.f32 %v2720, %v2915
      %v2917 = vpop.f32.mrb[0].mxu0
      %2918 = vmatprep.mubr.bf16.mxu0 0
      %2919 = vmatmul.mubr.bf16.gmra.mrb[0].mxu0 %v969
      %v2920 = vpop.f32.mrb[0].mxu0
      %v2921 = vadd.f32 %v2725, %v2920
      %v2922 = vpop.f32.mrb[0].mxu0
      %v2923 = vpop.f32.mrb[0].mxu0
      %v2924 = vadd.f32 %v2728, %v2923
      %v2925 = vpop.f32.mrb[0].mxu0
      %2926 = vmatprep.mubr.bf16.mxu0 0
      %2927 = vmatmul.mubr.bf16.gmra.mrb[0].mxu0 %v972
      %v2928 = vpop.f32.mrb[0].mxu0
      %v2929 = vadd.f32 %v2733, %v2928
      %v2930 = vpop.f32.mrb[0].mxu0
      %v2931 = vpop.f32.mrb[0].mxu0
      %v2932 = vadd.f32 %v2736, %v2931
      %v2933 = vpop.f32.mrb[0].mxu0
      %2934 = vmatprep.mubr.bf16.mxu0 0
      %2935 = vmatmul.mubr.bf16.gmra.mrb[0].mxu0 %v975
      %v2936 = vpop.f32.mrb[0].mxu0
      %v2937 = vadd.f32 %v2741, %v2936
      %v2938 = vpop.f32.mrb[0].mxu0
      %v2939 = vpop.f32.mrb[0].mxu0
      %v2940 = vadd.f32 %v2744, %v2939
      %v2941 = vpop.f32.mrb[0].mxu0
      %2942 = vmatprep.mubr.bf16.mxu0 0
      %2943 = vmatmul.mubr.bf16.gmra.mrb[0].mxu0 %v978
      %v2944 = vpop.f32.mrb[0].mxu0
      %v2945 = vadd.f32 %v2749, %v2944
      %v2946 = vpop.f32.mrb[0].mxu0
      %v2947 = vpop.f32.mrb[0].mxu0
      %v2948 = vadd.f32 %v2752, %v2947
      %v2949 = vpop.f32.mrb[0].mxu0
      %2950 = vmatprep.mubr.bf16.mxu0 0
      %2951 = vmatmul.mubr.bf16.gmra.mrb[0].mxu0 %v981
      %v2952 = vpop.f32.mrb[0].mxu0
      %v2953 = vadd.f32 %v2757, %v2952
      %v2954 = vpop.f32.mrb[0].mxu0
      %v2955 = vpop.f32.mrb[0].mxu0
      %v2956 = vadd.f32 %v2760, %v2955
      %v2957 = vpop.f32.mrb[0].mxu0
      %2958 = vmatprep.mubr.bf16.mxu0 0
      %2959 = vmatmul.mubr.bf16.gmra.mrb[0].mxu0 %v984
      %v2960 = vpop.f32.mrb[0].mxu0
      %v2961 = vadd.f32 %v2765, %v2960
      %v2962 = vpop.f32.mrb[0].mxu0
      %v2963 = vpop.f32.mrb[0].mxu0
      %v2964 = vadd.f32 %v2768, %v2963
      %v2965 = vpop.f32.mrb[0].mxu0
      %2966 = vmatprep.mubr.bf16.mxu0 0
      %2967 = vmatmul.mubr.bf16.gmra.mrb[0].mxu0 %v987
      %v2968 = vpop.f32.mrb[0].mxu0
      %v2969 = vadd.f32 %v2773, %v2968
      %v2970 = vpop.f32.mrb[0].mxu0
      %v2971 = vpop.f32.mrb[0].mxu0
      %v2972 = vadd.f32 %v2776, %v2971
      %v2973 = vpop.f32.mrb[0].mxu0
      %2974 = vmatprep.mubr.bf16.mxu0 0
      %2975 = vmatmul.mubr.bf16.gmra.mrb[0].mxu0 %v990
      %v2976 = vpop.f32.mrb[0].mxu0
      %v2977 = vadd.f32 %v2781, %v2976
      %v2978 = vpop.f32.mrb[0].mxu0
      %v2979 = vpop.f32.mrb[0].mxu0
      %v2980 = vadd.f32 %v2784, %v2979
      %v2981 = vpop.f32.mrb[0].mxu0
      %2982 = vmatprep.mubr.bf16.mxu0 0
      %2983 = vmatmul.mubr.bf16.gmra.mrb[0].mxu0 %v993
      %v2984 = vpop.f32.mrb[0].mxu0
      %v2985 = vadd.f32 %v2789, %v2984
      %v2986 = vpop.f32.mrb[0].mxu0
      %v2987 = vpop.f32.mrb[0].mxu0
      %v2988 = vadd.f32 %v2792, %v2987
      %v2989 = vpop.f32.mrb[0].mxu0
      %2990 = vmatprep.mubr.bf16.mxu0 0
      %2991 = vmatmul.mubr.bf16.gmra.mrb[0].mxu0 %v996
      %v2992 = vpop.f32.mrb[0].mxu0
      %v2993 = vadd.f32 %v2797, %v2992
      %v2994 = vpop.f32.mrb[0].mxu0
      %v2995 = vpop.f32.mrb[0].mxu0
      %v2996 = vadd.f32 %v2800, %v2995
      %v2997 = vpop.f32.mrb[0].mxu0
      %2998 = vmatprep.mubr.bf16.mxu0 0
      %2999 = vmatmul.mubr.bf16.gmra.mrb[0].mxu0 %v999
      %v3000 = vpop.f32.mrb[0].mxu0
      %v3001 = vadd.f32 %v2805, %v3000
      %v3002 = vpop.f32.mrb[0].mxu0
      %v3003 = vpop.f32.mrb[0].mxu0
      %v3004 = vadd.f32 %v2808, %v3003
      %v3005 = vpop.f32.mrb[0].mxu0
      %3006 = vmatprep.mubr.bf16.mxu0 0
      %3007 = vmatmul.mubr.bf16.gmra.mrb[0].mxu0 %v1002
      %v3008 = vpop.f32.mrb[0].mxu0
      %v3009 = vadd.f32 %v2813, %v3008
      %v3010 = vpop.f32.mrb[0].mxu0
      %v3011 = vpop.f32.mrb[0].mxu0
      %v3012 = vadd.f32 %v2816, %v3011
      %v3013 = vpop.f32.mrb[0].mxu0
      %3014 = vmatprep.mubr.bf16.mxu0 0
      %3015 = vmatmul.mubr.bf16.gmra.mrb[0].mxu0 %v1005
      %v3016 = vpop.f32.mrb[0].mxu0
      %v3017 = vadd.f32 %v2821, %v3016
      %v3018 = vpop.f32.mrb[0].mxu0
      %v3019 = vpop.f32.mrb[0].mxu0
      %v3020 = vadd.f32 %v2824, %v3019
      %v3021 = vpop.f32.mrb[0].mxu0
      %3022 = vmatprep.mubr.bf16.mxu0 0
      %3023 = vmatmul.mubr.bf16.gmra.mrb[0].mxu0 %v1008
      %v3024 = vpop.f32.mrb[0].mxu0
      %v3025 = vadd.f32 %v2829, %v3024
      %v3026 = vpop.f32.mrb[0].mxu0
      %v3027 = vpop.f32.mrb[0].mxu0
      %v3028 = vadd.f32 %v2832, %v3027
      %v3029 = vpop.f32.mrb[0].mxu0
      %3030 = vmatprep.mubr.bf16.mxu0 0
      %3031 = vmatmul.mubr.bf16.gmra.mrb[0].mxu0 %v1011
      %v3032 = vpop.f32.mrb[0].mxu0
      %v3033 = vadd.f32 %v2837, %v3032
      %v3034 = vpop.f32.mrb[0].mxu0
      %v3035 = vpop.f32.mrb[0].mxu0
      %v3036 = vadd.f32 %v2840, %v3035
      %v3037 = vpop.f32.mrb[0].mxu0
      %3038 = vmatprep.mubr.bf16.mxu0 0
      %3039 = vmatmul.mubr.bf16.gmra.mrb[0].mxu0 %v1014
      %v3040 = vpop.f32.mrb[0].mxu0
      %v3041 = vadd.f32 %v2845, %v3040
      %v3042 = vpop.f32.mrb[0].mxu0
      %v3043 = vpop.f32.mrb[0].mxu0
      %v3044 = vadd.f32 %v2848, %v3043
      %v3045 = vpop.f32.mrb[0].mxu0
      %3046 = vmatprep.mubr.bf16.mxu0 0
      %3047 = vmatmul.mubr.bf16.gmra.mrb[0].mxu0 %v1439
      %v3048 = vpop.f32.mrb[0].mxu0
      %v3049 = vadd.f32 %v2853, %v3048
      %v3050 = vpop.f32.mrb[0].mxu0
      %v3051 = vpop.f32.mrb[0].mxu0
      %v3052 = vadd.f32 %v2856, %v3051
      %v3053 = vpop.f32.mrb[0].mxu0
      %3054 = vmatprep.mubr.bf16.mxu0 0
      %3055 = vmatmul.mubr.bf16.gmra.mrb[0].mxu0 %v1442
      %v3056 = vpop.f32.mrb[0].mxu0
      %v3057 = vadd.f32 %v2861, %v3056
      %v3058 = vpop.f32.mrb[0].mxu0
      %v3059 = vpop.f32.mrb[0].mxu0
      %v3060 = vadd.f32 %v2864, %v3059
      %v3061 = vpop.f32.mrb[0].mxu0
      %3062 = vdwg.mxu0
      %v3063 = vadd.f32 %v2509, %v2905
      %v3064 = vadd.f32 %v2512, %v2908
      %v3065 = vadd.f32 %v2517, %v2913
      %v3066 = vadd.f32 %v2520, %v2916
      %v3067 = vadd.f32 %v2525, %v2921
      %v3068 = vadd.f32 %v2528, %v2924
      %v3069 = vadd.f32 %v2533, %v2929
      %v3070 = vadd.f32 %v2536, %v2932
      %v3071 = vadd.f32 %v2541, %v2937
      %v3072 = vadd.f32 %v2544, %v2940
      %v3073 = vadd.f32 %v2549, %v2945
      %v3074 = vadd.f32 %v2552, %v2948
      %v3075 = vadd.f32 %v2557, %v2953
      %v3076 = vadd.f32 %v2560, %v2956
      %v3077 = vadd.f32 %v2565, %v2961
      %v3078 = vadd.f32 %v2568, %v2964
      %v3079 = vadd.f32 %v2573, %v2969
      %v3080 = vadd.f32 %v2576, %v2972
      %v3081 = vadd.f32 %v2581, %v2977
      %v3082 = vadd.f32 %v2584, %v2980
      %v3083 = vadd.f32 %v2589, %v2985
      %v3084 = vadd.f32 %v2592, %v2988
      %v3085 = vadd.f32 %v2597, %v2993
      %v3086 = vadd.f32 %v2600, %v2996
      %v3087 = vadd.f32 %v2605, %v3001
      %v3088 = vadd.f32 %v2608, %v3004
      %v3089 = vadd.f32 %v2613, %v3009
      %v3090 = vadd.f32 %v2616, %v3012
      %v3091 = vadd.f32 %v2621, %v3017
      %v3092 = vadd.f32 %v2624, %v3020
      %v3093 = vadd.f32 %v2629, %v3025
      %v3094 = vadd.f32 %v2632, %v3028
      %v3095 = vadd.f32 %v2637, %v3033
      %v3096 = vadd.f32 %v2640, %v3036
      %v3097 = vadd.f32 %v2645, %v3041
      %v3098 = vadd.f32 %v2648, %v3044
      %v3099 = vadd.f32 %v2653, %v3049
      %v3100 = vadd.f32 %v2656, %v3052
      %v3101 = vadd.f32 %v2661, %v3057
      %v3102 = vadd.f32 %v2664, %v3060
      %s3103 = scalar_lea.vmem %s3, 14
      %v3104 = vld [vmem:[%s3103] sm:$0x3]
      %s3105 = scalar_lea.vmem %s4, 14
      %v3106 = vld [vmem:[%s3105] sm:$0x3]
      %v3108 = vsel %vm659, %v3106, 0
      %3110 = vmatprep.subr.bf16.mxu0 0
      %3111 = vmatpush1.bf16.msra.mxu0 %v3108
      %3112 = vmatprep.subr.bf16.mxu0 0
      %3113 = vmatpush1.bf16.msra.mxu0 0
      %3114 = vmatprep.subr.bf16.mxu0 0
      %3115 = vmatpush1.bf16.msra.mxu0 0
      %3116 = vmatprep.subr.bf16.mxu0 0
      %3117 = vmatpush1.bf16.msra.mxu0 0
      %3118 = vmatprep.subr.bf16.mxu0 0
      %3119 = vmatpush1.bf16.msra.mxu0 0
      %3120 = vmatprep.subr.bf16.mxu0 0
      %3121 = vmatpush1.bf16.msra.mxu0 0
      %3122 = vmatprep.subr.bf16.mxu0 0
      %3123 = vmatpush1.bf16.msra.mxu0 0
      %3124 = vmatprep.subr.bf16.mxu0 0
      %3125 = vmatpush1.bf16.msra.mxu0 0
      %3126 = vmatprep.subr.bf16.mxu0 0
      %3127 = vmatpush1.bf16.msra.mxu0 0
      %3128 = vmatprep.subr.bf16.mxu0 0
      %3129 = vmatpush1.bf16.msra.mxu0 0
      %3130 = vmatprep.subr.bf16.mxu0 0
      %3131 = vmatpush1.bf16.msra.mxu0 0
      %3132 = vmatprep.subr.bf16.mxu0 0
      %3133 = vmatpush1.bf16.msra.mxu0 0
      %3134 = vmatprep.subr.bf16.mxu0 0
      %3135 = vmatpush1.bf16.msra.mxu0 0
      %3136 = vmatprep.subr.bf16.mxu0 0
      %3137 = vmatpush1.bf16.msra.mxu0 0
      %3138 = vmatprep.subr.bf16.mxu0 0
      %3139 = vmatpush1.bf16.msra.mxu0 0
      %3140 = vmatprep.subr.bf16.mxu0 0
      %3141 = vmatpush1.bf16.msra.mxu0 0
      %3142 = vmatprep.mubr.bf16.mxu0 0
      %3143 = vmatmul.mubr.bf16.gmra.mrb[0].mxu0 %v612
      %v3144 = vpop.f32.mrb[0].mxu0
      %v3145 = vadd.f32 0.0, %v3144
      %v3146 = vpop.f32.mrb[0].mxu0
      %v3147 = vpop.f32.mrb[0].mxu0
      %v3148 = vadd.f32 0.0, %v3147
      %v3149 = vpop.f32.mrb[0].mxu0
      %3150 = vmatprep.mubr.bf16.mxu0 0
      %3151 = vmatmul.mubr.bf16.gmra.mrb[0].mxu0 %v615
      %v3152 = vpop.f32.mrb[0].mxu0
      %v3153 = vadd.f32 0.0, %v3152
      %v3154 = vpop.f32.mrb[0].mxu0
      %v3155 = vpop.f32.mrb[0].mxu0
      %v3156 = vadd.f32 0.0, %v3155
      %v3157 = vpop.f32.mrb[0].mxu0
      %3158 = vmatprep.mubr.bf16.mxu0 0
      %3159 = vmatmul.mubr.bf16.gmra.mrb[0].mxu0 %v618
      %v3160 = vpop.f32.mrb[0].mxu0
      %v3161 = vadd.f32 0.0, %v3160
      %v3162 = vpop.f32.mrb[0].mxu0
      %v3163 = vpop.f32.mrb[0].mxu0
      %v3164 = vadd.f32 0.0, %v3163
      %v3165 = vpop.f32.mrb[0].mxu0
      %3166 = vmatprep.mubr.bf16.mxu0 0
      %3167 = vmatmul.mubr.bf16.gmra.mrb[0].mxu0 %v621
      %v3168 = vpop.f32.mrb[0].mxu0
      %v3169 = vadd.f32 0.0, %v3168
      %v3170 = vpop.f32.mrb[0].mxu0
      %v3171 = vpop.f32.mrb[0].mxu0
      %v3172 = vadd.f32 0.0, %v3171
      %v3173 = vpop.f32.mrb[0].mxu0
      %3174 = vmatprep.mubr.bf16.mxu0 0
      %3175 = vmatmul.mubr.bf16.gmra.mrb[0].mxu0 %v624
      %v3176 = vpop.f32.mrb[0].mxu0
      %v3177 = vadd.f32 0.0, %v3176
      %v3178 = vpop.f32.mrb[0].mxu0
      %v3179 = vpop.f32.mrb[0].mxu0
      %v3180 = vadd.f32 0.0, %v3179
      %v3181 = vpop.f32.mrb[0].mxu0
      %3182 = vmatprep.mubr.bf16.mxu0 0
      %3183 = vmatmul.mubr.bf16.gmra.mrb[0].mxu0 %v627
      %v3184 = vpop.f32.mrb[0].mxu0
      %v3185 = vadd.f32 0.0, %v3184
      %v3186 = vpop.f32.mrb[0].mxu0
      %v3187 = vpop.f32.mrb[0].mxu0
      %v3188 = vadd.f32 0.0, %v3187
      %v3189 = vpop.f32.mrb[0].mxu0
      %3190 = vmatprep.mubr.bf16.mxu0 0
      %3191 = vmatmul.mubr.bf16.gmra.mrb[0].mxu0 %v630
      %v3192 = vpop.f32.mrb[0].mxu0
      %v3193 = vadd.f32 0.0, %v3192
      %v3194 = vpop.f32.mrb[0].mxu0
      %v3195 = vpop.f32.mrb[0].mxu0
      %v3196 = vadd.f32 0.0, %v3195
      %v3197 = vpop.f32.mrb[0].mxu0
      %3198 = vmatprep.mubr.bf16.mxu0 0
      %3199 = vmatmul.mubr.bf16.gmra.mrb[0].mxu0 %v633
      %v3200 = vpop.f32.mrb[0].mxu0
      %v3201 = vadd.f32 0.0, %v3200
      %v3202 = vpop.f32.mrb[0].mxu0
      %v3203 = vpop.f32.mrb[0].mxu0
      %v3204 = vadd.f32 0.0, %v3203
      %v3205 = vpop.f32.mrb[0].mxu0
      %3206 = vmatprep.mubr.bf16.mxu0 0
      %3207 = vmatmul.mubr.bf16.gmra.mrb[0].mxu0 %v636
      %v3208 = vpop.f32.mrb[0].mxu0
      %v3209 = vadd.f32 0.0, %v3208
      %v3210 = vpop.f32.mrb[0].mxu0
      %v3211 = vpop.f32.mrb[0].mxu0
      %v3212 = vadd.f32 0.0, %v3211
      %v3213 = vpop.f32.mrb[0].mxu0
      %3214 = vmatprep.mubr.bf16.mxu0 0
      %3215 = vmatmul.mubr.bf16.gmra.mrb[0].mxu0 %v639
      %v3216 = vpop.f32.mrb[0].mxu0
      %v3217 = vadd.f32 0.0, %v3216
      %v3218 = vpop.f32.mrb[0].mxu0
      %v3219 = vpop.f32.mrb[0].mxu0
      %v3220 = vadd.f32 0.0, %v3219
      %v3221 = vpop.f32.mrb[0].mxu0
      %3222 = vmatprep.mubr.bf16.mxu0 0
      %3223 = vmatmul.mubr.bf16.gmra.mrb[0].mxu0 %v642
      %v3224 = vpop.f32.mrb[0].mxu0
      %v3225 = vadd.f32 0.0, %v3224
      %v3226 = vpop.f32.mrb[0].mxu0
      %v3227 = vpop.f32.mrb[0].mxu0
      %v3228 = vadd.f32 0.0, %v3227
      %v3229 = vpop.f32.mrb[0].mxu0
      %3230 = vmatprep.mubr.bf16.mxu0 0
      %3231 = vmatmul.mubr.bf16.gmra.mrb[0].mxu0 %v645
      %v3232 = vpop.f32.mrb[0].mxu0
      %v3233 = vadd.f32 0.0, %v3232
      %v3234 = vpop.f32.mrb[0].mxu0
      %v3235 = vpop.f32.mrb[0].mxu0
      %v3236 = vadd.f32 0.0, %v3235
      %v3237 = vpop.f32.mrb[0].mxu0
      %3238 = vmatprep.mubr.bf16.mxu0 0
      %3239 = vmatmul.mubr.bf16.gmra.mrb[0].mxu0 %v648
      %v3240 = vpop.f32.mrb[0].mxu0
      %v3241 = vadd.f32 0.0, %v3240
      %v3242 = vpop.f32.mrb[0].mxu0
      %v3243 = vpop.f32.mrb[0].mxu0
      %v3244 = vadd.f32 0.0, %v3243
      %v3245 = vpop.f32.mrb[0].mxu0
      %3246 = vmatprep.mubr.bf16.mxu0 0
      %3247 = vmatmul.mubr.bf16.gmra.mrb[0].mxu0 %v651
      %v3248 = vpop.f32.mrb[0].mxu0
      %v3249 = vadd.f32 0.0, %v3248
      %v3250 = vpop.f32.mrb[0].mxu0
      %v3251 = vpop.f32.mrb[0].mxu0
      %v3252 = vadd.f32 0.0, %v3251
      %v3253 = vpop.f32.mrb[0].mxu0
      %3254 = vmatprep.mubr.bf16.mxu0 0
      %3255 = vmatmul.mubr.bf16.gmra.mrb[0].mxu0 %v654
      %v3256 = vpop.f32.mrb[0].mxu0
      %v3257 = vadd.f32 0.0, %v3256
      %v3258 = vpop.f32.mrb[0].mxu0
      %v3259 = vpop.f32.mrb[0].mxu0
      %v3260 = vadd.f32 0.0, %v3259
      %v3261 = vpop.f32.mrb[0].mxu0
      %3262 = vmatprep.mubr.bf16.mxu0 0
      %3263 = vmatmul.mubr.bf16.gmra.mrb[0].mxu0 %v657
      %v3264 = vpop.f32.mrb[0].mxu0
      %v3265 = vadd.f32 0.0, %v3264
      %v3266 = vpop.f32.mrb[0].mxu0
      %v3267 = vpop.f32.mrb[0].mxu0
      %v3268 = vadd.f32 0.0, %v3267
      %v3269 = vpop.f32.mrb[0].mxu0
      %3270 = vmatprep.mubr.bf16.mxu0 0
      %3271 = vmatmul.mubr.bf16.gmra.mrb[0].mxu0 %v1227
      %v3272 = vpop.f32.mrb[0].mxu0
      %v3273 = vadd.f32 0.0, %v3272
      %v3274 = vpop.f32.mrb[0].mxu0
      %v3275 = vpop.f32.mrb[0].mxu0
      %v3276 = vadd.f32 0.0, %v3275
      %v3277 = vpop.f32.mrb[0].mxu0
      %3278 = vmatprep.mubr.bf16.mxu0 0
      %3279 = vmatmul.mubr.bf16.gmra.mrb[0].mxu0 %v1230
      %v3280 = vpop.f32.mrb[0].mxu0
      %v3281 = vadd.f32 0.0, %v3280
      %v3282 = vpop.f32.mrb[0].mxu0
      %v3283 = vpop.f32.mrb[0].mxu0
      %v3284 = vadd.f32 0.0, %v3283
      %v3285 = vpop.f32.mrb[0].mxu0
      %3286 = vmatprep.mubr.bf16.mxu0 0
      %3287 = vmatmul.mubr.bf16.gmra.mrb[0].mxu0 %v1695
      %v3288 = vpop.f32.mrb[0].mxu0
      %v3289 = vadd.f32 0.0, %v3288
      %v3290 = vpop.f32.mrb[0].mxu0
      %v3291 = vpop.f32.mrb[0].mxu0
      %v3292 = vadd.f32 0.0, %v3291
      %v3293 = vpop.f32.mrb[0].mxu0
      %3294 = vmatprep.mubr.bf16.mxu0 0
      %3295 = vmatmul.mubr.bf16.gmra.mrb[0].mxu0 %v1698
      %v3296 = vpop.f32.mrb[0].mxu0
      %v3297 = vadd.f32 0.0, %v3296
      %v3298 = vpop.f32.mrb[0].mxu0
      %v3299 = vpop.f32.mrb[0].mxu0
      %v3300 = vadd.f32 0.0, %v3299
      %v3301 = vpop.f32.mrb[0].mxu0
      %3302 = vdwg.mxu0
      %v3304 = vsel %vm659, %v3104, 0
      %3306 = vmatprep.subr.bf16.mxu0 0
      %3307 = vmatpush1.bf16.msra.mxu0 %v3304
      %3308 = vmatprep.subr.bf16.mxu0 0
      %3309 = vmatpush1.bf16.msra.mxu0 0
      %3310 = vmatprep.subr.bf16.mxu0 0
      %3311 = vmatpush1.bf16.msra.mxu0 0
      %3312 = vmatprep.subr.bf16.mxu0 0
      %3313 = vmatpush1.bf16.msra.mxu0 0
      %3314 = vmatprep.subr.bf16.mxu0 0
      %3315 = vmatpush1.bf16.msra.mxu0 0
      %3316 = vmatprep.subr.bf16.mxu0 0
      %3317 = vmatpush1.bf16.msra.mxu0 0
      %3318 = vmatprep.subr.bf16.mxu0 0
      %3319 = vmatpush1.bf16.msra.mxu0 0
      %3320 = vmatprep.subr.bf16.mxu0 0
      %3321 = vmatpush1.bf16.msra.mxu0 0
      %3322 = vmatprep.subr.bf16.mxu0 0
      %3323 = vmatpush1.bf16.msra.mxu0 0
      %3324 = vmatprep.subr.bf16.mxu0 0
      %3325 = vmatpush1.bf16.msra.mxu0 0
      %3326 = vmatprep.subr.bf16.mxu0 0
      %3327 = vmatpush1.bf16.msra.mxu0 0
      %3328 = vmatprep.subr.bf16.mxu0 0
      %3329 = vmatpush1.bf16.msra.mxu0 0
      %3330 = vmatprep.subr.bf16.mxu0 0
      %3331 = vmatpush1.bf16.msra.mxu0 0
      %3332 = vmatprep.subr.bf16.mxu0 0
      %3333 = vmatpush1.bf16.msra.mxu0 0
      %3334 = vmatprep.subr.bf16.mxu0 0
      %3335 = vmatpush1.bf16.msra.mxu0 0
      %3336 = vmatprep.subr.bf16.mxu0 0
      %3337 = vmatpush1.bf16.msra.mxu0 0
      %3338 = vmatprep.mubr.bf16.mxu0 0
      %3339 = vmatmul.mubr.bf16.gmra.mrb[0].mxu0 %v969
      %v3340 = vpop.f32.mrb[0].mxu0
      %v3341 = vadd.f32 %v3145, %v3340
      %v3342 = vpop.f32.mrb[0].mxu0
      %v3343 = vpop.f32.mrb[0].mxu0
      %v3344 = vadd.f32 %v3148, %v3343
      %v3345 = vpop.f32.mrb[0].mxu0
      %3346 = vmatprep.mubr.bf16.mxu0 0
      %3347 = vmatmul.mubr.bf16.gmra.mrb[0].mxu0 %v972
      %v3348 = vpop.f32.mrb[0].mxu0
      %v3349 = vadd.f32 %v3153, %v3348
      %v3350 = vpop.f32.mrb[0].mxu0
      %v3351 = vpop.f32.mrb[0].mxu0
      %v3352 = vadd.f32 %v3156, %v3351
      %v3353 = vpop.f32.mrb[0].mxu0
      %3354 = vmatprep.mubr.bf16.mxu0 0
      %3355 = vmatmul.mubr.bf16.gmra.mrb[0].mxu0 %v975
      %v3356 = vpop.f32.mrb[0].mxu0
      %v3357 = vadd.f32 %v3161, %v3356
      %v3358 = vpop.f32.mrb[0].mxu0
      %v3359 = vpop.f32.mrb[0].mxu0
      %v3360 = vadd.f32 %v3164, %v3359
      %v3361 = vpop.f32.mrb[0].mxu0
      %3362 = vmatprep.mubr.bf16.mxu0 0
      %3363 = vmatmul.mubr.bf16.gmra.mrb[0].mxu0 %v978
      %v3364 = vpop.f32.mrb[0].mxu0
      %v3365 = vadd.f32 %v3169, %v3364
      %v3366 = vpop.f32.mrb[0].mxu0
      %v3367 = vpop.f32.mrb[0].mxu0
      %v3368 = vadd.f32 %v3172, %v3367
      %v3369 = vpop.f32.mrb[0].mxu0
      %3370 = vmatprep.mubr.bf16.mxu0 0
      %3371 = vmatmul.mubr.bf16.gmra.mrb[0].mxu0 %v981
      %v3372 = vpop.f32.mrb[0].mxu0
      %v3373 = vadd.f32 %v3177, %v3372
      %v3374 = vpop.f32.mrb[0].mxu0
      %v3375 = vpop.f32.mrb[0].mxu0
      %v3376 = vadd.f32 %v3180, %v3375
      %v3377 = vpop.f32.mrb[0].mxu0
      %3378 = vmatprep.mubr.bf16.mxu0 0
      %3379 = vmatmul.mubr.bf16.gmra.mrb[0].mxu0 %v984
      %v3380 = vpop.f32.mrb[0].mxu0
      %v3381 = vadd.f32 %v3185, %v3380
      %v3382 = vpop.f32.mrb[0].mxu0
      %v3383 = vpop.f32.mrb[0].mxu0
      %v3384 = vadd.f32 %v3188, %v3383
      %v3385 = vpop.f32.mrb[0].mxu0
      %3386 = vmatprep.mubr.bf16.mxu0 0
      %3387 = vmatmul.mubr.bf16.gmra.mrb[0].mxu0 %v987
      %v3388 = vpop.f32.mrb[0].mxu0
      %v3389 = vadd.f32 %v3193, %v3388
      %v3390 = vpop.f32.mrb[0].mxu0
      %v3391 = vpop.f32.mrb[0].mxu0
      %v3392 = vadd.f32 %v3196, %v3391
      %v3393 = vpop.f32.mrb[0].mxu0
      %3394 = vmatprep.mubr.bf16.mxu0 0
      %3395 = vmatmul.mubr.bf16.gmra.mrb[0].mxu0 %v990
      %v3396 = vpop.f32.mrb[0].mxu0
      %v3397 = vadd.f32 %v3201, %v3396
      %v3398 = vpop.f32.mrb[0].mxu0
      %v3399 = vpop.f32.mrb[0].mxu0
      %v3400 = vadd.f32 %v3204, %v3399
      %v3401 = vpop.f32.mrb[0].mxu0
      %3402 = vmatprep.mubr.bf16.mxu0 0
      %3403 = vmatmul.mubr.bf16.gmra.mrb[0].mxu0 %v993
      %v3404 = vpop.f32.mrb[0].mxu0
      %v3405 = vadd.f32 %v3209, %v3404
      %v3406 = vpop.f32.mrb[0].mxu0
      %v3407 = vpop.f32.mrb[0].mxu0
      %v3408 = vadd.f32 %v3212, %v3407
      %v3409 = vpop.f32.mrb[0].mxu0
      %3410 = vmatprep.mubr.bf16.mxu0 0
      %3411 = vmatmul.mubr.bf16.gmra.mrb[0].mxu0 %v996
      %v3412 = vpop.f32.mrb[0].mxu0
      %v3413 = vadd.f32 %v3217, %v3412
      %v3414 = vpop.f32.mrb[0].mxu0
      %v3415 = vpop.f32.mrb[0].mxu0
      %v3416 = vadd.f32 %v3220, %v3415
      %v3417 = vpop.f32.mrb[0].mxu0
      %3418 = vmatprep.mubr.bf16.mxu0 0
      %3419 = vmatmul.mubr.bf16.gmra.mrb[0].mxu0 %v999
      %v3420 = vpop.f32.mrb[0].mxu0
      %v3421 = vadd.f32 %v3225, %v3420
      %v3422 = vpop.f32.mrb[0].mxu0
      %v3423 = vpop.f32.mrb[0].mxu0
      %v3424 = vadd.f32 %v3228, %v3423
      %v3425 = vpop.f32.mrb[0].mxu0
      %3426 = vmatprep.mubr.bf16.mxu0 0
      %3427 = vmatmul.mubr.bf16.gmra.mrb[0].mxu0 %v1002
      %v3428 = vpop.f32.mrb[0].mxu0
      %v3429 = vadd.f32 %v3233, %v3428
      %v3430 = vpop.f32.mrb[0].mxu0
      %v3431 = vpop.f32.mrb[0].mxu0
      %v3432 = vadd.f32 %v3236, %v3431
      %v3433 = vpop.f32.mrb[0].mxu0
      %3434 = vmatprep.mubr.bf16.mxu0 0
      %3435 = vmatmul.mubr.bf16.gmra.mrb[0].mxu0 %v1005
      %v3436 = vpop.f32.mrb[0].mxu0
      %v3437 = vadd.f32 %v3241, %v3436
      %v3438 = vpop.f32.mrb[0].mxu0
      %v3439 = vpop.f32.mrb[0].mxu0
      %v3440 = vadd.f32 %v3244, %v3439
      %v3441 = vpop.f32.mrb[0].mxu0
      %3442 = vmatprep.mubr.bf16.mxu0 0
      %3443 = vmatmul.mubr.bf16.gmra.mrb[0].mxu0 %v1008
      %v3444 = vpop.f32.mrb[0].mxu0
      %v3445 = vadd.f32 %v3249, %v3444
      %v3446 = vpop.f32.mrb[0].mxu0
      %v3447 = vpop.f32.mrb[0].mxu0
      %v3448 = vadd.f32 %v3252, %v3447
      %v3449 = vpop.f32.mrb[0].mxu0
      %3450 = vmatprep.mubr.bf16.mxu0 0
      %3451 = vmatmul.mubr.bf16.gmra.mrb[0].mxu0 %v1011
      %v3452 = vpop.f32.mrb[0].mxu0
      %v3453 = vadd.f32 %v3257, %v3452
      %v3454 = vpop.f32.mrb[0].mxu0
      %v3455 = vpop.f32.mrb[0].mxu0
      %v3456 = vadd.f32 %v3260, %v3455
      %v3457 = vpop.f32.mrb[0].mxu0
      %3458 = vmatprep.mubr.bf16.mxu0 0
      %3459 = vmatmul.mubr.bf16.gmra.mrb[0].mxu0 %v1014
      %v3460 = vpop.f32.mrb[0].mxu0
      %v3461 = vadd.f32 %v3265, %v3460
      %v3462 = vpop.f32.mrb[0].mxu0
      %v3463 = vpop.f32.mrb[0].mxu0
      %v3464 = vadd.f32 %v3268, %v3463
      %v3465 = vpop.f32.mrb[0].mxu0
      %3466 = vmatprep.mubr.bf16.mxu0 0
      %3467 = vmatmul.mubr.bf16.gmra.mrb[0].mxu0 %v1439
      %v3468 = vpop.f32.mrb[0].mxu0
      %v3469 = vadd.f32 %v3273, %v3468
      %v3470 = vpop.f32.mrb[0].mxu0
      %v3471 = vpop.f32.mrb[0].mxu0
      %v3472 = vadd.f32 %v3276, %v3471
      %v3473 = vpop.f32.mrb[0].mxu0
      %3474 = vmatprep.mubr.bf16.mxu0 0
      %3475 = vmatmul.mubr.bf16.gmra.mrb[0].mxu0 %v1442
      %v3476 = vpop.f32.mrb[0].mxu0
      %v3477 = vadd.f32 %v3281, %v3476
      %v3478 = vpop.f32.mrb[0].mxu0
      %v3479 = vpop.f32.mrb[0].mxu0
      %v3480 = vadd.f32 %v3284, %v3479
      %v3481 = vpop.f32.mrb[0].mxu0
      %3482 = vmatprep.mubr.bf16.mxu0 0
      %3483 = vmatmul.mubr.bf16.gmra.mrb[0].mxu0 %v1907
      %v3484 = vpop.f32.mrb[0].mxu0
      %v3485 = vadd.f32 %v3289, %v3484
      %v3486 = vpop.f32.mrb[0].mxu0
      %v3487 = vpop.f32.mrb[0].mxu0
      %v3488 = vadd.f32 %v3292, %v3487
      %v3489 = vpop.f32.mrb[0].mxu0
      %3490 = vmatprep.mubr.bf16.mxu0 0
      %3491 = vmatmul.mubr.bf16.gmra.mrb[0].mxu0 %v1910
      %v3492 = vpop.f32.mrb[0].mxu0
      %v3493 = vadd.f32 %v3297, %v3492
      %v3494 = vpop.f32.mrb[0].mxu0
      %v3495 = vpop.f32.mrb[0].mxu0
      %v3496 = vadd.f32 %v3300, %v3495
      %v3497 = vpop.f32.mrb[0].mxu0
      %3498 = vdwg.mxu0
      %v3499 = vadd.f32 %v3063, %v3341
      %v3500 = vadd.f32 %v3064, %v3344
      %v3501 = vadd.f32 %v3065, %v3349
      %v3502 = vadd.f32 %v3066, %v3352
      %v3503 = vadd.f32 %v3067, %v3357
      %v3504 = vadd.f32 %v3068, %v3360
      %v3505 = vadd.f32 %v3069, %v3365
      %v3506 = vadd.f32 %v3070, %v3368
      %v3507 = vadd.f32 %v3071, %v3373
      %v3508 = vadd.f32 %v3072, %v3376
      %v3509 = vadd.f32 %v3073, %v3381
      %v3510 = vadd.f32 %v3074, %v3384
      %v3511 = vadd.f32 %v3075, %v3389
      %v3512 = vadd.f32 %v3076, %v3392
      %v3513 = vadd.f32 %v3077, %v3397
      %v3514 = vadd.f32 %v3078, %v3400
      %v3515 = vadd.f32 %v3079, %v3405
      %v3516 = vadd.f32 %v3080, %v3408
      %v3517 = vadd.f32 %v3081, %v3413
      %v3518 = vadd.f32 %v3082, %v3416
      %v3519 = vadd.f32 %v3083, %v3421
      %v3520 = vadd.f32 %v3084, %v3424
      %v3521 = vadd.f32 %v3085, %v3429
      %v3522 = vadd.f32 %v3086, %v3432
      %v3523 = vadd.f32 %v3087, %v3437
      %v3524 = vadd.f32 %v3088, %v3440
      %v3525 = vadd.f32 %v3089, %v3445
      %v3526 = vadd.f32 %v3090, %v3448
      %v3527 = vadd.f32 %v3091, %v3453
      %v3528 = vadd.f32 %v3092, %v3456
      %v3529 = vadd.f32 %v3093, %v3461
      %v3530 = vadd.f32 %v3094, %v3464
      %v3531 = vadd.f32 %v3095, %v3469
      %v3532 = vadd.f32 %v3096, %v3472
      %v3533 = vadd.f32 %v3097, %v3477
      %v3534 = vadd.f32 %v3098, %v3480
      %v3535 = vadd.f32 %v3099, %v3485
      %v3536 = vadd.f32 %v3100, %v3488
      %v3537 = vadd.f32 %v3101, %v3493
      %v3538 = vadd.f32 %v3102, %v3496
      %v3539 = vld [vmem:[#allocation2] sm:$0xff]
      %v3540 = vld [vmem:[#allocation2 + $0x8] sm:$0xff]
      %v3541 = vld [vmem:[#allocation2 + $0x10] sm:$0xff]
      %v3542 = vld [vmem:[#allocation2 + $0x18] sm:$0xff]
      %v3543 = vld [vmem:[#allocation2 + $0x20] sm:$0xff]
      %v3544 = vld [vmem:[#allocation2 + $0x28] sm:$0xff]
      %v3545 = vld [vmem:[#allocation2 + $0x30] sm:$0xff]
      %v3546 = vld [vmem:[#allocation2 + $0x38] sm:$0xff]
      %v3547 = vld [vmem:[#allocation2 + $0x40] sm:$0xff]
      %v3548 = vld [vmem:[#allocation2 + $0x48] sm:$0xff]
      %v3549 = vld [vmem:[#allocation2 + $0x50] sm:$0xff]
      %v3550 = vld [vmem:[#allocation2 + $0x58] sm:$0xff]
      %v3551 = vld [vmem:[#allocation2 + $0x60] sm:$0xff]
      %v3552 = vld [vmem:[#allocation2 + $0x68] sm:$0xff]
      %v3553 = vld [vmem:[#allocation2 + $0x70] sm:$0xff]
      %v3554 = vld [vmem:[#allocation2 + $0x78] sm:$0xff]
      %v3555 = vld [vmem:[#allocation2 + $0x80] sm:$0xff]
      %v3556 = vld [vmem:[#allocation2 + $0x88] sm:$0xff]
      %v3557 = vld [vmem:[#allocation2 + $0x90] sm:$0xff]
      %v3558 = vld [vmem:[#allocation2 + $0x98] sm:$0xff]
      %v3559 = vld [vmem:[#allocation2 + $0xa0] sm:$0xff]
      %v3560 = vld [vmem:[#allocation2 + $0xa8] sm:$0xff]
      %v3561 = vld [vmem:[#allocation2 + $0xb0] sm:$0xff]
      %v3562 = vld [vmem:[#allocation2 + $0xb8] sm:$0xff]
      %v3563 = vld [vmem:[#allocation2 + $0xc0] sm:$0xff]
      %v3564 = vld [vmem:[#allocation2 + $0xc8] sm:$0xff]
      %v3565 = vld [vmem:[#allocation2 + $0xd0] sm:$0xff]
      %v3566 = vld [vmem:[#allocation2 + $0xd8] sm:$0xff]
      %v3567 = vld [vmem:[#allocation2 + $0xe0] sm:$0xff]
      %v3568 = vld [vmem:[#allocation2 + $0xe8] sm:$0xff]
      %v3569 = vld [vmem:[#allocation2 + $0xf0] sm:$0xff]
      %v3570 = vld [vmem:[#allocation2 + $0xf8] sm:$0xff]
      %v3571 = vld [vmem:[#allocation2 + $0x100] sm:$0xff]
      %v3572 = vld [vmem:[#allocation2 + $0x108] sm:$0xff]
      %v3573 = vld [vmem:[#allocation2 + $0x110] sm:$0xff]
      %v3574 = vld [vmem:[#allocation2 + $0x118] sm:$0xff]
      %v3575 = vld [vmem:[#allocation2 + $0x120] sm:$0xff]
      %v3576 = vld [vmem:[#allocation2 + $0x128] sm:$0xff]
      %v3577 = vld [vmem:[#allocation2 + $0x130] sm:$0xff]
      %v3578 = vld [vmem:[#allocation2 + $0x138] sm:$0xff]
      %v3579 = vadd.f32 %v3539, %v3499
      %v3580 = vadd.f32 %v3540, %v3500
      %v3581 = vadd.f32 %v3541, %v3501
      %v3582 = vadd.f32 %v3542, %v3502
      %v3583 = vadd.f32 %v3543, %v3503
      %v3584 = vadd.f32 %v3544, %v3504
      %v3585 = vadd.f32 %v3545, %v3505
      %v3586 = vadd.f32 %v3546, %v3506
      %v3587 = vadd.f32 %v3547, %v3507
      %v3588 = vadd.f32 %v3548, %v3508
      %v3589 = vadd.f32 %v3549, %v3509
      %v3590 = vadd.f32 %v3550, %v3510
      %v3591 = vadd.f32 %v3551, %v3511
      %v3592 = vadd.f32 %v3552, %v3512
      %v3593 = vadd.f32 %v3553, %v3513
      %v3594 = vadd.f32 %v3554, %v3514
      %v3595 = vadd.f32 %v3555, %v3515
      %v3596 = vadd.f32 %v3556, %v3516
      %v3597 = vadd.f32 %v3557, %v3517
      %v3598 = vadd.f32 %v3558, %v3518
      %v3599 = vadd.f32 %v3559, %v3519
      %v3600 = vadd.f32 %v3560, %v3520
      %v3601 = vadd.f32 %v3561, %v3521
      %v3602 = vadd.f32 %v3562, %v3522
      %v3603 = vadd.f32 %v3563, %v3523
      %v3604 = vadd.f32 %v3564, %v3524
      %v3605 = vadd.f32 %v3565, %v3525
      %v3606 = vadd.f32 %v3566, %v3526
      %v3607 = vadd.f32 %v3567, %v3527
      %v3608 = vadd.f32 %v3568, %v3528
      %v3609 = vadd.f32 %v3569, %v3529
      %v3610 = vadd.f32 %v3570, %v3530
      %v3611 = vadd.f32 %v3571, %v3531
      %v3612 = vadd.f32 %v3572, %v3532
      %v3613 = vadd.f32 %v3573, %v3533
      %v3614 = vadd.f32 %v3574, %v3534
      %v3615 = vadd.f32 %v3575, %v3535
      %v3616 = vadd.f32 %v3576, %v3536
      %v3617 = vadd.f32 %v3577, %v3537
      %v3618 = vadd.f32 %v3578, %v3538
      %3619 = vst [vmem:[#allocation2] sm:$0xff] %v3579
      %3620 = vst [vmem:[#allocation2 + $0x8] sm:$0xff] %v3580
      %3621 = vst [vmem:[#allocation2 + $0x10] sm:$0xff] %v3581
      %3622 = vst [vmem:[#allocation2 + $0x18] sm:$0xff] %v3582
      %3623 = vst [vmem:[#allocation2 + $0x20] sm:$0xff] %v3583
      %3624 = vst [vmem:[#allocation2 + $0x28] sm:$0xff] %v3584
      %3625 = vst [vmem:[#allocation2 + $0x30] sm:$0xff] %v3585
      %3626 = vst [vmem:[#allocation2 + $0x38] sm:$0xff] %v3586
      %3627 = vst [vmem:[#allocation2 + $0x40] sm:$0xff] %v3587
      %3628 = vst [vmem:[#allocation2 + $0x48] sm:$0xff] %v3588
      %3629 = vst [vmem:[#allocation2 + $0x50] sm:$0xff] %v3589
      %3630 = vst [vmem:[#allocation2 + $0x58] sm:$0xff] %v3590
      %3631 = vst [vmem:[#allocation2 + $0x60] sm:$0xff] %v3591
      %3632 = vst [vmem:[#allocation2 + $0x68] sm:$0xff] %v3592
      %3633 = vst [vmem:[#allocation2 + $0x70] sm:$0xff] %v3593
      %3634 = vst [vmem:[#allocation2 + $0x78] sm:$0xff] %v3594
      %3635 = vst [vmem:[#allocation2 + $0x80] sm:$0xff] %v3595
      %3636 = vst [vmem:[#allocation2 + $0x88] sm:$0xff] %v3596
      %3637 = vst [vmem:[#allocation2 + $0x90] sm:$0xff] %v3597
      %3638 = vst [vmem:[#allocation2 + $0x98] sm:$0xff] %v3598
      %3639 = vst [vmem:[#allocation2 + $0xa0] sm:$0xff] %v3599
      %3640 = vst [vmem:[#allocation2 + $0xa8] sm:$0xff] %v3600
      %3641 = vst [vmem:[#allocation2 + $0xb0] sm:$0xff] %v3601
      %3642 = vst [vmem:[#allocation2 + $0xb8] sm:$0xff] %v3602
      %3643 = vst [vmem:[#allocation2 + $0xc0] sm:$0xff] %v3603
      %3644 = vst [vmem:[#allocation2 + $0xc8] sm:$0xff] %v3604
      %3645 = vst [vmem:[#allocation2 + $0xd0] sm:$0xff] %v3605
      %3646 = vst [vmem:[#allocation2 + $0xd8] sm:$0xff] %v3606
      %3647 = vst [vmem:[#allocation2 + $0xe0] sm:$0xff] %v3607
      %3648 = vst [vmem:[#allocation2 + $0xe8] sm:$0xff] %v3608
      %3649 = vst [vmem:[#allocation2 + $0xf0] sm:$0xff] %v3609
      %3650 = vst [vmem:[#allocation2 + $0xf8] sm:$0xff] %v3610
      %3651 = vst [vmem:[#allocation2 + $0x100] sm:$0xff] %v3611
      %3652 = vst [vmem:[#allocation2 + $0x108] sm:$0xff] %v3612
      %3653 = vst [vmem:[#allocation2 + $0x110] sm:$0xff] %v3613
      %3654 = vst [vmem:[#allocation2 + $0x118] sm:$0xff] %v3614
      %3655 = vst [vmem:[#allocation2 + $0x120] sm:$0xff] %v3615
      %3656 = vst [vmem:[#allocation2 + $0x128] sm:$0xff] %v3616
      %3657 = vst [vmem:[#allocation2 + $0x130] sm:$0xff] %v3617
      %3658 = vst [vmem:[#allocation2 + $0x138] sm:$0xff] %v3618
      %s3659 = scalar_lea.vmem %s3, 4
      %v3660 = vld [vmem:[%s3659] sm:$0x3]
      %s3661 = scalar_lea.vmem %s4, 4
      %v3662 = vld [vmem:[%s3661] sm:$0x3]
      %v3664 = vsel %vm659, %v3662, 0
      %3666 = vmatprep.subr.bf16.mxu0 0
      %3667 = vmatpush1.bf16.msra.mxu0 %v3664
      %3668 = vmatprep.subr.bf16.mxu0 0
      %3669 = vmatpush1.bf16.msra.mxu0 0
      %3670 = vmatprep.subr.bf16.mxu0 0
      %3671 = vmatpush1.bf16.msra.mxu0 0
      %3672 = vmatprep.subr.bf16.mxu0 0
      %3673 = vmatpush1.bf16.msra.mxu0 0
      %3674 = vmatprep.subr.bf16.mxu0 0
      %3675 = vmatpush1.bf16.msra.mxu0 0
      %3676 = vmatprep.subr.bf16.mxu0 0
      %3677 = vmatpush1.bf16.msra.mxu0 0
      %3678 = vmatprep.subr.bf16.mxu0 0
      %3679 = vmatpush1.bf16.msra.mxu0 0
      %3680 = vmatprep.subr.bf16.mxu0 0
      %3681 = vmatpush1.bf16.msra.mxu0 0
      %3682 = vmatprep.subr.bf16.mxu0 0
      %3683 = vmatpush1.bf16.msra.mxu0 0
      %3684 = vmatprep.subr.bf16.mxu0 0
      %3685 = vmatpush1.bf16.msra.mxu0 0
      %3686 = vmatprep.subr.bf16.mxu0 0
      %3687 = vmatpush1.bf16.msra.mxu0 0
      %3688 = vmatprep.subr.bf16.mxu0 0
      %3689 = vmatpush1.bf16.msra.mxu0 0
      %3690 = vmatprep.subr.bf16.mxu0 0
      %3691 = vmatpush1.bf16.msra.mxu0 0
      %3692 = vmatprep.subr.bf16.mxu0 0
      %3693 = vmatpush1.bf16.msra.mxu0 0
      %3694 = vmatprep.subr.bf16.mxu0 0
      %3695 = vmatpush1.bf16.msra.mxu0 0
      %3696 = vmatprep.subr.bf16.mxu0 0
      %3697 = vmatpush1.bf16.msra.mxu0 0
      %3698 = vmatprep.mubr.bf16.mxu0 0
      %3699 = vmatmul.mubr.bf16.gmra.mrb[0].mxu0 %v600
      %v3700 = vpop.f32.mrb[0].mxu0
      %v3701 = vadd.f32 0.0, %v3700
      %v3702 = vpop.f32.mrb[0].mxu0
      %v3703 = vpop.f32.mrb[0].mxu0
      %v3704 = vadd.f32 0.0, %v3703
      %v3705 = vpop.f32.mrb[0].mxu0
      %3706 = vmatprep.mubr.bf16.mxu0 0
      %3707 = vmatmul.mubr.bf16.gmra.mrb[0].mxu0 %v603
      %v3708 = vpop.f32.mrb[0].mxu0
      %v3709 = vadd.f32 0.0, %v3708
      %v3710 = vpop.f32.mrb[0].mxu0
      %v3711 = vpop.f32.mrb[0].mxu0
      %v3712 = vadd.f32 0.0, %v3711
      %v3713 = vpop.f32.mrb[0].mxu0
      %3714 = vmatprep.mubr.bf16.mxu0 0
      %3715 = vmatmul.mubr.bf16.gmra.mrb[0].mxu0 %v606
      %v3716 = vpop.f32.mrb[0].mxu0
      %v3717 = vadd.f32 0.0, %v3716
      %v3718 = vpop.f32.mrb[0].mxu0
      %v3719 = vpop.f32.mrb[0].mxu0
      %v3720 = vadd.f32 0.0, %v3719
      %v3721 = vpop.f32.mrb[0].mxu0
      %3722 = vmatprep.mubr.bf16.mxu0 0
      %3723 = vmatmul.mubr.bf16.gmra.mrb[0].mxu0 %v609
      %v3724 = vpop.f32.mrb[0].mxu0
      %v3725 = vadd.f32 0.0, %v3724
      %v3726 = vpop.f32.mrb[0].mxu0
      %v3727 = vpop.f32.mrb[0].mxu0
      %v3728 = vadd.f32 0.0, %v3727
      %v3729 = vpop.f32.mrb[0].mxu0
      %3730 = vmatprep.mubr.bf16.mxu0 0
      %3731 = vmatmul.mubr.bf16.gmra.mrb[0].mxu0 %v612
      %v3732 = vpop.f32.mrb[0].mxu0
      %v3733 = vadd.f32 0.0, %v3732
      %v3734 = vpop.f32.mrb[0].mxu0
      %v3735 = vpop.f32.mrb[0].mxu0
      %v3736 = vadd.f32 0.0, %v3735
      %v3737 = vpop.f32.mrb[0].mxu0
      %3738 = vmatprep.mubr.bf16.mxu0 0
      %3739 = vmatmul.mubr.bf16.gmra.mrb[0].mxu0 %v615
      %v3740 = vpop.f32.mrb[0].mxu0
      %v3741 = vadd.f32 0.0, %v3740
      %v3742 = vpop.f32.mrb[0].mxu0
      %v3743 = vpop.f32.mrb[0].mxu0
      %v3744 = vadd.f32 0.0, %v3743
      %v3745 = vpop.f32.mrb[0].mxu0
      %3746 = vmatprep.mubr.bf16.mxu0 0
      %3747 = vmatmul.mubr.bf16.gmra.mrb[0].mxu0 %v618
      %v3748 = vpop.f32.mrb[0].mxu0
      %v3749 = vadd.f32 0.0, %v3748
      %v3750 = vpop.f32.mrb[0].mxu0
      %v3751 = vpop.f32.mrb[0].mxu0
      %v3752 = vadd.f32 0.0, %v3751
      %v3753 = vpop.f32.mrb[0].mxu0
      %3754 = vmatprep.mubr.bf16.mxu0 0
      %3755 = vmatmul.mubr.bf16.gmra.mrb[0].mxu0 %v621
      %v3756 = vpop.f32.mrb[0].mxu0
      %v3757 = vadd.f32 0.0, %v3756
      %v3758 = vpop.f32.mrb[0].mxu0
      %v3759 = vpop.f32.mrb[0].mxu0
      %v3760 = vadd.f32 0.0, %v3759
      %v3761 = vpop.f32.mrb[0].mxu0
      %3762 = vmatprep.mubr.bf16.mxu0 0
      %3763 = vmatmul.mubr.bf16.gmra.mrb[0].mxu0 %v624
      %v3764 = vpop.f32.mrb[0].mxu0
      %v3765 = vadd.f32 0.0, %v3764
      %v3766 = vpop.f32.mrb[0].mxu0
      %v3767 = vpop.f32.mrb[0].mxu0
      %v3768 = vadd.f32 0.0, %v3767
      %v3769 = vpop.f32.mrb[0].mxu0
      %3770 = vmatprep.mubr.bf16.mxu0 0
      %3771 = vmatmul.mubr.bf16.gmra.mrb[0].mxu0 %v627
      %v3772 = vpop.f32.mrb[0].mxu0
      %v3773 = vadd.f32 0.0, %v3772
      %v3774 = vpop.f32.mrb[0].mxu0
      %v3775 = vpop.f32.mrb[0].mxu0
      %v3776 = vadd.f32 0.0, %v3775
      %v3777 = vpop.f32.mrb[0].mxu0
      %3778 = vmatprep.mubr.bf16.mxu0 0
      %3779 = vmatmul.mubr.bf16.gmra.mrb[0].mxu0 %v630
      %v3780 = vpop.f32.mrb[0].mxu0
      %v3781 = vadd.f32 0.0, %v3780
      %v3782 = vpop.f32.mrb[0].mxu0
      %v3783 = vpop.f32.mrb[0].mxu0
      %v3784 = vadd.f32 0.0, %v3783
      %v3785 = vpop.f32.mrb[0].mxu0
      %3786 = vmatprep.mubr.bf16.mxu0 0
      %3787 = vmatmul.mubr.bf16.gmra.mrb[0].mxu0 %v633
      %v3788 = vpop.f32.mrb[0].mxu0
      %v3789 = vadd.f32 0.0, %v3788
      %v3790 = vpop.f32.mrb[0].mxu0
      %v3791 = vpop.f32.mrb[0].mxu0
      %v3792 = vadd.f32 0.0, %v3791
      %v3793 = vpop.f32.mrb[0].mxu0
      %3794 = vmatprep.mubr.bf16.mxu0 0
      %3795 = vmatmul.mubr.bf16.gmra.mrb[0].mxu0 %v636
      %v3796 = vpop.f32.mrb[0].mxu0
      %v3797 = vadd.f32 0.0, %v3796
      %v3798 = vpop.f32.mrb[0].mxu0
      %v3799 = vpop.f32.mrb[0].mxu0
      %v3800 = vadd.f32 0.0, %v3799
      %v3801 = vpop.f32.mrb[0].mxu0
      %3802 = vmatprep.mubr.bf16.mxu0 0
      %3803 = vmatmul.mubr.bf16.gmra.mrb[0].mxu0 %v639
      %v3804 = vpop.f32.mrb[0].mxu0
      %v3805 = vadd.f32 0.0, %v3804
      %v3806 = vpop.f32.mrb[0].mxu0
      %v3807 = vpop.f32.mrb[0].mxu0
      %v3808 = vadd.f32 0.0, %v3807
      %v3809 = vpop.f32.mrb[0].mxu0
      %3810 = vmatprep.mubr.bf16.mxu0 0
      %3811 = vmatmul.mubr.bf16.gmra.mrb[0].mxu0 %v642
      %v3812 = vpop.f32.mrb[0].mxu0
      %v3813 = vadd.f32 0.0, %v3812
      %v3814 = vpop.f32.mrb[0].mxu0
      %v3815 = vpop.f32.mrb[0].mxu0
      %v3816 = vadd.f32 0.0, %v3815
      %v3817 = vpop.f32.mrb[0].mxu0
      %3818 = vmatprep.mubr.bf16.mxu0 0
      %3819 = vmatmul.mubr.bf16.gmra.mrb[0].mxu0 %v645
      %v3820 = vpop.f32.mrb[0].mxu0
      %v3821 = vadd.f32 0.0, %v3820
      %v3822 = vpop.f32.mrb[0].mxu0
      %v3823 = vpop.f32.mrb[0].mxu0
      %v3824 = vadd.f32 0.0, %v3823
      %v3825 = vpop.f32.mrb[0].mxu0
      %3826 = vmatprep.mubr.bf16.mxu0 0
      %3827 = vmatmul.mubr.bf16.gmra.mrb[0].mxu0 %v648
      %v3828 = vpop.f32.mrb[0].mxu0
      %v3829 = vadd.f32 0.0, %v3828
      %v3830 = vpop.f32.mrb[0].mxu0
      %v3831 = vpop.f32.mrb[0].mxu0
      %v3832 = vadd.f32 0.0, %v3831
      %v3833 = vpop.f32.mrb[0].mxu0
      %3834 = vmatprep.mubr.bf16.mxu0 0
      %3835 = vmatmul.mubr.bf16.gmra.mrb[0].mxu0 %v651
      %v3836 = vpop.f32.mrb[0].mxu0
      %v3837 = vadd.f32 0.0, %v3836
      %v3838 = vpop.f32.mrb[0].mxu0
      %v3839 = vpop.f32.mrb[0].mxu0
      %v3840 = vadd.f32 0.0, %v3839
      %v3841 = vpop.f32.mrb[0].mxu0
      %3842 = vmatprep.mubr.bf16.mxu0 0
      %3843 = vmatmul.mubr.bf16.gmra.mrb[0].mxu0 %v654
      %v3844 = vpop.f32.mrb[0].mxu0
      %v3845 = vadd.f32 0.0, %v3844
      %v3846 = vpop.f32.mrb[0].mxu0
      %v3847 = vpop.f32.mrb[0].mxu0
      %v3848 = vadd.f32 0.0, %v3847
      %v3849 = vpop.f32.mrb[0].mxu0
      %3850 = vmatprep.mubr.bf16.mxu0 0
      %3851 = vmatmul.mubr.bf16.gmra.mrb[0].mxu0 %v657
      %v3852 = vpop.f32.mrb[0].mxu0
      %v3853 = vadd.f32 0.0, %v3852
      %v3854 = vpop.f32.mrb[0].mxu0
      %v3855 = vpop.f32.mrb[0].mxu0
      %v3856 = vadd.f32 0.0, %v3855
      %v3857 = vpop.f32.mrb[0].mxu0
      %3858 = vdwg.mxu0
      %v3860 = vsel %vm659, %v3660, 0
      %3862 = vmatprep.subr.bf16.mxu0 0
      %3863 = vmatpush1.bf16.msra.mxu0 %v3860
      %3864 = vmatprep.subr.bf16.mxu0 0
      %3865 = vmatpush1.bf16.msra.mxu0 0
      %3866 = vmatprep.subr.bf16.mxu0 0
      %3867 = vmatpush1.bf16.msra.mxu0 0
      %3868 = vmatprep.subr.bf16.mxu0 0
      %3869 = vmatpush1.bf16.msra.mxu0 0
      %3870 = vmatprep.subr.bf16.mxu0 0
      %3871 = vmatpush1.bf16.msra.mxu0 0
      %3872 = vmatprep.subr.bf16.mxu0 0
      %3873 = vmatpush1.bf16.msra.mxu0 0
      %3874 = vmatprep.subr.bf16.mxu0 0
      %3875 = vmatpush1.bf16.msra.mxu0 0
      %3876 = vmatprep.subr.bf16.mxu0 0
      %3877 = vmatpush1.bf16.msra.mxu0 0
      %3878 = vmatprep.subr.bf16.mxu0 0
      %3879 = vmatpush1.bf16.msra.mxu0 0
      %3880 = vmatprep.subr.bf16.mxu0 0
      %3881 = vmatpush1.bf16.msra.mxu0 0
      %3882 = vmatprep.subr.bf16.mxu0 0
      %3883 = vmatpush1.bf16.msra.mxu0 0
      %3884 = vmatprep.subr.bf16.mxu0 0
      %3885 = vmatpush1.bf16.msra.mxu0 0
      %3886 = vmatprep.subr.bf16.mxu0 0
      %3887 = vmatpush1.bf16.msra.mxu0 0
      %3888 = vmatprep.subr.bf16.mxu0 0
      %3889 = vmatpush1.bf16.msra.mxu0 0
      %3890 = vmatprep.subr.bf16.mxu0 0
      %3891 = vmatpush1.bf16.msra.mxu0 0
      %3892 = vmatprep.subr.bf16.mxu0 0
      %3893 = vmatpush1.bf16.msra.mxu0 0
      %3894 = vmatprep.mubr.bf16.mxu0 0
      %3895 = vmatmul.mubr.bf16.gmra.mrb[0].mxu0 %v957
      %v3896 = vpop.f32.mrb[0].mxu0
      %v3897 = vadd.f32 %v3701, %v3896
      %v3898 = vpop.f32.mrb[0].mxu0
      %v3899 = vpop.f32.mrb[0].mxu0
      %v3900 = vadd.f32 %v3704, %v3899
      %v3901 = vpop.f32.mrb[0].mxu0
      %3902 = vmatprep.mubr.bf16.mxu0 0
      %3903 = vmatmul.mubr.bf16.gmra.mrb[0].mxu0 %v960
      %v3904 = vpop.f32.mrb[0].mxu0
      %v3905 = vadd.f32 %v3709, %v3904
      %v3906 = vpop.f32.mrb[0].mxu0
      %v3907 = vpop.f32.mrb[0].mxu0
      %v3908 = vadd.f32 %v3712, %v3907
      %v3909 = vpop.f32.mrb[0].mxu0
      %3910 = vmatprep.mubr.bf16.mxu0 0
      %3911 = vmatmul.mubr.bf16.gmra.mrb[0].mxu0 %v963
      %v3912 = vpop.f32.mrb[0].mxu0
      %v3913 = vadd.f32 %v3717, %v3912
      %v3914 = vpop.f32.mrb[0].mxu0
      %v3915 = vpop.f32.mrb[0].mxu0
      %v3916 = vadd.f32 %v3720, %v3915
      %v3917 = vpop.f32.mrb[0].mxu0
      %3918 = vmatprep.mubr.bf16.mxu0 0
      %3919 = vmatmul.mubr.bf16.gmra.mrb[0].mxu0 %v966
      %v3920 = vpop.f32.mrb[0].mxu0
      %v3921 = vadd.f32 %v3725, %v3920
      %v3922 = vpop.f32.mrb[0].mxu0
      %v3923 = vpop.f32.mrb[0].mxu0
      %v3924 = vadd.f32 %v3728, %v3923
      %v3925 = vpop.f32.mrb[0].mxu0
      %3926 = vmatprep.mubr.bf16.mxu0 0
      %3927 = vmatmul.mubr.bf16.gmra.mrb[0].mxu0 %v969
      %v3928 = vpop.f32.mrb[0].mxu0
      %v3929 = vadd.f32 %v3733, %v3928
      %v3930 = vpop.f32.mrb[0].mxu0
      %v3931 = vpop.f32.mrb[0].mxu0
      %v3932 = vadd.f32 %v3736, %v3931
      %v3933 = vpop.f32.mrb[0].mxu0
      %3934 = vmatprep.mubr.bf16.mxu0 0
      %3935 = vmatmul.mubr.bf16.gmra.mrb[0].mxu0 %v972
      %v3936 = vpop.f32.mrb[0].mxu0
      %v3937 = vadd.f32 %v3741, %v3936
      %v3938 = vpop.f32.mrb[0].mxu0
      %v3939 = vpop.f32.mrb[0].mxu0
      %v3940 = vadd.f32 %v3744, %v3939
      %v3941 = vpop.f32.mrb[0].mxu0
      %3942 = vmatprep.mubr.bf16.mxu0 0
      %3943 = vmatmul.mubr.bf16.gmra.mrb[0].mxu0 %v975
      %v3944 = vpop.f32.mrb[0].mxu0
      %v3945 = vadd.f32 %v3749, %v3944
      %v3946 = vpop.f32.mrb[0].mxu0
      %v3947 = vpop.f32.mrb[0].mxu0
      %v3948 = vadd.f32 %v3752, %v3947
      %v3949 = vpop.f32.mrb[0].mxu0
      %3950 = vmatprep.mubr.bf16.mxu0 0
      %3951 = vmatmul.mubr.bf16.gmra.mrb[0].mxu0 %v978
      %v3952 = vpop.f32.mrb[0].mxu0
      %v3953 = vadd.f32 %v3757, %v3952
      %v3954 = vpop.f32.mrb[0].mxu0
      %v3955 = vpop.f32.mrb[0].mxu0
      %v3956 = vadd.f32 %v3760, %v3955
      %v3957 = vpop.f32.mrb[0].mxu0
      %3958 = vmatprep.mubr.bf16.mxu0 0
      %3959 = vmatmul.mubr.bf16.gmra.mrb[0].mxu0 %v981
      %v3960 = vpop.f32.mrb[0].mxu0
      %v3961 = vadd.f32 %v3765, %v3960
      %v3962 = vpop.f32.mrb[0].mxu0
      %v3963 = vpop.f32.mrb[0].mxu0
      %v3964 = vadd.f32 %v3768, %v3963
      %v3965 = vpop.f32.mrb[0].mxu0
      %3966 = vmatprep.mubr.bf16.mxu0 0
      %3967 = vmatmul.mubr.bf16.gmra.mrb[0].mxu0 %v984
      %v3968 = vpop.f32.mrb[0].mxu0
      %v3969 = vadd.f32 %v3773, %v3968
      %v3970 = vpop.f32.mrb[0].mxu0
      %v3971 = vpop.f32.mrb[0].mxu0
      %v3972 = vadd.f32 %v3776, %v3971
      %v3973 = vpop.f32.mrb[0].mxu0
      %3974 = vmatprep.mubr.bf16.mxu0 0
      %3975 = vmatmul.mubr.bf16.gmra.mrb[0].mxu0 %v987
      %v3976 = vpop.f32.mrb[0].mxu0
      %v3977 = vadd.f32 %v3781, %v3976
      %v3978 = vpop.f32.mrb[0].mxu0
      %v3979 = vpop.f32.mrb[0].mxu0
      %v3980 = vadd.f32 %v3784, %v3979
      %v3981 = vpop.f32.mrb[0].mxu0
      %3982 = vmatprep.mubr.bf16.mxu0 0
      %3983 = vmatmul.mubr.bf16.gmra.mrb[0].mxu0 %v990
      %v3984 = vpop.f32.mrb[0].mxu0
      %v3985 = vadd.f32 %v3789, %v3984
      %v3986 = vpop.f32.mrb[0].mxu0
      %v3987 = vpop.f32.mrb[0].mxu0
      %v3988 = vadd.f32 %v3792, %v3987
      %v3989 = vpop.f32.mrb[0].mxu0
      %3990 = vmatprep.mubr.bf16.mxu0 0
      %3991 = vmatmul.mubr.bf16.gmra.mrb[0].mxu0 %v993
      %v3992 = vpop.f32.mrb[0].mxu0
      %v3993 = vadd.f32 %v3797, %v3992
      %v3994 = vpop.f32.mrb[0].mxu0
      %v3995 = vpop.f32.mrb[0].mxu0
      %v3996 = vadd.f32 %v3800, %v3995
      %v3997 = vpop.f32.mrb[0].mxu0
      %3998 = vmatprep.mubr.bf16.mxu0 0
      %3999 = vmatmul.mubr.bf16.gmra.mrb[0].mxu0 %v996
      %v4000 = vpop.f32.mrb[0].mxu0
      %v4001 = vadd.f32 %v3805, %v4000
      %v4002 = vpop.f32.mrb[0].mxu0
      %v4003 = vpop.f32.mrb[0].mxu0
      %v4004 = vadd.f32 %v3808, %v4003
      %v4005 = vpop.f32.mrb[0].mxu0
      %4006 = vmatprep.mubr.bf16.mxu0 0
      %4007 = vmatmul.mubr.bf16.gmra.mrb[0].mxu0 %v999
      %v4008 = vpop.f32.mrb[0].mxu0
      %v4009 = vadd.f32 %v3813, %v4008
      %v4010 = vpop.f32.mrb[0].mxu0
      %v4011 = vpop.f32.mrb[0].mxu0
      %v4012 = vadd.f32 %v3816, %v4011
      %v4013 = vpop.f32.mrb[0].mxu0
      %4014 = vmatprep.mubr.bf16.mxu0 0
      %4015 = vmatmul.mubr.bf16.gmra.mrb[0].mxu0 %v1002
      %v4016 = vpop.f32.mrb[0].mxu0
      %v4017 = vadd.f32 %v3821, %v4016
      %v4018 = vpop.f32.mrb[0].mxu0
      %v4019 = vpop.f32.mrb[0].mxu0
      %v4020 = vadd.f32 %v3824, %v4019
      %v4021 = vpop.f32.mrb[0].mxu0
      %4022 = vmatprep.mubr.bf16.mxu0 0
      %4023 = vmatmul.mubr.bf16.gmra.mrb[0].mxu0 %v1005
      %v4024 = vpop.f32.mrb[0].mxu0
      %v4025 = vadd.f32 %v3829, %v4024
      %v4026 = vpop.f32.mrb[0].mxu0
      %v4027 = vpop.f32.mrb[0].mxu0
      %v4028 = vadd.f32 %v3832, %v4027
      %v4029 = vpop.f32.mrb[0].mxu0
      %4030 = vmatprep.mubr.bf16.mxu0 0
      %4031 = vmatmul.mubr.bf16.gmra.mrb[0].mxu0 %v1008
      %v4032 = vpop.f32.mrb[0].mxu0
      %v4033 = vadd.f32 %v3837, %v4032
      %v4034 = vpop.f32.mrb[0].mxu0
      %v4035 = vpop.f32.mrb[0].mxu0
      %v4036 = vadd.f32 %v3840, %v4035
      %v4037 = vpop.f32.mrb[0].mxu0
      %4038 = vmatprep.mubr.bf16.mxu0 0
      %4039 = vmatmul.mubr.bf16.gmra.mrb[0].mxu0 %v1011
      %v4040 = vpop.f32.mrb[0].mxu0
      %v4041 = vadd.f32 %v3845, %v4040
      %v4042 = vpop.f32.mrb[0].mxu0
      %v4043 = vpop.f32.mrb[0].mxu0
      %v4044 = vadd.f32 %v3848, %v4043
      %v4045 = vpop.f32.mrb[0].mxu0
      %4046 = vmatprep.mubr.bf16.mxu0 0
      %4047 = vmatmul.mubr.bf16.gmra.mrb[0].mxu0 %v1014
      %v4048 = vpop.f32.mrb[0].mxu0
      %v4049 = vadd.f32 %v3853, %v4048
      %v4050 = vpop.f32.mrb[0].mxu0
      %v4051 = vpop.f32.mrb[0].mxu0
      %v4052 = vadd.f32 %v3856, %v4051
      %v4053 = vpop.f32.mrb[0].mxu0
      %4054 = vdwg.mxu0
      %s4055 = scalar_lea.vmem %s3, 10
      %v4056 = vld [vmem:[%s4055] sm:$0x3]
      %s4057 = scalar_lea.vmem %s4, 10
      %v4058 = vld [vmem:[%s4057] sm:$0x3]
      %v4060 = vsel %vm659, %v4058, 0
      %4062 = vmatprep.subr.bf16.mxu0 0
      %4063 = vmatpush1.bf16.msra.mxu0 %v4060
      %4064 = vmatprep.subr.bf16.mxu0 0
      %4065 = vmatpush1.bf16.msra.mxu0 0
      %4066 = vmatprep.subr.bf16.mxu0 0
      %4067 = vmatpush1.bf16.msra.mxu0 0
      %4068 = vmatprep.subr.bf16.mxu0 0
      %4069 = vmatpush1.bf16.msra.mxu0 0
      %4070 = vmatprep.subr.bf16.mxu0 0
      %4071 = vmatpush1.bf16.msra.mxu0 0
      %4072 = vmatprep.subr.bf16.mxu0 0
      %4073 = vmatpush1.bf16.msra.mxu0 0
      %4074 = vmatprep.subr.bf16.mxu0 0
      %4075 = vmatpush1.bf16.msra.mxu0 0
      %4076 = vmatprep.subr.bf16.mxu0 0
      %4077 = vmatpush1.bf16.msra.mxu0 0
      %4078 = vmatprep.subr.bf16.mxu0 0
      %4079 = vmatpush1.bf16.msra.mxu0 0
      %4080 = vmatprep.subr.bf16.mxu0 0
      %4081 = vmatpush1.bf16.msra.mxu0 0
      %4082 = vmatprep.subr.bf16.mxu0 0
      %4083 = vmatpush1.bf16.msra.mxu0 0
      %4084 = vmatprep.subr.bf16.mxu0 0
      %4085 = vmatpush1.bf16.msra.mxu0 0
      %4086 = vmatprep.subr.bf16.mxu0 0
      %4087 = vmatpush1.bf16.msra.mxu0 0
      %4088 = vmatprep.subr.bf16.mxu0 0
      %4089 = vmatpush1.bf16.msra.mxu0 0
      %4090 = vmatprep.subr.bf16.mxu0 0
      %4091 = vmatpush1.bf16.msra.mxu0 0
      %4092 = vmatprep.subr.bf16.mxu0 0
      %4093 = vmatpush1.bf16.msra.mxu0 0
      %4094 = vmatprep.mubr.bf16.mxu0 0
      %4095 = vmatmul.mubr.bf16.gmra.mrb[0].mxu0 %v606
      %v4096 = vpop.f32.mrb[0].mxu0
      %v4097 = vadd.f32 0.0, %v4096
      %v4098 = vpop.f32.mrb[0].mxu0
      %v4099 = vpop.f32.mrb[0].mxu0
      %v4100 = vadd.f32 0.0, %v4099
      %v4101 = vpop.f32.mrb[0].mxu0
      %4102 = vmatprep.mubr.bf16.mxu0 0
      %4103 = vmatmul.mubr.bf16.gmra.mrb[0].mxu0 %v609
      %v4104 = vpop.f32.mrb[0].mxu0
      %v4105 = vadd.f32 0.0, %v4104
      %v4106 = vpop.f32.mrb[0].mxu0
      %v4107 = vpop.f32.mrb[0].mxu0
      %v4108 = vadd.f32 0.0, %v4107
      %v4109 = vpop.f32.mrb[0].mxu0
      %4110 = vmatprep.mubr.bf16.mxu0 0
      %4111 = vmatmul.mubr.bf16.gmra.mrb[0].mxu0 %v612
      %v4112 = vpop.f32.mrb[0].mxu0
      %v4113 = vadd.f32 0.0, %v4112
      %v4114 = vpop.f32.mrb[0].mxu0
      %v4115 = vpop.f32.mrb[0].mxu0
      %v4116 = vadd.f32 0.0, %v4115
      %v4117 = vpop.f32.mrb[0].mxu0
      %4118 = vmatprep.mubr.bf16.mxu0 0
      %4119 = vmatmul.mubr.bf16.gmra.mrb[0].mxu0 %v615
      %v4120 = vpop.f32.mrb[0].mxu0
      %v4121 = vadd.f32 0.0, %v4120
      %v4122 = vpop.f32.mrb[0].mxu0
      %v4123 = vpop.f32.mrb[0].mxu0
      %v4124 = vadd.f32 0.0, %v4123
      %v4125 = vpop.f32.mrb[0].mxu0
      %4126 = vmatprep.mubr.bf16.mxu0 0
      %4127 = vmatmul.mubr.bf16.gmra.mrb[0].mxu0 %v618
      %v4128 = vpop.f32.mrb[0].mxu0
      %v4129 = vadd.f32 0.0, %v4128
      %v4130 = vpop.f32.mrb[0].mxu0
      %v4131 = vpop.f32.mrb[0].mxu0
      %v4132 = vadd.f32 0.0, %v4131
      %v4133 = vpop.f32.mrb[0].mxu0
      %4134 = vmatprep.mubr.bf16.mxu0 0
      %4135 = vmatmul.mubr.bf16.gmra.mrb[0].mxu0 %v621
      %v4136 = vpop.f32.mrb[0].mxu0
      %v4137 = vadd.f32 0.0, %v4136
      %v4138 = vpop.f32.mrb[0].mxu0
      %v4139 = vpop.f32.mrb[0].mxu0
      %v4140 = vadd.f32 0.0, %v4139
      %v4141 = vpop.f32.mrb[0].mxu0
      %4142 = vmatprep.mubr.bf16.mxu0 0
      %4143 = vmatmul.mubr.bf16.gmra.mrb[0].mxu0 %v624
      %v4144 = vpop.f32.mrb[0].mxu0
      %v4145 = vadd.f32 0.0, %v4144
      %v4146 = vpop.f32.mrb[0].mxu0
      %v4147 = vpop.f32.mrb[0].mxu0
      %v4148 = vadd.f32 0.0, %v4147
      %v4149 = vpop.f32.mrb[0].mxu0
      %4150 = vmatprep.mubr.bf16.mxu0 0
      %4151 = vmatmul.mubr.bf16.gmra.mrb[0].mxu0 %v627
      %v4152 = vpop.f32.mrb[0].mxu0
      %v4153 = vadd.f32 0.0, %v4152
      %v4154 = vpop.f32.mrb[0].mxu0
      %v4155 = vpop.f32.mrb[0].mxu0
      %v4156 = vadd.f32 0.0, %v4155
      %v4157 = vpop.f32.mrb[0].mxu0
      %4158 = vmatprep.mubr.bf16.mxu0 0
      %4159 = vmatmul.mubr.bf16.gmra.mrb[0].mxu0 %v630
      %v4160 = vpop.f32.mrb[0].mxu0
      %v4161 = vadd.f32 0.0, %v4160
      %v4162 = vpop.f32.mrb[0].mxu0
      %v4163 = vpop.f32.mrb[0].mxu0
      %v4164 = vadd.f32 0.0, %v4163
      %v4165 = vpop.f32.mrb[0].mxu0
      %4166 = vmatprep.mubr.bf16.mxu0 0
      %4167 = vmatmul.mubr.bf16.gmra.mrb[0].mxu0 %v633
      %v4168 = vpop.f32.mrb[0].mxu0
      %v4169 = vadd.f32 0.0, %v4168
      %v4170 = vpop.f32.mrb[0].mxu0
      %v4171 = vpop.f32.mrb[0].mxu0
      %v4172 = vadd.f32 0.0, %v4171
      %v4173 = vpop.f32.mrb[0].mxu0
      %4174 = vmatprep.mubr.bf16.mxu0 0
      %4175 = vmatmul.mubr.bf16.gmra.mrb[0].mxu0 %v636
      %v4176 = vpop.f32.mrb[0].mxu0
      %v4177 = vadd.f32 0.0, %v4176
      %v4178 = vpop.f32.mrb[0].mxu0
      %v4179 = vpop.f32.mrb[0].mxu0
      %v4180 = vadd.f32 0.0, %v4179
      %v4181 = vpop.f32.mrb[0].mxu0
      %4182 = vmatprep.mubr.bf16.mxu0 0
      %4183 = vmatmul.mubr.bf16.gmra.mrb[0].mxu0 %v639
      %v4184 = vpop.f32.mrb[0].mxu0
      %v4185 = vadd.f32 0.0, %v4184
      %v4186 = vpop.f32.mrb[0].mxu0
      %v4187 = vpop.f32.mrb[0].mxu0
      %v4188 = vadd.f32 0.0, %v4187
      %v4189 = vpop.f32.mrb[0].mxu0
      %4190 = vmatprep.mubr.bf16.mxu0 0
      %4191 = vmatmul.mubr.bf16.gmra.mrb[0].mxu0 %v642
      %v4192 = vpop.f32.mrb[0].mxu0
      %v4193 = vadd.f32 0.0, %v4192
      %v4194 = vpop.f32.mrb[0].mxu0
      %v4195 = vpop.f32.mrb[0].mxu0
      %v4196 = vadd.f32 0.0, %v4195
      %v4197 = vpop.f32.mrb[0].mxu0
      %4198 = vmatprep.mubr.bf16.mxu0 0
      %4199 = vmatmul.mubr.bf16.gmra.mrb[0].mxu0 %v645
      %v4200 = vpop.f32.mrb[0].mxu0
      %v4201 = vadd.f32 0.0, %v4200
      %v4202 = vpop.f32.mrb[0].mxu0
      %v4203 = vpop.f32.mrb[0].mxu0
      %v4204 = vadd.f32 0.0, %v4203
      %v4205 = vpop.f32.mrb[0].mxu0
      %4206 = vmatprep.mubr.bf16.mxu0 0
      %4207 = vmatmul.mubr.bf16.gmra.mrb[0].mxu0 %v648
      %v4208 = vpop.f32.mrb[0].mxu0
      %v4209 = vadd.f32 0.0, %v4208
      %v4210 = vpop.f32.mrb[0].mxu0
      %v4211 = vpop.f32.mrb[0].mxu0
      %v4212 = vadd.f32 0.0, %v4211
      %v4213 = vpop.f32.mrb[0].mxu0
      %4214 = vmatprep.mubr.bf16.mxu0 0
      %4215 = vmatmul.mubr.bf16.gmra.mrb[0].mxu0 %v651
      %v4216 = vpop.f32.mrb[0].mxu0
      %v4217 = vadd.f32 0.0, %v4216
      %v4218 = vpop.f32.mrb[0].mxu0
      %v4219 = vpop.f32.mrb[0].mxu0
      %v4220 = vadd.f32 0.0, %v4219
      %v4221 = vpop.f32.mrb[0].mxu0
      %4222 = vmatprep.mubr.bf16.mxu0 0
      %4223 = vmatmul.mubr.bf16.gmra.mrb[0].mxu0 %v654
      %v4224 = vpop.f32.mrb[0].mxu0
      %v4225 = vadd.f32 0.0, %v4224
      %v4226 = vpop.f32.mrb[0].mxu0
      %v4227 = vpop.f32.mrb[0].mxu0
      %v4228 = vadd.f32 0.0, %v4227
      %v4229 = vpop.f32.mrb[0].mxu0
      %4230 = vmatprep.mubr.bf16.mxu0 0
      %4231 = vmatmul.mubr.bf16.gmra.mrb[0].mxu0 %v657
      %v4232 = vpop.f32.mrb[0].mxu0
      %v4233 = vadd.f32 0.0, %v4232
      %v4234 = vpop.f32.mrb[0].mxu0
      %v4235 = vpop.f32.mrb[0].mxu0
      %v4236 = vadd.f32 0.0, %v4235
      %v4237 = vpop.f32.mrb[0].mxu0
      %4238 = vmatprep.mubr.bf16.mxu0 0
      %4239 = vmatmul.mubr.bf16.gmra.mrb[0].mxu0 %v1227
      %v4240 = vpop.f32.mrb[0].mxu0
      %v4241 = vadd.f32 0.0, %v4240
      %v4242 = vpop.f32.mrb[0].mxu0
      %v4243 = vpop.f32.mrb[0].mxu0
      %v4244 = vadd.f32 0.0, %v4243
      %v4245 = vpop.f32.mrb[0].mxu0
      %4246 = vmatprep.mubr.bf16.mxu0 0
      %4247 = vmatmul.mubr.bf16.gmra.mrb[0].mxu0 %v1230
      %v4248 = vpop.f32.mrb[0].mxu0
      %v4249 = vadd.f32 0.0, %v4248
      %v4250 = vpop.f32.mrb[0].mxu0
      %v4251 = vpop.f32.mrb[0].mxu0
      %v4252 = vadd.f32 0.0, %v4251
      %v4253 = vpop.f32.mrb[0].mxu0
      %4254 = vdwg.mxu0
      %v4256 = vsel %vm659, %v4056, 0
      %4258 = vmatprep.subr.bf16.mxu0 0
      %4259 = vmatpush1.bf16.msra.mxu0 %v4256
      %4260 = vmatprep.subr.bf16.mxu0 0
      %4261 = vmatpush1.bf16.msra.mxu0 0
      %4262 = vmatprep.subr.bf16.mxu0 0
      %4263 = vmatpush1.bf16.msra.mxu0 0
      %4264 = vmatprep.subr.bf16.mxu0 0
      %4265 = vmatpush1.bf16.msra.mxu0 0
      %4266 = vmatprep.subr.bf16.mxu0 0
      %4267 = vmatpush1.bf16.msra.mxu0 0
      %4268 = vmatprep.subr.bf16.mxu0 0
      %4269 = vmatpush1.bf16.msra.mxu0 0
      %4270 = vmatprep.subr.bf16.mxu0 0
      %4271 = vmatpush1.bf16.msra.mxu0 0
      %4272 = vmatprep.subr.bf16.mxu0 0
      %4273 = vmatpush1.bf16.msra.mxu0 0
      %4274 = vmatprep.subr.bf16.mxu0 0
      %4275 = vmatpush1.bf16.msra.mxu0 0
      %4276 = vmatprep.subr.bf16.mxu0 0
      %4277 = vmatpush1.bf16.msra.mxu0 0
      %4278 = vmatprep.subr.bf16.mxu0 0
      %4279 = vmatpush1.bf16.msra.mxu0 0
      %4280 = vmatprep.subr.bf16.mxu0 0
      %4281 = vmatpush1.bf16.msra.mxu0 0
      %4282 = vmatprep.subr.bf16.mxu0 0
      %4283 = vmatpush1.bf16.msra.mxu0 0
      %4284 = vmatprep.subr.bf16.mxu0 0
      %4285 = vmatpush1.bf16.msra.mxu0 0
      %4286 = vmatprep.subr.bf16.mxu0 0
      %4287 = vmatpush1.bf16.msra.mxu0 0
      %4288 = vmatprep.subr.bf16.mxu0 0
      %4289 = vmatpush1.bf16.msra.mxu0 0
      %4290 = vmatprep.mubr.bf16.mxu0 0
      %4291 = vmatmul.mubr.bf16.gmra.mrb[0].mxu0 %v963
      %v4292 = vpop.f32.mrb[0].mxu0
      %v4293 = vadd.f32 %v4097, %v4292
      %v4294 = vpop.f32.mrb[0].mxu0
      %v4295 = vpop.f32.mrb[0].mxu0
      %v4296 = vadd.f32 %v4100, %v4295
      %v4297 = vpop.f32.mrb[0].mxu0
      %4298 = vmatprep.mubr.bf16.mxu0 0
      %4299 = vmatmul.mubr.bf16.gmra.mrb[0].mxu0 %v966
      %v4300 = vpop.f32.mrb[0].mxu0
      %v4301 = vadd.f32 %v4105, %v4300
      %v4302 = vpop.f32.mrb[0].mxu0
      %v4303 = vpop.f32.mrb[0].mxu0
      %v4304 = vadd.f32 %v4108, %v4303
      %v4305 = vpop.f32.mrb[0].mxu0
      %4306 = vmatprep.mubr.bf16.mxu0 0
      %4307 = vmatmul.mubr.bf16.gmra.mrb[0].mxu0 %v969
      %v4308 = vpop.f32.mrb[0].mxu0
      %v4309 = vadd.f32 %v4113, %v4308
      %v4310 = vpop.f32.mrb[0].mxu0
      %v4311 = vpop.f32.mrb[0].mxu0
      %v4312 = vadd.f32 %v4116, %v4311
      %v4313 = vpop.f32.mrb[0].mxu0
      %4314 = vmatprep.mubr.bf16.mxu0 0
      %4315 = vmatmul.mubr.bf16.gmra.mrb[0].mxu0 %v972
      %v4316 = vpop.f32.mrb[0].mxu0
      %v4317 = vadd.f32 %v4121, %v4316
      %v4318 = vpop.f32.mrb[0].mxu0
      %v4319 = vpop.f32.mrb[0].mxu0
      %v4320 = vadd.f32 %v4124, %v4319
      %v4321 = vpop.f32.mrb[0].mxu0
      %4322 = vmatprep.mubr.bf16.mxu0 0
      %4323 = vmatmul.mubr.bf16.gmra.mrb[0].mxu0 %v975
      %v4324 = vpop.f32.mrb[0].mxu0
      %v4325 = vadd.f32 %v4129, %v4324
      %v4326 = vpop.f32.mrb[0].mxu0
      %v4327 = vpop.f32.mrb[0].mxu0
      %v4328 = vadd.f32 %v4132, %v4327
      %v4329 = vpop.f32.mrb[0].mxu0
      %4330 = vmatprep.mubr.bf16.mxu0 0
      %4331 = vmatmul.mubr.bf16.gmra.mrb[0].mxu0 %v978
      %v4332 = vpop.f32.mrb[0].mxu0
      %v4333 = vadd.f32 %v4137, %v4332
      %v4334 = vpop.f32.mrb[0].mxu0
      %v4335 = vpop.f32.mrb[0].mxu0
      %v4336 = vadd.f32 %v4140, %v4335
      %v4337 = vpop.f32.mrb[0].mxu0
      %4338 = vmatprep.mubr.bf16.mxu0 0
      %4339 = vmatmul.mubr.bf16.gmra.mrb[0].mxu0 %v981
      %v4340 = vpop.f32.mrb[0].mxu0
      %v4341 = vadd.f32 %v4145, %v4340
      %v4342 = vpop.f32.mrb[0].mxu0
      %v4343 = vpop.f32.mrb[0].mxu0
      %v4344 = vadd.f32 %v4148, %v4343
      %v4345 = vpop.f32.mrb[0].mxu0
      %4346 = vmatprep.mubr.bf16.mxu0 0
      %4347 = vmatmul.mubr.bf16.gmra.mrb[0].mxu0 %v984
      %v4348 = vpop.f32.mrb[0].mxu0
      %v4349 = vadd.f32 %v4153, %v4348
      %v4350 = vpop.f32.mrb[0].mxu0
      %v4351 = vpop.f32.mrb[0].mxu0
      %v4352 = vadd.f32 %v4156, %v4351
      %v4353 = vpop.f32.mrb[0].mxu0
      %4354 = vmatprep.mubr.bf16.mxu0 0
      %4355 = vmatmul.mubr.bf16.gmra.mrb[0].mxu0 %v987
      %v4356 = vpop.f32.mrb[0].mxu0
      %v4357 = vadd.f32 %v4161, %v4356
      %v4358 = vpop.f32.mrb[0].mxu0
      %v4359 = vpop.f32.mrb[0].mxu0
      %v4360 = vadd.f32 %v4164, %v4359
      %v4361 = vpop.f32.mrb[0].mxu0
      %4362 = vmatprep.mubr.bf16.mxu0 0
      %4363 = vmatmul.mubr.bf16.gmra.mrb[0].mxu0 %v990
      %v4364 = vpop.f32.mrb[0].mxu0
      %v4365 = vadd.f32 %v4169, %v4364
      %v4366 = vpop.f32.mrb[0].mxu0
      %v4367 = vpop.f32.mrb[0].mxu0
      %v4368 = vadd.f32 %v4172, %v4367
      %v4369 = vpop.f32.mrb[0].mxu0
      %4370 = vmatprep.mubr.bf16.mxu0 0
      %4371 = vmatmul.mubr.bf16.gmra.mrb[0].mxu0 %v993
      %v4372 = vpop.f32.mrb[0].mxu0
      %v4373 = vadd.f32 %v4177, %v4372
      %v4374 = vpop.f32.mrb[0].mxu0
      %v4375 = vpop.f32.mrb[0].mxu0
      %v4376 = vadd.f32 %v4180, %v4375
      %v4377 = vpop.f32.mrb[0].mxu0
      %4378 = vmatprep.mubr.bf16.mxu0 0
      %4379 = vmatmul.mubr.bf16.gmra.mrb[0].mxu0 %v996
      %v4380 = vpop.f32.mrb[0].mxu0
      %v4381 = vadd.f32 %v4185, %v4380
      %v4382 = vpop.f32.mrb[0].mxu0
      %v4383 = vpop.f32.mrb[0].mxu0
      %v4384 = vadd.f32 %v4188, %v4383
      %v4385 = vpop.f32.mrb[0].mxu0
      %4386 = vmatprep.mubr.bf16.mxu0 0
      %4387 = vmatmul.mubr.bf16.gmra.mrb[0].mxu0 %v999
      %v4388 = vpop.f32.mrb[0].mxu0
      %v4389 = vadd.f32 %v4193, %v4388
      %v4390 = vpop.f32.mrb[0].mxu0
      %v4391 = vpop.f32.mrb[0].mxu0
      %v4392 = vadd.f32 %v4196, %v4391
      %v4393 = vpop.f32.mrb[0].mxu0
      %4394 = vmatprep.mubr.bf16.mxu0 0
      %4395 = vmatmul.mubr.bf16.gmra.mrb[0].mxu0 %v1002
      %v4396 = vpop.f32.mrb[0].mxu0
      %v4397 = vadd.f32 %v4201, %v4396
      %v4398 = vpop.f32.mrb[0].mxu0
      %v4399 = vpop.f32.mrb[0].mxu0
      %v4400 = vadd.f32 %v4204, %v4399
      %v4401 = vpop.f32.mrb[0].mxu0
      %4402 = vmatprep.mubr.bf16.mxu0 0
      %4403 = vmatmul.mubr.bf16.gmra.mrb[0].mxu0 %v1005
      %v4404 = vpop.f32.mrb[0].mxu0
      %v4405 = vadd.f32 %v4209, %v4404
      %v4406 = vpop.f32.mrb[0].mxu0
      %v4407 = vpop.f32.mrb[0].mxu0
      %v4408 = vadd.f32 %v4212, %v4407
      %v4409 = vpop.f32.mrb[0].mxu0
      %4410 = vmatprep.mubr.bf16.mxu0 0
      %4411 = vmatmul.mubr.bf16.gmra.mrb[0].mxu0 %v1008
      %v4412 = vpop.f32.mrb[0].mxu0
      %v4413 = vadd.f32 %v4217, %v4412
      %v4414 = vpop.f32.mrb[0].mxu0
      %v4415 = vpop.f32.mrb[0].mxu0
      %v4416 = vadd.f32 %v4220, %v4415
      %v4417 = vpop.f32.mrb[0].mxu0
      %4418 = vmatprep.mubr.bf16.mxu0 0
      %4419 = vmatmul.mubr.bf16.gmra.mrb[0].mxu0 %v1011
      %v4420 = vpop.f32.mrb[0].mxu0
      %v4421 = vadd.f32 %v4225, %v4420
      %v4422 = vpop.f32.mrb[0].mxu0
      %v4423 = vpop.f32.mrb[0].mxu0
      %v4424 = vadd.f32 %v4228, %v4423
      %v4425 = vpop.f32.mrb[0].mxu0
      %4426 = vmatprep.mubr.bf16.mxu0 0
      %4427 = vmatmul.mubr.bf16.gmra.mrb[0].mxu0 %v1014
      %v4428 = vpop.f32.mrb[0].mxu0
      %v4429 = vadd.f32 %v4233, %v4428
      %v4430 = vpop.f32.mrb[0].mxu0
      %v4431 = vpop.f32.mrb[0].mxu0
      %v4432 = vadd.f32 %v4236, %v4431
      %v4433 = vpop.f32.mrb[0].mxu0
      %4434 = vmatprep.mubr.bf16.mxu0 0
      %4435 = vmatmul.mubr.bf16.gmra.mrb[0].mxu0 %v1439
      %v4436 = vpop.f32.mrb[0].mxu0
      %v4437 = vadd.f32 %v4241, %v4436
      %v4438 = vpop.f32.mrb[0].mxu0
      %v4439 = vpop.f32.mrb[0].mxu0
      %v4440 = vadd.f32 %v4244, %v4439
      %v4441 = vpop.f32.mrb[0].mxu0
      %4442 = vmatprep.mubr.bf16.mxu0 0
      %4443 = vmatmul.mubr.bf16.gmra.mrb[0].mxu0 %v1442
      %v4444 = vpop.f32.mrb[0].mxu0
      %v4445 = vadd.f32 %v4249, %v4444
      %v4446 = vpop.f32.mrb[0].mxu0
      %v4447 = vpop.f32.mrb[0].mxu0
      %v4448 = vadd.f32 %v4252, %v4447
      %v4449 = vpop.f32.mrb[0].mxu0
      %4450 = vdwg.mxu0
      %v4451 = vadd.f32 %v3897, %v4293
      %v4452 = vadd.f32 %v3900, %v4296
      %v4453 = vadd.f32 %v3905, %v4301
      %v4454 = vadd.f32 %v3908, %v4304
      %v4455 = vadd.f32 %v3913, %v4309
      %v4456 = vadd.f32 %v3916, %v4312
      %v4457 = vadd.f32 %v3921, %v4317
      %v4458 = vadd.f32 %v3924, %v4320
      %v4459 = vadd.f32 %v3929, %v4325
      %v4460 = vadd.f32 %v3932, %v4328
      %v4461 = vadd.f32 %v3937, %v4333
      %v4462 = vadd.f32 %v3940, %v4336
      %v4463 = vadd.f32 %v3945, %v4341
      %v4464 = vadd.f32 %v3948, %v4344
      %v4465 = vadd.f32 %v3953, %v4349
      %v4466 = vadd.f32 %v3956, %v4352
      %v4467 = vadd.f32 %v3961, %v4357
      %v4468 = vadd.f32 %v3964, %v4360
      %v4469 = vadd.f32 %v3969, %v4365
      %v4470 = vadd.f32 %v3972, %v4368
      %v4471 = vadd.f32 %v3977, %v4373
      %v4472 = vadd.f32 %v3980, %v4376
      %v4473 = vadd.f32 %v3985, %v4381
      %v4474 = vadd.f32 %v3988, %v4384
      %v4475 = vadd.f32 %v3993, %v4389
      %v4476 = vadd.f32 %v3996, %v4392
      %v4477 = vadd.f32 %v4001, %v4397
      %v4478 = vadd.f32 %v4004, %v4400
      %v4479 = vadd.f32 %v4009, %v4405
      %v4480 = vadd.f32 %v4012, %v4408
      %v4481 = vadd.f32 %v4017, %v4413
      %v4482 = vadd.f32 %v4020, %v4416
      %v4483 = vadd.f32 %v4025, %v4421
      %v4484 = vadd.f32 %v4028, %v4424
      %v4485 = vadd.f32 %v4033, %v4429
      %v4486 = vadd.f32 %v4036, %v4432
      %v4487 = vadd.f32 %v4041, %v4437
      %v4488 = vadd.f32 %v4044, %v4440
      %v4489 = vadd.f32 %v4049, %v4445
      %v4490 = vadd.f32 %v4052, %v4448
      %s4491 = scalar_lea.vmem %s3, 16
      %v4492 = vld [vmem:[%s4491] sm:$0x3]
      %s4493 = scalar_lea.vmem %s4, 16
      %v4494 = vld [vmem:[%s4493] sm:$0x3]
      %v4496 = vsel %vm659, %v4494, 0
      %4498 = vmatprep.subr.bf16.mxu0 0
      %4499 = vmatpush1.bf16.msra.mxu0 %v4496
      %4500 = vmatprep.subr.bf16.mxu0 0
      %4501 = vmatpush1.bf16.msra.mxu0 0
      %4502 = vmatprep.subr.bf16.mxu0 0
      %4503 = vmatpush1.bf16.msra.mxu0 0
      %4504 = vmatprep.subr.bf16.mxu0 0
      %4505 = vmatpush1.bf16.msra.mxu0 0
      %4506 = vmatprep.subr.bf16.mxu0 0
      %4507 = vmatpush1.bf16.msra.mxu0 0
      %4508 = vmatprep.subr.bf16.mxu0 0
      %4509 = vmatpush1.bf16.msra.mxu0 0
      %4510 = vmatprep.subr.bf16.mxu0 0
      %4511 = vmatpush1.bf16.msra.mxu0 0
      %4512 = vmatprep.subr.bf16.mxu0 0
      %4513 = vmatpush1.bf16.msra.mxu0 0
      %4514 = vmatprep.subr.bf16.mxu0 0
      %4515 = vmatpush1.bf16.msra.mxu0 0
      %4516 = vmatprep.subr.bf16.mxu0 0
      %4517 = vmatpush1.bf16.msra.mxu0 0
      %4518 = vmatprep.subr.bf16.mxu0 0
      %4519 = vmatpush1.bf16.msra.mxu0 0
      %4520 = vmatprep.subr.bf16.mxu0 0
      %4521 = vmatpush1.bf16.msra.mxu0 0
      %4522 = vmatprep.subr.bf16.mxu0 0
      %4523 = vmatpush1.bf16.msra.mxu0 0
      %4524 = vmatprep.subr.bf16.mxu0 0
      %4525 = vmatpush1.bf16.msra.mxu0 0
      %4526 = vmatprep.subr.bf16.mxu0 0
      %4527 = vmatpush1.bf16.msra.mxu0 0
      %4528 = vmatprep.subr.bf16.mxu0 0
      %4529 = vmatpush1.bf16.msra.mxu0 0
      %4530 = vmatprep.mubr.bf16.mxu0 0
      %4531 = vmatmul.mubr.bf16.gmra.mrb[0].mxu0 %v612
      %v4532 = vpop.f32.mrb[0].mxu0
      %v4533 = vadd.f32 0.0, %v4532
      %v4534 = vpop.f32.mrb[0].mxu0
      %v4535 = vpop.f32.mrb[0].mxu0
      %v4536 = vadd.f32 0.0, %v4535
      %v4537 = vpop.f32.mrb[0].mxu0
      %4538 = vmatprep.mubr.bf16.mxu0 0
      %4539 = vmatmul.mubr.bf16.gmra.mrb[0].mxu0 %v615
      %v4540 = vpop.f32.mrb[0].mxu0
      %v4541 = vadd.f32 0.0, %v4540
      %v4542 = vpop.f32.mrb[0].mxu0
      %v4543 = vpop.f32.mrb[0].mxu0
      %v4544 = vadd.f32 0.0, %v4543
      %v4545 = vpop.f32.mrb[0].mxu0
      %4546 = vmatprep.mubr.bf16.mxu0 0
      %4547 = vmatmul.mubr.bf16.gmra.mrb[0].mxu0 %v618
      %v4548 = vpop.f32.mrb[0].mxu0
      %v4549 = vadd.f32 0.0, %v4548
      %v4550 = vpop.f32.mrb[0].mxu0
      %v4551 = vpop.f32.mrb[0].mxu0
      %v4552 = vadd.f32 0.0, %v4551
      %v4553 = vpop.f32.mrb[0].mxu0
      %4554 = vmatprep.mubr.bf16.mxu0 0
      %4555 = vmatmul.mubr.bf16.gmra.mrb[0].mxu0 %v621
      %v4556 = vpop.f32.mrb[0].mxu0
      %v4557 = vadd.f32 0.0, %v4556
      %v4558 = vpop.f32.mrb[0].mxu0
      %v4559 = vpop.f32.mrb[0].mxu0
      %v4560 = vadd.f32 0.0, %v4559
      %v4561 = vpop.f32.mrb[0].mxu0
      %4562 = vmatprep.mubr.bf16.mxu0 0
      %4563 = vmatmul.mubr.bf16.gmra.mrb[0].mxu0 %v624
      %v4564 = vpop.f32.mrb[0].mxu0
      %v4565 = vadd.f32 0.0, %v4564
      %v4566 = vpop.f32.mrb[0].mxu0
      %v4567 = vpop.f32.mrb[0].mxu0
      %v4568 = vadd.f32 0.0, %v4567
      %v4569 = vpop.f32.mrb[0].mxu0
      %4570 = vmatprep.mubr.bf16.mxu0 0
      %4571 = vmatmul.mubr.bf16.gmra.mrb[0].mxu0 %v627
      %v4572 = vpop.f32.mrb[0].mxu0
      %v4573 = vadd.f32 0.0, %v4572
      %v4574 = vpop.f32.mrb[0].mxu0
      %v4575 = vpop.f32.mrb[0].mxu0
      %v4576 = vadd.f32 0.0, %v4575
      %v4577 = vpop.f32.mrb[0].mxu0
      %4578 = vmatprep.mubr.bf16.mxu0 0
      %4579 = vmatmul.mubr.bf16.gmra.mrb[0].mxu0 %v630
      %v4580 = vpop.f32.mrb[0].mxu0
      %v4581 = vadd.f32 0.0, %v4580
      %v4582 = vpop.f32.mrb[0].mxu0
      %v4583 = vpop.f32.mrb[0].mxu0
      %v4584 = vadd.f32 0.0, %v4583
      %v4585 = vpop.f32.mrb[0].mxu0
      %4586 = vmatprep.mubr.bf16.mxu0 0
      %4587 = vmatmul.mubr.bf16.gmra.mrb[0].mxu0 %v633
      %v4588 = vpop.f32.mrb[0].mxu0
      %v4589 = vadd.f32 0.0, %v4588
      %v4590 = vpop.f32.mrb[0].mxu0
      %v4591 = vpop.f32.mrb[0].mxu0
      %v4592 = vadd.f32 0.0, %v4591
      %v4593 = vpop.f32.mrb[0].mxu0
      %4594 = vmatprep.mubr.bf16.mxu0 0
      %4595 = vmatmul.mubr.bf16.gmra.mrb[0].mxu0 %v636
      %v4596 = vpop.f32.mrb[0].mxu0
      %v4597 = vadd.f32 0.0, %v4596
      %v4598 = vpop.f32.mrb[0].mxu0
      %v4599 = vpop.f32.mrb[0].mxu0
      %v4600 = vadd.f32 0.0, %v4599
      %v4601 = vpop.f32.mrb[0].mxu0
      %4602 = vmatprep.mubr.bf16.mxu0 0
      %4603 = vmatmul.mubr.bf16.gmra.mrb[0].mxu0 %v639
      %v4604 = vpop.f32.mrb[0].mxu0
      %v4605 = vadd.f32 0.0, %v4604
      %v4606 = vpop.f32.mrb[0].mxu0
      %v4607 = vpop.f32.mrb[0].mxu0
      %v4608 = vadd.f32 0.0, %v4607
      %v4609 = vpop.f32.mrb[0].mxu0
      %4610 = vmatprep.mubr.bf16.mxu0 0
      %4611 = vmatmul.mubr.bf16.gmra.mrb[0].mxu0 %v642
      %v4612 = vpop.f32.mrb[0].mxu0
      %v4613 = vadd.f32 0.0, %v4612
      %v4614 = vpop.f32.mrb[0].mxu0
      %v4615 = vpop.f32.mrb[0].mxu0
      %v4616 = vadd.f32 0.0, %v4615
      %v4617 = vpop.f32.mrb[0].mxu0
      %4618 = vmatprep.mubr.bf16.mxu0 0
      %4619 = vmatmul.mubr.bf16.gmra.mrb[0].mxu0 %v645
      %v4620 = vpop.f32.mrb[0].mxu0
      %v4621 = vadd.f32 0.0, %v4620
      %v4622 = vpop.f32.mrb[0].mxu0
      %v4623 = vpop.f32.mrb[0].mxu0
      %v4624 = vadd.f32 0.0, %v4623
      %v4625 = vpop.f32.mrb[0].mxu0
      %4626 = vmatprep.mubr.bf16.mxu0 0
      %4627 = vmatmul.mubr.bf16.gmra.mrb[0].mxu0 %v648
      %v4628 = vpop.f32.mrb[0].mxu0
      %v4629 = vadd.f32 0.0, %v4628
      %v4630 = vpop.f32.mrb[0].mxu0
      %v4631 = vpop.f32.mrb[0].mxu0
      %v4632 = vadd.f32 0.0, %v4631
      %v4633 = vpop.f32.mrb[0].mxu0
      %4634 = vmatprep.mubr.bf16.mxu0 0
      %4635 = vmatmul.mubr.bf16.gmra.mrb[0].mxu0 %v651
      %v4636 = vpop.f32.mrb[0].mxu0
      %v4637 = vadd.f32 0.0, %v4636
      %v4638 = vpop.f32.mrb[0].mxu0
      %v4639 = vpop.f32.mrb[0].mxu0
      %v4640 = vadd.f32 0.0, %v4639
      %v4641 = vpop.f32.mrb[0].mxu0
      %4642 = vmatprep.mubr.bf16.mxu0 0
      %4643 = vmatmul.mubr.bf16.gmra.mrb[0].mxu0 %v654
      %v4644 = vpop.f32.mrb[0].mxu0
      %v4645 = vadd.f32 0.0, %v4644
      %v4646 = vpop.f32.mrb[0].mxu0
      %v4647 = vpop.f32.mrb[0].mxu0
      %v4648 = vadd.f32 0.0, %v4647
      %v4649 = vpop.f32.mrb[0].mxu0
      %4650 = vmatprep.mubr.bf16.mxu0 0
      %4651 = vmatmul.mubr.bf16.gmra.mrb[0].mxu0 %v657
      %v4652 = vpop.f32.mrb[0].mxu0
      %v4653 = vadd.f32 0.0, %v4652
      %v4654 = vpop.f32.mrb[0].mxu0
      %v4655 = vpop.f32.mrb[0].mxu0
      %v4656 = vadd.f32 0.0, %v4655
      %v4657 = vpop.f32.mrb[0].mxu0
      %4658 = vmatprep.mubr.bf16.mxu0 0
      %4659 = vmatmul.mubr.bf16.gmra.mrb[0].mxu0 %v1227
      %v4660 = vpop.f32.mrb[0].mxu0
      %v4661 = vadd.f32 0.0, %v4660
      %v4662 = vpop.f32.mrb[0].mxu0
      %v4663 = vpop.f32.mrb[0].mxu0
      %v4664 = vadd.f32 0.0, %v4663
      %v4665 = vpop.f32.mrb[0].mxu0
      %4666 = vmatprep.mubr.bf16.mxu0 0
      %4667 = vmatmul.mubr.bf16.gmra.mrb[0].mxu0 %v1230
      %v4668 = vpop.f32.mrb[0].mxu0
      %v4669 = vadd.f32 0.0, %v4668
      %v4670 = vpop.f32.mrb[0].mxu0
      %v4671 = vpop.f32.mrb[0].mxu0
      %v4672 = vadd.f32 0.0, %v4671
      %v4673 = vpop.f32.mrb[0].mxu0
      %4674 = vmatprep.mubr.bf16.mxu0 0
      %4675 = vmatmul.mubr.bf16.gmra.mrb[0].mxu0 %v1695
      %v4676 = vpop.f32.mrb[0].mxu0
      %v4677 = vadd.f32 0.0, %v4676
      %v4678 = vpop.f32.mrb[0].mxu0
      %v4679 = vpop.f32.mrb[0].mxu0
      %v4680 = vadd.f32 0.0, %v4679
      %v4681 = vpop.f32.mrb[0].mxu0
      %4682 = vmatprep.mubr.bf16.mxu0 0
      %4683 = vmatmul.mubr.bf16.gmra.mrb[0].mxu0 %v1698
      %v4684 = vpop.f32.mrb[0].mxu0
      %v4685 = vadd.f32 0.0, %v4684
      %v4686 = vpop.f32.mrb[0].mxu0
      %v4687 = vpop.f32.mrb[0].mxu0
      %v4688 = vadd.f32 0.0, %v4687
      %v4689 = vpop.f32.mrb[0].mxu0
      %4690 = vdwg.mxu0
      %v4692 = vsel %vm659, %v4492, 0
      %4694 = vmatprep.subr.bf16.mxu0 0
      %4695 = vmatpush1.bf16.msra.mxu0 %v4692
      %4696 = vmatprep.subr.bf16.mxu0 0
      %4697 = vmatpush1.bf16.msra.mxu0 0
      %4698 = vmatprep.subr.bf16.mxu0 0
      %4699 = vmatpush1.bf16.msra.mxu0 0
      %4700 = vmatprep.subr.bf16.mxu0 0
      %4701 = vmatpush1.bf16.msra.mxu0 0
      %4702 = vmatprep.subr.bf16.mxu0 0
      %4703 = vmatpush1.bf16.msra.mxu0 0
      %4704 = vmatprep.subr.bf16.mxu0 0
      %4705 = vmatpush1.bf16.msra.mxu0 0
      %4706 = vmatprep.subr.bf16.mxu0 0
      %4707 = vmatpush1.bf16.msra.mxu0 0
      %4708 = vmatprep.subr.bf16.mxu0 0
      %4709 = vmatpush1.bf16.msra.mxu0 0
      %4710 = vmatprep.subr.bf16.mxu0 0
      %4711 = vmatpush1.bf16.msra.mxu0 0
      %4712 = vmatprep.subr.bf16.mxu0 0
      %4713 = vmatpush1.bf16.msra.mxu0 0
      %4714 = vmatprep.subr.bf16.mxu0 0
      %4715 = vmatpush1.bf16.msra.mxu0 0
      %4716 = vmatprep.subr.bf16.mxu0 0
      %4717 = vmatpush1.bf16.msra.mxu0 0
      %4718 = vmatprep.subr.bf16.mxu0 0
      %4719 = vmatpush1.bf16.msra.mxu0 0
      %4720 = vmatprep.subr.bf16.mxu0 0
      %4721 = vmatpush1.bf16.msra.mxu0 0
      %4722 = vmatprep.subr.bf16.mxu0 0
      %4723 = vmatpush1.bf16.msra.mxu0 0
      %4724 = vmatprep.subr.bf16.mxu0 0
      %4725 = vmatpush1.bf16.msra.mxu0 0
      %4726 = vmatprep.mubr.bf16.mxu0 0
      %4727 = vmatmul.mubr.bf16.gmra.mrb[0].mxu0 %v969
      %v4728 = vpop.f32.mrb[0].mxu0
      %v4729 = vadd.f32 %v4533, %v4728
      %v4730 = vpop.f32.mrb[0].mxu0
      %v4731 = vpop.f32.mrb[0].mxu0
      %v4732 = vadd.f32 %v4536, %v4731
      %v4733 = vpop.f32.mrb[0].mxu0
      %4734 = vmatprep.mubr.bf16.mxu0 0
      %4735 = vmatmul.mubr.bf16.gmra.mrb[0].mxu0 %v972
      %v4736 = vpop.f32.mrb[0].mxu0
      %v4737 = vadd.f32 %v4541, %v4736
      %v4738 = vpop.f32.mrb[0].mxu0
      %v4739 = vpop.f32.mrb[0].mxu0
      %v4740 = vadd.f32 %v4544, %v4739
      %v4741 = vpop.f32.mrb[0].mxu0
      %4742 = vmatprep.mubr.bf16.mxu0 0
      %4743 = vmatmul.mubr.bf16.gmra.mrb[0].mxu0 %v975
      %v4744 = vpop.f32.mrb[0].mxu0
      %v4745 = vadd.f32 %v4549, %v4744
      %v4746 = vpop.f32.mrb[0].mxu0
      %v4747 = vpop.f32.mrb[0].mxu0
      %v4748 = vadd.f32 %v4552, %v4747
      %v4749 = vpop.f32.mrb[0].mxu0
      %4750 = vmatprep.mubr.bf16.mxu0 0
      %4751 = vmatmul.mubr.bf16.gmra.mrb[0].mxu0 %v978
      %v4752 = vpop.f32.mrb[0].mxu0
      %v4753 = vadd.f32 %v4557, %v4752
      %v4754 = vpop.f32.mrb[0].mxu0
      %v4755 = vpop.f32.mrb[0].mxu0
      %v4756 = vadd.f32 %v4560, %v4755
      %v4757 = vpop.f32.mrb[0].mxu0
      %4758 = vmatprep.mubr.bf16.mxu0 0
      %4759 = vmatmul.mubr.bf16.gmra.mrb[0].mxu0 %v981
      %v4760 = vpop.f32.mrb[0].mxu0
      %v4761 = vadd.f32 %v4565, %v4760
      %v4762 = vpop.f32.mrb[0].mxu0
      %v4763 = vpop.f32.mrb[0].mxu0
      %v4764 = vadd.f32 %v4568, %v4763
      %v4765 = vpop.f32.mrb[0].mxu0
      %4766 = vmatprep.mubr.bf16.mxu0 0
      %4767 = vmatmul.mubr.bf16.gmra.mrb[0].mxu0 %v984
      %v4768 = vpop.f32.mrb[0].mxu0
      %v4769 = vadd.f32 %v4573, %v4768
      %v4770 = vpop.f32.mrb[0].mxu0
      %v4771 = vpop.f32.mrb[0].mxu0
      %v4772 = vadd.f32 %v4576, %v4771
      %v4773 = vpop.f32.mrb[0].mxu0
      %4774 = vmatprep.mubr.bf16.mxu0 0
      %4775 = vmatmul.mubr.bf16.gmra.mrb[0].mxu0 %v987
      %v4776 = vpop.f32.mrb[0].mxu0
      %v4777 = vadd.f32 %v4581, %v4776
      %v4778 = vpop.f32.mrb[0].mxu0
      %v4779 = vpop.f32.mrb[0].mxu0
      %v4780 = vadd.f32 %v4584, %v4779
      %v4781 = vpop.f32.mrb[0].mxu0
      %4782 = vmatprep.mubr.bf16.mxu0 0
      %4783 = vmatmul.mubr.bf16.gmra.mrb[0].mxu0 %v990
      %v4784 = vpop.f32.mrb[0].mxu0
      %v4785 = vadd.f32 %v4589, %v4784
      %v4786 = vpop.f32.mrb[0].mxu0
      %v4787 = vpop.f32.mrb[0].mxu0
      %v4788 = vadd.f32 %v4592, %v4787
      %v4789 = vpop.f32.mrb[0].mxu0
      %4790 = vmatprep.mubr.bf16.mxu0 0
      %4791 = vmatmul.mubr.bf16.gmra.mrb[0].mxu0 %v993
      %v4792 = vpop.f32.mrb[0].mxu0
      %v4793 = vadd.f32 %v4597, %v4792
      %v4794 = vpop.f32.mrb[0].mxu0
      %v4795 = vpop.f32.mrb[0].mxu0
      %v4796 = vadd.f32 %v4600, %v4795
      %v4797 = vpop.f32.mrb[0].mxu0
      %4798 = vmatprep.mubr.bf16.mxu0 0
      %4799 = vmatmul.mubr.bf16.gmra.mrb[0].mxu0 %v996
      %v4800 = vpop.f32.mrb[0].mxu0
      %v4801 = vadd.f32 %v4605, %v4800
      %v4802 = vpop.f32.mrb[0].mxu0
      %v4803 = vpop.f32.mrb[0].mxu0
      %v4804 = vadd.f32 %v4608, %v4803
      %v4805 = vpop.f32.mrb[0].mxu0
      %4806 = vmatprep.mubr.bf16.mxu0 0
      %4807 = vmatmul.mubr.bf16.gmra.mrb[0].mxu0 %v999
      %v4808 = vpop.f32.mrb[0].mxu0
      %v4809 = vadd.f32 %v4613, %v4808
      %v4810 = vpop.f32.mrb[0].mxu0
      %v4811 = vpop.f32.mrb[0].mxu0
      %v4812 = vadd.f32 %v4616, %v4811
      %v4813 = vpop.f32.mrb[0].mxu0
      %4814 = vmatprep.mubr.bf16.mxu0 0
      %4815 = vmatmul.mubr.bf16.gmra.mrb[0].mxu0 %v1002
      %v4816 = vpop.f32.mrb[0].mxu0
      %v4817 = vadd.f32 %v4621, %v4816
      %v4818 = vpop.f32.mrb[0].mxu0
      %v4819 = vpop.f32.mrb[0].mxu0
      %v4820 = vadd.f32 %v4624, %v4819
      %v4821 = vpop.f32.mrb[0].mxu0
      %4822 = vmatprep.mubr.bf16.mxu0 0
      %4823 = vmatmul.mubr.bf16.gmra.mrb[0].mxu0 %v1005
      %v4824 = vpop.f32.mrb[0].mxu0
      %v4825 = vadd.f32 %v4629, %v4824
      %v4826 = vpop.f32.mrb[0].mxu0
      %v4827 = vpop.f32.mrb[0].mxu0
      %v4828 = vadd.f32 %v4632, %v4827
      %v4829 = vpop.f32.mrb[0].mxu0
      %4830 = vmatprep.mubr.bf16.mxu0 0
      %4831 = vmatmul.mubr.bf16.gmra.mrb[0].mxu0 %v1008
      %v4832 = vpop.f32.mrb[0].mxu0
      %v4833 = vadd.f32 %v4637, %v4832
      %v4834 = vpop.f32.mrb[0].mxu0
      %v4835 = vpop.f32.mrb[0].mxu0
      %v4836 = vadd.f32 %v4640, %v4835
      %v4837 = vpop.f32.mrb[0].mxu0
      %4838 = vmatprep.mubr.bf16.mxu0 0
      %4839 = vmatmul.mubr.bf16.gmra.mrb[0].mxu0 %v1011
      %v4840 = vpop.f32.mrb[0].mxu0
      %v4841 = vadd.f32 %v4645, %v4840
      %v4842 = vpop.f32.mrb[0].mxu0
      %v4843 = vpop.f32.mrb[0].mxu0
      %v4844 = vadd.f32 %v4648, %v4843
      %v4845 = vpop.f32.mrb[0].mxu0
      %4846 = vmatprep.mubr.bf16.mxu0 0
      %4847 = vmatmul.mubr.bf16.gmra.mrb[0].mxu0 %v1014
      %v4848 = vpop.f32.mrb[0].mxu0
      %v4849 = vadd.f32 %v4653, %v4848
      %v4850 = vpop.f32.mrb[0].mxu0
      %v4851 = vpop.f32.mrb[0].mxu0
      %v4852 = vadd.f32 %v4656, %v4851
      %v4853 = vpop.f32.mrb[0].mxu0
      %4854 = vmatprep.mubr.bf16.mxu0 0
      %4855 = vmatmul.mubr.bf16.gmra.mrb[0].mxu0 %v1439
      %v4856 = vpop.f32.mrb[0].mxu0
      %v4857 = vadd.f32 %v4661, %v4856
      %v4858 = vpop.f32.mrb[0].mxu0
      %v4859 = vpop.f32.mrb[0].mxu0
      %v4860 = vadd.f32 %v4664, %v4859
      %v4861 = vpop.f32.mrb[0].mxu0
      %4862 = vmatprep.mubr.bf16.mxu0 0
      %4863 = vmatmul.mubr.bf16.gmra.mrb[0].mxu0 %v1442
      %v4864 = vpop.f32.mrb[0].mxu0
      %v4865 = vadd.f32 %v4669, %v4864
      %v4866 = vpop.f32.mrb[0].mxu0
      %v4867 = vpop.f32.mrb[0].mxu0
      %v4868 = vadd.f32 %v4672, %v4867
      %v4869 = vpop.f32.mrb[0].mxu0
      %4870 = vmatprep.mubr.bf16.mxu0 0
      %4871 = vmatmul.mubr.bf16.gmra.mrb[0].mxu0 %v1907
      %v4872 = vpop.f32.mrb[0].mxu0
      %v4873 = vadd.f32 %v4677, %v4872
      %v4874 = vpop.f32.mrb[0].mxu0
      %v4875 = vpop.f32.mrb[0].mxu0
      %v4876 = vadd.f32 %v4680, %v4875
      %v4877 = vpop.f32.mrb[0].mxu0
      %4878 = vmatprep.mubr.bf16.mxu0 0
      %4879 = vmatmul.mubr.bf16.gmra.mrb[0].mxu0 %v1910
      %v4880 = vpop.f32.mrb[0].mxu0
      %v4881 = vadd.f32 %v4685, %v4880
      %v4882 = vpop.f32.mrb[0].mxu0
      %v4883 = vpop.f32.mrb[0].mxu0
      %v4884 = vadd.f32 %v4688, %v4883
      %v4885 = vpop.f32.mrb[0].mxu0
      %4886 = vdwg.mxu0
      %v4887 = vadd.f32 %v4451, %v4729
      %v4888 = vadd.f32 %v4452, %v4732
      %v4889 = vadd.f32 %v4453, %v4737
      %v4890 = vadd.f32 %v4454, %v4740
      %v4891 = vadd.f32 %v4455, %v4745
      %v4892 = vadd.f32 %v4456, %v4748
      %v4893 = vadd.f32 %v4457, %v4753
      %v4894 = vadd.f32 %v4458, %v4756
      %v4895 = vadd.f32 %v4459, %v4761
      %v4896 = vadd.f32 %v4460, %v4764
      %v4897 = vadd.f32 %v4461, %v4769
      %v4898 = vadd.f32 %v4462, %v4772
      %v4899 = vadd.f32 %v4463, %v4777
      %v4900 = vadd.f32 %v4464, %v4780
      %v4901 = vadd.f32 %v4465, %v4785
      %v4902 = vadd.f32 %v4466, %v4788
      %v4903 = vadd.f32 %v4467, %v4793
      %v4904 = vadd.f32 %v4468, %v4796
      %v4905 = vadd.f32 %v4469, %v4801
      %v4906 = vadd.f32 %v4470, %v4804
      %v4907 = vadd.f32 %v4471, %v4809
      %v4908 = vadd.f32 %v4472, %v4812
      %v4909 = vadd.f32 %v4473, %v4817
      %v4910 = vadd.f32 %v4474, %v4820
      %v4911 = vadd.f32 %v4475, %v4825
      %v4912 = vadd.f32 %v4476, %v4828
      %v4913 = vadd.f32 %v4477, %v4833
      %v4914 = vadd.f32 %v4478, %v4836
      %v4915 = vadd.f32 %v4479, %v4841
      %v4916 = vadd.f32 %v4480, %v4844
      %v4917 = vadd.f32 %v4481, %v4849
      %v4918 = vadd.f32 %v4482, %v4852
      %v4919 = vadd.f32 %v4483, %v4857
      %v4920 = vadd.f32 %v4484, %v4860
      %v4921 = vadd.f32 %v4485, %v4865
      %v4922 = vadd.f32 %v4486, %v4868
      %v4923 = vadd.f32 %v4487, %v4873
      %v4924 = vadd.f32 %v4488, %v4876
      %v4925 = vadd.f32 %v4489, %v4881
      %v4926 = vadd.f32 %v4490, %v4884
      %v4927 = vrot.slane %v4887, 1
      %v4928 = vrot.slane %v4888, 1
      %v4929 = vrot.slane %v4889, 1
      %v4930 = vrot.slane %v4890, 1
      %v4931 = vrot.slane %v4891, 1
      %v4932 = vrot.slane %v4892, 1
      %v4933 = vrot.slane %v4893, 1
      %v4934 = vrot.slane %v4894, 1
      %v4935 = vrot.slane %v4895, 1
      %v4936 = vrot.slane %v4896, 1
      %v4937 = vrot.slane %v4897, 1
      %v4938 = vrot.slane %v4898, 1
      %v4939 = vrot.slane %v4899, 1
      %v4940 = vrot.slane %v4900, 1
      %v4941 = vrot.slane %v4901, 1
      %v4942 = vrot.slane %v4902, 1
      %v4943 = vrot.slane %v4903, 1
      %v4944 = vrot.slane %v4904, 1
      %v4945 = vrot.slane %v4905, 1
      %v4946 = vrot.slane %v4906, 1
      %v4947 = vrot.slane %v4907, 1
      %v4948 = vrot.slane %v4908, 1
      %v4949 = vrot.slane %v4909, 1
      %v4950 = vrot.slane %v4910, 1
      %v4951 = vrot.slane %v4911, 1
      %v4952 = vrot.slane %v4912, 1
      %v4953 = vrot.slane %v4913, 1
      %v4954 = vrot.slane %v4914, 1
      %v4955 = vrot.slane %v4915, 1
      %v4956 = vrot.slane %v4916, 1
      %v4957 = vrot.slane %v4917, 1
      %v4958 = vrot.slane %v4918, 1
      %v4959 = vrot.slane %v4919, 1
      %v4960 = vrot.slane %v4920, 1
      %v4961 = vrot.slane %v4921, 1
      %v4962 = vrot.slane %v4922, 1
      %v4963 = vrot.slane %v4923, 1
      %v4964 = vrot.slane %v4924, 1
      %v4965 = vrot.slane %v4925, 1
      %v4966 = vrot.slane %v4926, 1
      %vm4967 = vcmp.lt.s32.totalorder %v2189, 7
      %v4968 = vsel %vm4967, %v4965, %v4966
      %v4969 = vsel %vm4967, %v4964, %v4965
      %v4970 = vsel %vm4967, %v4963, %v4964
      %v4971 = vsel %vm4967, %v4962, %v4963
      %v4972 = vsel %vm4967, %v4961, %v4962
      %v4973 = vsel %vm4967, %v4960, %v4961
      %v4974 = vsel %vm4967, %v4959, %v4960
      %v4975 = vsel %vm4967, %v4958, %v4959
      %v4976 = vsel %vm4967, %v4957, %v4958
      %v4977 = vsel %vm4967, %v4956, %v4957
      %v4978 = vsel %vm4967, %v4955, %v4956
      %v4979 = vsel %vm4967, %v4954, %v4955
      %v4980 = vsel %vm4967, %v4953, %v4954
      %v4981 = vsel %vm4967, %v4952, %v4953
      %v4982 = vsel %vm4967, %v4951, %v4952
      %v4983 = vsel %vm4967, %v4950, %v4951
      %v4984 = vsel %vm4967, %v4949, %v4950
      %v4985 = vsel %vm4967, %v4948, %v4949
      %v4986 = vsel %vm4967, %v4947, %v4948
      %v4987 = vsel %vm4967, %v4946, %v4947
      %v4988 = vsel %vm4967, %v4945, %v4946
      %v4989 = vsel %vm4967, %v4944, %v4945
      %v4990 = vsel %vm4967, %v4943, %v4944
      %v4991 = vsel %vm4967, %v4942, %v4943
      %v4992 = vsel %vm4967, %v4941, %v4942
      %v4993 = vsel %vm4967, %v4940, %v4941
      %v4994 = vsel %vm4967, %v4939, %v4940
      %v4995 = vsel %vm4967, %v4938, %v4939
      %v4996 = vsel %vm4967, %v4937, %v4938
      %v4997 = vsel %vm4967, %v4936, %v4937
      %v4998 = vsel %vm4967, %v4935, %v4936
      %v4999 = vsel %vm4967, %v4934, %v4935
      %v5000 = vsel %vm4967, %v4933, %v4934
      %v5001 = vsel %vm4967, %v4932, %v4933
      %v5002 = vsel %vm4967, %v4931, %v4932
      %v5003 = vsel %vm4967, %v4930, %v4931
      %v5004 = vsel %vm4967, %v4929, %v4930
      %v5005 = vsel %vm4967, %v4928, %v4929
      %v5006 = vsel %vm4967, %v4927, %v4928
      %v5007 = vsel %vm4967, %v4966, %v4927
      %v5008 = vld [vmem:[#allocation2] sm:$0xff]
      %v5009 = vld [vmem:[#allocation2 + $0x8] sm:$0xff]
      %v5010 = vld [vmem:[#allocation2 + $0x10] sm:$0xff]
      %v5011 = vld [vmem:[#allocation2 + $0x18] sm:$0xff]
      %v5012 = vld [vmem:[#allocation2 + $0x20] sm:$0xff]
      %v5013 = vld [vmem:[#allocation2 + $0x28] sm:$0xff]
      %v5014 = vld [vmem:[#allocation2 + $0x30] sm:$0xff]
      %v5015 = vld [vmem:[#allocation2 + $0x38] sm:$0xff]
      %v5016 = vld [vmem:[#allocation2 + $0x40] sm:$0xff]
      %v5017 = vld [vmem:[#allocation2 + $0x48] sm:$0xff]
      %v5018 = vld [vmem:[#allocation2 + $0x50] sm:$0xff]
      %v5019 = vld [vmem:[#allocation2 + $0x58] sm:$0xff]
      %v5020 = vld [vmem:[#allocation2 + $0x60] sm:$0xff]
      %v5021 = vld [vmem:[#allocation2 + $0x68] sm:$0xff]
      %v5022 = vld [vmem:[#allocation2 + $0x70] sm:$0xff]
      %v5023 = vld [vmem:[#allocation2 + $0x78] sm:$0xff]
      %v5024 = vld [vmem:[#allocation2 + $0x80] sm:$0xff]
      %v5025 = vld [vmem:[#allocation2 + $0x88] sm:$0xff]
      %v5026 = vld [vmem:[#allocation2 + $0x90] sm:$0xff]
      %v5027 = vld [vmem:[#allocation2 + $0x98] sm:$0xff]
      %v5028 = vld [vmem:[#allocation2 + $0xa0] sm:$0xff]
      %v5029 = vld [vmem:[#allocation2 + $0xa8] sm:$0xff]
      %v5030 = vld [vmem:[#allocation2 + $0xb0] sm:$0xff]
      %v5031 = vld [vmem:[#allocation2 + $0xb8] sm:$0xff]
      %v5032 = vld [vmem:[#allocation2 + $0xc0] sm:$0xff]
      %v5033 = vld [vmem:[#allocation2 + $0xc8] sm:$0xff]
      %v5034 = vld [vmem:[#allocation2 + $0xd0] sm:$0xff]
      %v5035 = vld [vmem:[#allocation2 + $0xd8] sm:$0xff]
      %v5036 = vld [vmem:[#allocation2 + $0xe0] sm:$0xff]
      %v5037 = vld [vmem:[#allocation2 + $0xe8] sm:$0xff]
      %v5038 = vld [vmem:[#allocation2 + $0xf0] sm:$0xff]
      %v5039 = vld [vmem:[#allocation2 + $0xf8] sm:$0xff]
      %v5040 = vld [vmem:[#allocation2 + $0x100] sm:$0xff]
      %v5041 = vld [vmem:[#allocation2 + $0x108] sm:$0xff]
      %v5042 = vld [vmem:[#allocation2 + $0x110] sm:$0xff]
      %v5043 = vld [vmem:[#allocation2 + $0x118] sm:$0xff]
      %v5044 = vld [vmem:[#allocation2 + $0x120] sm:$0xff]
      %v5045 = vld [vmem:[#allocation2 + $0x128] sm:$0xff]
      %v5046 = vld [vmem:[#allocation2 + $0x130] sm:$0xff]
      %v5047 = vld [vmem:[#allocation2 + $0x138] sm:$0xff]
      %v5048 = vadd.f32 %v5008, %v5006
      %v5049 = vadd.f32 %v5009, %v5005
      %v5050 = vadd.f32 %v5010, %v5004
      %v5051 = vadd.f32 %v5011, %v5003
      %v5052 = vadd.f32 %v5012, %v5002
      %v5053 = vadd.f32 %v5013, %v5001
      %v5054 = vadd.f32 %v5014, %v5000
      %v5055 = vadd.f32 %v5015, %v4999
      %v5056 = vadd.f32 %v5016, %v4998
      %v5057 = vadd.f32 %v5017, %v4997
      %v5058 = vadd.f32 %v5018, %v4996
      %v5059 = vadd.f32 %v5019, %v4995
      %v5060 = vadd.f32 %v5020, %v4994
      %v5061 = vadd.f32 %v5021, %v4993
      %v5062 = vadd.f32 %v5022, %v4992
      %v5063 = vadd.f32 %v5023, %v4991
      %v5064 = vadd.f32 %v5024, %v4990
      %v5065 = vadd.f32 %v5025, %v4989
      %v5066 = vadd.f32 %v5026, %v4988
      %v5067 = vadd.f32 %v5027, %v4987
      %v5068 = vadd.f32 %v5028, %v4986
      %v5069 = vadd.f32 %v5029, %v4985
      %v5070 = vadd.f32 %v5030, %v4984
      %v5071 = vadd.f32 %v5031, %v4983
      %v5072 = vadd.f32 %v5032, %v4982
      %v5073 = vadd.f32 %v5033, %v4981
      %v5074 = vadd.f32 %v5034, %v4980
      %v5075 = vadd.f32 %v5035, %v4979
      %v5076 = vadd.f32 %v5036, %v4978
      %v5077 = vadd.f32 %v5037, %v4977
      %v5078 = vadd.f32 %v5038, %v4976
      %v5079 = vadd.f32 %v5039, %v4975
      %v5080 = vadd.f32 %v5040, %v4974
      %v5081 = vadd.f32 %v5041, %v4973
      %v5082 = vadd.f32 %v5042, %v4972
      %v5083 = vadd.f32 %v5043, %v4971
      %v5084 = vadd.f32 %v5044, %v4970
      %v5085 = vadd.f32 %v5045, %v4969
      %v5086 = vadd.f32 %v5046, %v4968
      %v5087 = vadd.f32 %v5047, %v5007
      %5088 = vst [vmem:[#allocation2] sm:$0xff] %v5048
      %5089 = vst [vmem:[#allocation2 + $0x8] sm:$0xff] %v5049
      %5090 = vst [vmem:[#allocation2 + $0x10] sm:$0xff] %v5050
      %5091 = vst [vmem:[#allocation2 + $0x18] sm:$0xff] %v5051
      %5092 = vst [vmem:[#allocation2 + $0x20] sm:$0xff] %v5052
      %5093 = vst [vmem:[#allocation2 + $0x28] sm:$0xff] %v5053
      %5094 = vst [vmem:[#allocation2 + $0x30] sm:$0xff] %v5054
      %5095 = vst [vmem:[#allocation2 + $0x38] sm:$0xff] %v5055
      %5096 = vst [vmem:[#allocation2 + $0x40] sm:$0xff] %v5056
      %5097 = vst [vmem:[#allocation2 + $0x48] sm:$0xff] %v5057
      %5098 = vst [vmem:[#allocation2 + $0x50] sm:$0xff] %v5058
      %5099 = vst [vmem:[#allocation2 + $0x58] sm:$0xff] %v5059
      %5100 = vst [vmem:[#allocation2 + $0x60] sm:$0xff] %v5060
      %5101 = vst [vmem:[#allocation2 + $0x68] sm:$0xff] %v5061
      %5102 = vst [vmem:[#allocation2 + $0x70] sm:$0xff] %v5062
      %5103 = vst [vmem:[#allocation2 + $0x78] sm:$0xff] %v5063
      %5104 = vst [vmem:[#allocation2 + $0x80] sm:$0xff] %v5064
      %5105 = vst [vmem:[#allocation2 + $0x88] sm:$0xff] %v5065
      %5106 = vst [vmem:[#allocation2 + $0x90] sm:$0xff] %v5066
      %5107 = vst [vmem:[#allocation2 + $0x98] sm:$0xff] %v5067
      %5108 = vst [vmem:[#allocation2 + $0xa0] sm:$0xff] %v5068
      %5109 = vst [vmem:[#allocation2 + $0xa8] sm:$0xff] %v5069
      %5110 = vst [vmem:[#allocation2 + $0xb0] sm:$0xff] %v5070
      %5111 = vst [vmem:[#allocation2 + $0xb8] sm:$0xff] %v5071
      %5112 = vst [vmem:[#allocation2 + $0xc0] sm:$0xff] %v5072
      %5113 = vst [vmem:[#allocation2 + $0xc8] sm:$0xff] %v5073
      %5114 = vst [vmem:[#allocation2 + $0xd0] sm:$0xff] %v5074
      %5115 = vst [vmem:[#allocation2 + $0xd8] sm:$0xff] %v5075
      %5116 = vst [vmem:[#allocation2 + $0xe0] sm:$0xff] %v5076
      %5117 = vst [vmem:[#allocation2 + $0xe8] sm:$0xff] %v5077
      %5118 = vst [vmem:[#allocation2 + $0xf0] sm:$0xff] %v5078
      %5119 = vst [vmem:[#allocation2 + $0xf8] sm:$0xff] %v5079
      %5120 = vst [vmem:[#allocation2 + $0x100] sm:$0xff] %v5080
      %5121 = vst [vmem:[#allocation2 + $0x108] sm:$0xff] %v5081
      %5122 = vst [vmem:[#allocation2 + $0x110] sm:$0xff] %v5082
      %5123 = vst [vmem:[#allocation2 + $0x118] sm:$0xff] %v5083
      %5124 = vst [vmem:[#allocation2 + $0x120] sm:$0xff] %v5084
      %5125 = vst [vmem:[#allocation2 + $0x128] sm:$0xff] %v5085
      %5126 = vst [vmem:[#allocation2 + $0x130] sm:$0xff] %v5086
      %5127 = vst [vmem:[#allocation2 + $0x138] sm:$0xff] %v5087
      %v5128 = vld [vmem:[#allocation2] sm:$0xff]
      %v5129 = vld [vmem:[#allocation2 + $0x8] sm:$0xff]
      %v5130 = vld [vmem:[#allocation2 + $0x10] sm:$0xff]
      %v5131 = vld [vmem:[#allocation2 + $0x18] sm:$0xff]
      %v5132 = vld [vmem:[#allocation2 + $0x20] sm:$0xff]
      %v5133 = vld [vmem:[#allocation2 + $0x28] sm:$0xff]
      %v5134 = vld [vmem:[#allocation2 + $0x30] sm:$0xff]
      %v5135 = vld [vmem:[#allocation2 + $0x38] sm:$0xff]
      %v5136 = vld [vmem:[#allocation2 + $0x40] sm:$0xff]
      %v5137 = vld [vmem:[#allocation2 + $0x48] sm:$0xff]
      %v5138 = vld [vmem:[#allocation2 + $0x50] sm:$0xff]
      %v5139 = vld [vmem:[#allocation2 + $0x58] sm:$0xff]
      %v5140 = vld [vmem:[#allocation2 + $0x60] sm:$0xff]
      %v5141 = vld [vmem:[#allocation2 + $0x68] sm:$0xff]
      %v5142 = vld [vmem:[#allocation2 + $0x70] sm:$0xff]
      %v5143 = vld [vmem:[#allocation2 + $0x78] sm:$0xff]
      %v5144 = vld [vmem:[#allocation2 + $0x80] sm:$0xff]
      %v5145 = vld [vmem:[#allocation2 + $0x88] sm:$0xff]
      %v5146 = vld [vmem:[#allocation2 + $0x90] sm:$0xff]
      %v5147 = vld [vmem:[#allocation2 + $0x98] sm:$0xff]
      %v5148 = vld [vmem:[#allocation2 + $0xa0] sm:$0xff]
      %v5149 = vld [vmem:[#allocation2 + $0xa8] sm:$0xff]
      %v5150 = vld [vmem:[#allocation2 + $0xb0] sm:$0xff]
      %v5151 = vld [vmem:[#allocation2 + $0xb8] sm:$0xff]
      %v5152 = vld [vmem:[#allocation2 + $0xc0] sm:$0xff]
      %v5153 = vld [vmem:[#allocation2 + $0xc8] sm:$0xff]
      %v5154 = vld [vmem:[#allocation2 + $0xd0] sm:$0xff]
      %v5155 = vld [vmem:[#allocation2 + $0xd8] sm:$0xff]
      %v5156 = vld [vmem:[#allocation2 + $0xe0] sm:$0xff]
      %v5157 = vld [vmem:[#allocation2 + $0xe8] sm:$0xff]
      %v5158 = vld [vmem:[#allocation2 + $0xf0] sm:$0xff]
      %v5159 = vld [vmem:[#allocation2 + $0xf8] sm:$0xff]
      %v5160 = vld [vmem:[#allocation2 + $0x100] sm:$0xff]
      %v5161 = vld [vmem:[#allocation2 + $0x108] sm:$0xff]
      %v5162 = vld [vmem:[#allocation2 + $0x110] sm:$0xff]
      %v5163 = vld [vmem:[#allocation2 + $0x118] sm:$0xff]
      %v5164 = vld [vmem:[#allocation2 + $0x120] sm:$0xff]
      %v5165 = vld [vmem:[#allocation2 + $0x128] sm:$0xff]
      %v5166 = vld [vmem:[#allocation2 + $0x130] sm:$0xff]
      %v5167 = vld [vmem:[#allocation2 + $0x138] sm:$0xff]
      %v5168 = vld [vmem:[%s6] sm:$0x1]
      %v5170 = vlaneseq
      %v5171 = vshrl.u32 %v5170, 7
      %v5172 = vsub.s32 0, %v5171
      %v5173 = vrot.slane %v5168, %v5172
      %v5175 = vadd.f32 %v5128, %v5173
      %v5176 = vadd.f32 %v5129, %v5173
      %v5177 = vadd.f32 %v5130, %v5173
      %v5178 = vadd.f32 %v5131, %v5173
      %v5179 = vadd.f32 %v5132, %v5173
      %v5180 = vadd.f32 %v5133, %v5173
      %v5181 = vadd.f32 %v5134, %v5173
      %v5182 = vadd.f32 %v5135, %v5173
      %v5183 = vadd.f32 %v5136, %v5173
      %v5184 = vadd.f32 %v5137, %v5173
      %v5185 = vadd.f32 %v5138, %v5173
      %v5186 = vadd.f32 %v5139, %v5173
      %v5187 = vadd.f32 %v5140, %v5173
      %v5188 = vadd.f32 %v5141, %v5173
      %v5189 = vadd.f32 %v5142, %v5173
      %v5190 = vadd.f32 %v5143, %v5173
      %v5191 = vadd.f32 %v5144, %v5173
      %v5192 = vadd.f32 %v5145, %v5173
      %v5193 = vadd.f32 %v5146, %v5173
      %v5194 = vadd.f32 %v5147, %v5173
      %v5195 = vadd.f32 %v5148, %v5173
      %v5196 = vadd.f32 %v5149, %v5173
      %v5197 = vadd.f32 %v5150, %v5173
      %v5198 = vadd.f32 %v5151, %v5173
      %v5199 = vadd.f32 %v5152, %v5173
      %v5200 = vadd.f32 %v5153, %v5173
      %v5201 = vadd.f32 %v5154, %v5173
      %v5202 = vadd.f32 %v5155, %v5173
      %v5203 = vadd.f32 %v5156, %v5173
      %v5204 = vadd.f32 %v5157, %v5173
      %v5205 = vadd.f32 %v5158, %v5173
      %v5206 = vadd.f32 %v5159, %v5173
      %v5207 = vadd.f32 %v5160, %v5173
      %v5208 = vadd.f32 %v5161, %v5173
      %v5209 = vadd.f32 %v5162, %v5173
      %v5210 = vadd.f32 %v5163, %v5173
      %v5211 = vadd.f32 %v5164, %v5173
      %v5212 = vadd.f32 %v5165, %v5173
      %v5213 = vadd.f32 %v5166, %v5173
      %v5214 = vadd.f32 %v5167, %v5173
      %v5215 = vmax.f32 %v5175, 0.0
      %v5216 = vmax.f32 %v5176, 0.0
      %v5217 = vmax.f32 %v5177, 0.0
      %v5218 = vmax.f32 %v5178, 0.0
      %v5219 = vmax.f32 %v5179, 0.0
      %v5220 = vmax.f32 %v5180, 0.0
      %v5221 = vmax.f32 %v5181, 0.0
      %v5222 = vmax.f32 %v5182, 0.0
      %v5223 = vmax.f32 %v5183, 0.0
      %v5224 = vmax.f32 %v5184, 0.0
      %v5225 = vmax.f32 %v5185, 0.0
      %v5226 = vmax.f32 %v5186, 0.0
      %v5227 = vmax.f32 %v5187, 0.0
      %v5228 = vmax.f32 %v5188, 0.0
      %v5229 = vmax.f32 %v5189, 0.0
      %v5230 = vmax.f32 %v5190, 0.0
      %v5231 = vmax.f32 %v5191, 0.0
      %v5232 = vmax.f32 %v5192, 0.0
      %v5233 = vmax.f32 %v5193, 0.0
      %v5234 = vmax.f32 %v5194, 0.0
      %v5235 = vmax.f32 %v5195, 0.0
      %v5236 = vmax.f32 %v5196, 0.0
      %v5237 = vmax.f32 %v5197, 0.0
      %v5238 = vmax.f32 %v5198, 0.0
      %v5239 = vmax.f32 %v5199, 0.0
      %v5240 = vmax.f32 %v5200, 0.0
      %v5241 = vmax.f32 %v5201, 0.0
      %v5242 = vmax.f32 %v5202, 0.0
      %v5243 = vmax.f32 %v5203, 0.0
      %v5244 = vmax.f32 %v5204, 0.0
      %v5245 = vmax.f32 %v5205, 0.0
      %v5246 = vmax.f32 %v5206, 0.0
      %v5247 = vmax.f32 %v5207, 0.0
      %v5248 = vmax.f32 %v5208, 0.0
      %v5249 = vmax.f32 %v5209, 0.0
      %v5250 = vmax.f32 %v5210, 0.0
      %v5251 = vmax.f32 %v5211, 0.0
      %v5252 = vmax.f32 %v5212, 0.0
      %v5253 = vmax.f32 %v5213, 0.0
      %v5254 = vmax.f32 %v5214, 0.0
      %v5255 = vld [vmem:[%s387] sm:$0xff]
      %v5256 = vld [vmem:[%s387 + $0x8] sm:$0xff]
      %v5257 = vld [vmem:[%s387 + $0x10] sm:$0xff]
      %v5258 = vld [vmem:[%s387 + $0x18] sm:$0xff]
      %v5259 = vld [vmem:[%s387 + $0x20] sm:$0xff]
      %v5260 = vld [vmem:[%s387 + $0x28] sm:$0xff]
      %v5261 = vld [vmem:[%s387 + $0x30] sm:$0xff]
      %v5262 = vld [vmem:[%s387 + $0x38] sm:$0xff]
      %v5263 = vld [vmem:[%s387 + $0x40] sm:$0xff]
      %v5264 = vld [vmem:[%s387 + $0x48] sm:$0xff]
      %v5265 = vld [vmem:[%s387 + $0x50] sm:$0xff]
      %v5266 = vld [vmem:[%s387 + $0x58] sm:$0xff]
      %v5267 = vld [vmem:[%s387 + $0x60] sm:$0xff]
      %v5268 = vld [vmem:[%s387 + $0x68] sm:$0xff]
      %v5269 = vld [vmem:[%s387 + $0x70] sm:$0xff]
      %v5270 = vld [vmem:[%s387 + $0x78] sm:$0xff]
      %v5271 = vld [vmem:[%s387 + $0x80] sm:$0xff]
      %v5272 = vld [vmem:[%s387 + $0x88] sm:$0xff]
      %v5273 = vld [vmem:[%s387 + $0x90] sm:$0xff]
      %v5274 = vld [vmem:[%s387 + $0x98] sm:$0xff]
      %v5275 = vld [vmem:[%s387 + $0xa0] sm:$0xff]
      %v5276 = vld [vmem:[%s387 + $0xa8] sm:$0xff]
      %v5277 = vld [vmem:[%s387 + $0xb0] sm:$0xff]
      %v5278 = vld [vmem:[%s387 + $0xb8] sm:$0xff]
      %v5279 = vld [vmem:[%s387 + $0xc0] sm:$0xff]
      %v5280 = vld [vmem:[%s387 + $0xc8] sm:$0xff]
      %v5281 = vld [vmem:[%s387 + $0xd0] sm:$0xff]
      %v5282 = vld [vmem:[%s387 + $0xd8] sm:$0xff]
      %v5283 = vld [vmem:[%s387 + $0xe0] sm:$0xff]
      %v5284 = vld [vmem:[%s387 + $0xe8] sm:$0xff]
      %v5285 = vld [vmem:[%s387 + $0xf0] sm:$0xff]
      %v5286 = vld [vmem:[%s387 + $0xf8] sm:$0xff]
      %v5287 = vld [vmem:[%s387 + $0x100] sm:$0xff]
      %v5288 = vld [vmem:[%s387 + $0x108] sm:$0xff]
      %v5289 = vld [vmem:[%s387 + $0x110] sm:$0xff]
      %v5290 = vld [vmem:[%s387 + $0x118] sm:$0xff]
      %v5291 = vld [vmem:[%s387 + $0x120] sm:$0xff]
      %v5292 = vld [vmem:[%s387 + $0x128] sm:$0xff]
      %v5293 = vld [vmem:[%s387 + $0x130] sm:$0xff]
      %v5294 = vld [vmem:[%s387 + $0x138] sm:$0xff]
      %5296 = vset.pattern.permute.xlu0 0
      %5297 = vperm.xlu0 %5296, %v5255
      %v5298 = vpop.permute.xlu0 %5297
      %5301 = vset.pattern.permute.xlu0 0
      %5302 = vperm.xlu0 %5301, %v5256
      %v5303 = vpop.permute.xlu0 %5302
      %5306 = vset.pattern.permute.xlu0 0
      %5307 = vperm.xlu0 %5306, %v5257
      %v5308 = vpop.permute.xlu0 %5307
      %5311 = vset.pattern.permute.xlu0 0
      %5312 = vperm.xlu0 %5311, %v5258
      %v5313 = vpop.permute.xlu0 %5312
      %5316 = vset.pattern.permute.xlu0 0
      %5317 = vperm.xlu0 %5316, %v5259
      %v5318 = vpop.permute.xlu0 %5317
      %5321 = vset.pattern.permute.xlu0 0
      %5322 = vperm.xlu0 %5321, %v5260
      %v5323 = vpop.permute.xlu0 %5322
      %5326 = vset.pattern.permute.xlu0 0
      %5327 = vperm.xlu0 %5326, %v5261
      %v5328 = vpop.permute.xlu0 %5327
      %5331 = vset.pattern.permute.xlu0 0
      %5332 = vperm.xlu0 %5331, %v5262
      %v5333 = vpop.permute.xlu0 %5332
      %5336 = vset.pattern.permute.xlu0 0
      %5337 = vperm.xlu0 %5336, %v5263
      %v5338 = vpop.permute.xlu0 %5337
      %5341 = vset.pattern.permute.xlu0 0
      %5342 = vperm.xlu0 %5341, %v5264
      %v5343 = vpop.permute.xlu0 %5342
      %5346 = vset.pattern.permute.xlu0 0
      %5347 = vperm.xlu0 %5346, %v5265
      %v5348 = vpop.permute.xlu0 %5347
      %5351 = vset.pattern.permute.xlu0 0
      %5352 = vperm.xlu0 %5351, %v5266
      %v5353 = vpop.permute.xlu0 %5352
      %5356 = vset.pattern.permute.xlu0 0
      %5357 = vperm.xlu0 %5356, %v5267
      %v5358 = vpop.permute.xlu0 %5357
      %5361 = vset.pattern.permute.xlu0 0
      %5362 = vperm.xlu0 %5361, %v5268
      %v5363 = vpop.permute.xlu0 %5362
      %5366 = vset.pattern.permute.xlu0 0
      %5367 = vperm.xlu0 %5366, %v5269
      %v5368 = vpop.permute.xlu0 %5367
      %5371 = vset.pattern.permute.xlu0 0
      %5372 = vperm.xlu0 %5371, %v5270
      %v5373 = vpop.permute.xlu0 %5372
      %5376 = vset.pattern.permute.xlu0 0
      %5377 = vperm.xlu0 %5376, %v5271
      %v5378 = vpop.permute.xlu0 %5377
      %5381 = vset.pattern.permute.xlu0 0
      %5382 = vperm.xlu0 %5381, %v5272
      %v5383 = vpop.permute.xlu0 %5382
      %5386 = vset.pattern.permute.xlu0 0
      %5387 = vperm.xlu0 %5386, %v5273
      %v5388 = vpop.permute.xlu0 %5387
      %5391 = vset.pattern.permute.xlu0 0
      %5392 = vperm.xlu0 %5391, %v5274
      %v5393 = vpop.permute.xlu0 %5392
      %5396 = vset.pattern.permute.xlu0 0
      %5397 = vperm.xlu0 %5396, %v5275
      %v5398 = vpop.permute.xlu0 %5397
      %5401 = vset.pattern.permute.xlu0 0
      %5402 = vperm.xlu0 %5401, %v5276
      %v5403 = vpop.permute.xlu0 %5402
      %5406 = vset.pattern.permute.xlu0 0
      %5407 = vperm.xlu0 %5406, %v5277
      %v5408 = vpop.permute.xlu0 %5407
      %5411 = vset.pattern.permute.xlu0 0
      %5412 = vperm.xlu0 %5411, %v5278
      %v5413 = vpop.permute.xlu0 %5412
      %5416 = vset.pattern.permute.xlu0 0
      %5417 = vperm.xlu0 %5416, %v5279
      %v5418 = vpop.permute.xlu0 %5417
      %5421 = vset.pattern.permute.xlu0 0
      %5422 = vperm.xlu0 %5421, %v5280
      %v5423 = vpop.permute.xlu0 %5422
      %5426 = vset.pattern.permute.xlu0 0
      %5427 = vperm.xlu0 %5426, %v5281
      %v5428 = vpop.permute.xlu0 %5427
      %5431 = vset.pattern.permute.xlu0 0
      %5432 = vperm.xlu0 %5431, %v5282
      %v5433 = vpop.permute.xlu0 %5432
      %5436 = vset.pattern.permute.xlu0 0
      %5437 = vperm.xlu0 %5436, %v5283
      %v5438 = vpop.permute.xlu0 %5437
      %5441 = vset.pattern.permute.xlu0 0
      %5442 = vperm.xlu0 %5441, %v5284
      %v5443 = vpop.permute.xlu0 %5442
      %5446 = vset.pattern.permute.xlu0 0
      %5447 = vperm.xlu0 %5446, %v5285
      %v5448 = vpop.permute.xlu0 %5447
      %5451 = vset.pattern.permute.xlu0 0
      %5452 = vperm.xlu0 %5451, %v5286
      %v5453 = vpop.permute.xlu0 %5452
      %5456 = vset.pattern.permute.xlu0 0
      %5457 = vperm.xlu0 %5456, %v5287
      %v5458 = vpop.permute.xlu0 %5457
      %5461 = vset.pattern.permute.xlu0 0
      %5462 = vperm.xlu0 %5461, %v5288
      %v5463 = vpop.permute.xlu0 %5462
      %5466 = vset.pattern.permute.xlu0 0
      %5467 = vperm.xlu0 %5466, %v5289
      %v5468 = vpop.permute.xlu0 %5467
      %5471 = vset.pattern.permute.xlu0 0
      %5472 = vperm.xlu0 %5471, %v5290
      %v5473 = vpop.permute.xlu0 %5472
      %5476 = vset.pattern.permute.xlu0 0
      %5477 = vperm.xlu0 %5476, %v5291
      %v5478 = vpop.permute.xlu0 %5477
      %5481 = vset.pattern.permute.xlu0 0
      %5482 = vperm.xlu0 %5481, %v5292
      %v5483 = vpop.permute.xlu0 %5482
      %5486 = vset.pattern.permute.xlu0 0
      %5487 = vperm.xlu0 %5486, %v5293
      %v5488 = vpop.permute.xlu0 %5487
      %5491 = vset.pattern.permute.xlu0 0
      %5492 = vperm.xlu0 %5491, %v5294
      %v5493 = vpop.permute.xlu0 %5492
      %v5495 = vmul.f32 %v5215, %v5298
      %v5496 = vmul.f32 %v5216, %v5303
      %v5497 = vmul.f32 %v5217, %v5308
      %v5498 = vmul.f32 %v5218, %v5313
      %v5499 = vmul.f32 %v5219, %v5318
      %v5500 = vmul.f32 %v5220, %v5323
      %v5501 = vmul.f32 %v5221, %v5328
      %v5502 = vmul.f32 %v5222, %v5333
      %v5503 = vmul.f32 %v5223, %v5338
      %v5504 = vmul.f32 %v5224, %v5343
      %v5505 = vmul.f32 %v5225, %v5348
      %v5506 = vmul.f32 %v5226, %v5353
      %v5507 = vmul.f32 %v5227, %v5358
      %v5508 = vmul.f32 %v5228, %v5363
      %v5509 = vmul.f32 %v5229, %v5368
      %v5510 = vmul.f32 %v5230, %v5373
      %v5511 = vmul.f32 %v5231, %v5378
      %v5512 = vmul.f32 %v5232, %v5383
      %v5513 = vmul.f32 %v5233, %v5388
      %v5514 = vmul.f32 %v5234, %v5393
      %v5515 = vmul.f32 %v5235, %v5398
      %v5516 = vmul.f32 %v5236, %v5403
      %v5517 = vmul.f32 %v5237, %v5408
      %v5518 = vmul.f32 %v5238, %v5413
      %v5519 = vmul.f32 %v5239, %v5418
      %v5520 = vmul.f32 %v5240, %v5423
      %v5521 = vmul.f32 %v5241, %v5428
      %v5522 = vmul.f32 %v5242, %v5433
      %v5523 = vmul.f32 %v5243, %v5438
      %v5524 = vmul.f32 %v5244, %v5443
      %v5525 = vmul.f32 %v5245, %v5448
      %v5526 = vmul.f32 %v5246, %v5453
      %v5527 = vmul.f32 %v5247, %v5458
      %v5528 = vmul.f32 %v5248, %v5463
      %v5529 = vmul.f32 %v5249, %v5468
      %v5530 = vmul.f32 %v5250, %v5473
      %v5531 = vmul.f32 %v5251, %v5478
      %v5532 = vmul.f32 %v5252, %v5483
      %v5533 = vmul.f32 %v5253, %v5488
      %v5534 = vmul.f32 %v5254, %v5493
      %5535 = vst [vmem:[#allocation3] sm:$0xff] %v5495
      %5536 = vst [vmem:[#allocation3 + $0x8] sm:$0xff] %v5496
      %5537 = vst [vmem:[#allocation3 + $0x10] sm:$0xff] %v5497
      %5538 = vst [vmem:[#allocation3 + $0x18] sm:$0xff] %v5498
      %5539 = vst [vmem:[#allocation3 + $0x20] sm:$0xff] %v5499
      %5540 = vst [vmem:[#allocation3 + $0x28] sm:$0xff] %v5500
      %5541 = vst [vmem:[#allocation3 + $0x30] sm:$0xff] %v5501
      %5542 = vst [vmem:[#allocation3 + $0x38] sm:$0xff] %v5502
      %5543 = vst [vmem:[#allocation3 + $0x40] sm:$0xff] %v5503
      %5544 = vst [vmem:[#allocation3 + $0x48] sm:$0xff] %v5504
      %5545 = vst [vmem:[#allocation3 + $0x50] sm:$0xff] %v5505
      %5546 = vst [vmem:[#allocation3 + $0x58] sm:$0xff] %v5506
      %5547 = vst [vmem:[#allocation3 + $0x60] sm:$0xff] %v5507
      %5548 = vst [vmem:[#allocation3 + $0x68] sm:$0xff] %v5508
      %5549 = vst [vmem:[#allocation3 + $0x70] sm:$0xff] %v5509
      %5550 = vst [vmem:[#allocation3 + $0x78] sm:$0xff] %v5510
      %5551 = vst [vmem:[#allocation3 + $0x80] sm:$0xff] %v5511
      %5552 = vst [vmem:[#allocation3 + $0x88] sm:$0xff] %v5512
      %5553 = vst [vmem:[#allocation3 + $0x90] sm:$0xff] %v5513
      %5554 = vst [vmem:[#allocation3 + $0x98] sm:$0xff] %v5514
      %5555 = vst [vmem:[#allocation3 + $0xa0] sm:$0xff] %v5515
      %5556 = vst [vmem:[#allocation3 + $0xa8] sm:$0xff] %v5516
      %5557 = vst [vmem:[#allocation3 + $0xb0] sm:$0xff] %v5517
      %5558 = vst [vmem:[#allocation3 + $0xb8] sm:$0xff] %v5518
      %5559 = vst [vmem:[#allocation3 + $0xc0] sm:$0xff] %v5519
      %5560 = vst [vmem:[#allocation3 + $0xc8] sm:$0xff] %v5520
      %5561 = vst [vmem:[#allocation3 + $0xd0] sm:$0xff] %v5521
      %5562 = vst [vmem:[#allocation3 + $0xd8] sm:$0xff] %v5522
      %5563 = vst [vmem:[#allocation3 + $0xe0] sm:$0xff] %v5523
      %5564 = vst [vmem:[#allocation3 + $0xe8] sm:$0xff] %v5524
      %5565 = vst [vmem:[#allocation3 + $0xf0] sm:$0xff] %v5525
      %5566 = vst [vmem:[#allocation3 + $0xf8] sm:$0xff] %v5526
      %5567 = vst [vmem:[#allocation3 + $0x100] sm:$0xff] %v5527
      %5568 = vst [vmem:[#allocation3 + $0x108] sm:$0xff] %v5528
      %5569 = vst [vmem:[#allocation3 + $0x110] sm:$0xff] %v5529
      %5570 = vst [vmem:[#allocation3 + $0x118] sm:$0xff] %v5530
      %5571 = vst [vmem:[#allocation3 + $0x120] sm:$0xff] %v5531
      %5572 = vst [vmem:[#allocation3 + $0x128] sm:$0xff] %v5532
      %5573 = vst [vmem:[#allocation3 + $0x130] sm:$0xff] %v5533
      %5574 = vst [vmem:[#allocation3 + $0x138] sm:$0xff] %v5534
      %v5575 = vld [vmem:[#allocation3] sm:$0xff]
      %v5576 = vld [vmem:[#allocation3 + $0x8] sm:$0xff]
      %v5577 = vld [vmem:[#allocation3 + $0x10] sm:$0xff]
      %v5578 = vld [vmem:[#allocation3 + $0x18] sm:$0xff]
      %v5579 = vld [vmem:[#allocation3 + $0x20] sm:$0xff]
      %v5580 = vld [vmem:[#allocation3 + $0x28] sm:$0xff]
      %v5581 = vld [vmem:[#allocation3 + $0x30] sm:$0xff]
      %v5582 = vld [vmem:[#allocation3 + $0x38] sm:$0xff]
      %v5583 = vld [vmem:[#allocation3 + $0x40] sm:$0xff]
      %v5584 = vld [vmem:[#allocation3 + $0x48] sm:$0xff]
      %v5585 = vld [vmem:[#allocation3 + $0x50] sm:$0xff]
      %v5586 = vld [vmem:[#allocation3 + $0x58] sm:$0xff]
      %v5587 = vld [vmem:[#allocation3 + $0x60] sm:$0xff]
      %v5588 = vld [vmem:[#allocation3 + $0x68] sm:$0xff]
      %v5589 = vld [vmem:[#allocation3 + $0x70] sm:$0xff]
      %v5590 = vld [vmem:[#allocation3 + $0x78] sm:$0xff]
      %v5591 = vld [vmem:[#allocation3 + $0x80] sm:$0xff]
      %v5592 = vld [vmem:[#allocation3 + $0x88] sm:$0xff]
      %v5593 = vld [vmem:[#allocation3 + $0x90] sm:$0xff]
      %v5594 = vld [vmem:[#allocation3 + $0x98] sm:$0xff]
      %v5595 = vld [vmem:[#allocation3 + $0xa0] sm:$0xff]
      %v5596 = vld [vmem:[#allocation3 + $0xa8] sm:$0xff]
      %v5597 = vld [vmem:[#allocation3 + $0xb0] sm:$0xff]
      %v5598 = vld [vmem:[#allocation3 + $0xb8] sm:$0xff]
      %v5599 = vld [vmem:[#allocation3 + $0xc0] sm:$0xff]
      %v5600 = vld [vmem:[#allocation3 + $0xc8] sm:$0xff]
      %v5601 = vld [vmem:[#allocation3 + $0xd0] sm:$0xff]
      %v5602 = vld [vmem:[#allocation3 + $0xd8] sm:$0xff]
      %v5603 = vld [vmem:[#allocation3 + $0xe0] sm:$0xff]
      %v5604 = vld [vmem:[#allocation3 + $0xe8] sm:$0xff]
      %v5605 = vld [vmem:[#allocation3 + $0xf0] sm:$0xff]
      %v5606 = vld [vmem:[#allocation3 + $0xf8] sm:$0xff]
      %v5607 = vld [vmem:[#allocation3 + $0x100] sm:$0xff]
      %v5608 = vld [vmem:[#allocation3 + $0x108] sm:$0xff]
      %v5609 = vld [vmem:[#allocation3 + $0x110] sm:$0xff]
      %v5610 = vld [vmem:[#allocation3 + $0x118] sm:$0xff]
      %v5611 = vld [vmem:[#allocation3 + $0x120] sm:$0xff]
      %v5612 = vld [vmem:[#allocation3 + $0x128] sm:$0xff]
      %v5613 = vld [vmem:[#allocation3 + $0x130] sm:$0xff]
      %v5614 = vld [vmem:[#allocation3 + $0x138] sm:$0xff]
      %v5615 = vrot.slane %v5575, 7
      %v5616 = vrot.slane %v5576, 7
      %v5617 = vrot.slane %v5577, 7
      %v5618 = vrot.slane %v5578, 7
      %v5619 = vrot.slane %v5579, 7
      %v5620 = vrot.slane %v5580, 7
      %v5621 = vrot.slane %v5581, 7
      %v5622 = vrot.slane %v5582, 7
      %v5623 = vrot.slane %v5583, 7
      %v5624 = vrot.slane %v5584, 7
      %v5625 = vrot.slane %v5585, 7
      %v5626 = vrot.slane %v5586, 7
      %v5627 = vrot.slane %v5587, 7
      %v5628 = vrot.slane %v5588, 7
      %v5629 = vrot.slane %v5589, 7
      %v5630 = vrot.slane %v5590, 7
      %v5631 = vrot.slane %v5591, 7
      %v5632 = vrot.slane %v5592, 7
      %v5633 = vrot.slane %v5593, 7
      %v5634 = vrot.slane %v5594, 7
      %v5635 = vrot.slane %v5595, 7
      %v5636 = vrot.slane %v5596, 7
      %v5637 = vrot.slane %v5597, 7
      %v5638 = vrot.slane %v5598, 7
      %v5639 = vrot.slane %v5599, 7
      %v5640 = vrot.slane %v5600, 7
      %v5641 = vrot.slane %v5601, 7
      %v5642 = vrot.slane %v5602, 7
      %v5643 = vrot.slane %v5603, 7
      %v5644 = vrot.slane %v5604, 7
      %v5645 = vrot.slane %v5605, 7
      %v5646 = vrot.slane %v5606, 7
      %v5647 = vrot.slane %v5607, 7
      %v5648 = vrot.slane %v5608, 7
      %v5649 = vrot.slane %v5609, 7
      %v5650 = vrot.slane %v5610, 7
      %v5651 = vrot.slane %v5611, 7
      %v5652 = vrot.slane %v5612, 7
      %v5653 = vrot.slane %v5613, 7
      %v5654 = vrot.slane %v5614, 7
      %v5655 = vsel %vm2190, %v5653, %v5654
      %v5656 = vsel %vm2190, %v5652, %v5653
      %v5657 = vsel %vm2190, %v5651, %v5652
      %v5658 = vsel %vm2190, %v5650, %v5651
      %v5659 = vsel %vm2190, %v5649, %v5650
      %v5660 = vsel %vm2190, %v5648, %v5649
      %v5661 = vsel %vm2190, %v5647, %v5648
      %v5662 = vsel %vm2190, %v5646, %v5647
      %v5663 = vsel %vm2190, %v5645, %v5646
      %v5664 = vsel %vm2190, %v5644, %v5645
      %v5665 = vsel %vm2190, %v5643, %v5644
      %v5666 = vsel %vm2190, %v5642, %v5643
      %v5667 = vsel %vm2190, %v5641, %v5642
      %v5668 = vsel %vm2190, %v5640, %v5641
      %v5669 = vsel %vm2190, %v5639, %v5640
      %v5670 = vsel %vm2190, %v5638, %v5639
      %v5671 = vsel %vm2190, %v5637, %v5638
      %v5672 = vsel %vm2190, %v5636, %v5637
      %v5673 = vsel %vm2190, %v5635, %v5636
      %v5674 = vsel %vm2190, %v5634, %v5635
      %v5675 = vsel %vm2190, %v5633, %v5634
      %v5676 = vsel %vm2190, %v5632, %v5633
      %v5677 = vsel %vm2190, %v5631, %v5632
      %v5678 = vsel %vm2190, %v5630, %v5631
      %v5679 = vsel %vm2190, %v5629, %v5630
      %v5680 = vsel %vm2190, %v5628, %v5629
      %v5681 = vsel %vm2190, %v5627, %v5628
      %v5682 = vsel %vm2190, %v5626, %v5627
      %v5683 = vsel %vm2190, %v5625, %v5626
      %v5684 = vsel %vm2190, %v5624, %v5625
      %v5685 = vsel %vm2190, %v5623, %v5624
      %v5686 = vsel %vm2190, %v5622, %v5623
      %v5687 = vsel %vm2190, %v5621, %v5622
      %v5688 = vsel %vm2190, %v5620, %v5621
      %v5689 = vsel %vm2190, %v5619, %v5620
      %v5690 = vsel %vm2190, %v5618, %v5619
      %v5691 = vsel %vm2190, %v5617, %v5618
      %v5692 = vsel %vm2190, %v5616, %v5617
      %v5693 = vsel %vm2190, %v5615, %v5616
      %v5694 = vsel %vm2190, %v5654, %v5615
      %v5695 = vpack.c.bf16 %v5693, %v5694
      %v5696 = vpack.c.bf16 %v5691, %v5692
      %v5697 = vpack.c.bf16 %v5689, %v5690
      %v5698 = vpack.c.bf16 %v5687, %v5688
      %v5699 = vpack.c.bf16 %v5685, %v5686
      %v5700 = vpack.c.bf16 %v5683, %v5684
      %v5701 = vpack.c.bf16 %v5681, %v5682
      %v5702 = vpack.c.bf16 %v5679, %v5680
      %v5703 = vpack.c.bf16 %v5677, %v5678
      %v5704 = vpack.c.bf16 %v5675, %v5676
      %v5705 = vpack.c.bf16 %v5673, %v5674
      %v5706 = vpack.c.bf16 %v5671, %v5672
      %v5707 = vpack.c.bf16 %v5669, %v5670
      %v5708 = vpack.c.bf16 %v5667, %v5668
      %v5709 = vpack.c.bf16 %v5665, %v5666
      %v5710 = vpack.c.bf16 %v5663, %v5664
      %v5711 = vpack.c.bf16 %v5661, %v5662
      %v5712 = vpack.c.bf16 %v5659, %v5660
      %v5713 = vpack.c.bf16 %v5657, %v5658
      %v5714 = vpack.c.bf16 %v5655, %v5656
      %v5715 = vld [vmem:[%s5] sm:$0xf]
      %v5716 = vld [vmem:[%s5 + $0x4] sm:$0xf]
      %v5717 = vld [vmem:[%s5 + $0x8] sm:$0xf]
      %v5718 = vld [vmem:[%s5 + $0xc] sm:$0xf]
      %v5719 = vld [vmem:[%s5 + $0x10] sm:$0xf]
      %v5720 = vld [vmem:[%s5 + $0x14] sm:$0xf]
      %v5721 = vld [vmem:[%s5 + $0x18] sm:$0xf]
      %v5722 = vld [vmem:[%s5 + $0x1c] sm:$0xf]
      %v5723 = vld [vmem:[%s5 + $0x20] sm:$0xf]
      %v5724 = vld [vmem:[%s5 + $0x24] sm:$0xf]
      %v5725 = vld [vmem:[%s5 + $0x28] sm:$0xf]
      %v5726 = vld [vmem:[%s5 + $0x2c] sm:$0xf]
      %v5727 = vld [vmem:[%s5 + $0x30] sm:$0xf]
      %v5728 = vld [vmem:[%s5 + $0x34] sm:$0xf]
      %v5729 = vld [vmem:[%s5 + $0x38] sm:$0xf]
      %v5730 = vld [vmem:[%s5 + $0x3c] sm:$0xf]
      %v5747 = vunpack.c.l.b16 %v5715
      %v5748 = vunpack.c.l.b16 %v5716
      %v5749 = vunpack.c.l.b16 %v5717
      %v5750 = vunpack.c.l.b16 %v5718
      %v5751 = vunpack.c.l.b16 %v5719
      %v5752 = vunpack.c.l.b16 %v5720
      %v5753 = vunpack.c.l.b16 %v5721
      %v5754 = vunpack.c.l.b16 %v5722
      %v5755 = vunpack.c.l.b16 %v5723
      %v5756 = vunpack.c.l.b16 %v5724
      %v5757 = vunpack.c.l.b16 %v5725
      %v5758 = vunpack.c.l.b16 %v5726
      %v5759 = vunpack.c.l.b16 %v5727
      %v5760 = vunpack.c.l.b16 %v5728
      %v5761 = vunpack.c.l.b16 %v5729
      %v5762 = vunpack.c.l.b16 %v5730
      %v5763 = vpack.c.b16 %v5748, %v5747
      %v5764 = vpack.c.b16 %v5750, %v5749
      %v5765 = vpack.c.b16 %v5752, %v5751
      %v5766 = vpack.c.b16 %v5754, %v5753
      %v5767 = vpack.c.b16 %v5756, %v5755
      %v5768 = vpack.c.b16 %v5758, %v5757
      %v5769 = vpack.c.b16 %v5760, %v5759
      %v5770 = vpack.c.b16 %v5762, %v5761
      %5779 = vmatprep.subr.bf16.mxu0 0
      %5780 = vmatpush1.bf16.msra.mxu0 %v5763
      %5781 = vmatprep.subr.bf16.mxu0 0
      %5782 = vmatpush1.bf16.msra.mxu0 %v5764
      %5783 = vmatprep.subr.bf16.mxu0 0
      %5784 = vmatpush1.bf16.msra.mxu0 %v5765
      %5785 = vmatprep.subr.bf16.mxu0 0
      %5786 = vmatpush1.bf16.msra.mxu0 %v5766
      %5787 = vmatprep.subr.bf16.mxu0 0
      %5788 = vmatpush1.bf16.msra.mxu0 %v5767
      %5789 = vmatprep.subr.bf16.mxu0 0
      %5790 = vmatpush1.bf16.msra.mxu0 %v5768
      %5791 = vmatprep.subr.bf16.mxu0 0
      %5792 = vmatpush1.bf16.msra.mxu0 %v5769
      %5793 = vmatprep.subr.bf16.mxu0 0
      %5794 = vmatpush1.bf16.msra.mxu0 %v5770
      %5795 = vmatprep.subr.bf16.mxu0 0
      %5796 = vmatpush1.bf16.msra.mxu0 0
      %5797 = vmatprep.subr.bf16.mxu0 0
      %5798 = vmatpush1.bf16.msra.mxu0 0
      %5799 = vmatprep.subr.bf16.mxu0 0
      %5800 = vmatpush1.bf16.msra.mxu0 0
      %5801 = vmatprep.subr.bf16.mxu0 0
      %5802 = vmatpush1.bf16.msra.mxu0 0
      %5803 = vmatprep.subr.bf16.mxu0 0
      %5804 = vmatpush1.bf16.msra.mxu0 0
      %5805 = vmatprep.subr.bf16.mxu0 0
      %5806 = vmatpush1.bf16.msra.mxu0 0
      %5807 = vmatprep.subr.bf16.mxu0 0
      %5808 = vmatpush1.bf16.msra.mxu0 0
      %5809 = vmatprep.subr.bf16.mxu0 0
      %5810 = vmatpush1.bf16.msra.mxu0 0
      %5811 = vmatprep.mubr.bf16.mxu0 0
      %5812 = vmatmul.mubr.bf16.gmra.mrb[0].mxu0 %v5695
      %v5813 = vpop.f32.mrb[0].mxu0
      %v5814 = vadd.f32 0.0, %v5813
      %v5815 = vpop.f32.mrb[0].mxu0
      %v5816 = vpop.f32.mrb[0].mxu0
      %v5817 = vadd.f32 0.0, %v5816
      %v5818 = vpop.f32.mrb[0].mxu0
      %5819 = vmatprep.mubr.bf16.mxu0 0
      %5820 = vmatmul.mubr.bf16.gmra.mrb[0].mxu0 %v5696
      %v5821 = vpop.f32.mrb[0].mxu0
      %v5822 = vadd.f32 0.0, %v5821
      %v5823 = vpop.f32.mrb[0].mxu0
      %v5824 = vpop.f32.mrb[0].mxu0
      %v5825 = vadd.f32 0.0, %v5824
      %v5826 = vpop.f32.mrb[0].mxu0
      %5827 = vmatprep.mubr.bf16.mxu0 0
      %5828 = vmatmul.mubr.bf16.gmra.mrb[0].mxu0 %v5697
      %v5829 = vpop.f32.mrb[0].mxu0
      %v5830 = vadd.f32 0.0, %v5829
      %v5831 = vpop.f32.mrb[0].mxu0
      %v5832 = vpop.f32.mrb[0].mxu0
      %v5833 = vadd.f32 0.0, %v5832
      %v5834 = vpop.f32.mrb[0].mxu0
      %5835 = vmatprep.mubr.bf16.mxu0 0
      %5836 = vmatmul.mubr.bf16.gmra.mrb[0].mxu0 %v5698
      %v5837 = vpop.f32.mrb[0].mxu0
      %v5838 = vadd.f32 0.0, %v5837
      %v5839 = vpop.f32.mrb[0].mxu0
      %v5840 = vpop.f32.mrb[0].mxu0
      %v5841 = vadd.f32 0.0, %v5840
      %v5842 = vpop.f32.mrb[0].mxu0
      %5843 = vmatprep.mubr.bf16.mxu0 0
      %5844 = vmatmul.mubr.bf16.gmra.mrb[0].mxu0 %v5699
      %v5845 = vpop.f32.mrb[0].mxu0
      %v5846 = vadd.f32 0.0, %v5845
      %v5847 = vpop.f32.mrb[0].mxu0
      %v5848 = vpop.f32.mrb[0].mxu0
      %v5849 = vadd.f32 0.0, %v5848
      %v5850 = vpop.f32.mrb[0].mxu0
      %5851 = vmatprep.mubr.bf16.mxu0 0
      %5852 = vmatmul.mubr.bf16.gmra.mrb[0].mxu0 %v5700
      %v5853 = vpop.f32.mrb[0].mxu0
      %v5854 = vadd.f32 0.0, %v5853
      %v5855 = vpop.f32.mrb[0].mxu0
      %v5856 = vpop.f32.mrb[0].mxu0
      %v5857 = vadd.f32 0.0, %v5856
      %v5858 = vpop.f32.mrb[0].mxu0
      %5859 = vmatprep.mubr.bf16.mxu0 0
      %5860 = vmatmul.mubr.bf16.gmra.mrb[0].mxu0 %v5701
      %v5861 = vpop.f32.mrb[0].mxu0
      %v5862 = vadd.f32 0.0, %v5861
      %v5863 = vpop.f32.mrb[0].mxu0
      %v5864 = vpop.f32.mrb[0].mxu0
      %v5865 = vadd.f32 0.0, %v5864
      %v5866 = vpop.f32.mrb[0].mxu0
      %5867 = vmatprep.mubr.bf16.mxu0 0
      %5868 = vmatmul.mubr.bf16.gmra.mrb[0].mxu0 %v5702
      %v5869 = vpop.f32.mrb[0].mxu0
      %v5870 = vadd.f32 0.0, %v5869
      %v5871 = vpop.f32.mrb[0].mxu0
      %v5872 = vpop.f32.mrb[0].mxu0
      %v5873 = vadd.f32 0.0, %v5872
      %v5874 = vpop.f32.mrb[0].mxu0
      %5875 = vmatprep.mubr.bf16.mxu0 0
      %5876 = vmatmul.mubr.bf16.gmra.mrb[0].mxu0 %v5703
      %v5877 = vpop.f32.mrb[0].mxu0
      %v5878 = vadd.f32 0.0, %v5877
      %v5879 = vpop.f32.mrb[0].mxu0
      %v5880 = vpop.f32.mrb[0].mxu0
      %v5881 = vadd.f32 0.0, %v5880
      %v5882 = vpop.f32.mrb[0].mxu0
      %5883 = vmatprep.mubr.bf16.mxu0 0
      %5884 = vmatmul.mubr.bf16.gmra.mrb[0].mxu0 %v5704
      %v5885 = vpop.f32.mrb[0].mxu0
      %v5886 = vadd.f32 0.0, %v5885
      %v5887 = vpop.f32.mrb[0].mxu0
      %v5888 = vpop.f32.mrb[0].mxu0
      %v5889 = vadd.f32 0.0, %v5888
      %v5890 = vpop.f32.mrb[0].mxu0
      %5891 = vmatprep.mubr.bf16.mxu0 0
      %5892 = vmatmul.mubr.bf16.gmra.mrb[0].mxu0 %v5705
      %v5893 = vpop.f32.mrb[0].mxu0
      %v5894 = vadd.f32 0.0, %v5893
      %v5895 = vpop.f32.mrb[0].mxu0
      %v5896 = vpop.f32.mrb[0].mxu0
      %v5897 = vadd.f32 0.0, %v5896
      %v5898 = vpop.f32.mrb[0].mxu0
      %5899 = vmatprep.mubr.bf16.mxu0 0
      %5900 = vmatmul.mubr.bf16.gmra.mrb[0].mxu0 %v5706
      %v5901 = vpop.f32.mrb[0].mxu0
      %v5902 = vadd.f32 0.0, %v5901
      %v5903 = vpop.f32.mrb[0].mxu0
      %v5904 = vpop.f32.mrb[0].mxu0
      %v5905 = vadd.f32 0.0, %v5904
      %v5906 = vpop.f32.mrb[0].mxu0
      %5907 = vmatprep.mubr.bf16.mxu0 0
      %5908 = vmatmul.mubr.bf16.gmra.mrb[0].mxu0 %v5707
      %v5909 = vpop.f32.mrb[0].mxu0
      %v5910 = vadd.f32 0.0, %v5909
      %v5911 = vpop.f32.mrb[0].mxu0
      %v5912 = vpop.f32.mrb[0].mxu0
      %v5913 = vadd.f32 0.0, %v5912
      %v5914 = vpop.f32.mrb[0].mxu0
      %5915 = vmatprep.mubr.bf16.mxu0 0
      %5916 = vmatmul.mubr.bf16.gmra.mrb[0].mxu0 %v5708
      %v5917 = vpop.f32.mrb[0].mxu0
      %v5918 = vadd.f32 0.0, %v5917
      %v5919 = vpop.f32.mrb[0].mxu0
      %v5920 = vpop.f32.mrb[0].mxu0
      %v5921 = vadd.f32 0.0, %v5920
      %v5922 = vpop.f32.mrb[0].mxu0
      %5923 = vmatprep.mubr.bf16.mxu0 0
      %5924 = vmatmul.mubr.bf16.gmra.mrb[0].mxu0 %v5709
      %v5925 = vpop.f32.mrb[0].mxu0
      %v5926 = vadd.f32 0.0, %v5925
      %v5927 = vpop.f32.mrb[0].mxu0
      %v5928 = vpop.f32.mrb[0].mxu0
      %v5929 = vadd.f32 0.0, %v5928
      %v5930 = vpop.f32.mrb[0].mxu0
      %5931 = vmatprep.mubr.bf16.mxu0 0
      %5932 = vmatmul.mubr.bf16.gmra.mrb[0].mxu0 %v5710
      %v5933 = vpop.f32.mrb[0].mxu0
      %v5934 = vadd.f32 0.0, %v5933
      %v5935 = vpop.f32.mrb[0].mxu0
      %v5936 = vpop.f32.mrb[0].mxu0
      %v5937 = vadd.f32 0.0, %v5936
      %v5938 = vpop.f32.mrb[0].mxu0
      %5939 = vdwg.mxu0
      %5940 = vst [vmem:[#allocation4] sm:$0xff] %v5814
      %5941 = vst [vmem:[#allocation4 + $0x8] sm:$0xff] %v5817
      %5942 = vst [vmem:[#allocation4 + $0x10] sm:$0xff] %v5822
      %5943 = vst [vmem:[#allocation4 + $0x18] sm:$0xff] %v5825
      %5944 = vst [vmem:[#allocation4 + $0x20] sm:$0xff] %v5830
      %5945 = vst [vmem:[#allocation4 + $0x28] sm:$0xff] %v5833
      %5946 = vst [vmem:[#allocation4 + $0x30] sm:$0xff] %v5838
      %5947 = vst [vmem:[#allocation4 + $0x38] sm:$0xff] %v5841
      %5948 = vst [vmem:[#allocation4 + $0x40] sm:$0xff] %v5846
      %5949 = vst [vmem:[#allocation4 + $0x48] sm:$0xff] %v5849
      %5950 = vst [vmem:[#allocation4 + $0x50] sm:$0xff] %v5854
      %5951 = vst [vmem:[#allocation4 + $0x58] sm:$0xff] %v5857
      %5952 = vst [vmem:[#allocation4 + $0x60] sm:$0xff] %v5862
      %5953 = vst [vmem:[#allocation4 + $0x68] sm:$0xff] %v5865
      %5954 = vst [vmem:[#allocation4 + $0x70] sm:$0xff] %v5870
      %5955 = vst [vmem:[#allocation4 + $0x78] sm:$0xff] %v5873
      %5956 = vst [vmem:[#allocation4 + $0x80] sm:$0xff] %v5878
      %5957 = vst [vmem:[#allocation4 + $0x88] sm:$0xff] %v5881
      %5958 = vst [vmem:[#allocation4 + $0x90] sm:$0xff] %v5886
      %5959 = vst [vmem:[#allocation4 + $0x98] sm:$0xff] %v5889
      %5960 = vst [vmem:[#allocation4 + $0xa0] sm:$0xff] %v5894
      %5961 = vst [vmem:[#allocation4 + $0xa8] sm:$0xff] %v5897
      %5962 = vst [vmem:[#allocation4 + $0xb0] sm:$0xff] %v5902
      %5963 = vst [vmem:[#allocation4 + $0xb8] sm:$0xff] %v5905
      %5964 = vst [vmem:[#allocation4 + $0xc0] sm:$0xff] %v5910
      %5965 = vst [vmem:[#allocation4 + $0xc8] sm:$0xff] %v5913
      %5966 = vst [vmem:[#allocation4 + $0xd0] sm:$0xff] %v5918
      %5967 = vst [vmem:[#allocation4 + $0xd8] sm:$0xff] %v5921
      %5968 = vst [vmem:[#allocation4 + $0xe0] sm:$0xff] %v5926
      %5969 = vst [vmem:[#allocation4 + $0xe8] sm:$0xff] %v5929
      %5970 = vst [vmem:[#allocation4 + $0xf0] sm:$0xff] %v5934
      %5971 = vst [vmem:[#allocation4 + $0xf8] sm:$0xff] %v5937
      %s5972 = scalar_lea.vmem %s5, 192
      %v5973 = vld [vmem:[%s5972] sm:$0xf]
      %v5974 = vld [vmem:[%s5972 + $0x4] sm:$0xf]
      %v5975 = vld [vmem:[%s5972 + $0x8] sm:$0xf]
      %v5976 = vld [vmem:[%s5972 + $0xc] sm:$0xf]
      %v5977 = vld [vmem:[%s5972 + $0x10] sm:$0xf]
      %v5978 = vld [vmem:[%s5972 + $0x14] sm:$0xf]
      %v5979 = vld [vmem:[%s5972 + $0x18] sm:$0xf]
      %v5980 = vld [vmem:[%s5972 + $0x1c] sm:$0xf]
      %v5981 = vld [vmem:[%s5972 + $0x20] sm:$0xf]
      %v5982 = vld [vmem:[%s5972 + $0x24] sm:$0xf]
      %v5983 = vld [vmem:[%s5972 + $0x28] sm:$0xf]
      %v5984 = vld [vmem:[%s5972 + $0x2c] sm:$0xf]
      %v5985 = vld [vmem:[%s5972 + $0x30] sm:$0xf]
      %v5986 = vld [vmem:[%s5972 + $0x34] sm:$0xf]
      %v5987 = vld [vmem:[%s5972 + $0x38] sm:$0xf]
      %v5988 = vld [vmem:[%s5972 + $0x3c] sm:$0xf]
      %v6005 = vunpack.c.l.b16 %v5973
      %v6006 = vunpack.c.l.b16 %v5974
      %v6007 = vunpack.c.l.b16 %v5975
      %v6008 = vunpack.c.l.b16 %v5976
      %v6009 = vunpack.c.l.b16 %v5977
      %v6010 = vunpack.c.l.b16 %v5978
      %v6011 = vunpack.c.l.b16 %v5979
      %v6012 = vunpack.c.l.b16 %v5980
      %v6013 = vunpack.c.l.b16 %v5981
      %v6014 = vunpack.c.l.b16 %v5982
      %v6015 = vunpack.c.l.b16 %v5983
      %v6016 = vunpack.c.l.b16 %v5984
      %v6017 = vunpack.c.l.b16 %v5985
      %v6018 = vunpack.c.l.b16 %v5986
      %v6019 = vunpack.c.l.b16 %v5987
      %v6020 = vunpack.c.l.b16 %v5988
      %v6021 = vpack.c.b16 %v6006, %v6005
      %v6022 = vpack.c.b16 %v6008, %v6007
      %v6023 = vpack.c.b16 %v6010, %v6009
      %v6024 = vpack.c.b16 %v6012, %v6011
      %v6025 = vpack.c.b16 %v6014, %v6013
      %v6026 = vpack.c.b16 %v6016, %v6015
      %v6027 = vpack.c.b16 %v6018, %v6017
      %v6028 = vpack.c.b16 %v6020, %v6019
      %6037 = vmatprep.subr.bf16.mxu0 0
      %6038 = vmatpush1.bf16.msra.mxu0 %v6021
      %6039 = vmatprep.subr.bf16.mxu0 0
      %6040 = vmatpush1.bf16.msra.mxu0 %v6022
      %6041 = vmatprep.subr.bf16.mxu0 0
      %6042 = vmatpush1.bf16.msra.mxu0 %v6023
      %6043 = vmatprep.subr.bf16.mxu0 0
      %6044 = vmatpush1.bf16.msra.mxu0 %v6024
      %6045 = vmatprep.subr.bf16.mxu0 0
      %6046 = vmatpush1.bf16.msra.mxu0 %v6025
      %6047 = vmatprep.subr.bf16.mxu0 0
      %6048 = vmatpush1.bf16.msra.mxu0 %v6026
      %6049 = vmatprep.subr.bf16.mxu0 0
      %6050 = vmatpush1.bf16.msra.mxu0 %v6027
      %6051 = vmatprep.subr.bf16.mxu0 0
      %6052 = vmatpush1.bf16.msra.mxu0 %v6028
      %6053 = vmatprep.subr.bf16.mxu0 0
      %6054 = vmatpush1.bf16.msra.mxu0 0
      %6055 = vmatprep.subr.bf16.mxu0 0
      %6056 = vmatpush1.bf16.msra.mxu0 0
      %6057 = vmatprep.subr.bf16.mxu0 0
      %6058 = vmatpush1.bf16.msra.mxu0 0
      %6059 = vmatprep.subr.bf16.mxu0 0
      %6060 = vmatpush1.bf16.msra.mxu0 0
      %6061 = vmatprep.subr.bf16.mxu0 0
      %6062 = vmatpush1.bf16.msra.mxu0 0
      %6063 = vmatprep.subr.bf16.mxu0 0
      %6064 = vmatpush1.bf16.msra.mxu0 0
      %6065 = vmatprep.subr.bf16.mxu0 0
      %6066 = vmatpush1.bf16.msra.mxu0 0
      %6067 = vmatprep.subr.bf16.mxu0 0
      %6068 = vmatpush1.bf16.msra.mxu0 0
      %6069 = vmatprep.mubr.bf16.mxu0 0
      %6070 = vmatmul.mubr.bf16.gmra.mrb[0].mxu0 %v5697
      %v6071 = vpop.f32.mrb[0].mxu0
      %v6072 = vadd.f32 0.0, %v6071
      %v6073 = vpop.f32.mrb[0].mxu0
      %v6074 = vpop.f32.mrb[0].mxu0
      %v6075 = vadd.f32 0.0, %v6074
      %v6076 = vpop.f32.mrb[0].mxu0
      %6077 = vmatprep.mubr.bf16.mxu0 0
      %6078 = vmatmul.mubr.bf16.gmra.mrb[0].mxu0 %v5698
      %v6079 = vpop.f32.mrb[0].mxu0
      %v6080 = vadd.f32 0.0, %v6079
      %v6081 = vpop.f32.mrb[0].mxu0
      %v6082 = vpop.f32.mrb[0].mxu0
      %v6083 = vadd.f32 0.0, %v6082
      %v6084 = vpop.f32.mrb[0].mxu0
      %6085 = vmatprep.mubr.bf16.mxu0 0
      %6086 = vmatmul.mubr.bf16.gmra.mrb[0].mxu0 %v5699
      %v6087 = vpop.f32.mrb[0].mxu0
      %v6088 = vadd.f32 0.0, %v6087
      %v6089 = vpop.f32.mrb[0].mxu0
      %v6090 = vpop.f32.mrb[0].mxu0
      %v6091 = vadd.f32 0.0, %v6090
      %v6092 = vpop.f32.mrb[0].mxu0
      %6093 = vmatprep.mubr.bf16.mxu0 0
      %6094 = vmatmul.mubr.bf16.gmra.mrb[0].mxu0 %v5700
      %v6095 = vpop.f32.mrb[0].mxu0
      %v6096 = vadd.f32 0.0, %v6095
      %v6097 = vpop.f32.mrb[0].mxu0
      %v6098 = vpop.f32.mrb[0].mxu0
      %v6099 = vadd.f32 0.0, %v6098
      %v6100 = vpop.f32.mrb[0].mxu0
      %6101 = vmatprep.mubr.bf16.mxu0 0
      %6102 = vmatmul.mubr.bf16.gmra.mrb[0].mxu0 %v5701
      %v6103 = vpop.f32.mrb[0].mxu0
      %v6104 = vadd.f32 0.0, %v6103
      %v6105 = vpop.f32.mrb[0].mxu0
      %v6106 = vpop.f32.mrb[0].mxu0
      %v6107 = vadd.f32 0.0, %v6106
      %v6108 = vpop.f32.mrb[0].mxu0
      %6109 = vmatprep.mubr.bf16.mxu0 0
      %6110 = vmatmul.mubr.bf16.gmra.mrb[0].mxu0 %v5702
      %v6111 = vpop.f32.mrb[0].mxu0
      %v6112 = vadd.f32 0.0, %v6111
      %v6113 = vpop.f32.mrb[0].mxu0
      %v6114 = vpop.f32.mrb[0].mxu0
      %v6115 = vadd.f32 0.0, %v6114
      %v6116 = vpop.f32.mrb[0].mxu0
      %6117 = vmatprep.mubr.bf16.mxu0 0
      %6118 = vmatmul.mubr.bf16.gmra.mrb[0].mxu0 %v5703
      %v6119 = vpop.f32.mrb[0].mxu0
      %v6120 = vadd.f32 0.0, %v6119
      %v6121 = vpop.f32.mrb[0].mxu0
      %v6122 = vpop.f32.mrb[0].mxu0
      %v6123 = vadd.f32 0.0, %v6122
      %v6124 = vpop.f32.mrb[0].mxu0
      %6125 = vmatprep.mubr.bf16.mxu0 0
      %6126 = vmatmul.mubr.bf16.gmra.mrb[0].mxu0 %v5704
      %v6127 = vpop.f32.mrb[0].mxu0
      %v6128 = vadd.f32 0.0, %v6127
      %v6129 = vpop.f32.mrb[0].mxu0
      %v6130 = vpop.f32.mrb[0].mxu0
      %v6131 = vadd.f32 0.0, %v6130
      %v6132 = vpop.f32.mrb[0].mxu0
      %6133 = vmatprep.mubr.bf16.mxu0 0
      %6134 = vmatmul.mubr.bf16.gmra.mrb[0].mxu0 %v5705
      %v6135 = vpop.f32.mrb[0].mxu0
      %v6136 = vadd.f32 0.0, %v6135
      %v6137 = vpop.f32.mrb[0].mxu0
      %v6138 = vpop.f32.mrb[0].mxu0
      %v6139 = vadd.f32 0.0, %v6138
      %v6140 = vpop.f32.mrb[0].mxu0
      %6141 = vmatprep.mubr.bf16.mxu0 0
      %6142 = vmatmul.mubr.bf16.gmra.mrb[0].mxu0 %v5706
      %v6143 = vpop.f32.mrb[0].mxu0
      %v6144 = vadd.f32 0.0, %v6143
      %v6145 = vpop.f32.mrb[0].mxu0
      %v6146 = vpop.f32.mrb[0].mxu0
      %v6147 = vadd.f32 0.0, %v6146
      %v6148 = vpop.f32.mrb[0].mxu0
      %6149 = vmatprep.mubr.bf16.mxu0 0
      %6150 = vmatmul.mubr.bf16.gmra.mrb[0].mxu0 %v5707
      %v6151 = vpop.f32.mrb[0].mxu0
      %v6152 = vadd.f32 0.0, %v6151
      %v6153 = vpop.f32.mrb[0].mxu0
      %v6154 = vpop.f32.mrb[0].mxu0
      %v6155 = vadd.f32 0.0, %v6154
      %v6156 = vpop.f32.mrb[0].mxu0
      %6157 = vmatprep.mubr.bf16.mxu0 0
      %6158 = vmatmul.mubr.bf16.gmra.mrb[0].mxu0 %v5708
      %v6159 = vpop.f32.mrb[0].mxu0
      %v6160 = vadd.f32 0.0, %v6159
      %v6161 = vpop.f32.mrb[0].mxu0
      %v6162 = vpop.f32.mrb[0].mxu0
      %v6163 = vadd.f32 0.0, %v6162
      %v6164 = vpop.f32.mrb[0].mxu0
      %6165 = vmatprep.mubr.bf16.mxu0 0
      %6166 = vmatmul.mubr.bf16.gmra.mrb[0].mxu0 %v5709
      %v6167 = vpop.f32.mrb[0].mxu0
      %v6168 = vadd.f32 0.0, %v6167
      %v6169 = vpop.f32.mrb[0].mxu0
      %v6170 = vpop.f32.mrb[0].mxu0
      %v6171 = vadd.f32 0.0, %v6170
      %v6172 = vpop.f32.mrb[0].mxu0
      %6173 = vmatprep.mubr.bf16.mxu0 0
      %6174 = vmatmul.mubr.bf16.gmra.mrb[0].mxu0 %v5710
      %v6175 = vpop.f32.mrb[0].mxu0
      %v6176 = vadd.f32 0.0, %v6175
      %v6177 = vpop.f32.mrb[0].mxu0
      %v6178 = vpop.f32.mrb[0].mxu0
      %v6179 = vadd.f32 0.0, %v6178
      %v6180 = vpop.f32.mrb[0].mxu0
      %6181 = vmatprep.mubr.bf16.mxu0 0
      %6182 = vmatmul.mubr.bf16.gmra.mrb[0].mxu0 %v5711
      %v6183 = vpop.f32.mrb[0].mxu0
      %v6184 = vadd.f32 0.0, %v6183
      %v6185 = vpop.f32.mrb[0].mxu0
      %v6186 = vpop.f32.mrb[0].mxu0
      %v6187 = vadd.f32 0.0, %v6186
      %v6188 = vpop.f32.mrb[0].mxu0
      %6189 = vmatprep.mubr.bf16.mxu0 0
      %6190 = vmatmul.mubr.bf16.gmra.mrb[0].mxu0 %v5712
      %v6191 = vpop.f32.mrb[0].mxu0
      %v6192 = vadd.f32 0.0, %v6191
      %v6193 = vpop.f32.mrb[0].mxu0
      %v6194 = vpop.f32.mrb[0].mxu0
      %v6195 = vadd.f32 0.0, %v6194
      %v6196 = vpop.f32.mrb[0].mxu0
      %6197 = vdwg.mxu0
      %v6198 = vld [vmem:[#allocation4] sm:$0xff]
      %v6199 = vld [vmem:[#allocation4 + $0x8] sm:$0xff]
      %v6200 = vld [vmem:[#allocation4 + $0x10] sm:$0xff]
      %v6201 = vld [vmem:[#allocation4 + $0x18] sm:$0xff]
      %v6202 = vld [vmem:[#allocation4 + $0x20] sm:$0xff]
      %v6203 = vld [vmem:[#allocation4 + $0x28] sm:$0xff]
      %v6204 = vld [vmem:[#allocation4 + $0x30] sm:$0xff]
      %v6205 = vld [vmem:[#allocation4 + $0x38] sm:$0xff]
      %v6206 = vld [vmem:[#allocation4 + $0x40] sm:$0xff]
      %v6207 = vld [vmem:[#allocation4 + $0x48] sm:$0xff]
      %v6208 = vld [vmem:[#allocation4 + $0x50] sm:$0xff]
      %v6209 = vld [vmem:[#allocation4 + $0x58] sm:$0xff]
      %v6210 = vld [vmem:[#allocation4 + $0x60] sm:$0xff]
      %v6211 = vld [vmem:[#allocation4 + $0x68] sm:$0xff]
      %v6212 = vld [vmem:[#allocation4 + $0x70] sm:$0xff]
      %v6213 = vld [vmem:[#allocation4 + $0x78] sm:$0xff]
      %v6214 = vld [vmem:[#allocation4 + $0x80] sm:$0xff]
      %v6215 = vld [vmem:[#allocation4 + $0x88] sm:$0xff]
      %v6216 = vld [vmem:[#allocation4 + $0x90] sm:$0xff]
      %v6217 = vld [vmem:[#allocation4 + $0x98] sm:$0xff]
      %v6218 = vld [vmem:[#allocation4 + $0xa0] sm:$0xff]
      %v6219 = vld [vmem:[#allocation4 + $0xa8] sm:$0xff]
      %v6220 = vld [vmem:[#allocation4 + $0xb0] sm:$0xff]
      %v6221 = vld [vmem:[#allocation4 + $0xb8] sm:$0xff]
      %v6222 = vld [vmem:[#allocation4 + $0xc0] sm:$0xff]
      %v6223 = vld [vmem:[#allocation4 + $0xc8] sm:$0xff]
      %v6224 = vld [vmem:[#allocation4 + $0xd0] sm:$0xff]
      %v6225 = vld [vmem:[#allocation4 + $0xd8] sm:$0xff]
      %v6226 = vld [vmem:[#allocation4 + $0xe0] sm:$0xff]
      %v6227 = vld [vmem:[#allocation4 + $0xe8] sm:$0xff]
      %v6228 = vld [vmem:[#allocation4 + $0xf0] sm:$0xff]
      %v6229 = vld [vmem:[#allocation4 + $0xf8] sm:$0xff]
      %v6230 = vadd.f32 %v6198, %v6072
      %v6231 = vadd.f32 %v6199, %v6075
      %v6232 = vadd.f32 %v6200, %v6080
      %v6233 = vadd.f32 %v6201, %v6083
      %v6234 = vadd.f32 %v6202, %v6088
      %v6235 = vadd.f32 %v6203, %v6091
      %v6236 = vadd.f32 %v6204, %v6096
      %v6237 = vadd.f32 %v6205, %v6099
      %v6238 = vadd.f32 %v6206, %v6104
      %v6239 = vadd.f32 %v6207, %v6107
      %v6240 = vadd.f32 %v6208, %v6112
      %v6241 = vadd.f32 %v6209, %v6115
      %v6242 = vadd.f32 %v6210, %v6120
      %v6243 = vadd.f32 %v6211, %v6123
      %v6244 = vadd.f32 %v6212, %v6128
      %v6245 = vadd.f32 %v6213, %v6131
      %v6246 = vadd.f32 %v6214, %v6136
      %v6247 = vadd.f32 %v6215, %v6139
      %v6248 = vadd.f32 %v6216, %v6144
      %v6249 = vadd.f32 %v6217, %v6147
      %v6250 = vadd.f32 %v6218, %v6152
      %v6251 = vadd.f32 %v6219, %v6155
      %v6252 = vadd.f32 %v6220, %v6160
      %v6253 = vadd.f32 %v6221, %v6163
      %v6254 = vadd.f32 %v6222, %v6168
      %v6255 = vadd.f32 %v6223, %v6171
      %v6256 = vadd.f32 %v6224, %v6176
      %v6257 = vadd.f32 %v6225, %v6179
      %v6258 = vadd.f32 %v6226, %v6184
      %v6259 = vadd.f32 %v6227, %v6187
      %v6260 = vadd.f32 %v6228, %v6192
      %v6261 = vadd.f32 %v6229, %v6195
      %6262 = vst [vmem:[#allocation4] sm:$0xff] %v6230
      %6263 = vst [vmem:[#allocation4 + $0x8] sm:$0xff] %v6231
      %6264 = vst [vmem:[#allocation4 + $0x10] sm:$0xff] %v6232
      %6265 = vst [vmem:[#allocation4 + $0x18] sm:$0xff] %v6233
      %6266 = vst [vmem:[#allocation4 + $0x20] sm:$0xff] %v6234
      %6267 = vst [vmem:[#allocation4 + $0x28] sm:$0xff] %v6235
      %6268 = vst [vmem:[#allocation4 + $0x30] sm:$0xff] %v6236
      %6269 = vst [vmem:[#allocation4 + $0x38] sm:$0xff] %v6237
      %6270 = vst [vmem:[#allocation4 + $0x40] sm:$0xff] %v6238
      %6271 = vst [vmem:[#allocation4 + $0x48] sm:$0xff] %v6239
      %6272 = vst [vmem:[#allocation4 + $0x50] sm:$0xff] %v6240
      %6273 = vst [vmem:[#allocation4 + $0x58] sm:$0xff] %v6241
      %6274 = vst [vmem:[#allocation4 + $0x60] sm:$0xff] %v6242
      %6275 = vst [vmem:[#allocation4 + $0x68] sm:$0xff] %v6243
      %6276 = vst [vmem:[#allocation4 + $0x70] sm:$0xff] %v6244
      %6277 = vst [vmem:[#allocation4 + $0x78] sm:$0xff] %v6245
      %6278 = vst [vmem:[#allocation4 + $0x80] sm:$0xff] %v6246
      %6279 = vst [vmem:[#allocation4 + $0x88] sm:$0xff] %v6247
      %6280 = vst [vmem:[#allocation4 + $0x90] sm:$0xff] %v6248
      %6281 = vst [vmem:[#allocation4 + $0x98] sm:$0xff] %v6249
      %6282 = vst [vmem:[#allocation4 + $0xa0] sm:$0xff] %v6250
      %6283 = vst [vmem:[#allocation4 + $0xa8] sm:$0xff] %v6251
      %6284 = vst [vmem:[#allocation4 + $0xb0] sm:$0xff] %v6252
      %6285 = vst [vmem:[#allocation4 + $0xb8] sm:$0xff] %v6253
      %6286 = vst [vmem:[#allocation4 + $0xc0] sm:$0xff] %v6254
      %6287 = vst [vmem:[#allocation4 + $0xc8] sm:$0xff] %v6255
      %6288 = vst [vmem:[#allocation4 + $0xd0] sm:$0xff] %v6256
      %6289 = vst [vmem:[#allocation4 + $0xd8] sm:$0xff] %v6257
      %6290 = vst [vmem:[#allocation4 + $0xe0] sm:$0xff] %v6258
      %6291 = vst [vmem:[#allocation4 + $0xe8] sm:$0xff] %v6259
      %6292 = vst [vmem:[#allocation4 + $0xf0] sm:$0xff] %v6260
      %6293 = vst [vmem:[#allocation4 + $0xf8] sm:$0xff] %v6261
      %s6294 = scalar_lea.vmem %s5, 384
      %v6295 = vld [vmem:[%s6294] sm:$0xf]
      %v6296 = vld [vmem:[%s6294 + $0x4] sm:$0xf]
      %v6297 = vld [vmem:[%s6294 + $0x8] sm:$0xf]
      %v6298 = vld [vmem:[%s6294 + $0xc] sm:$0xf]
      %v6299 = vld [vmem:[%s6294 + $0x10] sm:$0xf]
      %v6300 = vld [vmem:[%s6294 + $0x14] sm:$0xf]
      %v6301 = vld [vmem:[%s6294 + $0x18] sm:$0xf]
      %v6302 = vld [vmem:[%s6294 + $0x1c] sm:$0xf]
      %v6303 = vld [vmem:[%s6294 + $0x20] sm:$0xf]
      %v6304 = vld [vmem:[%s6294 + $0x24] sm:$0xf]
      %v6305 = vld [vmem:[%s6294 + $0x28] sm:$0xf]
      %v6306 = vld [vmem:[%s6294 + $0x2c] sm:$0xf]
      %v6307 = vld [vmem:[%s6294 + $0x30] sm:$0xf]
      %v6308 = vld [vmem:[%s6294 + $0x34] sm:$0xf]
      %v6309 = vld [vmem:[%s6294 + $0x38] sm:$0xf]
      %v6310 = vld [vmem:[%s6294 + $0x3c] sm:$0xf]
      %v6327 = vunpack.c.l.b16 %v6295
      %v6328 = vunpack.c.l.b16 %v6296
      %v6329 = vunpack.c.l.b16 %v6297
      %v6330 = vunpack.c.l.b16 %v6298
      %v6331 = vunpack.c.l.b16 %v6299
      %v6332 = vunpack.c.l.b16 %v6300
      %v6333 = vunpack.c.l.b16 %v6301
      %v6334 = vunpack.c.l.b16 %v6302
      %v6335 = vunpack.c.l.b16 %v6303
      %v6336 = vunpack.c.l.b16 %v6304
      %v6337 = vunpack.c.l.b16 %v6305
      %v6338 = vunpack.c.l.b16 %v6306
      %v6339 = vunpack.c.l.b16 %v6307
      %v6340 = vunpack.c.l.b16 %v6308
      %v6341 = vunpack.c.l.b16 %v6309
      %v6342 = vunpack.c.l.b16 %v6310
      %v6343 = vpack.c.b16 %v6328, %v6327
      %v6344 = vpack.c.b16 %v6330, %v6329
      %v6345 = vpack.c.b16 %v6332, %v6331
      %v6346 = vpack.c.b16 %v6334, %v6333
      %v6347 = vpack.c.b16 %v6336, %v6335
      %v6348 = vpack.c.b16 %v6338, %v6337
      %v6349 = vpack.c.b16 %v6340, %v6339
      %v6350 = vpack.c.b16 %v6342, %v6341
      %6359 = vmatprep.subr.bf16.mxu0 0
      %6360 = vmatpush1.bf16.msra.mxu0 %v6343
      %6361 = vmatprep.subr.bf16.mxu0 0
      %6362 = vmatpush1.bf16.msra.mxu0 %v6344
      %6363 = vmatprep.subr.bf16.mxu0 0
      %6364 = vmatpush1.bf16.msra.mxu0 %v6345
      %6365 = vmatprep.subr.bf16.mxu0 0
      %6366 = vmatpush1.bf16.msra.mxu0 %v6346
      %6367 = vmatprep.subr.bf16.mxu0 0
      %6368 = vmatpush1.bf16.msra.mxu0 %v6347
      %6369 = vmatprep.subr.bf16.mxu0 0
      %6370 = vmatpush1.bf16.msra.mxu0 %v6348
      %6371 = vmatprep.subr.bf16.mxu0 0
      %6372 = vmatpush1.bf16.msra.mxu0 %v6349
      %6373 = vmatprep.subr.bf16.mxu0 0
      %6374 = vmatpush1.bf16.msra.mxu0 %v6350
      %6375 = vmatprep.subr.bf16.mxu0 0
      %6376 = vmatpush1.bf16.msra.mxu0 0
      %6377 = vmatprep.subr.bf16.mxu0 0
      %6378 = vmatpush1.bf16.msra.mxu0 0
      %6379 = vmatprep.subr.bf16.mxu0 0
      %6380 = vmatpush1.bf16.msra.mxu0 0
      %6381 = vmatprep.subr.bf16.mxu0 0
      %6382 = vmatpush1.bf16.msra.mxu0 0
      %6383 = vmatprep.subr.bf16.mxu0 0
      %6384 = vmatpush1.bf16.msra.mxu0 0
      %6385 = vmatprep.subr.bf16.mxu0 0
      %6386 = vmatpush1.bf16.msra.mxu0 0
      %6387 = vmatprep.subr.bf16.mxu0 0
      %6388 = vmatpush1.bf16.msra.mxu0 0
      %6389 = vmatprep.subr.bf16.mxu0 0
      %6390 = vmatpush1.bf16.msra.mxu0 0
      %6391 = vmatprep.mubr.bf16.mxu0 0
      %6392 = vmatmul.mubr.bf16.gmra.mrb[0].mxu0 %v5699
      %v6393 = vpop.f32.mrb[0].mxu0
      %v6394 = vadd.f32 0.0, %v6393
      %v6395 = vpop.f32.mrb[0].mxu0
      %v6396 = vpop.f32.mrb[0].mxu0
      %v6397 = vadd.f32 0.0, %v6396
      %v6398 = vpop.f32.mrb[0].mxu0
      %6399 = vmatprep.mubr.bf16.mxu0 0
      %6400 = vmatmul.mubr.bf16.gmra.mrb[0].mxu0 %v5700
      %v6401 = vpop.f32.mrb[0].mxu0
      %v6402 = vadd.f32 0.0, %v6401
      %v6403 = vpop.f32.mrb[0].mxu0
      %v6404 = vpop.f32.mrb[0].mxu0
      %v6405 = vadd.f32 0.0, %v6404
      %v6406 = vpop.f32.mrb[0].mxu0
      %6407 = vmatprep.mubr.bf16.mxu0 0
      %6408 = vmatmul.mubr.bf16.gmra.mrb[0].mxu0 %v5701
      %v6409 = vpop.f32.mrb[0].mxu0
      %v6410 = vadd.f32 0.0, %v6409
      %v6411 = vpop.f32.mrb[0].mxu0
      %v6412 = vpop.f32.mrb[0].mxu0
      %v6413 = vadd.f32 0.0, %v6412
      %v6414 = vpop.f32.mrb[0].mxu0
      %6415 = vmatprep.mubr.bf16.mxu0 0
      %6416 = vmatmul.mubr.bf16.gmra.mrb[0].mxu0 %v5702
      %v6417 = vpop.f32.mrb[0].mxu0
      %v6418 = vadd.f32 0.0, %v6417
      %v6419 = vpop.f32.mrb[0].mxu0
      %v6420 = vpop.f32.mrb[0].mxu0
      %v6421 = vadd.f32 0.0, %v6420
      %v6422 = vpop.f32.mrb[0].mxu0
      %6423 = vmatprep.mubr.bf16.mxu0 0
      %6424 = vmatmul.mubr.bf16.gmra.mrb[0].mxu0 %v5703
      %v6425 = vpop.f32.mrb[0].mxu0
      %v6426 = vadd.f32 0.0, %v6425
      %v6427 = vpop.f32.mrb[0].mxu0
      %v6428 = vpop.f32.mrb[0].mxu0
      %v6429 = vadd.f32 0.0, %v6428
      %v6430 = vpop.f32.mrb[0].mxu0
      %6431 = vmatprep.mubr.bf16.mxu0 0
      %6432 = vmatmul.mubr.bf16.gmra.mrb[0].mxu0 %v5704
      %v6433 = vpop.f32.mrb[0].mxu0
      %v6434 = vadd.f32 0.0, %v6433
      %v6435 = vpop.f32.mrb[0].mxu0
      %v6436 = vpop.f32.mrb[0].mxu0
      %v6437 = vadd.f32 0.0, %v6436
      %v6438 = vpop.f32.mrb[0].mxu0
      %6439 = vmatprep.mubr.bf16.mxu0 0
      %6440 = vmatmul.mubr.bf16.gmra.mrb[0].mxu0 %v5705
      %v6441 = vpop.f32.mrb[0].mxu0
      %v6442 = vadd.f32 0.0, %v6441
      %v6443 = vpop.f32.mrb[0].mxu0
      %v6444 = vpop.f32.mrb[0].mxu0
      %v6445 = vadd.f32 0.0, %v6444
      %v6446 = vpop.f32.mrb[0].mxu0
      %6447 = vmatprep.mubr.bf16.mxu0 0
      %6448 = vmatmul.mubr.bf16.gmra.mrb[0].mxu0 %v5706
      %v6449 = vpop.f32.mrb[0].mxu0
      %v6450 = vadd.f32 0.0, %v6449
      %v6451 = vpop.f32.mrb[0].mxu0
      %v6452 = vpop.f32.mrb[0].mxu0
      %v6453 = vadd.f32 0.0, %v6452
      %v6454 = vpop.f32.mrb[0].mxu0
      %6455 = vmatprep.mubr.bf16.mxu0 0
      %6456 = vmatmul.mubr.bf16.gmra.mrb[0].mxu0 %v5707
      %v6457 = vpop.f32.mrb[0].mxu0
      %v6458 = vadd.f32 0.0, %v6457
      %v6459 = vpop.f32.mrb[0].mxu0
      %v6460 = vpop.f32.mrb[0].mxu0
      %v6461 = vadd.f32 0.0, %v6460
      %v6462 = vpop.f32.mrb[0].mxu0
      %6463 = vmatprep.mubr.bf16.mxu0 0
      %6464 = vmatmul.mubr.bf16.gmra.mrb[0].mxu0 %v5708
      %v6465 = vpop.f32.mrb[0].mxu0
      %v6466 = vadd.f32 0.0, %v6465
      %v6467 = vpop.f32.mrb[0].mxu0
      %v6468 = vpop.f32.mrb[0].mxu0
      %v6469 = vadd.f32 0.0, %v6468
      %v6470 = vpop.f32.mrb[0].mxu0
      %6471 = vmatprep.mubr.bf16.mxu0 0
      %6472 = vmatmul.mubr.bf16.gmra.mrb[0].mxu0 %v5709
      %v6473 = vpop.f32.mrb[0].mxu0
      %v6474 = vadd.f32 0.0, %v6473
      %v6475 = vpop.f32.mrb[0].mxu0
      %v6476 = vpop.f32.mrb[0].mxu0
      %v6477 = vadd.f32 0.0, %v6476
      %v6478 = vpop.f32.mrb[0].mxu0
      %6479 = vmatprep.mubr.bf16.mxu0 0
      %6480 = vmatmul.mubr.bf16.gmra.mrb[0].mxu0 %v5710
      %v6481 = vpop.f32.mrb[0].mxu0
      %v6482 = vadd.f32 0.0, %v6481
      %v6483 = vpop.f32.mrb[0].mxu0
      %v6484 = vpop.f32.mrb[0].mxu0
      %v6485 = vadd.f32 0.0, %v6484
      %v6486 = vpop.f32.mrb[0].mxu0
      %6487 = vmatprep.mubr.bf16.mxu0 0
      %6488 = vmatmul.mubr.bf16.gmra.mrb[0].mxu0 %v5711
      %v6489 = vpop.f32.mrb[0].mxu0
      %v6490 = vadd.f32 0.0, %v6489
      %v6491 = vpop.f32.mrb[0].mxu0
      %v6492 = vpop.f32.mrb[0].mxu0
      %v6493 = vadd.f32 0.0, %v6492
      %v6494 = vpop.f32.mrb[0].mxu0
      %6495 = vmatprep.mubr.bf16.mxu0 0
      %6496 = vmatmul.mubr.bf16.gmra.mrb[0].mxu0 %v5712
      %v6497 = vpop.f32.mrb[0].mxu0
      %v6498 = vadd.f32 0.0, %v6497
      %v6499 = vpop.f32.mrb[0].mxu0
      %v6500 = vpop.f32.mrb[0].mxu0
      %v6501 = vadd.f32 0.0, %v6500
      %v6502 = vpop.f32.mrb[0].mxu0
      %6503 = vmatprep.mubr.bf16.mxu0 0
      %6504 = vmatmul.mubr.bf16.gmra.mrb[0].mxu0 %v5713
      %v6505 = vpop.f32.mrb[0].mxu0
      %v6506 = vadd.f32 0.0, %v6505
      %v6507 = vpop.f32.mrb[0].mxu0
      %v6508 = vpop.f32.mrb[0].mxu0
      %v6509 = vadd.f32 0.0, %v6508
      %v6510 = vpop.f32.mrb[0].mxu0
      %6511 = vmatprep.mubr.bf16.mxu0 0
      %6512 = vmatmul.mubr.bf16.gmra.mrb[0].mxu0 %v5714
      %v6513 = vpop.f32.mrb[0].mxu0
      %v6514 = vadd.f32 0.0, %v6513
      %v6515 = vpop.f32.mrb[0].mxu0
      %v6516 = vpop.f32.mrb[0].mxu0
      %v6517 = vadd.f32 0.0, %v6516
      %v6518 = vpop.f32.mrb[0].mxu0
      %6519 = vdwg.mxu0
      %v6520 = vld [vmem:[#allocation4] sm:$0xff]
      %v6521 = vld [vmem:[#allocation4 + $0x8] sm:$0xff]
      %v6522 = vld [vmem:[#allocation4 + $0x10] sm:$0xff]
      %v6523 = vld [vmem:[#allocation4 + $0x18] sm:$0xff]
      %v6524 = vld [vmem:[#allocation4 + $0x20] sm:$0xff]
      %v6525 = vld [vmem:[#allocation4 + $0x28] sm:$0xff]
      %v6526 = vld [vmem:[#allocation4 + $0x30] sm:$0xff]
      %v6527 = vld [vmem:[#allocation4 + $0x38] sm:$0xff]
      %v6528 = vld [vmem:[#allocation4 + $0x40] sm:$0xff]
      %v6529 = vld [vmem:[#allocation4 + $0x48] sm:$0xff]
      %v6530 = vld [vmem:[#allocation4 + $0x50] sm:$0xff]
      %v6531 = vld [vmem:[#allocation4 + $0x58] sm:$0xff]
      %v6532 = vld [vmem:[#allocation4 + $0x60] sm:$0xff]
      %v6533 = vld [vmem:[#allocation4 + $0x68] sm:$0xff]
      %v6534 = vld [vmem:[#allocation4 + $0x70] sm:$0xff]
      %v6535 = vld [vmem:[#allocation4 + $0x78] sm:$0xff]
      %v6536 = vld [vmem:[#allocation4 + $0x80] sm:$0xff]
      %v6537 = vld [vmem:[#allocation4 + $0x88] sm:$0xff]
      %v6538 = vld [vmem:[#allocation4 + $0x90] sm:$0xff]
      %v6539 = vld [vmem:[#allocation4 + $0x98] sm:$0xff]
      %v6540 = vld [vmem:[#allocation4 + $0xa0] sm:$0xff]
      %v6541 = vld [vmem:[#allocation4 + $0xa8] sm:$0xff]
      %v6542 = vld [vmem:[#allocation4 + $0xb0] sm:$0xff]
      %v6543 = vld [vmem:[#allocation4 + $0xb8] sm:$0xff]
      %v6544 = vld [vmem:[#allocation4 + $0xc0] sm:$0xff]
      %v6545 = vld [vmem:[#allocation4 + $0xc8] sm:$0xff]
      %v6546 = vld [vmem:[#allocation4 + $0xd0] sm:$0xff]
      %v6547 = vld [vmem:[#allocation4 + $0xd8] sm:$0xff]
      %v6548 = vld [vmem:[#allocation4 + $0xe0] sm:$0xff]
      %v6549 = vld [vmem:[#allocation4 + $0xe8] sm:$0xff]
      %v6550 = vld [vmem:[#allocation4 + $0xf0] sm:$0xff]
      %v6551 = vld [vmem:[#allocation4 + $0xf8] sm:$0xff]
      %v6552 = vadd.f32 %v6520, %v6394
      %v6553 = vadd.f32 %v6521, %v6397
      %v6554 = vadd.f32 %v6522, %v6402
      %v6555 = vadd.f32 %v6523, %v6405
      %v6556 = vadd.f32 %v6524, %v6410
      %v6557 = vadd.f32 %v6525, %v6413
      %v6558 = vadd.f32 %v6526, %v6418
      %v6559 = vadd.f32 %v6527, %v6421
      %v6560 = vadd.f32 %v6528, %v6426
      %v6561 = vadd.f32 %v6529, %v6429
      %v6562 = vadd.f32 %v6530, %v6434
      %v6563 = vadd.f32 %v6531, %v6437
      %v6564 = vadd.f32 %v6532, %v6442
      %v6565 = vadd.f32 %v6533, %v6445
      %v6566 = vadd.f32 %v6534, %v6450
      %v6567 = vadd.f32 %v6535, %v6453
      %v6568 = vadd.f32 %v6536, %v6458
      %v6569 = vadd.f32 %v6537, %v6461
      %v6570 = vadd.f32 %v6538, %v6466
      %v6571 = vadd.f32 %v6539, %v6469
      %v6572 = vadd.f32 %v6540, %v6474
      %v6573 = vadd.f32 %v6541, %v6477
      %v6574 = vadd.f32 %v6542, %v6482
      %v6575 = vadd.f32 %v6543, %v6485
      %v6576 = vadd.f32 %v6544, %v6490
      %v6577 = vadd.f32 %v6545, %v6493
      %v6578 = vadd.f32 %v6546, %v6498
      %v6579 = vadd.f32 %v6547, %v6501
      %v6580 = vadd.f32 %v6548, %v6506
      %v6581 = vadd.f32 %v6549, %v6509
      %v6582 = vadd.f32 %v6550, %v6514
      %v6583 = vadd.f32 %v6551, %v6517
      %6584 = vst [vmem:[#allocation4] sm:$0xff] %v6552
      %6585 = vst [vmem:[#allocation4 + $0x8] sm:$0xff] %v6553
      %6586 = vst [vmem:[#allocation4 + $0x10] sm:$0xff] %v6554
      %6587 = vst [vmem:[#allocation4 + $0x18] sm:$0xff] %v6555
      %6588 = vst [vmem:[#allocation4 + $0x20] sm:$0xff] %v6556
      %6589 = vst [vmem:[#allocation4 + $0x28] sm:$0xff] %v6557
      %6590 = vst [vmem:[#allocation4 + $0x30] sm:$0xff] %v6558
      %6591 = vst [vmem:[#allocation4 + $0x38] sm:$0xff] %v6559
      %6592 = vst [vmem:[#allocation4 + $0x40] sm:$0xff] %v6560
      %6593 = vst [vmem:[#allocation4 + $0x48] sm:$0xff] %v6561
      %6594 = vst [vmem:[#allocation4 + $0x50] sm:$0xff] %v6562
      %6595 = vst [vmem:[#allocation4 + $0x58] sm:$0xff] %v6563
      %6596 = vst [vmem:[#allocation4 + $0x60] sm:$0xff] %v6564
      %6597 = vst [vmem:[#allocation4 + $0x68] sm:$0xff] %v6565
      %6598 = vst [vmem:[#allocation4 + $0x70] sm:$0xff] %v6566
      %6599 = vst [vmem:[#allocation4 + $0x78] sm:$0xff] %v6567
      %6600 = vst [vmem:[#allocation4 + $0x80] sm:$0xff] %v6568
      %6601 = vst [vmem:[#allocation4 + $0x88] sm:$0xff] %v6569
      %6602 = vst [vmem:[#allocation4 + $0x90] sm:$0xff] %v6570
      %6603 = vst [vmem:[#allocation4 + $0x98] sm:$0xff] %v6571
      %6604 = vst [vmem:[#allocation4 + $0xa0] sm:$0xff] %v6572
      %6605 = vst [vmem:[#allocation4 + $0xa8] sm:$0xff] %v6573
      %6606 = vst [vmem:[#allocation4 + $0xb0] sm:$0xff] %v6574
      %6607 = vst [vmem:[#allocation4 + $0xb8] sm:$0xff] %v6575
      %6608 = vst [vmem:[#allocation4 + $0xc0] sm:$0xff] %v6576
      %6609 = vst [vmem:[#allocation4 + $0xc8] sm:$0xff] %v6577
      %6610 = vst [vmem:[#allocation4 + $0xd0] sm:$0xff] %v6578
      %6611 = vst [vmem:[#allocation4 + $0xd8] sm:$0xff] %v6579
      %6612 = vst [vmem:[#allocation4 + $0xe0] sm:$0xff] %v6580
      %6613 = vst [vmem:[#allocation4 + $0xe8] sm:$0xff] %v6581
      %6614 = vst [vmem:[#allocation4 + $0xf0] sm:$0xff] %v6582
      %6615 = vst [vmem:[#allocation4 + $0xf8] sm:$0xff] %v6583
      %v6616 = vpack.c.bf16 %v5576, %v5575
      %v6617 = vpack.c.bf16 %v5578, %v5577
      %v6618 = vpack.c.bf16 %v5580, %v5579
      %v6619 = vpack.c.bf16 %v5582, %v5581
      %v6620 = vpack.c.bf16 %v5584, %v5583
      %v6621 = vpack.c.bf16 %v5586, %v5585
      %v6622 = vpack.c.bf16 %v5588, %v5587
      %v6623 = vpack.c.bf16 %v5590, %v5589
      %v6624 = vpack.c.bf16 %v5592, %v5591
      %v6625 = vpack.c.bf16 %v5594, %v5593
      %v6626 = vpack.c.bf16 %v5596, %v5595
      %v6627 = vpack.c.bf16 %v5598, %v5597
      %v6628 = vpack.c.bf16 %v5600, %v5599
      %v6629 = vpack.c.bf16 %v5602, %v5601
      %v6630 = vpack.c.bf16 %v5604, %v5603
      %v6631 = vpack.c.bf16 %v5606, %v5605
      %v6632 = vpack.c.bf16 %v5608, %v5607
      %v6633 = vpack.c.bf16 %v5610, %v5609
      %v6634 = vpack.c.bf16 %v5612, %v5611
      %v6635 = vpack.c.bf16 %v5614, %v5613
      %s6636 = scalar_lea.vmem %s5, 64
      %v6637 = vld [vmem:[%s6636] sm:$0xf]
      %v6638 = vld [vmem:[%s6636 + $0x4] sm:$0xf]
      %v6639 = vld [vmem:[%s6636 + $0x8] sm:$0xf]
      %v6640 = vld [vmem:[%s6636 + $0xc] sm:$0xf]
      %v6641 = vld [vmem:[%s6636 + $0x10] sm:$0xf]
      %v6642 = vld [vmem:[%s6636 + $0x14] sm:$0xf]
      %v6643 = vld [vmem:[%s6636 + $0x18] sm:$0xf]
      %v6644 = vld [vmem:[%s6636 + $0x1c] sm:$0xf]
      %v6645 = vld [vmem:[%s6636 + $0x20] sm:$0xf]
      %v6646 = vld [vmem:[%s6636 + $0x24] sm:$0xf]
      %v6647 = vld [vmem:[%s6636 + $0x28] sm:$0xf]
      %v6648 = vld [vmem:[%s6636 + $0x2c] sm:$0xf]
      %v6649 = vld [vmem:[%s6636 + $0x30] sm:$0xf]
      %v6650 = vld [vmem:[%s6636 + $0x34] sm:$0xf]
      %v6651 = vld [vmem:[%s6636 + $0x38] sm:$0xf]
      %v6652 = vld [vmem:[%s6636 + $0x3c] sm:$0xf]
      %v6669 = vunpack.c.l.b16 %v6637
      %v6670 = vunpack.c.l.b16 %v6638
      %v6671 = vunpack.c.l.b16 %v6639
      %v6672 = vunpack.c.l.b16 %v6640
      %v6673 = vunpack.c.l.b16 %v6641
      %v6674 = vunpack.c.l.b16 %v6642
      %v6675 = vunpack.c.l.b16 %v6643
      %v6676 = vunpack.c.l.b16 %v6644
      %v6677 = vunpack.c.l.b16 %v6645
      %v6678 = vunpack.c.l.b16 %v6646
      %v6679 = vunpack.c.l.b16 %v6647
      %v6680 = vunpack.c.l.b16 %v6648
      %v6681 = vunpack.c.l.b16 %v6649
      %v6682 = vunpack.c.l.b16 %v6650
      %v6683 = vunpack.c.l.b16 %v6651
      %v6684 = vunpack.c.l.b16 %v6652
      %v6685 = vpack.c.b16 %v6670, %v6669
      %v6686 = vpack.c.b16 %v6672, %v6671
      %v6687 = vpack.c.b16 %v6674, %v6673
      %v6688 = vpack.c.b16 %v6676, %v6675
      %v6689 = vpack.c.b16 %v6678, %v6677
      %v6690 = vpack.c.b16 %v6680, %v6679
      %v6691 = vpack.c.b16 %v6682, %v6681
      %v6692 = vpack.c.b16 %v6684, %v6683
      %6701 = vmatprep.subr.bf16.mxu0 0
      %6702 = vmatpush1.bf16.msra.mxu0 %v6685
      %6703 = vmatprep.subr.bf16.mxu0 0
      %6704 = vmatpush1.bf16.msra.mxu0 %v6686
      %6705 = vmatprep.subr.bf16.mxu0 0
      %6706 = vmatpush1.bf16.msra.mxu0 %v6687
      %6707 = vmatprep.subr.bf16.mxu0 0
      %6708 = vmatpush1.bf16.msra.mxu0 %v6688
      %6709 = vmatprep.subr.bf16.mxu0 0
      %6710 = vmatpush1.bf16.msra.mxu0 %v6689
      %6711 = vmatprep.subr.bf16.mxu0 0
      %6712 = vmatpush1.bf16.msra.mxu0 %v6690
      %6713 = vmatprep.subr.bf16.mxu0 0
      %6714 = vmatpush1.bf16.msra.mxu0 %v6691
      %6715 = vmatprep.subr.bf16.mxu0 0
      %6716 = vmatpush1.bf16.msra.mxu0 %v6692
      %6717 = vmatprep.subr.bf16.mxu0 0
      %6718 = vmatpush1.bf16.msra.mxu0 0
      %6719 = vmatprep.subr.bf16.mxu0 0
      %6720 = vmatpush1.bf16.msra.mxu0 0
      %6721 = vmatprep.subr.bf16.mxu0 0
      %6722 = vmatpush1.bf16.msra.mxu0 0
      %6723 = vmatprep.subr.bf16.mxu0 0
      %6724 = vmatpush1.bf16.msra.mxu0 0
      %6725 = vmatprep.subr.bf16.mxu0 0
      %6726 = vmatpush1.bf16.msra.mxu0 0
      %6727 = vmatprep.subr.bf16.mxu0 0
      %6728 = vmatpush1.bf16.msra.mxu0 0
      %6729 = vmatprep.subr.bf16.mxu0 0
      %6730 = vmatpush1.bf16.msra.mxu0 0
      %6731 = vmatprep.subr.bf16.mxu0 0
      %6732 = vmatpush1.bf16.msra.mxu0 0
      %6733 = vmatprep.mubr.bf16.mxu0 0
      %6734 = vmatmul.mubr.bf16.gmra.mrb[0].mxu0 %v6616
      %v6735 = vpop.f32.mrb[0].mxu0
      %v6736 = vadd.f32 0.0, %v6735
      %v6737 = vpop.f32.mrb[0].mxu0
      %v6738 = vpop.f32.mrb[0].mxu0
      %v6739 = vadd.f32 0.0, %v6738
      %v6740 = vpop.f32.mrb[0].mxu0
      %6741 = vmatprep.mubr.bf16.mxu0 0
      %6742 = vmatmul.mubr.bf16.gmra.mrb[0].mxu0 %v6617
      %v6743 = vpop.f32.mrb[0].mxu0
      %v6744 = vadd.f32 0.0, %v6743
      %v6745 = vpop.f32.mrb[0].mxu0
      %v6746 = vpop.f32.mrb[0].mxu0
      %v6747 = vadd.f32 0.0, %v6746
      %v6748 = vpop.f32.mrb[0].mxu0
      %6749 = vmatprep.mubr.bf16.mxu0 0
      %6750 = vmatmul.mubr.bf16.gmra.mrb[0].mxu0 %v6618
      %v6751 = vpop.f32.mrb[0].mxu0
      %v6752 = vadd.f32 0.0, %v6751
      %v6753 = vpop.f32.mrb[0].mxu0
      %v6754 = vpop.f32.mrb[0].mxu0
      %v6755 = vadd.f32 0.0, %v6754
      %v6756 = vpop.f32.mrb[0].mxu0
      %6757 = vmatprep.mubr.bf16.mxu0 0
      %6758 = vmatmul.mubr.bf16.gmra.mrb[0].mxu0 %v6619
      %v6759 = vpop.f32.mrb[0].mxu0
      %v6760 = vadd.f32 0.0, %v6759
      %v6761 = vpop.f32.mrb[0].mxu0
      %v6762 = vpop.f32.mrb[0].mxu0
      %v6763 = vadd.f32 0.0, %v6762
      %v6764 = vpop.f32.mrb[0].mxu0
      %6765 = vmatprep.mubr.bf16.mxu0 0
      %6766 = vmatmul.mubr.bf16.gmra.mrb[0].mxu0 %v6620
      %v6767 = vpop.f32.mrb[0].mxu0
      %v6768 = vadd.f32 0.0, %v6767
      %v6769 = vpop.f32.mrb[0].mxu0
      %v6770 = vpop.f32.mrb[0].mxu0
      %v6771 = vadd.f32 0.0, %v6770
      %v6772 = vpop.f32.mrb[0].mxu0
      %6773 = vmatprep.mubr.bf16.mxu0 0
      %6774 = vmatmul.mubr.bf16.gmra.mrb[0].mxu0 %v6621
      %v6775 = vpop.f32.mrb[0].mxu0
      %v6776 = vadd.f32 0.0, %v6775
      %v6777 = vpop.f32.mrb[0].mxu0
      %v6778 = vpop.f32.mrb[0].mxu0
      %v6779 = vadd.f32 0.0, %v6778
      %v6780 = vpop.f32.mrb[0].mxu0
      %6781 = vmatprep.mubr.bf16.mxu0 0
      %6782 = vmatmul.mubr.bf16.gmra.mrb[0].mxu0 %v6622
      %v6783 = vpop.f32.mrb[0].mxu0
      %v6784 = vadd.f32 0.0, %v6783
      %v6785 = vpop.f32.mrb[0].mxu0
      %v6786 = vpop.f32.mrb[0].mxu0
      %v6787 = vadd.f32 0.0, %v6786
      %v6788 = vpop.f32.mrb[0].mxu0
      %6789 = vmatprep.mubr.bf16.mxu0 0
      %6790 = vmatmul.mubr.bf16.gmra.mrb[0].mxu0 %v6623
      %v6791 = vpop.f32.mrb[0].mxu0
      %v6792 = vadd.f32 0.0, %v6791
      %v6793 = vpop.f32.mrb[0].mxu0
      %v6794 = vpop.f32.mrb[0].mxu0
      %v6795 = vadd.f32 0.0, %v6794
      %v6796 = vpop.f32.mrb[0].mxu0
      %6797 = vmatprep.mubr.bf16.mxu0 0
      %6798 = vmatmul.mubr.bf16.gmra.mrb[0].mxu0 %v6624
      %v6799 = vpop.f32.mrb[0].mxu0
      %v6800 = vadd.f32 0.0, %v6799
      %v6801 = vpop.f32.mrb[0].mxu0
      %v6802 = vpop.f32.mrb[0].mxu0
      %v6803 = vadd.f32 0.0, %v6802
      %v6804 = vpop.f32.mrb[0].mxu0
      %6805 = vmatprep.mubr.bf16.mxu0 0
      %6806 = vmatmul.mubr.bf16.gmra.mrb[0].mxu0 %v6625
      %v6807 = vpop.f32.mrb[0].mxu0
      %v6808 = vadd.f32 0.0, %v6807
      %v6809 = vpop.f32.mrb[0].mxu0
      %v6810 = vpop.f32.mrb[0].mxu0
      %v6811 = vadd.f32 0.0, %v6810
      %v6812 = vpop.f32.mrb[0].mxu0
      %6813 = vmatprep.mubr.bf16.mxu0 0
      %6814 = vmatmul.mubr.bf16.gmra.mrb[0].mxu0 %v6626
      %v6815 = vpop.f32.mrb[0].mxu0
      %v6816 = vadd.f32 0.0, %v6815
      %v6817 = vpop.f32.mrb[0].mxu0
      %v6818 = vpop.f32.mrb[0].mxu0
      %v6819 = vadd.f32 0.0, %v6818
      %v6820 = vpop.f32.mrb[0].mxu0
      %6821 = vmatprep.mubr.bf16.mxu0 0
      %6822 = vmatmul.mubr.bf16.gmra.mrb[0].mxu0 %v6627
      %v6823 = vpop.f32.mrb[0].mxu0
      %v6824 = vadd.f32 0.0, %v6823
      %v6825 = vpop.f32.mrb[0].mxu0
      %v6826 = vpop.f32.mrb[0].mxu0
      %v6827 = vadd.f32 0.0, %v6826
      %v6828 = vpop.f32.mrb[0].mxu0
      %6829 = vmatprep.mubr.bf16.mxu0 0
      %6830 = vmatmul.mubr.bf16.gmra.mrb[0].mxu0 %v6628
      %v6831 = vpop.f32.mrb[0].mxu0
      %v6832 = vadd.f32 0.0, %v6831
      %v6833 = vpop.f32.mrb[0].mxu0
      %v6834 = vpop.f32.mrb[0].mxu0
      %v6835 = vadd.f32 0.0, %v6834
      %v6836 = vpop.f32.mrb[0].mxu0
      %6837 = vmatprep.mubr.bf16.mxu0 0
      %6838 = vmatmul.mubr.bf16.gmra.mrb[0].mxu0 %v6629
      %v6839 = vpop.f32.mrb[0].mxu0
      %v6840 = vadd.f32 0.0, %v6839
      %v6841 = vpop.f32.mrb[0].mxu0
      %v6842 = vpop.f32.mrb[0].mxu0
      %v6843 = vadd.f32 0.0, %v6842
      %v6844 = vpop.f32.mrb[0].mxu0
      %6845 = vmatprep.mubr.bf16.mxu0 0
      %6846 = vmatmul.mubr.bf16.gmra.mrb[0].mxu0 %v6630
      %v6847 = vpop.f32.mrb[0].mxu0
      %v6848 = vadd.f32 0.0, %v6847
      %v6849 = vpop.f32.mrb[0].mxu0
      %v6850 = vpop.f32.mrb[0].mxu0
      %v6851 = vadd.f32 0.0, %v6850
      %v6852 = vpop.f32.mrb[0].mxu0
      %6853 = vmatprep.mubr.bf16.mxu0 0
      %6854 = vmatmul.mubr.bf16.gmra.mrb[0].mxu0 %v6631
      %v6855 = vpop.f32.mrb[0].mxu0
      %v6856 = vadd.f32 0.0, %v6855
      %v6857 = vpop.f32.mrb[0].mxu0
      %v6858 = vpop.f32.mrb[0].mxu0
      %v6859 = vadd.f32 0.0, %v6858
      %v6860 = vpop.f32.mrb[0].mxu0
      %6861 = vdwg.mxu0
      %v6862 = vld [vmem:[#allocation4] sm:$0xff]
      %v6863 = vld [vmem:[#allocation4 + $0x8] sm:$0xff]
      %v6864 = vld [vmem:[#allocation4 + $0x10] sm:$0xff]
      %v6865 = vld [vmem:[#allocation4 + $0x18] sm:$0xff]
      %v6866 = vld [vmem:[#allocation4 + $0x20] sm:$0xff]
      %v6867 = vld [vmem:[#allocation4 + $0x28] sm:$0xff]
      %v6868 = vld [vmem:[#allocation4 + $0x30] sm:$0xff]
      %v6869 = vld [vmem:[#allocation4 + $0x38] sm:$0xff]
      %v6870 = vld [vmem:[#allocation4 + $0x40] sm:$0xff]
      %v6871 = vld [vmem:[#allocation4 + $0x48] sm:$0xff]
      %v6872 = vld [vmem:[#allocation4 + $0x50] sm:$0xff]
      %v6873 = vld [vmem:[#allocation4 + $0x58] sm:$0xff]
      %v6874 = vld [vmem:[#allocation4 + $0x60] sm:$0xff]
      %v6875 = vld [vmem:[#allocation4 + $0x68] sm:$0xff]
      %v6876 = vld [vmem:[#allocation4 + $0x70] sm:$0xff]
      %v6877 = vld [vmem:[#allocation4 + $0x78] sm:$0xff]
      %v6878 = vld [vmem:[#allocation4 + $0x80] sm:$0xff]
      %v6879 = vld [vmem:[#allocation4 + $0x88] sm:$0xff]
      %v6880 = vld [vmem:[#allocation4 + $0x90] sm:$0xff]
      %v6881 = vld [vmem:[#allocation4 + $0x98] sm:$0xff]
      %v6882 = vld [vmem:[#allocation4 + $0xa0] sm:$0xff]
      %v6883 = vld [vmem:[#allocation4 + $0xa8] sm:$0xff]
      %v6884 = vld [vmem:[#allocation4 + $0xb0] sm:$0xff]
      %v6885 = vld [vmem:[#allocation4 + $0xb8] sm:$0xff]
      %v6886 = vld [vmem:[#allocation4 + $0xc0] sm:$0xff]
      %v6887 = vld [vmem:[#allocation4 + $0xc8] sm:$0xff]
      %v6888 = vld [vmem:[#allocation4 + $0xd0] sm:$0xff]
      %v6889 = vld [vmem:[#allocation4 + $0xd8] sm:$0xff]
      %v6890 = vld [vmem:[#allocation4 + $0xe0] sm:$0xff]
      %v6891 = vld [vmem:[#allocation4 + $0xe8] sm:$0xff]
      %v6892 = vld [vmem:[#allocation4 + $0xf0] sm:$0xff]
      %v6893 = vld [vmem:[#allocation4 + $0xf8] sm:$0xff]
      %v6894 = vadd.f32 %v6862, %v6736
      %v6895 = vadd.f32 %v6863, %v6739
      %v6896 = vadd.f32 %v6864, %v6744
      %v6897 = vadd.f32 %v6865, %v6747
      %v6898 = vadd.f32 %v6866, %v6752
      %v6899 = vadd.f32 %v6867, %v6755
      %v6900 = vadd.f32 %v6868, %v6760
      %v6901 = vadd.f32 %v6869, %v6763
      %v6902 = vadd.f32 %v6870, %v6768
      %v6903 = vadd.f32 %v6871, %v6771
      %v6904 = vadd.f32 %v6872, %v6776
      %v6905 = vadd.f32 %v6873, %v6779
      %v6906 = vadd.f32 %v6874, %v6784
      %v6907 = vadd.f32 %v6875, %v6787
      %v6908 = vadd.f32 %v6876, %v6792
      %v6909 = vadd.f32 %v6877, %v6795
      %v6910 = vadd.f32 %v6878, %v6800
      %v6911 = vadd.f32 %v6879, %v6803
      %v6912 = vadd.f32 %v6880, %v6808
      %v6913 = vadd.f32 %v6881, %v6811
      %v6914 = vadd.f32 %v6882, %v6816
      %v6915 = vadd.f32 %v6883, %v6819
      %v6916 = vadd.f32 %v6884, %v6824
      %v6917 = vadd.f32 %v6885, %v6827
      %v6918 = vadd.f32 %v6886, %v6832
      %v6919 = vadd.f32 %v6887, %v6835
      %v6920 = vadd.f32 %v6888, %v6840
      %v6921 = vadd.f32 %v6889, %v6843
      %v6922 = vadd.f32 %v6890, %v6848
      %v6923 = vadd.f32 %v6891, %v6851
      %v6924 = vadd.f32 %v6892, %v6856
      %v6925 = vadd.f32 %v6893, %v6859
      %6926 = vst [vmem:[#allocation4] sm:$0xff] %v6894
      %6927 = vst [vmem:[#allocation4 + $0x8] sm:$0xff] %v6895
      %6928 = vst [vmem:[#allocation4 + $0x10] sm:$0xff] %v6896
      %6929 = vst [vmem:[#allocation4 + $0x18] sm:$0xff] %v6897
      %6930 = vst [vmem:[#allocation4 + $0x20] sm:$0xff] %v6898
      %6931 = vst [vmem:[#allocation4 + $0x28] sm:$0xff] %v6899
      %6932 = vst [vmem:[#allocation4 + $0x30] sm:$0xff] %v6900
      %6933 = vst [vmem:[#allocation4 + $0x38] sm:$0xff] %v6901
      %6934 = vst [vmem:[#allocation4 + $0x40] sm:$0xff] %v6902
      %6935 = vst [vmem:[#allocation4 + $0x48] sm:$0xff] %v6903
      %6936 = vst [vmem:[#allocation4 + $0x50] sm:$0xff] %v6904
      %6937 = vst [vmem:[#allocation4 + $0x58] sm:$0xff] %v6905
      %6938 = vst [vmem:[#allocation4 + $0x60] sm:$0xff] %v6906
      %6939 = vst [vmem:[#allocation4 + $0x68] sm:$0xff] %v6907
      %6940 = vst [vmem:[#allocation4 + $0x70] sm:$0xff] %v6908
      %6941 = vst [vmem:[#allocation4 + $0x78] sm:$0xff] %v6909
      %6942 = vst [vmem:[#allocation4 + $0x80] sm:$0xff] %v6910
      %6943 = vst [vmem:[#allocation4 + $0x88] sm:$0xff] %v6911
      %6944 = vst [vmem:[#allocation4 + $0x90] sm:$0xff] %v6912
      %6945 = vst [vmem:[#allocation4 + $0x98] sm:$0xff] %v6913
      %6946 = vst [vmem:[#allocation4 + $0xa0] sm:$0xff] %v6914
      %6947 = vst [vmem:[#allocation4 + $0xa8] sm:$0xff] %v6915
      %6948 = vst [vmem:[#allocation4 + $0xb0] sm:$0xff] %v6916
      %6949 = vst [vmem:[#allocation4 + $0xb8] sm:$0xff] %v6917
      %6950 = vst [vmem:[#allocation4 + $0xc0] sm:$0xff] %v6918
      %6951 = vst [vmem:[#allocation4 + $0xc8] sm:$0xff] %v6919
      %6952 = vst [vmem:[#allocation4 + $0xd0] sm:$0xff] %v6920
      %6953 = vst [vmem:[#allocation4 + $0xd8] sm:$0xff] %v6921
      %6954 = vst [vmem:[#allocation4 + $0xe0] sm:$0xff] %v6922
      %6955 = vst [vmem:[#allocation4 + $0xe8] sm:$0xff] %v6923
      %6956 = vst [vmem:[#allocation4 + $0xf0] sm:$0xff] %v6924
      %6957 = vst [vmem:[#allocation4 + $0xf8] sm:$0xff] %v6925
      %s6958 = scalar_lea.vmem %s5, 256
      %v6959 = vld [vmem:[%s6958] sm:$0xf]
      %v6960 = vld [vmem:[%s6958 + $0x4] sm:$0xf]
      %v6961 = vld [vmem:[%s6958 + $0x8] sm:$0xf]
      %v6962 = vld [vmem:[%s6958 + $0xc] sm:$0xf]
      %v6963 = vld [vmem:[%s6958 + $0x10] sm:$0xf]
      %v6964 = vld [vmem:[%s6958 + $0x14] sm:$0xf]
      %v6965 = vld [vmem:[%s6958 + $0x18] sm:$0xf]
      %v6966 = vld [vmem:[%s6958 + $0x1c] sm:$0xf]
      %v6967 = vld [vmem:[%s6958 + $0x20] sm:$0xf]
      %v6968 = vld [vmem:[%s6958 + $0x24] sm:$0xf]
      %v6969 = vld [vmem:[%s6958 + $0x28] sm:$0xf]
      %v6970 = vld [vmem:[%s6958 + $0x2c] sm:$0xf]
      %v6971 = vld [vmem:[%s6958 + $0x30] sm:$0xf]
      %v6972 = vld [vmem:[%s6958 + $0x34] sm:$0xf]
      %v6973 = vld [vmem:[%s6958 + $0x38] sm:$0xf]
      %v6974 = vld [vmem:[%s6958 + $0x3c] sm:$0xf]
      %v6991 = vunpack.c.l.b16 %v6959
      %v6992 = vunpack.c.l.b16 %v6960
      %v6993 = vunpack.c.l.b16 %v6961
      %v6994 = vunpack.c.l.b16 %v6962
      %v6995 = vunpack.c.l.b16 %v6963
      %v6996 = vunpack.c.l.b16 %v6964
      %v6997 = vunpack.c.l.b16 %v6965
      %v6998 = vunpack.c.l.b16 %v6966
      %v6999 = vunpack.c.l.b16 %v6967
      %v7000 = vunpack.c.l.b16 %v6968
      %v7001 = vunpack.c.l.b16 %v6969
      %v7002 = vunpack.c.l.b16 %v6970
      %v7003 = vunpack.c.l.b16 %v6971
      %v7004 = vunpack.c.l.b16 %v6972
      %v7005 = vunpack.c.l.b16 %v6973
      %v7006 = vunpack.c.l.b16 %v6974
      %v7007 = vpack.c.b16 %v6992, %v6991
      %v7008 = vpack.c.b16 %v6994, %v6993
      %v7009 = vpack.c.b16 %v6996, %v6995
      %v7010 = vpack.c.b16 %v6998, %v6997
      %v7011 = vpack.c.b16 %v7000, %v6999
      %v7012 = vpack.c.b16 %v7002, %v7001
      %v7013 = vpack.c.b16 %v7004, %v7003
      %v7014 = vpack.c.b16 %v7006, %v7005
      %7023 = vmatprep.subr.bf16.mxu0 0
      %7024 = vmatpush1.bf16.msra.mxu0 %v7007
      %7025 = vmatprep.subr.bf16.mxu0 0
      %7026 = vmatpush1.bf16.msra.mxu0 %v7008
      %7027 = vmatprep.subr.bf16.mxu0 0
      %7028 = vmatpush1.bf16.msra.mxu0 %v7009
      %7029 = vmatprep.subr.bf16.mxu0 0
      %7030 = vmatpush1.bf16.msra.mxu0 %v7010
      %7031 = vmatprep.subr.bf16.mxu0 0
      %7032 = vmatpush1.bf16.msra.mxu0 %v7011
      %7033 = vmatprep.subr.bf16.mxu0 0
      %7034 = vmatpush1.bf16.msra.mxu0 %v7012
      %7035 = vmatprep.subr.bf16.mxu0 0
      %7036 = vmatpush1.bf16.msra.mxu0 %v7013
      %7037 = vmatprep.subr.bf16.mxu0 0
      %7038 = vmatpush1.bf16.msra.mxu0 %v7014
      %7039 = vmatprep.subr.bf16.mxu0 0
      %7040 = vmatpush1.bf16.msra.mxu0 0
      %7041 = vmatprep.subr.bf16.mxu0 0
      %7042 = vmatpush1.bf16.msra.mxu0 0
      %7043 = vmatprep.subr.bf16.mxu0 0
      %7044 = vmatpush1.bf16.msra.mxu0 0
      %7045 = vmatprep.subr.bf16.mxu0 0
      %7046 = vmatpush1.bf16.msra.mxu0 0
      %7047 = vmatprep.subr.bf16.mxu0 0
      %7048 = vmatpush1.bf16.msra.mxu0 0
      %7049 = vmatprep.subr.bf16.mxu0 0
      %7050 = vmatpush1.bf16.msra.mxu0 0
      %7051 = vmatprep.subr.bf16.mxu0 0
      %7052 = vmatpush1.bf16.msra.mxu0 0
      %7053 = vmatprep.subr.bf16.mxu0 0
      %7054 = vmatpush1.bf16.msra.mxu0 0
      %7055 = vmatprep.mubr.bf16.mxu0 0
      %7056 = vmatmul.mubr.bf16.gmra.mrb[0].mxu0 %v6618
      %v7057 = vpop.f32.mrb[0].mxu0
      %v7058 = vadd.f32 0.0, %v7057
      %v7059 = vpop.f32.mrb[0].mxu0
      %v7060 = vpop.f32.mrb[0].mxu0
      %v7061 = vadd.f32 0.0, %v7060
      %v7062 = vpop.f32.mrb[0].mxu0
      %7063 = vmatprep.mubr.bf16.mxu0 0
      %7064 = vmatmul.mubr.bf16.gmra.mrb[0].mxu0 %v6619
      %v7065 = vpop.f32.mrb[0].mxu0
      %v7066 = vadd.f32 0.0, %v7065
      %v7067 = vpop.f32.mrb[0].mxu0
      %v7068 = vpop.f32.mrb[0].mxu0
      %v7069 = vadd.f32 0.0, %v7068
      %v7070 = vpop.f32.mrb[0].mxu0
      %7071 = vmatprep.mubr.bf16.mxu0 0
      %7072 = vmatmul.mubr.bf16.gmra.mrb[0].mxu0 %v6620
      %v7073 = vpop.f32.mrb[0].mxu0
      %v7074 = vadd.f32 0.0, %v7073
      %v7075 = vpop.f32.mrb[0].mxu0
      %v7076 = vpop.f32.mrb[0].mxu0
      %v7077 = vadd.f32 0.0, %v7076
      %v7078 = vpop.f32.mrb[0].mxu0
      %7079 = vmatprep.mubr.bf16.mxu0 0
      %7080 = vmatmul.mubr.bf16.gmra.mrb[0].mxu0 %v6621
      %v7081 = vpop.f32.mrb[0].mxu0
      %v7082 = vadd.f32 0.0, %v7081
      %v7083 = vpop.f32.mrb[0].mxu0
      %v7084 = vpop.f32.mrb[0].mxu0
      %v7085 = vadd.f32 0.0, %v7084
      %v7086 = vpop.f32.mrb[0].mxu0
      %7087 = vmatprep.mubr.bf16.mxu0 0
      %7088 = vmatmul.mubr.bf16.gmra.mrb[0].mxu0 %v6622
      %v7089 = vpop.f32.mrb[0].mxu0
      %v7090 = vadd.f32 0.0, %v7089
      %v7091 = vpop.f32.mrb[0].mxu0
      %v7092 = vpop.f32.mrb[0].mxu0
      %v7093 = vadd.f32 0.0, %v7092
      %v7094 = vpop.f32.mrb[0].mxu0
      %7095 = vmatprep.mubr.bf16.mxu0 0
      %7096 = vmatmul.mubr.bf16.gmra.mrb[0].mxu0 %v6623
      %v7097 = vpop.f32.mrb[0].mxu0
      %v7098 = vadd.f32 0.0, %v7097
      %v7099 = vpop.f32.mrb[0].mxu0
      %v7100 = vpop.f32.mrb[0].mxu0
      %v7101 = vadd.f32 0.0, %v7100
      %v7102 = vpop.f32.mrb[0].mxu0
      %7103 = vmatprep.mubr.bf16.mxu0 0
      %7104 = vmatmul.mubr.bf16.gmra.mrb[0].mxu0 %v6624
      %v7105 = vpop.f32.mrb[0].mxu0
      %v7106 = vadd.f32 0.0, %v7105
      %v7107 = vpop.f32.mrb[0].mxu0
      %v7108 = vpop.f32.mrb[0].mxu0
      %v7109 = vadd.f32 0.0, %v7108
      %v7110 = vpop.f32.mrb[0].mxu0
      %7111 = vmatprep.mubr.bf16.mxu0 0
      %7112 = vmatmul.mubr.bf16.gmra.mrb[0].mxu0 %v6625
      %v7113 = vpop.f32.mrb[0].mxu0
      %v7114 = vadd.f32 0.0, %v7113
      %v7115 = vpop.f32.mrb[0].mxu0
      %v7116 = vpop.f32.mrb[0].mxu0
      %v7117 = vadd.f32 0.0, %v7116
      %v7118 = vpop.f32.mrb[0].mxu0
      %7119 = vmatprep.mubr.bf16.mxu0 0
      %7120 = vmatmul.mubr.bf16.gmra.mrb[0].mxu0 %v6626
      %v7121 = vpop.f32.mrb[0].mxu0
      %v7122 = vadd.f32 0.0, %v7121
      %v7123 = vpop.f32.mrb[0].mxu0
      %v7124 = vpop.f32.mrb[0].mxu0
      %v7125 = vadd.f32 0.0, %v7124
      %v7126 = vpop.f32.mrb[0].mxu0
      %7127 = vmatprep.mubr.bf16.mxu0 0
      %7128 = vmatmul.mubr.bf16.gmra.mrb[0].mxu0 %v6627
      %v7129 = vpop.f32.mrb[0].mxu0
      %v7130 = vadd.f32 0.0, %v7129
      %v7131 = vpop.f32.mrb[0].mxu0
      %v7132 = vpop.f32.mrb[0].mxu0
      %v7133 = vadd.f32 0.0, %v7132
      %v7134 = vpop.f32.mrb[0].mxu0
      %7135 = vmatprep.mubr.bf16.mxu0 0
      %7136 = vmatmul.mubr.bf16.gmra.mrb[0].mxu0 %v6628
      %v7137 = vpop.f32.mrb[0].mxu0
      %v7138 = vadd.f32 0.0, %v7137
      %v7139 = vpop.f32.mrb[0].mxu0
      %v7140 = vpop.f32.mrb[0].mxu0
      %v7141 = vadd.f32 0.0, %v7140
      %v7142 = vpop.f32.mrb[0].mxu0
      %7143 = vmatprep.mubr.bf16.mxu0 0
      %7144 = vmatmul.mubr.bf16.gmra.mrb[0].mxu0 %v6629
      %v7145 = vpop.f32.mrb[0].mxu0
      %v7146 = vadd.f32 0.0, %v7145
      %v7147 = vpop.f32.mrb[0].mxu0
      %v7148 = vpop.f32.mrb[0].mxu0
      %v7149 = vadd.f32 0.0, %v7148
      %v7150 = vpop.f32.mrb[0].mxu0
      %7151 = vmatprep.mubr.bf16.mxu0 0
      %7152 = vmatmul.mubr.bf16.gmra.mrb[0].mxu0 %v6630
      %v7153 = vpop.f32.mrb[0].mxu0
      %v7154 = vadd.f32 0.0, %v7153
      %v7155 = vpop.f32.mrb[0].mxu0
      %v7156 = vpop.f32.mrb[0].mxu0
      %v7157 = vadd.f32 0.0, %v7156
      %v7158 = vpop.f32.mrb[0].mxu0
      %7159 = vmatprep.mubr.bf16.mxu0 0
      %7160 = vmatmul.mubr.bf16.gmra.mrb[0].mxu0 %v6631
      %v7161 = vpop.f32.mrb[0].mxu0
      %v7162 = vadd.f32 0.0, %v7161
      %v7163 = vpop.f32.mrb[0].mxu0
      %v7164 = vpop.f32.mrb[0].mxu0
      %v7165 = vadd.f32 0.0, %v7164
      %v7166 = vpop.f32.mrb[0].mxu0
      %7167 = vmatprep.mubr.bf16.mxu0 0
      %7168 = vmatmul.mubr.bf16.gmra.mrb[0].mxu0 %v6632
      %v7169 = vpop.f32.mrb[0].mxu0
      %v7170 = vadd.f32 0.0, %v7169
      %v7171 = vpop.f32.mrb[0].mxu0
      %v7172 = vpop.f32.mrb[0].mxu0
      %v7173 = vadd.f32 0.0, %v7172
      %v7174 = vpop.f32.mrb[0].mxu0
      %7175 = vmatprep.mubr.bf16.mxu0 0
      %7176 = vmatmul.mubr.bf16.gmra.mrb[0].mxu0 %v6633
      %v7177 = vpop.f32.mrb[0].mxu0
      %v7178 = vadd.f32 0.0, %v7177
      %v7179 = vpop.f32.mrb[0].mxu0
      %v7180 = vpop.f32.mrb[0].mxu0
      %v7181 = vadd.f32 0.0, %v7180
      %v7182 = vpop.f32.mrb[0].mxu0
      %7183 = vdwg.mxu0
      %v7184 = vld [vmem:[#allocation4] sm:$0xff]
      %v7185 = vld [vmem:[#allocation4 + $0x8] sm:$0xff]
      %v7186 = vld [vmem:[#allocation4 + $0x10] sm:$0xff]
      %v7187 = vld [vmem:[#allocation4 + $0x18] sm:$0xff]
      %v7188 = vld [vmem:[#allocation4 + $0x20] sm:$0xff]
      %v7189 = vld [vmem:[#allocation4 + $0x28] sm:$0xff]
      %v7190 = vld [vmem:[#allocation4 + $0x30] sm:$0xff]
      %v7191 = vld [vmem:[#allocation4 + $0x38] sm:$0xff]
      %v7192 = vld [vmem:[#allocation4 + $0x40] sm:$0xff]
      %v7193 = vld [vmem:[#allocation4 + $0x48] sm:$0xff]
      %v7194 = vld [vmem:[#allocation4 + $0x50] sm:$0xff]
      %v7195 = vld [vmem:[#allocation4 + $0x58] sm:$0xff]
      %v7196 = vld [vmem:[#allocation4 + $0x60] sm:$0xff]
      %v7197 = vld [vmem:[#allocation4 + $0x68] sm:$0xff]
      %v7198 = vld [vmem:[#allocation4 + $0x70] sm:$0xff]
      %v7199 = vld [vmem:[#allocation4 + $0x78] sm:$0xff]
      %v7200 = vld [vmem:[#allocation4 + $0x80] sm:$0xff]
      %v7201 = vld [vmem:[#allocation4 + $0x88] sm:$0xff]
      %v7202 = vld [vmem:[#allocation4 + $0x90] sm:$0xff]
      %v7203 = vld [vmem:[#allocation4 + $0x98] sm:$0xff]
      %v7204 = vld [vmem:[#allocation4 + $0xa0] sm:$0xff]
      %v7205 = vld [vmem:[#allocation4 + $0xa8] sm:$0xff]
      %v7206 = vld [vmem:[#allocation4 + $0xb0] sm:$0xff]
      %v7207 = vld [vmem:[#allocation4 + $0xb8] sm:$0xff]
      %v7208 = vld [vmem:[#allocation4 + $0xc0] sm:$0xff]
      %v7209 = vld [vmem:[#allocation4 + $0xc8] sm:$0xff]
      %v7210 = vld [vmem:[#allocation4 + $0xd0] sm:$0xff]
      %v7211 = vld [vmem:[#allocation4 + $0xd8] sm:$0xff]
      %v7212 = vld [vmem:[#allocation4 + $0xe0] sm:$0xff]
      %v7213 = vld [vmem:[#allocation4 + $0xe8] sm:$0xff]
      %v7214 = vld [vmem:[#allocation4 + $0xf0] sm:$0xff]
      %v7215 = vld [vmem:[#allocation4 + $0xf8] sm:$0xff]
      %v7216 = vadd.f32 %v7184, %v7058
      %v7217 = vadd.f32 %v7185, %v7061
      %v7218 = vadd.f32 %v7186, %v7066
      %v7219 = vadd.f32 %v7187, %v7069
      %v7220 = vadd.f32 %v7188, %v7074
      %v7221 = vadd.f32 %v7189, %v7077
      %v7222 = vadd.f32 %v7190, %v7082
      %v7223 = vadd.f32 %v7191, %v7085
      %v7224 = vadd.f32 %v7192, %v7090
      %v7225 = vadd.f32 %v7193, %v7093
      %v7226 = vadd.f32 %v7194, %v7098
      %v7227 = vadd.f32 %v7195, %v7101
      %v7228 = vadd.f32 %v7196, %v7106
      %v7229 = vadd.f32 %v7197, %v7109
      %v7230 = vadd.f32 %v7198, %v7114
      %v7231 = vadd.f32 %v7199, %v7117
      %v7232 = vadd.f32 %v7200, %v7122
      %v7233 = vadd.f32 %v7201, %v7125
      %v7234 = vadd.f32 %v7202, %v7130
      %v7235 = vadd.f32 %v7203, %v7133
      %v7236 = vadd.f32 %v7204, %v7138
      %v7237 = vadd.f32 %v7205, %v7141
      %v7238 = vadd.f32 %v7206, %v7146
      %v7239 = vadd.f32 %v7207, %v7149
      %v7240 = vadd.f32 %v7208, %v7154
      %v7241 = vadd.f32 %v7209, %v7157
      %v7242 = vadd.f32 %v7210, %v7162
      %v7243 = vadd.f32 %v7211, %v7165
      %v7244 = vadd.f32 %v7212, %v7170
      %v7245 = vadd.f32 %v7213, %v7173
      %v7246 = vadd.f32 %v7214, %v7178
      %v7247 = vadd.f32 %v7215, %v7181
      %7248 = vst [vmem:[#allocation4] sm:$0xff] %v7216
      %7249 = vst [vmem:[#allocation4 + $0x8] sm:$0xff] %v7217
      %7250 = vst [vmem:[#allocation4 + $0x10] sm:$0xff] %v7218
      %7251 = vst [vmem:[#allocation4 + $0x18] sm:$0xff] %v7219
      %7252 = vst [vmem:[#allocation4 + $0x20] sm:$0xff] %v7220
      %7253 = vst [vmem:[#allocation4 + $0x28] sm:$0xff] %v7221
      %7254 = vst [vmem:[#allocation4 + $0x30] sm:$0xff] %v7222
      %7255 = vst [vmem:[#allocation4 + $0x38] sm:$0xff] %v7223
      %7256 = vst [vmem:[#allocation4 + $0x40] sm:$0xff] %v7224
      %7257 = vst [vmem:[#allocation4 + $0x48] sm:$0xff] %v7225
      %7258 = vst [vmem:[#allocation4 + $0x50] sm:$0xff] %v7226
      %7259 = vst [vmem:[#allocation4 + $0x58] sm:$0xff] %v7227
      %7260 = vst [vmem:[#allocation4 + $0x60] sm:$0xff] %v7228
      %7261 = vst [vmem:[#allocation4 + $0x68] sm:$0xff] %v7229
      %7262 = vst [vmem:[#allocation4 + $0x70] sm:$0xff] %v7230
      %7263 = vst [vmem:[#allocation4 + $0x78] sm:$0xff] %v7231
      %7264 = vst [vmem:[#allocation4 + $0x80] sm:$0xff] %v7232
      %7265 = vst [vmem:[#allocation4 + $0x88] sm:$0xff] %v7233
      %7266 = vst [vmem:[#allocation4 + $0x90] sm:$0xff] %v7234
      %7267 = vst [vmem:[#allocation4 + $0x98] sm:$0xff] %v7235
      %7268 = vst [vmem:[#allocation4 + $0xa0] sm:$0xff] %v7236
      %7269 = vst [vmem:[#allocation4 + $0xa8] sm:$0xff] %v7237
      %7270 = vst [vmem:[#allocation4 + $0xb0] sm:$0xff] %v7238
      %7271 = vst [vmem:[#allocation4 + $0xb8] sm:$0xff] %v7239
      %7272 = vst [vmem:[#allocation4 + $0xc0] sm:$0xff] %v7240
      %7273 = vst [vmem:[#allocation4 + $0xc8] sm:$0xff] %v7241
      %7274 = vst [vmem:[#allocation4 + $0xd0] sm:$0xff] %v7242
      %7275 = vst [vmem:[#allocation4 + $0xd8] sm:$0xff] %v7243
      %7276 = vst [vmem:[#allocation4 + $0xe0] sm:$0xff] %v7244
      %7277 = vst [vmem:[#allocation4 + $0xe8] sm:$0xff] %v7245
      %7278 = vst [vmem:[#allocation4 + $0xf0] sm:$0xff] %v7246
      %7279 = vst [vmem:[#allocation4 + $0xf8] sm:$0xff] %v7247
      %s7280 = scalar_lea.vmem %s5, 448
      %v7281 = vld [vmem:[%s7280] sm:$0xf]
      %v7282 = vld [vmem:[%s7280 + $0x4] sm:$0xf]
      %v7283 = vld [vmem:[%s7280 + $0x8] sm:$0xf]
      %v7284 = vld [vmem:[%s7280 + $0xc] sm:$0xf]
      %v7285 = vld [vmem:[%s7280 + $0x10] sm:$0xf]
      %v7286 = vld [vmem:[%s7280 + $0x14] sm:$0xf]
      %v7287 = vld [vmem:[%s7280 + $0x18] sm:$0xf]
      %v7288 = vld [vmem:[%s7280 + $0x1c] sm:$0xf]
      %v7289 = vld [vmem:[%s7280 + $0x20] sm:$0xf]
      %v7290 = vld [vmem:[%s7280 + $0x24] sm:$0xf]
      %v7291 = vld [vmem:[%s7280 + $0x28] sm:$0xf]
      %v7292 = vld [vmem:[%s7280 + $0x2c] sm:$0xf]
      %v7293 = vld [vmem:[%s7280 + $0x30] sm:$0xf]
      %v7294 = vld [vmem:[%s7280 + $0x34] sm:$0xf]
      %v7295 = vld [vmem:[%s7280 + $0x38] sm:$0xf]
      %v7296 = vld [vmem:[%s7280 + $0x3c] sm:$0xf]
      %v7313 = vunpack.c.l.b16 %v7281
      %v7314 = vunpack.c.l.b16 %v7282
      %v7315 = vunpack.c.l.b16 %v7283
      %v7316 = vunpack.c.l.b16 %v7284
      %v7317 = vunpack.c.l.b16 %v7285
      %v7318 = vunpack.c.l.b16 %v7286
      %v7319 = vunpack.c.l.b16 %v7287
      %v7320 = vunpack.c.l.b16 %v7288
      %v7321 = vunpack.c.l.b16 %v7289
      %v7322 = vunpack.c.l.b16 %v7290
      %v7323 = vunpack.c.l.b16 %v7291
      %v7324 = vunpack.c.l.b16 %v7292
      %v7325 = vunpack.c.l.b16 %v7293
      %v7326 = vunpack.c.l.b16 %v7294
      %v7327 = vunpack.c.l.b16 %v7295
      %v7328 = vunpack.c.l.b16 %v7296
      %v7329 = vpack.c.b16 %v7314, %v7313
      %v7330 = vpack.c.b16 %v7316, %v7315
      %v7331 = vpack.c.b16 %v7318, %v7317
      %v7332 = vpack.c.b16 %v7320, %v7319
      %v7333 = vpack.c.b16 %v7322, %v7321
      %v7334 = vpack.c.b16 %v7324, %v7323
      %v7335 = vpack.c.b16 %v7326, %v7325
      %v7336 = vpack.c.b16 %v7328, %v7327
      %7345 = vmatprep.subr.bf16.mxu0 0
      %7346 = vmatpush1.bf16.msra.mxu0 %v7329
      %7347 = vmatprep.subr.bf16.mxu0 0
      %7348 = vmatpush1.bf16.msra.mxu0 %v7330
      %7349 = vmatprep.subr.bf16.mxu0 0
      %7350 = vmatpush1.bf16.msra.mxu0 %v7331
      %7351 = vmatprep.subr.bf16.mxu0 0
      %7352 = vmatpush1.bf16.msra.mxu0 %v7332
      %7353 = vmatprep.subr.bf16.mxu0 0
      %7354 = vmatpush1.bf16.msra.mxu0 %v7333
      %7355 = vmatprep.subr.bf16.mxu0 0
      %7356 = vmatpush1.bf16.msra.mxu0 %v7334
      %7357 = vmatprep.subr.bf16.mxu0 0
      %7358 = vmatpush1.bf16.msra.mxu0 %v7335
      %7359 = vmatprep.subr.bf16.mxu0 0
      %7360 = vmatpush1.bf16.msra.mxu0 %v7336
      %7361 = vmatprep.subr.bf16.mxu0 0
      %7362 = vmatpush1.bf16.msra.mxu0 0
      %7363 = vmatprep.subr.bf16.mxu0 0
      %7364 = vmatpush1.bf16.msra.mxu0 0
      %7365 = vmatprep.subr.bf16.mxu0 0
      %7366 = vmatpush1.bf16.msra.mxu0 0
      %7367 = vmatprep.subr.bf16.mxu0 0
      %7368 = vmatpush1.bf16.msra.mxu0 0
      %7369 = vmatprep.subr.bf16.mxu0 0
      %7370 = vmatpush1.bf16.msra.mxu0 0
      %7371 = vmatprep.subr.bf16.mxu0 0
      %7372 = vmatpush1.bf16.msra.mxu0 0
      %7373 = vmatprep.subr.bf16.mxu0 0
      %7374 = vmatpush1.bf16.msra.mxu0 0
      %7375 = vmatprep.subr.bf16.mxu0 0
      %7376 = vmatpush1.bf16.msra.mxu0 0
      %7377 = vmatprep.mubr.bf16.mxu0 0
      %7378 = vmatmul.mubr.bf16.gmra.mrb[0].mxu0 %v6620
      %v7379 = vpop.f32.mrb[0].mxu0
      %v7380 = vadd.f32 0.0, %v7379
      %v7381 = vpop.f32.mrb[0].mxu0
      %v7382 = vpop.f32.mrb[0].mxu0
      %v7383 = vadd.f32 0.0, %v7382
      %v7384 = vpop.f32.mrb[0].mxu0
      %7385 = vmatprep.mubr.bf16.mxu0 0
      %7386 = vmatmul.mubr.bf16.gmra.mrb[0].mxu0 %v6621
      %v7387 = vpop.f32.mrb[0].mxu0
      %v7388 = vadd.f32 0.0, %v7387
      %v7389 = vpop.f32.mrb[0].mxu0
      %v7390 = vpop.f32.mrb[0].mxu0
      %v7391 = vadd.f32 0.0, %v7390
      %v7392 = vpop.f32.mrb[0].mxu0
      %7393 = vmatprep.mubr.bf16.mxu0 0
      %7394 = vmatmul.mubr.bf16.gmra.mrb[0].mxu0 %v6622
      %v7395 = vpop.f32.mrb[0].mxu0
      %v7396 = vadd.f32 0.0, %v7395
      %v7397 = vpop.f32.mrb[0].mxu0
      %v7398 = vpop.f32.mrb[0].mxu0
      %v7399 = vadd.f32 0.0, %v7398
      %v7400 = vpop.f32.mrb[0].mxu0
      %7401 = vmatprep.mubr.bf16.mxu0 0
      %7402 = vmatmul.mubr.bf16.gmra.mrb[0].mxu0 %v6623
      %v7403 = vpop.f32.mrb[0].mxu0
      %v7404 = vadd.f32 0.0, %v7403
      %v7405 = vpop.f32.mrb[0].mxu0
      %v7406 = vpop.f32.mrb[0].mxu0
      %v7407 = vadd.f32 0.0, %v7406
      %v7408 = vpop.f32.mrb[0].mxu0
      %7409 = vmatprep.mubr.bf16.mxu0 0
      %7410 = vmatmul.mubr.bf16.gmra.mrb[0].mxu0 %v6624
      %v7411 = vpop.f32.mrb[0].mxu0
      %v7412 = vadd.f32 0.0, %v7411
      %v7413 = vpop.f32.mrb[0].mxu0
      %v7414 = vpop.f32.mrb[0].mxu0
      %v7415 = vadd.f32 0.0, %v7414
      %v7416 = vpop.f32.mrb[0].mxu0
      %7417 = vmatprep.mubr.bf16.mxu0 0
      %7418 = vmatmul.mubr.bf16.gmra.mrb[0].mxu0 %v6625
      %v7419 = vpop.f32.mrb[0].mxu0
      %v7420 = vadd.f32 0.0, %v7419
      %v7421 = vpop.f32.mrb[0].mxu0
      %v7422 = vpop.f32.mrb[0].mxu0
      %v7423 = vadd.f32 0.0, %v7422
      %v7424 = vpop.f32.mrb[0].mxu0
      %7425 = vmatprep.mubr.bf16.mxu0 0
      %7426 = vmatmul.mubr.bf16.gmra.mrb[0].mxu0 %v6626
      %v7427 = vpop.f32.mrb[0].mxu0
      %v7428 = vadd.f32 0.0, %v7427
      %v7429 = vpop.f32.mrb[0].mxu0
      %v7430 = vpop.f32.mrb[0].mxu0
      %v7431 = vadd.f32 0.0, %v7430
      %v7432 = vpop.f32.mrb[0].mxu0
      %7433 = vmatprep.mubr.bf16.mxu0 0
      %7434 = vmatmul.mubr.bf16.gmra.mrb[0].mxu0 %v6627
      %v7435 = vpop.f32.mrb[0].mxu0
      %v7436 = vadd.f32 0.0, %v7435
      %v7437 = vpop.f32.mrb[0].mxu0
      %v7438 = vpop.f32.mrb[0].mxu0
      %v7439 = vadd.f32 0.0, %v7438
      %v7440 = vpop.f32.mrb[0].mxu0
      %7441 = vmatprep.mubr.bf16.mxu0 0
      %7442 = vmatmul.mubr.bf16.gmra.mrb[0].mxu0 %v6628
      %v7443 = vpop.f32.mrb[0].mxu0
      %v7444 = vadd.f32 0.0, %v7443
      %v7445 = vpop.f32.mrb[0].mxu0
      %v7446 = vpop.f32.mrb[0].mxu0
      %v7447 = vadd.f32 0.0, %v7446
      %v7448 = vpop.f32.mrb[0].mxu0
      %7449 = vmatprep.mubr.bf16.mxu0 0
      %7450 = vmatmul.mubr.bf16.gmra.mrb[0].mxu0 %v6629
      %v7451 = vpop.f32.mrb[0].mxu0
      %v7452 = vadd.f32 0.0, %v7451
      %v7453 = vpop.f32.mrb[0].mxu0
      %v7454 = vpop.f32.mrb[0].mxu0
      %v7455 = vadd.f32 0.0, %v7454
      %v7456 = vpop.f32.mrb[0].mxu0
      %7457 = vmatprep.mubr.bf16.mxu0 0
      %7458 = vmatmul.mubr.bf16.gmra.mrb[0].mxu0 %v6630
      %v7459 = vpop.f32.mrb[0].mxu0
      %v7460 = vadd.f32 0.0, %v7459
      %v7461 = vpop.f32.mrb[0].mxu0
      %v7462 = vpop.f32.mrb[0].mxu0
      %v7463 = vadd.f32 0.0, %v7462
      %v7464 = vpop.f32.mrb[0].mxu0
      %7465 = vmatprep.mubr.bf16.mxu0 0
      %7466 = vmatmul.mubr.bf16.gmra.mrb[0].mxu0 %v6631
      %v7467 = vpop.f32.mrb[0].mxu0
      %v7468 = vadd.f32 0.0, %v7467
      %v7469 = vpop.f32.mrb[0].mxu0
      %v7470 = vpop.f32.mrb[0].mxu0
      %v7471 = vadd.f32 0.0, %v7470
      %v7472 = vpop.f32.mrb[0].mxu0
      %7473 = vmatprep.mubr.bf16.mxu0 0
      %7474 = vmatmul.mubr.bf16.gmra.mrb[0].mxu0 %v6632
      %v7475 = vpop.f32.mrb[0].mxu0
      %v7476 = vadd.f32 0.0, %v7475
      %v7477 = vpop.f32.mrb[0].mxu0
      %v7478 = vpop.f32.mrb[0].mxu0
      %v7479 = vadd.f32 0.0, %v7478
      %v7480 = vpop.f32.mrb[0].mxu0
      %7481 = vmatprep.mubr.bf16.mxu0 0
      %7482 = vmatmul.mubr.bf16.gmra.mrb[0].mxu0 %v6633
      %v7483 = vpop.f32.mrb[0].mxu0
      %v7484 = vadd.f32 0.0, %v7483
      %v7485 = vpop.f32.mrb[0].mxu0
      %v7486 = vpop.f32.mrb[0].mxu0
      %v7487 = vadd.f32 0.0, %v7486
      %v7488 = vpop.f32.mrb[0].mxu0
      %7489 = vmatprep.mubr.bf16.mxu0 0
      %7490 = vmatmul.mubr.bf16.gmra.mrb[0].mxu0 %v6634
      %v7491 = vpop.f32.mrb[0].mxu0
      %v7492 = vadd.f32 0.0, %v7491
      %v7493 = vpop.f32.mrb[0].mxu0
      %v7494 = vpop.f32.mrb[0].mxu0
      %v7495 = vadd.f32 0.0, %v7494
      %v7496 = vpop.f32.mrb[0].mxu0
      %7497 = vmatprep.mubr.bf16.mxu0 0
      %7498 = vmatmul.mubr.bf16.gmra.mrb[0].mxu0 %v6635
      %v7499 = vpop.f32.mrb[0].mxu0
      %v7500 = vadd.f32 0.0, %v7499
      %v7501 = vpop.f32.mrb[0].mxu0
      %v7502 = vpop.f32.mrb[0].mxu0
      %v7503 = vadd.f32 0.0, %v7502
      %v7504 = vpop.f32.mrb[0].mxu0
      %7505 = vdwg.mxu0
      %v7506 = vld [vmem:[#allocation4] sm:$0xff]
      %v7507 = vld [vmem:[#allocation4 + $0x8] sm:$0xff]
      %v7508 = vld [vmem:[#allocation4 + $0x10] sm:$0xff]
      %v7509 = vld [vmem:[#allocation4 + $0x18] sm:$0xff]
      %v7510 = vld [vmem:[#allocation4 + $0x20] sm:$0xff]
      %v7511 = vld [vmem:[#allocation4 + $0x28] sm:$0xff]
      %v7512 = vld [vmem:[#allocation4 + $0x30] sm:$0xff]
      %v7513 = vld [vmem:[#allocation4 + $0x38] sm:$0xff]
      %v7514 = vld [vmem:[#allocation4 + $0x40] sm:$0xff]
      %v7515 = vld [vmem:[#allocation4 + $0x48] sm:$0xff]
      %v7516 = vld [vmem:[#allocation4 + $0x50] sm:$0xff]
      %v7517 = vld [vmem:[#allocation4 + $0x58] sm:$0xff]
      %v7518 = vld [vmem:[#allocation4 + $0x60] sm:$0xff]
      %v7519 = vld [vmem:[#allocation4 + $0x68] sm:$0xff]
      %v7520 = vld [vmem:[#allocation4 + $0x70] sm:$0xff]
      %v7521 = vld [vmem:[#allocation4 + $0x78] sm:$0xff]
      %v7522 = vld [vmem:[#allocation4 + $0x80] sm:$0xff]
      %v7523 = vld [vmem:[#allocation4 + $0x88] sm:$0xff]
      %v7524 = vld [vmem:[#allocation4 + $0x90] sm:$0xff]
      %v7525 = vld [vmem:[#allocation4 + $0x98] sm:$0xff]
      %v7526 = vld [vmem:[#allocation4 + $0xa0] sm:$0xff]
      %v7527 = vld [vmem:[#allocation4 + $0xa8] sm:$0xff]
      %v7528 = vld [vmem:[#allocation4 + $0xb0] sm:$0xff]
      %v7529 = vld [vmem:[#allocation4 + $0xb8] sm:$0xff]
      %v7530 = vld [vmem:[#allocation4 + $0xc0] sm:$0xff]
      %v7531 = vld [vmem:[#allocation4 + $0xc8] sm:$0xff]
      %v7532 = vld [vmem:[#allocation4 + $0xd0] sm:$0xff]
      %v7533 = vld [vmem:[#allocation4 + $0xd8] sm:$0xff]
      %v7534 = vld [vmem:[#allocation4 + $0xe0] sm:$0xff]
      %v7535 = vld [vmem:[#allocation4 + $0xe8] sm:$0xff]
      %v7536 = vld [vmem:[#allocation4 + $0xf0] sm:$0xff]
      %v7537 = vld [vmem:[#allocation4 + $0xf8] sm:$0xff]
      %v7538 = vadd.f32 %v7506, %v7380
      %v7539 = vadd.f32 %v7507, %v7383
      %v7540 = vadd.f32 %v7508, %v7388
      %v7541 = vadd.f32 %v7509, %v7391
      %v7542 = vadd.f32 %v7510, %v7396
      %v7543 = vadd.f32 %v7511, %v7399
      %v7544 = vadd.f32 %v7512, %v7404
      %v7545 = vadd.f32 %v7513, %v7407
      %v7546 = vadd.f32 %v7514, %v7412
      %v7547 = vadd.f32 %v7515, %v7415
      %v7548 = vadd.f32 %v7516, %v7420
      %v7549 = vadd.f32 %v7517, %v7423
      %v7550 = vadd.f32 %v7518, %v7428
      %v7551 = vadd.f32 %v7519, %v7431
      %v7552 = vadd.f32 %v7520, %v7436
      %v7553 = vadd.f32 %v7521, %v7439
      %v7554 = vadd.f32 %v7522, %v7444
      %v7555 = vadd.f32 %v7523, %v7447
      %v7556 = vadd.f32 %v7524, %v7452
      %v7557 = vadd.f32 %v7525, %v7455
      %v7558 = vadd.f32 %v7526, %v7460
      %v7559 = vadd.f32 %v7527, %v7463
      %v7560 = vadd.f32 %v7528, %v7468
      %v7561 = vadd.f32 %v7529, %v7471
      %v7562 = vadd.f32 %v7530, %v7476
      %v7563 = vadd.f32 %v7531, %v7479
      %v7564 = vadd.f32 %v7532, %v7484
      %v7565 = vadd.f32 %v7533, %v7487
      %v7566 = vadd.f32 %v7534, %v7492
      %v7567 = vadd.f32 %v7535, %v7495
      %v7568 = vadd.f32 %v7536, %v7500
      %v7569 = vadd.f32 %v7537, %v7503
      %7570 = vst [vmem:[#allocation4] sm:$0xff] %v7538
      %7571 = vst [vmem:[#allocation4 + $0x8] sm:$0xff] %v7539
      %7572 = vst [vmem:[#allocation4 + $0x10] sm:$0xff] %v7540
      %7573 = vst [vmem:[#allocation4 + $0x18] sm:$0xff] %v7541
      %7574 = vst [vmem:[#allocation4 + $0x20] sm:$0xff] %v7542
      %7575 = vst [vmem:[#allocation4 + $0x28] sm:$0xff] %v7543
      %7576 = vst [vmem:[#allocation4 + $0x30] sm:$0xff] %v7544
      %7577 = vst [vmem:[#allocation4 + $0x38] sm:$0xff] %v7545
      %7578 = vst [vmem:[#allocation4 + $0x40] sm:$0xff] %v7546
      %7579 = vst [vmem:[#allocation4 + $0x48] sm:$0xff] %v7547
      %7580 = vst [vmem:[#allocation4 + $0x50] sm:$0xff] %v7548
      %7581 = vst [vmem:[#allocation4 + $0x58] sm:$0xff] %v7549
      %7582 = vst [vmem:[#allocation4 + $0x60] sm:$0xff] %v7550
      %7583 = vst [vmem:[#allocation4 + $0x68] sm:$0xff] %v7551
      %7584 = vst [vmem:[#allocation4 + $0x70] sm:$0xff] %v7552
      %7585 = vst [vmem:[#allocation4 + $0x78] sm:$0xff] %v7553
      %7586 = vst [vmem:[#allocation4 + $0x80] sm:$0xff] %v7554
      %7587 = vst [vmem:[#allocation4 + $0x88] sm:$0xff] %v7555
      %7588 = vst [vmem:[#allocation4 + $0x90] sm:$0xff] %v7556
      %7589 = vst [vmem:[#allocation4 + $0x98] sm:$0xff] %v7557
      %7590 = vst [vmem:[#allocation4 + $0xa0] sm:$0xff] %v7558
      %7591 = vst [vmem:[#allocation4 + $0xa8] sm:$0xff] %v7559
      %7592 = vst [vmem:[#allocation4 + $0xb0] sm:$0xff] %v7560
      %7593 = vst [vmem:[#allocation4 + $0xb8] sm:$0xff] %v7561
      %7594 = vst [vmem:[#allocation4 + $0xc0] sm:$0xff] %v7562
      %7595 = vst [vmem:[#allocation4 + $0xc8] sm:$0xff] %v7563
      %7596 = vst [vmem:[#allocation4 + $0xd0] sm:$0xff] %v7564
      %7597 = vst [vmem:[#allocation4 + $0xd8] sm:$0xff] %v7565
      %7598 = vst [vmem:[#allocation4 + $0xe0] sm:$0xff] %v7566
      %7599 = vst [vmem:[#allocation4 + $0xe8] sm:$0xff] %v7567
      %7600 = vst [vmem:[#allocation4 + $0xf0] sm:$0xff] %v7568
      %7601 = vst [vmem:[#allocation4 + $0xf8] sm:$0xff] %v7569
      %v7602 = vrot.slane %v5575, 1
      %v7603 = vrot.slane %v5576, 1
      %v7604 = vrot.slane %v5577, 1
      %v7605 = vrot.slane %v5578, 1
      %v7606 = vrot.slane %v5579, 1
      %v7607 = vrot.slane %v5580, 1
      %v7608 = vrot.slane %v5581, 1
      %v7609 = vrot.slane %v5582, 1
      %v7610 = vrot.slane %v5583, 1
      %v7611 = vrot.slane %v5584, 1
      %v7612 = vrot.slane %v5585, 1
      %v7613 = vrot.slane %v5586, 1
      %v7614 = vrot.slane %v5587, 1
      %v7615 = vrot.slane %v5588, 1
      %v7616 = vrot.slane %v5589, 1
      %v7617 = vrot.slane %v5590, 1
      %v7618 = vrot.slane %v5591, 1
      %v7619 = vrot.slane %v5592, 1
      %v7620 = vrot.slane %v5593, 1
      %v7621 = vrot.slane %v5594, 1
      %v7622 = vrot.slane %v5595, 1
      %v7623 = vrot.slane %v5596, 1
      %v7624 = vrot.slane %v5597, 1
      %v7625 = vrot.slane %v5598, 1
      %v7626 = vrot.slane %v5599, 1
      %v7627 = vrot.slane %v5600, 1
      %v7628 = vrot.slane %v5601, 1
      %v7629 = vrot.slane %v5602, 1
      %v7630 = vrot.slane %v5603, 1
      %v7631 = vrot.slane %v5604, 1
      %v7632 = vrot.slane %v5605, 1
      %v7633 = vrot.slane %v5606, 1
      %v7634 = vrot.slane %v5607, 1
      %v7635 = vrot.slane %v5608, 1
      %v7636 = vrot.slane %v5609, 1
      %v7637 = vrot.slane %v5610, 1
      %v7638 = vrot.slane %v5611, 1
      %v7639 = vrot.slane %v5612, 1
      %v7640 = vrot.slane %v5613, 1
      %v7641 = vrot.slane %v5614, 1
      %v7642 = vsel %vm4967, %v7640, %v7641
      %v7643 = vsel %vm4967, %v7639, %v7640
      %v7644 = vsel %vm4967, %v7638, %v7639
      %v7645 = vsel %vm4967, %v7637, %v7638
      %v7646 = vsel %vm4967, %v7636, %v7637
      %v7647 = vsel %vm4967, %v7635, %v7636
      %v7648 = vsel %vm4967, %v7634, %v7635
      %v7649 = vsel %vm4967, %v7633, %v7634
      %v7650 = vsel %vm4967, %v7632, %v7633
      %v7651 = vsel %vm4967, %v7631, %v7632
      %v7652 = vsel %vm4967, %v7630, %v7631
      %v7653 = vsel %vm4967, %v7629, %v7630
      %v7654 = vsel %vm4967, %v7628, %v7629
      %v7655 = vsel %vm4967, %v7627, %v7628
      %v7656 = vsel %vm4967, %v7626, %v7627
      %v7657 = vsel %vm4967, %v7625, %v7626
      %v7658 = vsel %vm4967, %v7624, %v7625
      %v7659 = vsel %vm4967, %v7623, %v7624
      %v7660 = vsel %vm4967, %v7622, %v7623
      %v7661 = vsel %vm4967, %v7621, %v7622
      %v7662 = vsel %vm4967, %v7620, %v7621
      %v7663 = vsel %vm4967, %v7619, %v7620
      %v7664 = vsel %vm4967, %v7618, %v7619
      %v7665 = vsel %vm4967, %v7617, %v7618
      %v7666 = vsel %vm4967, %v7616, %v7617
      %v7667 = vsel %vm4967, %v7615, %v7616
      %v7668 = vsel %vm4967, %v7614, %v7615
      %v7669 = vsel %vm4967, %v7613, %v7614
      %v7670 = vsel %vm4967, %v7612, %v7613
      %v7671 = vsel %vm4967, %v7611, %v7612
      %v7672 = vsel %vm4967, %v7610, %v7611
      %v7673 = vsel %vm4967, %v7609, %v7610
      %v7674 = vsel %vm4967, %v7608, %v7609
      %v7675 = vsel %vm4967, %v7607, %v7608
      %v7676 = vsel %vm4967, %v7606, %v7607
      %v7677 = vsel %vm4967, %v7605, %v7606
      %v7678 = vsel %vm4967, %v7604, %v7605
      %v7679 = vsel %vm4967, %v7603, %v7604
      %v7680 = vsel %vm4967, %v7602, %v7603
      %v7681 = vsel %vm4967, %v7641, %v7602
      %v7682 = vpack.c.bf16 %v7679, %v7680
      %v7683 = vpack.c.bf16 %v7677, %v7678
      %v7684 = vpack.c.bf16 %v7675, %v7676
      %v7685 = vpack.c.bf16 %v7673, %v7674
      %v7686 = vpack.c.bf16 %v7671, %v7672
      %v7687 = vpack.c.bf16 %v7669, %v7670
      %v7688 = vpack.c.bf16 %v7667, %v7668
      %v7689 = vpack.c.bf16 %v7665, %v7666
      %v7690 = vpack.c.bf16 %v7663, %v7664
      %v7691 = vpack.c.bf16 %v7661, %v7662
      %v7692 = vpack.c.bf16 %v7659, %v7660
      %v7693 = vpack.c.bf16 %v7657, %v7658
      %v7694 = vpack.c.bf16 %v7655, %v7656
      %v7695 = vpack.c.bf16 %v7653, %v7654
      %v7696 = vpack.c.bf16 %v7651, %v7652
      %v7697 = vpack.c.bf16 %v7649, %v7650
      %v7698 = vpack.c.bf16 %v7647, %v7648
      %v7699 = vpack.c.bf16 %v7645, %v7646
      %v7700 = vpack.c.bf16 %v7643, %v7644
      %v7701 = vpack.c.bf16 %v7681, %v7642
      %s7702 = scalar_lea.vmem %s5, 128
      %v7703 = vld [vmem:[%s7702] sm:$0xf]
      %v7704 = vld [vmem:[%s7702 + $0x4] sm:$0xf]
      %v7705 = vld [vmem:[%s7702 + $0x8] sm:$0xf]
      %v7706 = vld [vmem:[%s7702 + $0xc] sm:$0xf]
      %v7707 = vld [vmem:[%s7702 + $0x10] sm:$0xf]
      %v7708 = vld [vmem:[%s7702 + $0x14] sm:$0xf]
      %v7709 = vld [vmem:[%s7702 + $0x18] sm:$0xf]
      %v7710 = vld [vmem:[%s7702 + $0x1c] sm:$0xf]
      %v7711 = vld [vmem:[%s7702 + $0x20] sm:$0xf]
      %v7712 = vld [vmem:[%s7702 + $0x24] sm:$0xf]
      %v7713 = vld [vmem:[%s7702 + $0x28] sm:$0xf]
      %v7714 = vld [vmem:[%s7702 + $0x2c] sm:$0xf]
      %v7715 = vld [vmem:[%s7702 + $0x30] sm:$0xf]
      %v7716 = vld [vmem:[%s7702 + $0x34] sm:$0xf]
      %v7717 = vld [vmem:[%s7702 + $0x38] sm:$0xf]
      %v7718 = vld [vmem:[%s7702 + $0x3c] sm:$0xf]
      %v7735 = vunpack.c.l.b16 %v7703
      %v7736 = vunpack.c.l.b16 %v7704
      %v7737 = vunpack.c.l.b16 %v7705
      %v7738 = vunpack.c.l.b16 %v7706
      %v7739 = vunpack.c.l.b16 %v7707
      %v7740 = vunpack.c.l.b16 %v7708
      %v7741 = vunpack.c.l.b16 %v7709
      %v7742 = vunpack.c.l.b16 %v7710
      %v7743 = vunpack.c.l.b16 %v7711
      %v7744 = vunpack.c.l.b16 %v7712
      %v7745 = vunpack.c.l.b16 %v7713
      %v7746 = vunpack.c.l.b16 %v7714
      %v7747 = vunpack.c.l.b16 %v7715
      %v7748 = vunpack.c.l.b16 %v7716
      %v7749 = vunpack.c.l.b16 %v7717
      %v7750 = vunpack.c.l.b16 %v7718
      %v7751 = vpack.c.b16 %v7736, %v7735
      %v7752 = vpack.c.b16 %v7738, %v7737
      %v7753 = vpack.c.b16 %v7740, %v7739
      %v7754 = vpack.c.b16 %v7742, %v7741
      %v7755 = vpack.c.b16 %v7744, %v7743
      %v7756 = vpack.c.b16 %v7746, %v7745
      %v7757 = vpack.c.b16 %v7748, %v7747
      %v7758 = vpack.c.b16 %v7750, %v7749
      %7767 = vmatprep.subr.bf16.mxu0 0
      %7768 = vmatpush1.bf16.msra.mxu0 %v7751
      %7769 = vmatprep.subr.bf16.mxu0 0
      %7770 = vmatpush1.bf16.msra.mxu0 %v7752
      %7771 = vmatprep.subr.bf16.mxu0 0
      %7772 = vmatpush1.bf16.msra.mxu0 %v7753
      %7773 = vmatprep.subr.bf16.mxu0 0
      %7774 = vmatpush1.bf16.msra.mxu0 %v7754
      %7775 = vmatprep.subr.bf16.mxu0 0
      %7776 = vmatpush1.bf16.msra.mxu0 %v7755
      %7777 = vmatprep.subr.bf16.mxu0 0
      %7778 = vmatpush1.bf16.msra.mxu0 %v7756
      %7779 = vmatprep.subr.bf16.mxu0 0
      %7780 = vmatpush1.bf16.msra.mxu0 %v7757
      %7781 = vmatprep.subr.bf16.mxu0 0
      %7782 = vmatpush1.bf16.msra.mxu0 %v7758
      %7783 = vmatprep.subr.bf16.mxu0 0
      %7784 = vmatpush1.bf16.msra.mxu0 0
      %7785 = vmatprep.subr.bf16.mxu0 0
      %7786 = vmatpush1.bf16.msra.mxu0 0
      %7787 = vmatprep.subr.bf16.mxu0 0
      %7788 = vmatpush1.bf16.msra.mxu0 0
      %7789 = vmatprep.subr.bf16.mxu0 0
      %7790 = vmatpush1.bf16.msra.mxu0 0
      %7791 = vmatprep.subr.bf16.mxu0 0
      %7792 = vmatpush1.bf16.msra.mxu0 0
      %7793 = vmatprep.subr.bf16.mxu0 0
      %7794 = vmatpush1.bf16.msra.mxu0 0
      %7795 = vmatprep.subr.bf16.mxu0 0
      %7796 = vmatpush1.bf16.msra.mxu0 0
      %7797 = vmatprep.subr.bf16.mxu0 0
      %7798 = vmatpush1.bf16.msra.mxu0 0
      %7799 = vmatprep.mubr.bf16.mxu0 0
      %7800 = vmatmul.mubr.bf16.gmra.mrb[0].mxu0 %v7682
      %v7801 = vpop.f32.mrb[0].mxu0
      %v7802 = vadd.f32 0.0, %v7801
      %v7803 = vpop.f32.mrb[0].mxu0
      %v7804 = vpop.f32.mrb[0].mxu0
      %v7805 = vadd.f32 0.0, %v7804
      %v7806 = vpop.f32.mrb[0].mxu0
      %7807 = vmatprep.mubr.bf16.mxu0 0
      %7808 = vmatmul.mubr.bf16.gmra.mrb[0].mxu0 %v7683
      %v7809 = vpop.f32.mrb[0].mxu0
      %v7810 = vadd.f32 0.0, %v7809
      %v7811 = vpop.f32.mrb[0].mxu0
      %v7812 = vpop.f32.mrb[0].mxu0
      %v7813 = vadd.f32 0.0, %v7812
      %v7814 = vpop.f32.mrb[0].mxu0
      %7815 = vmatprep.mubr.bf16.mxu0 0
      %7816 = vmatmul.mubr.bf16.gmra.mrb[0].mxu0 %v7684
      %v7817 = vpop.f32.mrb[0].mxu0
      %v7818 = vadd.f32 0.0, %v7817
      %v7819 = vpop.f32.mrb[0].mxu0
      %v7820 = vpop.f32.mrb[0].mxu0
      %v7821 = vadd.f32 0.0, %v7820
      %v7822 = vpop.f32.mrb[0].mxu0
      %7823 = vmatprep.mubr.bf16.mxu0 0
      %7824 = vmatmul.mubr.bf16.gmra.mrb[0].mxu0 %v7685
      %v7825 = vpop.f32.mrb[0].mxu0
      %v7826 = vadd.f32 0.0, %v7825
      %v7827 = vpop.f32.mrb[0].mxu0
      %v7828 = vpop.f32.mrb[0].mxu0
      %v7829 = vadd.f32 0.0, %v7828
      %v7830 = vpop.f32.mrb[0].mxu0
      %7831 = vmatprep.mubr.bf16.mxu0 0
      %7832 = vmatmul.mubr.bf16.gmra.mrb[0].mxu0 %v7686
      %v7833 = vpop.f32.mrb[0].mxu0
      %v7834 = vadd.f32 0.0, %v7833
      %v7835 = vpop.f32.mrb[0].mxu0
      %v7836 = vpop.f32.mrb[0].mxu0
      %v7837 = vadd.f32 0.0, %v7836
      %v7838 = vpop.f32.mrb[0].mxu0
      %7839 = vmatprep.mubr.bf16.mxu0 0
      %7840 = vmatmul.mubr.bf16.gmra.mrb[0].mxu0 %v7687
      %v7841 = vpop.f32.mrb[0].mxu0
      %v7842 = vadd.f32 0.0, %v7841
      %v7843 = vpop.f32.mrb[0].mxu0
      %v7844 = vpop.f32.mrb[0].mxu0
      %v7845 = vadd.f32 0.0, %v7844
      %v7846 = vpop.f32.mrb[0].mxu0
      %7847 = vmatprep.mubr.bf16.mxu0 0
      %7848 = vmatmul.mubr.bf16.gmra.mrb[0].mxu0 %v7688
      %v7849 = vpop.f32.mrb[0].mxu0
      %v7850 = vadd.f32 0.0, %v7849
      %v7851 = vpop.f32.mrb[0].mxu0
      %v7852 = vpop.f32.mrb[0].mxu0
      %v7853 = vadd.f32 0.0, %v7852
      %v7854 = vpop.f32.mrb[0].mxu0
      %7855 = vmatprep.mubr.bf16.mxu0 0
      %7856 = vmatmul.mubr.bf16.gmra.mrb[0].mxu0 %v7689
      %v7857 = vpop.f32.mrb[0].mxu0
      %v7858 = vadd.f32 0.0, %v7857
      %v7859 = vpop.f32.mrb[0].mxu0
      %v7860 = vpop.f32.mrb[0].mxu0
      %v7861 = vadd.f32 0.0, %v7860
      %v7862 = vpop.f32.mrb[0].mxu0
      %7863 = vmatprep.mubr.bf16.mxu0 0
      %7864 = vmatmul.mubr.bf16.gmra.mrb[0].mxu0 %v7690
      %v7865 = vpop.f32.mrb[0].mxu0
      %v7866 = vadd.f32 0.0, %v7865
      %v7867 = vpop.f32.mrb[0].mxu0
      %v7868 = vpop.f32.mrb[0].mxu0
      %v7869 = vadd.f32 0.0, %v7868
      %v7870 = vpop.f32.mrb[0].mxu0
      %7871 = vmatprep.mubr.bf16.mxu0 0
      %7872 = vmatmul.mubr.bf16.gmra.mrb[0].mxu0 %v7691
      %v7873 = vpop.f32.mrb[0].mxu0
      %v7874 = vadd.f32 0.0, %v7873
      %v7875 = vpop.f32.mrb[0].mxu0
      %v7876 = vpop.f32.mrb[0].mxu0
      %v7877 = vadd.f32 0.0, %v7876
      %v7878 = vpop.f32.mrb[0].mxu0
      %7879 = vmatprep.mubr.bf16.mxu0 0
      %7880 = vmatmul.mubr.bf16.gmra.mrb[0].mxu0 %v7692
      %v7881 = vpop.f32.mrb[0].mxu0
      %v7882 = vadd.f32 0.0, %v7881
      %v7883 = vpop.f32.mrb[0].mxu0
      %v7884 = vpop.f32.mrb[0].mxu0
      %v7885 = vadd.f32 0.0, %v7884
      %v7886 = vpop.f32.mrb[0].mxu0
      %7887 = vmatprep.mubr.bf16.mxu0 0
      %7888 = vmatmul.mubr.bf16.gmra.mrb[0].mxu0 %v7693
      %v7889 = vpop.f32.mrb[0].mxu0
      %v7890 = vadd.f32 0.0, %v7889
      %v7891 = vpop.f32.mrb[0].mxu0
      %v7892 = vpop.f32.mrb[0].mxu0
      %v7893 = vadd.f32 0.0, %v7892
      %v7894 = vpop.f32.mrb[0].mxu0
      %7895 = vmatprep.mubr.bf16.mxu0 0
      %7896 = vmatmul.mubr.bf16.gmra.mrb[0].mxu0 %v7694
      %v7897 = vpop.f32.mrb[0].mxu0
      %v7898 = vadd.f32 0.0, %v7897
      %v7899 = vpop.f32.mrb[0].mxu0
      %v7900 = vpop.f32.mrb[0].mxu0
      %v7901 = vadd.f32 0.0, %v7900
      %v7902 = vpop.f32.mrb[0].mxu0
      %7903 = vmatprep.mubr.bf16.mxu0 0
      %7904 = vmatmul.mubr.bf16.gmra.mrb[0].mxu0 %v7695
      %v7905 = vpop.f32.mrb[0].mxu0
      %v7906 = vadd.f32 0.0, %v7905
      %v7907 = vpop.f32.mrb[0].mxu0
      %v7908 = vpop.f32.mrb[0].mxu0
      %v7909 = vadd.f32 0.0, %v7908
      %v7910 = vpop.f32.mrb[0].mxu0
      %7911 = vmatprep.mubr.bf16.mxu0 0
      %7912 = vmatmul.mubr.bf16.gmra.mrb[0].mxu0 %v7696
      %v7913 = vpop.f32.mrb[0].mxu0
      %v7914 = vadd.f32 0.0, %v7913
      %v7915 = vpop.f32.mrb[0].mxu0
      %v7916 = vpop.f32.mrb[0].mxu0
      %v7917 = vadd.f32 0.0, %v7916
      %v7918 = vpop.f32.mrb[0].mxu0
      %7919 = vmatprep.mubr.bf16.mxu0 0
      %7920 = vmatmul.mubr.bf16.gmra.mrb[0].mxu0 %v7697
      %v7921 = vpop.f32.mrb[0].mxu0
      %v7922 = vadd.f32 0.0, %v7921
      %v7923 = vpop.f32.mrb[0].mxu0
      %v7924 = vpop.f32.mrb[0].mxu0
      %v7925 = vadd.f32 0.0, %v7924
      %v7926 = vpop.f32.mrb[0].mxu0
      %7927 = vdwg.mxu0
      %v7928 = vld [vmem:[#allocation4] sm:$0xff]
      %v7929 = vld [vmem:[#allocation4 + $0x8] sm:$0xff]
      %v7930 = vld [vmem:[#allocation4 + $0x10] sm:$0xff]
      %v7931 = vld [vmem:[#allocation4 + $0x18] sm:$0xff]
      %v7932 = vld [vmem:[#allocation4 + $0x20] sm:$0xff]
      %v7933 = vld [vmem:[#allocation4 + $0x28] sm:$0xff]
      %v7934 = vld [vmem:[#allocation4 + $0x30] sm:$0xff]
      %v7935 = vld [vmem:[#allocation4 + $0x38] sm:$0xff]
      %v7936 = vld [vmem:[#allocation4 + $0x40] sm:$0xff]
      %v7937 = vld [vmem:[#allocation4 + $0x48] sm:$0xff]
      %v7938 = vld [vmem:[#allocation4 + $0x50] sm:$0xff]
      %v7939 = vld [vmem:[#allocation4 + $0x58] sm:$0xff]
      %v7940 = vld [vmem:[#allocation4 + $0x60] sm:$0xff]
      %v7941 = vld [vmem:[#allocation4 + $0x68] sm:$0xff]
      %v7942 = vld [vmem:[#allocation4 + $0x70] sm:$0xff]
      %v7943 = vld [vmem:[#allocation4 + $0x78] sm:$0xff]
      %v7944 = vld [vmem:[#allocation4 + $0x80] sm:$0xff]
      %v7945 = vld [vmem:[#allocation4 + $0x88] sm:$0xff]
      %v7946 = vld [vmem:[#allocation4 + $0x90] sm:$0xff]
      %v7947 = vld [vmem:[#allocation4 + $0x98] sm:$0xff]
      %v7948 = vld [vmem:[#allocation4 + $0xa0] sm:$0xff]
      %v7949 = vld [vmem:[#allocation4 + $0xa8] sm:$0xff]
      %v7950 = vld [vmem:[#allocation4 + $0xb0] sm:$0xff]
      %v7951 = vld [vmem:[#allocation4 + $0xb8] sm:$0xff]
      %v7952 = vld [vmem:[#allocation4 + $0xc0] sm:$0xff]
      %v7953 = vld [vmem:[#allocation4 + $0xc8] sm:$0xff]
      %v7954 = vld [vmem:[#allocation4 + $0xd0] sm:$0xff]
      %v7955 = vld [vmem:[#allocation4 + $0xd8] sm:$0xff]
      %v7956 = vld [vmem:[#allocation4 + $0xe0] sm:$0xff]
      %v7957 = vld [vmem:[#allocation4 + $0xe8] sm:$0xff]
      %v7958 = vld [vmem:[#allocation4 + $0xf0] sm:$0xff]
      %v7959 = vld [vmem:[#allocation4 + $0xf8] sm:$0xff]
      %v7960 = vadd.f32 %v7928, %v7802
      %v7961 = vadd.f32 %v7929, %v7805
      %v7962 = vadd.f32 %v7930, %v7810
      %v7963 = vadd.f32 %v7931, %v7813
      %v7964 = vadd.f32 %v7932, %v7818
      %v7965 = vadd.f32 %v7933, %v7821
      %v7966 = vadd.f32 %v7934, %v7826
      %v7967 = vadd.f32 %v7935, %v7829
      %v7968 = vadd.f32 %v7936, %v7834
      %v7969 = vadd.f32 %v7937, %v7837
      %v7970 = vadd.f32 %v7938, %v7842
      %v7971 = vadd.f32 %v7939, %v7845
      %v7972 = vadd.f32 %v7940, %v7850
      %v7973 = vadd.f32 %v7941, %v7853
      %v7974 = vadd.f32 %v7942, %v7858
      %v7975 = vadd.f32 %v7943, %v7861
      %v7976 = vadd.f32 %v7944, %v7866
      %v7977 = vadd.f32 %v7945, %v7869
      %v7978 = vadd.f32 %v7946, %v7874
      %v7979 = vadd.f32 %v7947, %v7877
      %v7980 = vadd.f32 %v7948, %v7882
      %v7981 = vadd.f32 %v7949, %v7885
      %v7982 = vadd.f32 %v7950, %v7890
      %v7983 = vadd.f32 %v7951, %v7893
      %v7984 = vadd.f32 %v7952, %v7898
      %v7985 = vadd.f32 %v7953, %v7901
      %v7986 = vadd.f32 %v7954, %v7906
      %v7987 = vadd.f32 %v7955, %v7909
      %v7988 = vadd.f32 %v7956, %v7914
      %v7989 = vadd.f32 %v7957, %v7917
      %v7990 = vadd.f32 %v7958, %v7922
      %v7991 = vadd.f32 %v7959, %v7925
      %7992 = vst [vmem:[#allocation4] sm:$0xff] %v7960
      %7993 = vst [vmem:[#allocation4 + $0x8] sm:$0xff] %v7961
      %7994 = vst [vmem:[#allocation4 + $0x10] sm:$0xff] %v7962
      %7995 = vst [vmem:[#allocation4 + $0x18] sm:$0xff] %v7963
      %7996 = vst [vmem:[#allocation4 + $0x20] sm:$0xff] %v7964
      %7997 = vst [vmem:[#allocation4 + $0x28] sm:$0xff] %v7965
      %7998 = vst [vmem:[#allocation4 + $0x30] sm:$0xff] %v7966
      %7999 = vst [vmem:[#allocation4 + $0x38] sm:$0xff] %v7967
      %8000 = vst [vmem:[#allocation4 + $0x40] sm:$0xff] %v7968
      %8001 = vst [vmem:[#allocation4 + $0x48] sm:$0xff] %v7969
      %8002 = vst [vmem:[#allocation4 + $0x50] sm:$0xff] %v7970
      %8003 = vst [vmem:[#allocation4 + $0x58] sm:$0xff] %v7971
      %8004 = vst [vmem:[#allocation4 + $0x60] sm:$0xff] %v7972
      %8005 = vst [vmem:[#allocation4 + $0x68] sm:$0xff] %v7973
      %8006 = vst [vmem:[#allocation4 + $0x70] sm:$0xff] %v7974
      %8007 = vst [vmem:[#allocation4 + $0x78] sm:$0xff] %v7975
      %8008 = vst [vmem:[#allocation4 + $0x80] sm:$0xff] %v7976
      %8009 = vst [vmem:[#allocation4 + $0x88] sm:$0xff] %v7977
      %8010 = vst [vmem:[#allocation4 + $0x90] sm:$0xff] %v7978
      %8011 = vst [vmem:[#allocation4 + $0x98] sm:$0xff] %v7979
      %8012 = vst [vmem:[#allocation4 + $0xa0] sm:$0xff] %v7980
      %8013 = vst [vmem:[#allocation4 + $0xa8] sm:$0xff] %v7981
      %8014 = vst [vmem:[#allocation4 + $0xb0] sm:$0xff] %v7982
      %8015 = vst [vmem:[#allocation4 + $0xb8] sm:$0xff] %v7983
      %8016 = vst [vmem:[#allocation4 + $0xc0] sm:$0xff] %v7984
      %8017 = vst [vmem:[#allocation4 + $0xc8] sm:$0xff] %v7985
      %8018 = vst [vmem:[#allocation4 + $0xd0] sm:$0xff] %v7986
      %8019 = vst [vmem:[#allocation4 + $0xd8] sm:$0xff] %v7987
      %8020 = vst [vmem:[#allocation4 + $0xe0] sm:$0xff] %v7988
      %8021 = vst [vmem:[#allocation4 + $0xe8] sm:$0xff] %v7989
      %8022 = vst [vmem:[#allocation4 + $0xf0] sm:$0xff] %v7990
      %8023 = vst [vmem:[#allocation4 + $0xf8] sm:$0xff] %v7991
      %s8024 = scalar_lea.vmem %s5, 320
      %v8025 = vld [vmem:[%s8024] sm:$0xf]
      %v8026 = vld [vmem:[%s8024 + $0x4] sm:$0xf]
      %v8027 = vld [vmem:[%s8024 + $0x8] sm:$0xf]
      %v8028 = vld [vmem:[%s8024 + $0xc] sm:$0xf]
      %v8029 = vld [vmem:[%s8024 + $0x10] sm:$0xf]
      %v8030 = vld [vmem:[%s8024 + $0x14] sm:$0xf]
      %v8031 = vld [vmem:[%s8024 + $0x18] sm:$0xf]
      %v8032 = vld [vmem:[%s8024 + $0x1c] sm:$0xf]
      %v8033 = vld [vmem:[%s8024 + $0x20] sm:$0xf]
      %v8034 = vld [vmem:[%s8024 + $0x24] sm:$0xf]
      %v8035 = vld [vmem:[%s8024 + $0x28] sm:$0xf]
      %v8036 = vld [vmem:[%s8024 + $0x2c] sm:$0xf]
      %v8037 = vld [vmem:[%s8024 + $0x30] sm:$0xf]
      %v8038 = vld [vmem:[%s8024 + $0x34] sm:$0xf]
      %v8039 = vld [vmem:[%s8024 + $0x38] sm:$0xf]
      %v8040 = vld [vmem:[%s8024 + $0x3c] sm:$0xf]
      %v8057 = vunpack.c.l.b16 %v8025
      %v8058 = vunpack.c.l.b16 %v8026
      %v8059 = vunpack.c.l.b16 %v8027
      %v8060 = vunpack.c.l.b16 %v8028
      %v8061 = vunpack.c.l.b16 %v8029
      %v8062 = vunpack.c.l.b16 %v8030
      %v8063 = vunpack.c.l.b16 %v8031
      %v8064 = vunpack.c.l.b16 %v8032
      %v8065 = vunpack.c.l.b16 %v8033
      %v8066 = vunpack.c.l.b16 %v8034
      %v8067 = vunpack.c.l.b16 %v8035
      %v8068 = vunpack.c.l.b16 %v8036
      %v8069 = vunpack.c.l.b16 %v8037
      %v8070 = vunpack.c.l.b16 %v8038
      %v8071 = vunpack.c.l.b16 %v8039
      %v8072 = vunpack.c.l.b16 %v8040
      %v8073 = vpack.c.b16 %v8058, %v8057
      %v8074 = vpack.c.b16 %v8060, %v8059
      %v8075 = vpack.c.b16 %v8062, %v8061
      %v8076 = vpack.c.b16 %v8064, %v8063
      %v8077 = vpack.c.b16 %v8066, %v8065
      %v8078 = vpack.c.b16 %v8068, %v8067
      %v8079 = vpack.c.b16 %v8070, %v8069
      %v8080 = vpack.c.b16 %v8072, %v8071
      %8089 = vmatprep.subr.bf16.mxu0 0
      %8090 = vmatpush1.bf16.msra.mxu0 %v8073
      %8091 = vmatprep.subr.bf16.mxu0 0
      %8092 = vmatpush1.bf16.msra.mxu0 %v8074
      %8093 = vmatprep.subr.bf16.mxu0 0
      %8094 = vmatpush1.bf16.msra.mxu0 %v8075
      %8095 = vmatprep.subr.bf16.mxu0 0
      %8096 = vmatpush1.bf16.msra.mxu0 %v8076
      %8097 = vmatprep.subr.bf16.mxu0 0
      %8098 = vmatpush1.bf16.msra.mxu0 %v8077
      %8099 = vmatprep.subr.bf16.mxu0 0
      %8100 = vmatpush1.bf16.msra.mxu0 %v8078
      %8101 = vmatprep.subr.bf16.mxu0 0
      %8102 = vmatpush1.bf16.msra.mxu0 %v8079
      %8103 = vmatprep.subr.bf16.mxu0 0
      %8104 = vmatpush1.bf16.msra.mxu0 %v8080
      %8105 = vmatprep.subr.bf16.mxu0 0
      %8106 = vmatpush1.bf16.msra.mxu0 0
      %8107 = vmatprep.subr.bf16.mxu0 0
      %8108 = vmatpush1.bf16.msra.mxu0 0
      %8109 = vmatprep.subr.bf16.mxu0 0
      %8110 = vmatpush1.bf16.msra.mxu0 0
      %8111 = vmatprep.subr.bf16.mxu0 0
      %8112 = vmatpush1.bf16.msra.mxu0 0
      %8113 = vmatprep.subr.bf16.mxu0 0
      %8114 = vmatpush1.bf16.msra.mxu0 0
      %8115 = vmatprep.subr.bf16.mxu0 0
      %8116 = vmatpush1.bf16.msra.mxu0 0
      %8117 = vmatprep.subr.bf16.mxu0 0
      %8118 = vmatpush1.bf16.msra.mxu0 0
      %8119 = vmatprep.subr.bf16.mxu0 0
      %8120 = vmatpush1.bf16.msra.mxu0 0
      %8121 = vmatprep.mubr.bf16.mxu0 0
      %8122 = vmatmul.mubr.bf16.gmra.mrb[0].mxu0 %v7684
      %v8123 = vpop.f32.mrb[0].mxu0
      %v8124 = vadd.f32 0.0, %v8123
      %v8125 = vpop.f32.mrb[0].mxu0
      %v8126 = vpop.f32.mrb[0].mxu0
      %v8127 = vadd.f32 0.0, %v8126
      %v8128 = vpop.f32.mrb[0].mxu0
      %8129 = vmatprep.mubr.bf16.mxu0 0
      %8130 = vmatmul.mubr.bf16.gmra.mrb[0].mxu0 %v7685
      %v8131 = vpop.f32.mrb[0].mxu0
      %v8132 = vadd.f32 0.0, %v8131
      %v8133 = vpop.f32.mrb[0].mxu0
      %v8134 = vpop.f32.mrb[0].mxu0
      %v8135 = vadd.f32 0.0, %v8134
      %v8136 = vpop.f32.mrb[0].mxu0
      %8137 = vmatprep.mubr.bf16.mxu0 0
      %8138 = vmatmul.mubr.bf16.gmra.mrb[0].mxu0 %v7686
      %v8139 = vpop.f32.mrb[0].mxu0
      %v8140 = vadd.f32 0.0, %v8139
      %v8141 = vpop.f32.mrb[0].mxu0
      %v8142 = vpop.f32.mrb[0].mxu0
      %v8143 = vadd.f32 0.0, %v8142
      %v8144 = vpop.f32.mrb[0].mxu0
      %8145 = vmatprep.mubr.bf16.mxu0 0
      %8146 = vmatmul.mubr.bf16.gmra.mrb[0].mxu0 %v7687
      %v8147 = vpop.f32.mrb[0].mxu0
      %v8148 = vadd.f32 0.0, %v8147
      %v8149 = vpop.f32.mrb[0].mxu0
      %v8150 = vpop.f32.mrb[0].mxu0
      %v8151 = vadd.f32 0.0, %v8150
      %v8152 = vpop.f32.mrb[0].mxu0
      %8153 = vmatprep.mubr.bf16.mxu0 0
      %8154 = vmatmul.mubr.bf16.gmra.mrb[0].mxu0 %v7688
      %v8155 = vpop.f32.mrb[0].mxu0
      %v8156 = vadd.f32 0.0, %v8155
      %v8157 = vpop.f32.mrb[0].mxu0
      %v8158 = vpop.f32.mrb[0].mxu0
      %v8159 = vadd.f32 0.0, %v8158
      %v8160 = vpop.f32.mrb[0].mxu0
      %8161 = vmatprep.mubr.bf16.mxu0 0
      %8162 = vmatmul.mubr.bf16.gmra.mrb[0].mxu0 %v7689
      %v8163 = vpop.f32.mrb[0].mxu0
      %v8164 = vadd.f32 0.0, %v8163
      %v8165 = vpop.f32.mrb[0].mxu0
      %v8166 = vpop.f32.mrb[0].mxu0
      %v8167 = vadd.f32 0.0, %v8166
      %v8168 = vpop.f32.mrb[0].mxu0
      %8169 = vmatprep.mubr.bf16.mxu0 0
      %8170 = vmatmul.mubr.bf16.gmra.mrb[0].mxu0 %v7690
      %v8171 = vpop.f32.mrb[0].mxu0
      %v8172 = vadd.f32 0.0, %v8171
      %v8173 = vpop.f32.mrb[0].mxu0
      %v8174 = vpop.f32.mrb[0].mxu0
      %v8175 = vadd.f32 0.0, %v8174
      %v8176 = vpop.f32.mrb[0].mxu0
      %8177 = vmatprep.mubr.bf16.mxu0 0
      %8178 = vmatmul.mubr.bf16.gmra.mrb[0].mxu0 %v7691
      %v8179 = vpop.f32.mrb[0].mxu0
      %v8180 = vadd.f32 0.0, %v8179
      %v8181 = vpop.f32.mrb[0].mxu0
      %v8182 = vpop.f32.mrb[0].mxu0
      %v8183 = vadd.f32 0.0, %v8182
      %v8184 = vpop.f32.mrb[0].mxu0
      %8185 = vmatprep.mubr.bf16.mxu0 0
      %8186 = vmatmul.mubr.bf16.gmra.mrb[0].mxu0 %v7692
      %v8187 = vpop.f32.mrb[0].mxu0
      %v8188 = vadd.f32 0.0, %v8187
      %v8189 = vpop.f32.mrb[0].mxu0
      %v8190 = vpop.f32.mrb[0].mxu0
      %v8191 = vadd.f32 0.0, %v8190
      %v8192 = vpop.f32.mrb[0].mxu0
      %8193 = vmatprep.mubr.bf16.mxu0 0
      %8194 = vmatmul.mubr.bf16.gmra.mrb[0].mxu0 %v7693
      %v8195 = vpop.f32.mrb[0].mxu0
      %v8196 = vadd.f32 0.0, %v8195
      %v8197 = vpop.f32.mrb[0].mxu0
      %v8198 = vpop.f32.mrb[0].mxu0
      %v8199 = vadd.f32 0.0, %v8198
      %v8200 = vpop.f32.mrb[0].mxu0
      %8201 = vmatprep.mubr.bf16.mxu0 0
      %8202 = vmatmul.mubr.bf16.gmra.mrb[0].mxu0 %v7694
      %v8203 = vpop.f32.mrb[0].mxu0
      %v8204 = vadd.f32 0.0, %v8203
      %v8205 = vpop.f32.mrb[0].mxu0
      %v8206 = vpop.f32.mrb[0].mxu0
      %v8207 = vadd.f32 0.0, %v8206
      %v8208 = vpop.f32.mrb[0].mxu0
      %8209 = vmatprep.mubr.bf16.mxu0 0
      %8210 = vmatmul.mubr.bf16.gmra.mrb[0].mxu0 %v7695
      %v8211 = vpop.f32.mrb[0].mxu0
      %v8212 = vadd.f32 0.0, %v8211
      %v8213 = vpop.f32.mrb[0].mxu0
      %v8214 = vpop.f32.mrb[0].mxu0
      %v8215 = vadd.f32 0.0, %v8214
      %v8216 = vpop.f32.mrb[0].mxu0
      %8217 = vmatprep.mubr.bf16.mxu0 0
      %8218 = vmatmul.mubr.bf16.gmra.mrb[0].mxu0 %v7696
      %v8219 = vpop.f32.mrb[0].mxu0
      %v8220 = vadd.f32 0.0, %v8219
      %v8221 = vpop.f32.mrb[0].mxu0
      %v8222 = vpop.f32.mrb[0].mxu0
      %v8223 = vadd.f32 0.0, %v8222
      %v8224 = vpop.f32.mrb[0].mxu0
      %8225 = vmatprep.mubr.bf16.mxu0 0
      %8226 = vmatmul.mubr.bf16.gmra.mrb[0].mxu0 %v7697
      %v8227 = vpop.f32.mrb[0].mxu0
      %v8228 = vadd.f32 0.0, %v8227
      %v8229 = vpop.f32.mrb[0].mxu0
      %v8230 = vpop.f32.mrb[0].mxu0
      %v8231 = vadd.f32 0.0, %v8230
      %v8232 = vpop.f32.mrb[0].mxu0
      %8233 = vmatprep.mubr.bf16.mxu0 0
      %8234 = vmatmul.mubr.bf16.gmra.mrb[0].mxu0 %v7698
      %v8235 = vpop.f32.mrb[0].mxu0
      %v8236 = vadd.f32 0.0, %v8235
      %v8237 = vpop.f32.mrb[0].mxu0
      %v8238 = vpop.f32.mrb[0].mxu0
      %v8239 = vadd.f32 0.0, %v8238
      %v8240 = vpop.f32.mrb[0].mxu0
      %8241 = vmatprep.mubr.bf16.mxu0 0
      %8242 = vmatmul.mubr.bf16.gmra.mrb[0].mxu0 %v7699
      %v8243 = vpop.f32.mrb[0].mxu0
      %v8244 = vadd.f32 0.0, %v8243
      %v8245 = vpop.f32.mrb[0].mxu0
      %v8246 = vpop.f32.mrb[0].mxu0
      %v8247 = vadd.f32 0.0, %v8246
      %v8248 = vpop.f32.mrb[0].mxu0
      %8249 = vdwg.mxu0
      %v8250 = vld [vmem:[#allocation4] sm:$0xff]
      %v8251 = vld [vmem:[#allocation4 + $0x8] sm:$0xff]
      %v8252 = vld [vmem:[#allocation4 + $0x10] sm:$0xff]
      %v8253 = vld [vmem:[#allocation4 + $0x18] sm:$0xff]
      %v8254 = vld [vmem:[#allocation4 + $0x20] sm:$0xff]
      %v8255 = vld [vmem:[#allocation4 + $0x28] sm:$0xff]
      %v8256 = vld [vmem:[#allocation4 + $0x30] sm:$0xff]
      %v8257 = vld [vmem:[#allocation4 + $0x38] sm:$0xff]
      %v8258 = vld [vmem:[#allocation4 + $0x40] sm:$0xff]
      %v8259 = vld [vmem:[#allocation4 + $0x48] sm:$0xff]
      %v8260 = vld [vmem:[#allocation4 + $0x50] sm:$0xff]
      %v8261 = vld [vmem:[#allocation4 + $0x58] sm:$0xff]
      %v8262 = vld [vmem:[#allocation4 + $0x60] sm:$0xff]
      %v8263 = vld [vmem:[#allocation4 + $0x68] sm:$0xff]
      %v8264 = vld [vmem:[#allocation4 + $0x70] sm:$0xff]
      %v8265 = vld [vmem:[#allocation4 + $0x78] sm:$0xff]
      %v8266 = vld [vmem:[#allocation4 + $0x80] sm:$0xff]
      %v8267 = vld [vmem:[#allocation4 + $0x88] sm:$0xff]
      %v8268 = vld [vmem:[#allocation4 + $0x90] sm:$0xff]
      %v8269 = vld [vmem:[#allocation4 + $0x98] sm:$0xff]
      %v8270 = vld [vmem:[#allocation4 + $0xa0] sm:$0xff]
      %v8271 = vld [vmem:[#allocation4 + $0xa8] sm:$0xff]
      %v8272 = vld [vmem:[#allocation4 + $0xb0] sm:$0xff]
      %v8273 = vld [vmem:[#allocation4 + $0xb8] sm:$0xff]
      %v8274 = vld [vmem:[#allocation4 + $0xc0] sm:$0xff]
      %v8275 = vld [vmem:[#allocation4 + $0xc8] sm:$0xff]
      %v8276 = vld [vmem:[#allocation4 + $0xd0] sm:$0xff]
      %v8277 = vld [vmem:[#allocation4 + $0xd8] sm:$0xff]
      %v8278 = vld [vmem:[#allocation4 + $0xe0] sm:$0xff]
      %v8279 = vld [vmem:[#allocation4 + $0xe8] sm:$0xff]
      %v8280 = vld [vmem:[#allocation4 + $0xf0] sm:$0xff]
      %v8281 = vld [vmem:[#allocation4 + $0xf8] sm:$0xff]
      %v8282 = vadd.f32 %v8250, %v8124
      %v8283 = vadd.f32 %v8251, %v8127
      %v8284 = vadd.f32 %v8252, %v8132
      %v8285 = vadd.f32 %v8253, %v8135
      %v8286 = vadd.f32 %v8254, %v8140
      %v8287 = vadd.f32 %v8255, %v8143
      %v8288 = vadd.f32 %v8256, %v8148
      %v8289 = vadd.f32 %v8257, %v8151
      %v8290 = vadd.f32 %v8258, %v8156
      %v8291 = vadd.f32 %v8259, %v8159
      %v8292 = vadd.f32 %v8260, %v8164
      %v8293 = vadd.f32 %v8261, %v8167
      %v8294 = vadd.f32 %v8262, %v8172
      %v8295 = vadd.f32 %v8263, %v8175
      %v8296 = vadd.f32 %v8264, %v8180
      %v8297 = vadd.f32 %v8265, %v8183
      %v8298 = vadd.f32 %v8266, %v8188
      %v8299 = vadd.f32 %v8267, %v8191
      %v8300 = vadd.f32 %v8268, %v8196
      %v8301 = vadd.f32 %v8269, %v8199
      %v8302 = vadd.f32 %v8270, %v8204
      %v8303 = vadd.f32 %v8271, %v8207
      %v8304 = vadd.f32 %v8272, %v8212
      %v8305 = vadd.f32 %v8273, %v8215
      %v8306 = vadd.f32 %v8274, %v8220
      %v8307 = vadd.f32 %v8275, %v8223
      %v8308 = vadd.f32 %v8276, %v8228
      %v8309 = vadd.f32 %v8277, %v8231
      %v8310 = vadd.f32 %v8278, %v8236
      %v8311 = vadd.f32 %v8279, %v8239
      %v8312 = vadd.f32 %v8280, %v8244
      %v8313 = vadd.f32 %v8281, %v8247
      %8314 = vst [vmem:[#allocation4] sm:$0xff] %v8282
      %8315 = vst [vmem:[#allocation4 + $0x8] sm:$0xff] %v8283
      %8316 = vst [vmem:[#allocation4 + $0x10] sm:$0xff] %v8284
      %8317 = vst [vmem:[#allocation4 + $0x18] sm:$0xff] %v8285
      %8318 = vst [vmem:[#allocation4 + $0x20] sm:$0xff] %v8286
      %8319 = vst [vmem:[#allocation4 + $0x28] sm:$0xff] %v8287
      %8320 = vst [vmem:[#allocation4 + $0x30] sm:$0xff] %v8288
      %8321 = vst [vmem:[#allocation4 + $0x38] sm:$0xff] %v8289
      %8322 = vst [vmem:[#allocation4 + $0x40] sm:$0xff] %v8290
      %8323 = vst [vmem:[#allocation4 + $0x48] sm:$0xff] %v8291
      %8324 = vst [vmem:[#allocation4 + $0x50] sm:$0xff] %v8292
      %8325 = vst [vmem:[#allocation4 + $0x58] sm:$0xff] %v8293
      %8326 = vst [vmem:[#allocation4 + $0x60] sm:$0xff] %v8294
      %8327 = vst [vmem:[#allocation4 + $0x68] sm:$0xff] %v8295
      %8328 = vst [vmem:[#allocation4 + $0x70] sm:$0xff] %v8296
      %8329 = vst [vmem:[#allocation4 + $0x78] sm:$0xff] %v8297
      %8330 = vst [vmem:[#allocation4 + $0x80] sm:$0xff] %v8298
      %8331 = vst [vmem:[#allocation4 + $0x88] sm:$0xff] %v8299
      %8332 = vst [vmem:[#allocation4 + $0x90] sm:$0xff] %v8300
      %8333 = vst [vmem:[#allocation4 + $0x98] sm:$0xff] %v8301
      %8334 = vst [vmem:[#allocation4 + $0xa0] sm:$0xff] %v8302
      %8335 = vst [vmem:[#allocation4 + $0xa8] sm:$0xff] %v8303
      %8336 = vst [vmem:[#allocation4 + $0xb0] sm:$0xff] %v8304
      %8337 = vst [vmem:[#allocation4 + $0xb8] sm:$0xff] %v8305
      %8338 = vst [vmem:[#allocation4 + $0xc0] sm:$0xff] %v8306
      %8339 = vst [vmem:[#allocation4 + $0xc8] sm:$0xff] %v8307
      %8340 = vst [vmem:[#allocation4 + $0xd0] sm:$0xff] %v8308
      %8341 = vst [vmem:[#allocation4 + $0xd8] sm:$0xff] %v8309
      %8342 = vst [vmem:[#allocation4 + $0xe0] sm:$0xff] %v8310
      %8343 = vst [vmem:[#allocation4 + $0xe8] sm:$0xff] %v8311
      %8344 = vst [vmem:[#allocation4 + $0xf0] sm:$0xff] %v8312
      %8345 = vst [vmem:[#allocation4 + $0xf8] sm:$0xff] %v8313
      %s8346 = scalar_lea.vmem %s5, 512
      %v8347 = vld [vmem:[%s8346] sm:$0xf]
      %v8348 = vld [vmem:[%s8346 + $0x4] sm:$0xf]
      %v8349 = vld [vmem:[%s8346 + $0x8] sm:$0xf]
      %v8350 = vld [vmem:[%s8346 + $0xc] sm:$0xf]
      %v8351 = vld [vmem:[%s8346 + $0x10] sm:$0xf]
      %v8352 = vld [vmem:[%s8346 + $0x14] sm:$0xf]
      %v8353 = vld [vmem:[%s8346 + $0x18] sm:$0xf]
      %v8354 = vld [vmem:[%s8346 + $0x1c] sm:$0xf]
      %v8355 = vld [vmem:[%s8346 + $0x20] sm:$0xf]
      %v8356 = vld [vmem:[%s8346 + $0x24] sm:$0xf]
      %v8357 = vld [vmem:[%s8346 + $0x28] sm:$0xf]
      %v8358 = vld [vmem:[%s8346 + $0x2c] sm:$0xf]
      %v8359 = vld [vmem:[%s8346 + $0x30] sm:$0xf]
      %v8360 = vld [vmem:[%s8346 + $0x34] sm:$0xf]
      %v8361 = vld [vmem:[%s8346 + $0x38] sm:$0xf]
      %v8362 = vld [vmem:[%s8346 + $0x3c] sm:$0xf]
      %v8379 = vunpack.c.l.b16 %v8347
      %v8380 = vunpack.c.l.b16 %v8348
      %v8381 = vunpack.c.l.b16 %v8349
      %v8382 = vunpack.c.l.b16 %v8350
      %v8383 = vunpack.c.l.b16 %v8351
      %v8384 = vunpack.c.l.b16 %v8352
      %v8385 = vunpack.c.l.b16 %v8353
      %v8386 = vunpack.c.l.b16 %v8354
      %v8387 = vunpack.c.l.b16 %v8355
      %v8388 = vunpack.c.l.b16 %v8356
      %v8389 = vunpack.c.l.b16 %v8357
      %v8390 = vunpack.c.l.b16 %v8358
      %v8391 = vunpack.c.l.b16 %v8359
      %v8392 = vunpack.c.l.b16 %v8360
      %v8393 = vunpack.c.l.b16 %v8361
      %v8394 = vunpack.c.l.b16 %v8362
      %v8395 = vpack.c.b16 %v8380, %v8379
      %v8396 = vpack.c.b16 %v8382, %v8381
      %v8397 = vpack.c.b16 %v8384, %v8383
      %v8398 = vpack.c.b16 %v8386, %v8385
      %v8399 = vpack.c.b16 %v8388, %v8387
      %v8400 = vpack.c.b16 %v8390, %v8389
      %v8401 = vpack.c.b16 %v8392, %v8391
      %v8402 = vpack.c.b16 %v8394, %v8393
      %8411 = vmatprep.subr.bf16.mxu0 0
      %8412 = vmatpush1.bf16.msra.mxu0 %v8395
      %8413 = vmatprep.subr.bf16.mxu0 0
      %8414 = vmatpush1.bf16.msra.mxu0 %v8396
      %8415 = vmatprep.subr.bf16.mxu0 0
      %8416 = vmatpush1.bf16.msra.mxu0 %v8397
      %8417 = vmatprep.subr.bf16.mxu0 0
      %8418 = vmatpush1.bf16.msra.mxu0 %v8398
      %8419 = vmatprep.subr.bf16.mxu0 0
      %8420 = vmatpush1.bf16.msra.mxu0 %v8399
      %8421 = vmatprep.subr.bf16.mxu0 0
      %8422 = vmatpush1.bf16.msra.mxu0 %v8400
      %8423 = vmatprep.subr.bf16.mxu0 0
      %8424 = vmatpush1.bf16.msra.mxu0 %v8401
      %8425 = vmatprep.subr.bf16.mxu0 0
      %8426 = vmatpush1.bf16.msra.mxu0 %v8402
      %8427 = vmatprep.subr.bf16.mxu0 0
      %8428 = vmatpush1.bf16.msra.mxu0 0
      %8429 = vmatprep.subr.bf16.mxu0 0
      %8430 = vmatpush1.bf16.msra.mxu0 0
      %8431 = vmatprep.subr.bf16.mxu0 0
      %8432 = vmatpush1.bf16.msra.mxu0 0
      %8433 = vmatprep.subr.bf16.mxu0 0
      %8434 = vmatpush1.bf16.msra.mxu0 0
      %8435 = vmatprep.subr.bf16.mxu0 0
      %8436 = vmatpush1.bf16.msra.mxu0 0
      %8437 = vmatprep.subr.bf16.mxu0 0
      %8438 = vmatpush1.bf16.msra.mxu0 0
      %8439 = vmatprep.subr.bf16.mxu0 0
      %8440 = vmatpush1.bf16.msra.mxu0 0
      %8441 = vmatprep.subr.bf16.mxu0 0
      %8442 = vmatpush1.bf16.msra.mxu0 0
      %8443 = vmatprep.mubr.bf16.mxu0 0
      %8444 = vmatmul.mubr.bf16.gmra.mrb[0].mxu0 %v7686
      %v8445 = vpop.f32.mrb[0].mxu0
      %v8446 = vadd.f32 0.0, %v8445
      %v8447 = vpop.f32.mrb[0].mxu0
      %v8448 = vpop.f32.mrb[0].mxu0
      %v8449 = vadd.f32 0.0, %v8448
      %v8450 = vpop.f32.mrb[0].mxu0
      %8451 = vmatprep.mubr.bf16.mxu0 0
      %8452 = vmatmul.mubr.bf16.gmra.mrb[0].mxu0 %v7687
      %v8453 = vpop.f32.mrb[0].mxu0
      %v8454 = vadd.f32 0.0, %v8453
      %v8455 = vpop.f32.mrb[0].mxu0
      %v8456 = vpop.f32.mrb[0].mxu0
      %v8457 = vadd.f32 0.0, %v8456
      %v8458 = vpop.f32.mrb[0].mxu0
      %8459 = vmatprep.mubr.bf16.mxu0 0
      %8460 = vmatmul.mubr.bf16.gmra.mrb[0].mxu0 %v7688
      %v8461 = vpop.f32.mrb[0].mxu0
      %v8462 = vadd.f32 0.0, %v8461
      %v8463 = vpop.f32.mrb[0].mxu0
      %v8464 = vpop.f32.mrb[0].mxu0
      %v8465 = vadd.f32 0.0, %v8464
      %v8466 = vpop.f32.mrb[0].mxu0
      %8467 = vmatprep.mubr.bf16.mxu0 0
      %8468 = vmatmul.mubr.bf16.gmra.mrb[0].mxu0 %v7689
      %v8469 = vpop.f32.mrb[0].mxu0
      %v8470 = vadd.f32 0.0, %v8469
      %v8471 = vpop.f32.mrb[0].mxu0
      %v8472 = vpop.f32.mrb[0].mxu0
      %v8473 = vadd.f32 0.0, %v8472
      %v8474 = vpop.f32.mrb[0].mxu0
      %8475 = vmatprep.mubr.bf16.mxu0 0
      %8476 = vmatmul.mubr.bf16.gmra.mrb[0].mxu0 %v7690
      %v8477 = vpop.f32.mrb[0].mxu0
      %v8478 = vadd.f32 0.0, %v8477
      %v8479 = vpop.f32.mrb[0].mxu0
      %v8480 = vpop.f32.mrb[0].mxu0
      %v8481 = vadd.f32 0.0, %v8480
      %v8482 = vpop.f32.mrb[0].mxu0
      %8483 = vmatprep.mubr.bf16.mxu0 0
      %8484 = vmatmul.mubr.bf16.gmra.mrb[0].mxu0 %v7691
      %v8485 = vpop.f32.mrb[0].mxu0
      %v8486 = vadd.f32 0.0, %v8485
      %v8487 = vpop.f32.mrb[0].mxu0
      %v8488 = vpop.f32.mrb[0].mxu0
      %v8489 = vadd.f32 0.0, %v8488
      %v8490 = vpop.f32.mrb[0].mxu0
      %8491 = vmatprep.mubr.bf16.mxu0 0
      %8492 = vmatmul.mubr.bf16.gmra.mrb[0].mxu0 %v7692
      %v8493 = vpop.f32.mrb[0].mxu0
      %v8494 = vadd.f32 0.0, %v8493
      %v8495 = vpop.f32.mrb[0].mxu0
      %v8496 = vpop.f32.mrb[0].mxu0
      %v8497 = vadd.f32 0.0, %v8496
      %v8498 = vpop.f32.mrb[0].mxu0
      %8499 = vmatprep.mubr.bf16.mxu0 0
      %8500 = vmatmul.mubr.bf16.gmra.mrb[0].mxu0 %v7693
      %v8501 = vpop.f32.mrb[0].mxu0
      %v8502 = vadd.f32 0.0, %v8501
      %v8503 = vpop.f32.mrb[0].mxu0
      %v8504 = vpop.f32.mrb[0].mxu0
      %v8505 = vadd.f32 0.0, %v8504
      %v8506 = vpop.f32.mrb[0].mxu0
      %8507 = vmatprep.mubr.bf16.mxu0 0
      %8508 = vmatmul.mubr.bf16.gmra.mrb[0].mxu0 %v7694
      %v8509 = vpop.f32.mrb[0].mxu0
      %v8510 = vadd.f32 0.0, %v8509
      %v8511 = vpop.f32.mrb[0].mxu0
      %v8512 = vpop.f32.mrb[0].mxu0
      %v8513 = vadd.f32 0.0, %v8512
      %v8514 = vpop.f32.mrb[0].mxu0
      %8515 = vmatprep.mubr.bf16.mxu0 0
      %8516 = vmatmul.mubr.bf16.gmra.mrb[0].mxu0 %v7695
      %v8517 = vpop.f32.mrb[0].mxu0
      %v8518 = vadd.f32 0.0, %v8517
      %v8519 = vpop.f32.mrb[0].mxu0
      %v8520 = vpop.f32.mrb[0].mxu0
      %v8521 = vadd.f32 0.0, %v8520
      %v8522 = vpop.f32.mrb[0].mxu0
      %8523 = vmatprep.mubr.bf16.mxu0 0
      %8524 = vmatmul.mubr.bf16.gmra.mrb[0].mxu0 %v7696
      %v8525 = vpop.f32.mrb[0].mxu0
      %v8526 = vadd.f32 0.0, %v8525
      %v8527 = vpop.f32.mrb[0].mxu0
      %v8528 = vpop.f32.mrb[0].mxu0
      %v8529 = vadd.f32 0.0, %v8528
      %v8530 = vpop.f32.mrb[0].mxu0
      %8531 = vmatprep.mubr.bf16.mxu0 0
      %8532 = vmatmul.mubr.bf16.gmra.mrb[0].mxu0 %v7697
      %v8533 = vpop.f32.mrb[0].mxu0
      %v8534 = vadd.f32 0.0, %v8533
      %v8535 = vpop.f32.mrb[0].mxu0
      %v8536 = vpop.f32.mrb[0].mxu0
      %v8537 = vadd.f32 0.0, %v8536
      %v8538 = vpop.f32.mrb[0].mxu0
      %8539 = vmatprep.mubr.bf16.mxu0 0
      %8540 = vmatmul.mubr.bf16.gmra.mrb[0].mxu0 %v7698
      %v8541 = vpop.f32.mrb[0].mxu0
      %v8542 = vadd.f32 0.0, %v8541
      %v8543 = vpop.f32.mrb[0].mxu0
      %v8544 = vpop.f32.mrb[0].mxu0
      %v8545 = vadd.f32 0.0, %v8544
      %v8546 = vpop.f32.mrb[0].mxu0
      %8547 = vmatprep.mubr.bf16.mxu0 0
      %8548 = vmatmul.mubr.bf16.gmra.mrb[0].mxu0 %v7699
      %v8549 = vpop.f32.mrb[0].mxu0
      %v8550 = vadd.f32 0.0, %v8549
      %v8551 = vpop.f32.mrb[0].mxu0
      %v8552 = vpop.f32.mrb[0].mxu0
      %v8553 = vadd.f32 0.0, %v8552
      %v8554 = vpop.f32.mrb[0].mxu0
      %8555 = vmatprep.mubr.bf16.mxu0 0
      %8556 = vmatmul.mubr.bf16.gmra.mrb[0].mxu0 %v7700
      %v8557 = vpop.f32.mrb[0].mxu0
      %v8558 = vadd.f32 0.0, %v8557
      %v8559 = vpop.f32.mrb[0].mxu0
      %v8560 = vpop.f32.mrb[0].mxu0
      %v8561 = vadd.f32 0.0, %v8560
      %v8562 = vpop.f32.mrb[0].mxu0
      %8563 = vmatprep.mubr.bf16.mxu0 0
      %8564 = vmatmul.mubr.bf16.gmra.mrb[0].mxu0 %v7701
      %v8565 = vpop.f32.mrb[0].mxu0
      %v8566 = vadd.f32 0.0, %v8565
      %v8567 = vpop.f32.mrb[0].mxu0
      %v8568 = vpop.f32.mrb[0].mxu0
      %v8569 = vadd.f32 0.0, %v8568
      %v8570 = vpop.f32.mrb[0].mxu0
      %8571 = vdwg.mxu0
      %v8572 = vld [vmem:[#allocation4] sm:$0xff]
      %v8573 = vld [vmem:[#allocation4 + $0x8] sm:$0xff]
      %v8574 = vld [vmem:[#allocation4 + $0x10] sm:$0xff]
      %v8575 = vld [vmem:[#allocation4 + $0x18] sm:$0xff]
      %v8576 = vld [vmem:[#allocation4 + $0x20] sm:$0xff]
      %v8577 = vld [vmem:[#allocation4 + $0x28] sm:$0xff]
      %v8578 = vld [vmem:[#allocation4 + $0x30] sm:$0xff]
      %v8579 = vld [vmem:[#allocation4 + $0x38] sm:$0xff]
      %v8580 = vld [vmem:[#allocation4 + $0x40] sm:$0xff]
      %v8581 = vld [vmem:[#allocation4 + $0x48] sm:$0xff]
      %v8582 = vld [vmem:[#allocation4 + $0x50] sm:$0xff]
      %v8583 = vld [vmem:[#allocation4 + $0x58] sm:$0xff]
      %v8584 = vld [vmem:[#allocation4 + $0x60] sm:$0xff]
      %v8585 = vld [vmem:[#allocation4 + $0x68] sm:$0xff]
      %v8586 = vld [vmem:[#allocation4 + $0x70] sm:$0xff]
      %v8587 = vld [vmem:[#allocation4 + $0x78] sm:$0xff]
      %v8588 = vld [vmem:[#allocation4 + $0x80] sm:$0xff]
      %v8589 = vld [vmem:[#allocation4 + $0x88] sm:$0xff]
      %v8590 = vld [vmem:[#allocation4 + $0x90] sm:$0xff]
      %v8591 = vld [vmem:[#allocation4 + $0x98] sm:$0xff]
      %v8592 = vld [vmem:[#allocation4 + $0xa0] sm:$0xff]
      %v8593 = vld [vmem:[#allocation4 + $0xa8] sm:$0xff]
      %v8594 = vld [vmem:[#allocation4 + $0xb0] sm:$0xff]
      %v8595 = vld [vmem:[#allocation4 + $0xb8] sm:$0xff]
      %v8596 = vld [vmem:[#allocation4 + $0xc0] sm:$0xff]
      %v8597 = vld [vmem:[#allocation4 + $0xc8] sm:$0xff]
      %v8598 = vld [vmem:[#allocation4 + $0xd0] sm:$0xff]
      %v8599 = vld [vmem:[#allocation4 + $0xd8] sm:$0xff]
      %v8600 = vld [vmem:[#allocation4 + $0xe0] sm:$0xff]
      %v8601 = vld [vmem:[#allocation4 + $0xe8] sm:$0xff]
      %v8602 = vld [vmem:[#allocation4 + $0xf0] sm:$0xff]
      %v8603 = vld [vmem:[#allocation4 + $0xf8] sm:$0xff]
      %v8604 = vadd.f32 %v8572, %v8446
      %v8605 = vadd.f32 %v8573, %v8449
      %v8606 = vadd.f32 %v8574, %v8454
      %v8607 = vadd.f32 %v8575, %v8457
      %v8608 = vadd.f32 %v8576, %v8462
      %v8609 = vadd.f32 %v8577, %v8465
      %v8610 = vadd.f32 %v8578, %v8470
      %v8611 = vadd.f32 %v8579, %v8473
      %v8612 = vadd.f32 %v8580, %v8478
      %v8613 = vadd.f32 %v8581, %v8481
      %v8614 = vadd.f32 %v8582, %v8486
      %v8615 = vadd.f32 %v8583, %v8489
      %v8616 = vadd.f32 %v8584, %v8494
      %v8617 = vadd.f32 %v8585, %v8497
      %v8618 = vadd.f32 %v8586, %v8502
      %v8619 = vadd.f32 %v8587, %v8505
      %v8620 = vadd.f32 %v8588, %v8510
      %v8621 = vadd.f32 %v8589, %v8513
      %v8622 = vadd.f32 %v8590, %v8518
      %v8623 = vadd.f32 %v8591, %v8521
      %v8624 = vadd.f32 %v8592, %v8526
      %v8625 = vadd.f32 %v8593, %v8529
      %v8626 = vadd.f32 %v8594, %v8534
      %v8627 = vadd.f32 %v8595, %v8537
      %v8628 = vadd.f32 %v8596, %v8542
      %v8629 = vadd.f32 %v8597, %v8545
      %v8630 = vadd.f32 %v8598, %v8550
      %v8631 = vadd.f32 %v8599, %v8553
      %v8632 = vadd.f32 %v8600, %v8558
      %v8633 = vadd.f32 %v8601, %v8561
      %v8634 = vadd.f32 %v8602, %v8566
      %v8635 = vadd.f32 %v8603, %v8569
      %8636 = vst [vmem:[#allocation4] sm:$0xff] %v8604
      %8637 = vst [vmem:[#allocation4 + $0x8] sm:$0xff] %v8605
      %8638 = vst [vmem:[#allocation4 + $0x10] sm:$0xff] %v8606
      %8639 = vst [vmem:[#allocation4 + $0x18] sm:$0xff] %v8607
      %8640 = vst [vmem:[#allocation4 + $0x20] sm:$0xff] %v8608
      %8641 = vst [vmem:[#allocation4 + $0x28] sm:$0xff] %v8609
      %8642 = vst [vmem:[#allocation4 + $0x30] sm:$0xff] %v8610
      %8643 = vst [vmem:[#allocation4 + $0x38] sm:$0xff] %v8611
      %8644 = vst [vmem:[#allocation4 + $0x40] sm:$0xff] %v8612
      %8645 = vst [vmem:[#allocation4 + $0x48] sm:$0xff] %v8613
      %8646 = vst [vmem:[#allocation4 + $0x50] sm:$0xff] %v8614
      %8647 = vst [vmem:[#allocation4 + $0x58] sm:$0xff] %v8615
      %8648 = vst [vmem:[#allocation4 + $0x60] sm:$0xff] %v8616
      %8649 = vst [vmem:[#allocation4 + $0x68] sm:$0xff] %v8617
      %8650 = vst [vmem:[#allocation4 + $0x70] sm:$0xff] %v8618
      %8651 = vst [vmem:[#allocation4 + $0x78] sm:$0xff] %v8619
      %8652 = vst [vmem:[#allocation4 + $0x80] sm:$0xff] %v8620
      %8653 = vst [vmem:[#allocation4 + $0x88] sm:$0xff] %v8621
      %8654 = vst [vmem:[#allocation4 + $0x90] sm:$0xff] %v8622
      %8655 = vst [vmem:[#allocation4 + $0x98] sm:$0xff] %v8623
      %8656 = vst [vmem:[#allocation4 + $0xa0] sm:$0xff] %v8624
      %8657 = vst [vmem:[#allocation4 + $0xa8] sm:$0xff] %v8625
      %8658 = vst [vmem:[#allocation4 + $0xb0] sm:$0xff] %v8626
      %8659 = vst [vmem:[#allocation4 + $0xb8] sm:$0xff] %v8627
      %8660 = vst [vmem:[#allocation4 + $0xc0] sm:$0xff] %v8628
      %8661 = vst [vmem:[#allocation4 + $0xc8] sm:$0xff] %v8629
      %8662 = vst [vmem:[#allocation4 + $0xd0] sm:$0xff] %v8630
      %8663 = vst [vmem:[#allocation4 + $0xd8] sm:$0xff] %v8631
      %8664 = vst [vmem:[#allocation4 + $0xe0] sm:$0xff] %v8632
      %8665 = vst [vmem:[#allocation4 + $0xe8] sm:$0xff] %v8633
      %8666 = vst [vmem:[#allocation4 + $0xf0] sm:$0xff] %v8634
      %8667 = vst [vmem:[#allocation4 + $0xf8] sm:$0xff] %v8635
      %v8668 = vld [vmem:[#allocation4] sm:$0xff]
      %v8669 = vld [vmem:[#allocation4 + $0x8] sm:$0xff]
      %v8670 = vld [vmem:[#allocation4 + $0x10] sm:$0xff]
      %v8671 = vld [vmem:[#allocation4 + $0x18] sm:$0xff]
      %v8672 = vld [vmem:[#allocation4 + $0x20] sm:$0xff]
      %v8673 = vld [vmem:[#allocation4 + $0x28] sm:$0xff]
      %v8674 = vld [vmem:[#allocation4 + $0x30] sm:$0xff]
      %v8675 = vld [vmem:[#allocation4 + $0x38] sm:$0xff]
      %v8676 = vld [vmem:[#allocation4 + $0x40] sm:$0xff]
      %v8677 = vld [vmem:[#allocation4 + $0x48] sm:$0xff]
      %v8678 = vld [vmem:[#allocation4 + $0x50] sm:$0xff]
      %v8679 = vld [vmem:[#allocation4 + $0x58] sm:$0xff]
      %v8680 = vld [vmem:[#allocation4 + $0x60] sm:$0xff]
      %v8681 = vld [vmem:[#allocation4 + $0x68] sm:$0xff]
      %v8682 = vld [vmem:[#allocation4 + $0x70] sm:$0xff]
      %v8683 = vld [vmem:[#allocation4 + $0x78] sm:$0xff]
      %v8684 = vld [vmem:[#allocation4 + $0x80] sm:$0xff]
      %v8685 = vld [vmem:[#allocation4 + $0x88] sm:$0xff]
      %v8686 = vld [vmem:[#allocation4 + $0x90] sm:$0xff]
      %v8687 = vld [vmem:[#allocation4 + $0x98] sm:$0xff]
      %v8688 = vld [vmem:[#allocation4 + $0xa0] sm:$0xff]
      %v8689 = vld [vmem:[#allocation4 + $0xa8] sm:$0xff]
      %v8690 = vld [vmem:[#allocation4 + $0xb0] sm:$0xff]
      %v8691 = vld [vmem:[#allocation4 + $0xb8] sm:$0xff]
      %v8692 = vld [vmem:[#allocation4 + $0xc0] sm:$0xff]
      %v8693 = vld [vmem:[#allocation4 + $0xc8] sm:$0xff]
      %v8694 = vld [vmem:[#allocation4 + $0xd0] sm:$0xff]
      %v8695 = vld [vmem:[#allocation4 + $0xd8] sm:$0xff]
      %v8696 = vld [vmem:[#allocation4 + $0xe0] sm:$0xff]
      %v8697 = vld [vmem:[#allocation4 + $0xe8] sm:$0xff]
      %v8698 = vld [vmem:[#allocation4 + $0xf0] sm:$0xff]
      %v8699 = vld [vmem:[#allocation4 + $0xf8] sm:$0xff]
      %v8700 = vld [vmem:[%s7] sm:$0x1]
      %v8702 = vlaneseq
      %v8703 = vshrl.u32 %v8702, 7
      %v8704 = vsub.s32 0, %v8703
      %v8705 = vrot.slane %v8700, %v8704
      %v8707 = vadd.f32 %v8668, %v8705
      %v8708 = vadd.f32 %v8669, %v8705
      %v8709 = vadd.f32 %v8670, %v8705
      %v8710 = vadd.f32 %v8671, %v8705
      %v8711 = vadd.f32 %v8672, %v8705
      %v8712 = vadd.f32 %v8673, %v8705
      %v8713 = vadd.f32 %v8674, %v8705
      %v8714 = vadd.f32 %v8675, %v8705
      %v8715 = vadd.f32 %v8676, %v8705
      %v8716 = vadd.f32 %v8677, %v8705
      %v8717 = vadd.f32 %v8678, %v8705
      %v8718 = vadd.f32 %v8679, %v8705
      %v8719 = vadd.f32 %v8680, %v8705
      %v8720 = vadd.f32 %v8681, %v8705
      %v8721 = vadd.f32 %v8682, %v8705
      %v8722 = vadd.f32 %v8683, %v8705
      %v8723 = vadd.f32 %v8684, %v8705
      %v8724 = vadd.f32 %v8685, %v8705
      %v8725 = vadd.f32 %v8686, %v8705
      %v8726 = vadd.f32 %v8687, %v8705
      %v8727 = vadd.f32 %v8688, %v8705
      %v8728 = vadd.f32 %v8689, %v8705
      %v8729 = vadd.f32 %v8690, %v8705
      %v8730 = vadd.f32 %v8691, %v8705
      %v8731 = vadd.f32 %v8692, %v8705
      %v8732 = vadd.f32 %v8693, %v8705
      %v8733 = vadd.f32 %v8694, %v8705
      %v8734 = vadd.f32 %v8695, %v8705
      %v8735 = vadd.f32 %v8696, %v8705
      %v8736 = vadd.f32 %v8697, %v8705
      %v8737 = vadd.f32 %v8698, %v8705
      %v8738 = vadd.f32 %v8699, %v8705
      %v8739 = vmax.f32 %v8707, 0.0
      %v8740 = vmax.f32 %v8708, 0.0
      %v8741 = vmax.f32 %v8709, 0.0
      %v8742 = vmax.f32 %v8710, 0.0
      %v8743 = vmax.f32 %v8711, 0.0
      %v8744 = vmax.f32 %v8712, 0.0
      %v8745 = vmax.f32 %v8713, 0.0
      %v8746 = vmax.f32 %v8714, 0.0
      %v8747 = vmax.f32 %v8715, 0.0
      %v8748 = vmax.f32 %v8716, 0.0
      %v8749 = vmax.f32 %v8717, 0.0
      %v8750 = vmax.f32 %v8718, 0.0
      %v8751 = vmax.f32 %v8719, 0.0
      %v8752 = vmax.f32 %v8720, 0.0
      %v8753 = vmax.f32 %v8721, 0.0
      %v8754 = vmax.f32 %v8722, 0.0
      %v8755 = vmax.f32 %v8723, 0.0
      %v8756 = vmax.f32 %v8724, 0.0
      %v8757 = vmax.f32 %v8725, 0.0
      %v8758 = vmax.f32 %v8726, 0.0
      %v8759 = vmax.f32 %v8727, 0.0
      %v8760 = vmax.f32 %v8728, 0.0
      %v8761 = vmax.f32 %v8729, 0.0
      %v8762 = vmax.f32 %v8730, 0.0
      %v8763 = vmax.f32 %v8731, 0.0
      %v8764 = vmax.f32 %v8732, 0.0
      %v8765 = vmax.f32 %v8733, 0.0
      %v8766 = vmax.f32 %v8734, 0.0
      %v8767 = vmax.f32 %v8735, 0.0
      %v8768 = vmax.f32 %v8736, 0.0
      %v8769 = vmax.f32 %v8737, 0.0
      %v8770 = vmax.f32 %v8738, 0.0
      %8771 = vst [vmem:[%s397] sm:$0xff] %v8739
      %8772 = vst [vmem:[%s397 + $0x8] sm:$0xff] %v8740
      %8773 = vst [vmem:[%s397 + $0x10] sm:$0xff] %v8741
      %8774 = vst [vmem:[%s397 + $0x18] sm:$0xff] %v8742
      %8775 = vst [vmem:[%s397 + $0x20] sm:$0xff] %v8743
      %8776 = vst [vmem:[%s397 + $0x28] sm:$0xff] %v8744
      %8777 = vst [vmem:[%s397 + $0x30] sm:$0xff] %v8745
      %8778 = vst [vmem:[%s397 + $0x38] sm:$0xff] %v8746
      %8779 = vst [vmem:[%s397 + $0x40] sm:$0xff] %v8747
      %8780 = vst [vmem:[%s397 + $0x48] sm:$0xff] %v8748
      %8781 = vst [vmem:[%s397 + $0x50] sm:$0xff] %v8749
      %8782 = vst [vmem:[%s397 + $0x58] sm:$0xff] %v8750
      %8783 = vst [vmem:[%s397 + $0x60] sm:$0xff] %v8751
      %8784 = vst [vmem:[%s397 + $0x68] sm:$0xff] %v8752
      %8785 = vst [vmem:[%s397 + $0x70] sm:$0xff] %v8753
      %8786 = vst [vmem:[%s397 + $0x78] sm:$0xff] %v8754
      %8787 = vst [vmem:[%s397 + $0x80] sm:$0xff] %v8755
      %8788 = vst [vmem:[%s397 + $0x88] sm:$0xff] %v8756
      %8789 = vst [vmem:[%s397 + $0x90] sm:$0xff] %v8757
      %8790 = vst [vmem:[%s397 + $0x98] sm:$0xff] %v8758
      %8791 = vst [vmem:[%s397 + $0xa0] sm:$0xff] %v8759
      %8792 = vst [vmem:[%s397 + $0xa8] sm:$0xff] %v8760
      %8793 = vst [vmem:[%s397 + $0xb0] sm:$0xff] %v8761
      %8794 = vst [vmem:[%s397 + $0xb8] sm:$0xff] %v8762
      %8795 = vst [vmem:[%s397 + $0xc0] sm:$0xff] %v8763
      %8796 = vst [vmem:[%s397 + $0xc8] sm:$0xff] %v8764
      %8797 = vst [vmem:[%s397 + $0xd0] sm:$0xff] %v8765
      %8798 = vst [vmem:[%s397 + $0xd8] sm:$0xff] %v8766
      %8799 = vst [vmem:[%s397 + $0xe0] sm:$0xff] %v8767
      %8800 = vst [vmem:[%s397 + $0xe8] sm:$0xff] %v8768
      %8801 = vst [vmem:[%s397 + $0xf0] sm:$0xff] %v8769
      %8802 = vst [vmem:[%s397 + $0xf8] sm:$0xff] %v8770
      %s8803 = smul.u32 8, %s24
      %p8804 = scmp.lt.s32.totalorder %s23, 1
      %s8805 = scalar_select %p8804, %s23, 1
      %p8806 = scmp.lt.s32.totalorder %s8803, 15
      %s8807 = scalar_select %p8806, %s8803, 15
      %s8808 = smul.addr %s8807, 4
      %s8809 = smul.addr %s8805, 64
      %s8810 = sadd.s32 %s8808, %s8809
      %s8811 = smul.addr %s8810, 8
      %s8812 = scalar_lea.vmem %s8, %s8811
      // Predicated region
      $region53: #{up_forward.1} parent=51 // pred_check
        %p8813 = pneg %p238
      $region54: #{up_forward.1} parent=51 // pred_check_branch
        %8815 = sbr.rel (%p8813) target = $region56
      $region55: #{up_forward.1} parent=51 // pred_region
        %s8816 = smul.u32 8, %s24
      $region56: #{up_forward.1} parent=51 // pred_fallthru
        _
    $region52: #{up_forward.1} parent=5 // pred_fallthru
      _
    %p8817 = scmp.le.s32.totalorder 2, %s14
    // Predicated region
    $region57: #{up_forward.1} parent=5 // pred_check
      %p8818 = pneg %p8817
    $region58: #{up_forward.1} parent=5 // pred_check_branch
      %8820 = sbr.rel (%p8818) target = $region60
    $region59: #{up_forward.1} parent=5 // pred_region
      %s8821 = ssub.s32 %s14, 2
      // Predicated region
      $region61: #{up_forward.1} parent=59 // pred_check
        %p8822 = pneg %p244
      $region62: #{up_forward.1} parent=59 // pred_check_branch
        %8824 = sbr.rel (%p8822) target = $region64
      $region63: #{up_forward.1} parent=59 // pred_region
        %s8825 = smul.u32 8, %s26
        %p8826 = scmp.lt.s32.totalorder %s25, 1
        %s8827 = scalar_select %p8826, %s25, 1
        %p8828 = scmp.lt.s32.totalorder %s8825, 15
        %s8829 = scalar_select %p8828, %s8825, 15
        %s8830 = smul.addr %s8829, 4
        %s8831 = smul.addr %s8827, 64
        %s8832 = sadd.s32 %s8830, %s8831
        %s8833 = smul.addr %s8832, 8
        %s8834 = scalar_lea.vmem %s8, %s8833
      $region64: #{up_forward.1} parent=59 // pred_fallthru
        _
    $region60: #{up_forward.1} parent=5 // pred_fallthru
      _
  $region6: #{up_forward.1} parent=0 // loop_footer
    %s18 = sadd.s32 1, %s14
  $region7: #{up_forward.1} parent=0 // loop_footer_branch
    %13 = sbr.rel target = $region3
  $region8: #{up_forward.1} parent=0 // loop_exit
    _

</llo_original>
